<compile_context>
chip_gen: v7x
topology: tpu7x:2x2x1
jax: 0.10.0
libtpu: 0.0.40
codegen_flags: <defaults>
</compile_context>

<pallas_src>
import functools

import jax
import jax.numpy as jnp
from jax import lax
from jax.experimental import pallas as pl
from jax.experimental.pallas import tpu as pltpu


def _round_up(x, m):
    return ((x + m - 1) // m) * m


def _pick_tile(total, target):
    """Largest tile <= target that divides `total` and is a multiple of 8."""
    if total <= target:
        return total
    for t in range(target, 7, -1):
        if t % 8 == 0 and total % t == 0:
            return t
    return total


@functools.lru_cache(maxsize=1)
def _vmem_limit_bytes():
    cap = 64 * 1024 * 1024                      # conservative fallback (v7x-sized)
    try:
        info = pltpu.get_tpu_info()
        cap = int(getattr(info, "vmem_capacity_bytes", cap))
    except Exception:
        pass
    return int(min(cap * 3 // 4, 96 * 1024 * 1024))


# ----------------------------------------------------------------------------
# Kernel: Conv2d(k=4) with kw folded into the contraction, fused bias,
#         optional LeakyReLU, optional fused InstanceNorm statistics.
# ----------------------------------------------------------------------------
def _conv_kernel(x_ref, w_ref, b_ref, o_ref, *stat_refs, taps, toh, owp,
                 leaky_slope, oh_valid, ow_valid, emit_stats):
    """One (batch n, cout tile, output-row tile) grid step.

    x_ref : (n_ph, PH, OWP, K) bf16  width-folded row-phase LHS (K = taps*Cin)
    w_ref : (G, K, TCO)        bf16  per-row-tap weight slabs
    b_ref : (1, TCO)           f32   bias
    o_ref : (1, TOH*OWP, TCO)        lane-dense output tile
    stat_refs (only if emit_stats): sum_ref, sq_ref  (1, 1, TCO) f32
    """
    row0 = pl.multiple_of(pl.program_id(2) * toh, toh)

    # Back-to-back MXU dots into one accumulator value (no scratch RMW).
    acc = None
    for g, (ph, dh) in enumerate(taps):
        xs = x_ref[ph, pl.ds(row0 + dh, toh), :, :]          # (toh, OWP, K)
        lhs = xs.reshape(toh * owp, xs.shape[-1])            # tile-aligned reshape
        d = jnp.dot(lhs, w_ref[g], preferred_element_type=jnp.float32)
        acc = d if acc is None else acc + d

    out = acc + b_ref[...]
    if leaky_slope is not None:
        out = jnp.where(out >= 0, out, leaky_slope * out)
    o_ref[0] = out.astype(o_ref.dtype)

    if emit_stats:
        sum_ref, sq_ref = stat_refs
        tco = out.shape[-1]
        out3 = out.reshape(toh, owp, tco)                    # leading-dim split
        oh_ids = lax.broadcasted_iota(jnp.int32, (toh, owp, tco), 0) + row0
        ow_ids = lax.broadcasted_iota(jnp.int32, (toh, owp, tco), 1)
        valid = (oh_ids < oh_valid) & (ow_ids < ow_valid)
        masked = jnp.where(valid, out3, 0.0)

        @pl.when(pl.program_id(2) == 0)
        def _():
            sum_ref[...] = jnp.zeros_like(sum_ref)
            sq_ref[...] = jnp.zeros_like(sq_ref)

        ps = jnp.sum(jnp.sum(masked, axis=0), axis=0)                  # (TCO,)
        pq = jnp.sum(jnp.sum(masked * masked, axis=0), axis=0)
        sum_ref[...] += ps[None, None, :]
        sq_ref[...] += pq[None, None, :]


# ----------------------------------------------------------------------------
# Wrapper-side LHS builders (XLA ops): width-folded phases / full im2col.
# ----------------------------------------------------------------------------
def _build_phase_lhs(xp, k, s, ph_need, ow, owp):
    """(N, s, PH, OWP, k*C): width-only im2col per row phase (dup = k/s)."""
    N, _, _, C = xp.shape
    phases = []
    for p_h in range(s):
        rows = xp[:, p_h::s, :, :]
        taps = []
        for kw in range(k):
            cols = rows[:, :, kw::s, :][:, :, :ow, :]
            if cols.shape[2] < ow:
                cols = jnp.pad(cols, ((0, 0), (0, 0),
                                      (0, ow - cols.shape[2]), (0, 0)))
            taps.append(cols)
        t = jnp.stack(taps, axis=-2)                         # (N, R, OW, k, C)
        t = t.reshape(N, t.shape[1], ow, k * C)
        t = t[:, :ph_need]
        t = jnp.pad(t, ((0, 0), (0, ph_need - t.shape[1]),
                        (0, owp - ow), (0, 0)))
        phases.append(t)
    return jnp.stack(phases, axis=1)                         # (N, s, PH, OWP, k*C)


def _build_im2col_lhs(xp, k, s, oh, ow, ohp, owp):
    """(N, 1, OHP, OWP, k*k*C): full im2col (only for tiny Cin, e.g. RGB)."""
    N, _, _, C = xp.shape
    taps = []
    for kh in range(k):
        for kw in range(k):
            t = xp[:, kh::s, kw::s, :][:, :oh, :ow, :]
            t = jnp.pad(t, ((0, 0), (0, oh - t.shape[1]),
                            (0, ow - t.shape[2]), (0, 0)))
            taps.append(t)
    t = jnp.stack(taps, axis=-2).reshape(N, oh, ow, k * k * C)
    t = jnp.pad(t, ((0, 0), (0, ohp - oh), (0, owp - ow), (0, 0)))
    return t[:, None]                                        # (N, 1, OHP, OWP, kkC)


def conv2d_pallas(x_nhwc, weight, bias, stride, pad=1, leaky_slope=None,
                  out_dtype=jnp.bfloat16, emit_stats=False):
    """Conv2d(kernel=4) as a Pallas MXU kernel (+ optional IN statistics)."""
    N, H, W, cin_act = x_nhwc.shape
    cout, cin_true, kh_, kw_ = weight.shape
    assert kh_ == kw_ and cin_true <= cin_act
    k, s = kh_, stride

    OH = (H + 2 * pad - k) // s + 1
    OW = (W + 2 * pad - k) // s + 1
    owp = _round_up(OW, 16)                      # bf16 sublane tile
    toh = min(max(1, 512 // owp), OH)            # ~512-row M tiles
    ohp = _round_up(OH, toh)
    tm = toh * owp

    full_im2col = cin_true <= 16                 # RGB first layer: K = 4*4*Cin

    xp = jnp.pad(x_nhwc, ((0, 0), (pad, pad), (pad, pad), (0, 0)))
    xp = xp.astype(jnp.bfloat16)

    if full_im2col:
        ph_count, ph_need = 1, ohp
        K = k * k * cin_act
        taps = ((0, 0),)
        lhs = _build_im2col_lhs(xp, k, s, OH, OW, ohp, owp)
    else:
        max_dh = (k - 1) // s
        ph_count, ph_need = s, ohp + max_dh
        K = k * cin_act
        taps = tuple((kh % s, kh // s) for kh in range(k))
        lhs = _build_phase_lhs(xp, k, s, ph_need, OW, owp)
    lhs = lhs.reshape(N * ph_count, ph_need, owp, K)

    # ---- lane-dense weights / bias (Cout padded to a multiple of 128) -----
    cop = _round_up(cout, 128)
    tco = 512 if cop % 512 == 0 else (256 if cop % 256 == 0 else 128)
    w = jnp.transpose(weight, (2, 3, 1, 0))      # (k, k, Cin_true, Cout)
    w = jnp.pad(w, ((0, 0), (0, 0), (0, cin_act - cin_true), (0, cop - cout)))
    w = w.reshape(len(taps), K, cop).astype(jnp.bfloat16)
    b = jnp.pad(bias, (0, cop - cout)).astype(jnp.float32).reshape(1, cop)

    # Large phase blocks only change with the outermost n axis -> single-buffer.
    lhs_spec_kwargs = {}
    if ph_count * ph_need * owp * K * 2 >= 4 * 1024 * 1024:
        lhs_spec_kwargs["pipeline_mode"] = pl.Buffered(1)
    lhs_spec = pl.BlockSpec((ph_count, ph_need, owp, K),
                            lambda n, co, m: (n, 0, 0, 0), **lhs_spec_kwargs)

    out_shape = [jax.ShapeDtypeStruct((N, ohp * owp, cop), out_dtype)]
    out_specs = [pl.BlockSpec((1, tm, tco), lambda n, co, m: (n, m, co))]
    if emit_stats:
        out_shape += [jax.ShapeDtypeStruct((N, 1, cop), jnp.float32)] * 2
        out_specs += [pl.BlockSpec((1, 1, tco), lambda n, co, m: (n, 0, co)),
                      pl.BlockSpec((1, 1, tco), lambda n, co, m: (n, 0, co))]
        dim_sem = ("parallel", "parallel", "arbitrary")   # stats accumulate over m
    else:
        dim_sem = ("parallel", "parallel", "parallel")

    grid = (N, cop // tco, ohp // toh)
    res = pl.pallas_call(
        functools.partial(_conv_kernel, taps=taps, toh=toh, owp=owp,
                          leaky_slope=leaky_slope, oh_valid=OH, ow_valid=OW,
                          emit_stats=emit_stats),
        out_shape=tuple(out_shape),
        grid=grid,
        in_specs=[lhs_spec,
                  pl.BlockSpec((len(taps), K, tco), lambda n, co, m: (0, 0, co)),
                  pl.BlockSpec((1, tco), lambda n, co, m: (0, co))],
        out_specs=tuple(out_specs),
        compiler_params=pltpu.CompilerParams(
            dimension_semantics=dim_sem,
            vmem_limit_bytes=_vmem_limit_bytes()),
    )(lhs, w, b)

    if emit_stats:
        out, sums, sqs = res
        stats = (sums, sqs)
    else:
        (out,) = res
        stats = None
    return out, stats, (OH, OW, ohp, owp, cout, cop)


# ----------------------------------------------------------------------------
# InstanceNorm2d (affine=False, eps=1e-5) + LeakyReLU(0.2): normalize pass only
# (sum / sum-of-squares come fused from the conv kernel epilogue).
# ----------------------------------------------------------------------------
def _in_norm_kernel(x_ref, sum_ref, sq_ref, o_ref, *, count, eps, slope):
    x = x_ref[0].astype(jnp.float32)                 # (THW, C)
    inv = 1.0 / count
    mean = sum_ref[0] * inv                          # (1, C)
    var = jnp.maximum(sq_ref[0] * inv - mean * mean, 0.0)
    y = (x - mean) * lax.rsqrt(var + eps)
    y = jnp.where(y >= 0, y, slope * y)
    o_ref[0] = y.astype(o_ref.dtype)


def instance_norm_lrelu(x_nhwc, sums, sqs, eps=1e-5, slope=0.2):
    N, H, W, C = x_nhwc.shape
    HW = H * W
    thw = _pick_tile(HW, 2048)
    x3 = x_nhwc.reshape(N, HW, C)
    out = pl.pallas_call(
        functools.partial(_in_norm_kernel, count=float(HW), eps=eps, slope=slope),
        out_shape=jax.ShapeDtypeStruct((N, HW, C), x_nhwc.dtype),
        grid=(N, HW // thw),
        in_specs=[pl.BlockSpec((1, thw, C), lambda n, t: (n, t, 0)),
                  pl.BlockSpec((1, 1, C), lambda n, t: (n, 0, 0)),
                  pl.BlockSpec((1, 1, C), lambda n, t: (n, 0, 0))],
        out_specs=pl.BlockSpec((1, thw, C), lambda n, t: (n, t, 0)),
        compiler_params=pltpu.CompilerParams(
            dimension_semantics=("parallel", "parallel"),
            vmem_limit_bytes=_vmem_limit_bytes()),
    )(x3, sums, sqs)
    return out.reshape(N, H, W, C)


# ----------------------------------------------------------------------------
# PatchGANDiscriminator parameters + forward
# ----------------------------------------------------------------------------
def init_params(key, input_nc=3, ndf=64, n_layers=3):
    specs = [(input_nc, ndf, 2, False, True)]        # (cin, cout, stride, norm, act)
    nf_mult = 1
    for n in range(1, n_layers):
        nf_prev, nf_mult = nf_mult, min(2 ** n, 8)
        specs.append((ndf * nf_prev, ndf * nf_mult, 2, True, True))
    nf_prev, nf_mult = nf_mult, min(2 ** n_layers, 8)
    specs.append((ndf * nf_prev, ndf * nf_mult, 1, True, True))
    specs.append((ndf * nf_mult, 1, 1, False, False))

    params = []
    for (cin, cout, stride, norm, act) in specs:
        key, k1, k2 = jax.random.split(key, 3)
        w = jax.random.normal(k1, (cout, cin, 4, 4), jnp.float32) * 0.05
        b = jax.random.normal(k2, (cout,), jnp.float32) * 0.01
        params.append(dict(w=w, b=b, stride=stride, norm=norm, act=act))
    return params


def patchgan_forward(x_nchw, params):
    # NCHW at the PyTorch boundary, NHWC inside the kernels.
    x = jnp.transpose(x_nchw, (0, 2, 3, 1))
    n_layers = len(params)
    for li, p in enumerate(params):
        is_last = li == n_layers - 1
        slope = 0.2 if (p["act"] and not p["norm"]) else None
        out_dtype = jnp.float32 if is_last else jnp.bfloat16
        y, stats, (OH, OW, ohp, owp, cout, cop) = conv2d_pallas(
            x, p["w"], p["b"], p["stride"], pad=1, leaky_slope=slope,
            out_dtype=out_dtype, emit_stats=p["norm"])
        y = y.reshape(y.shape[0], ohp, owp, cop)[:, :OH, :OW, :]
        if p["norm"]:
            y = instance_norm_lrelu(y, *stats)       # fused-stats IN + LeakyReLU
        x = y                                        # padded channels stay 0
        if is_last:
            x = x[..., :cout]                        # drop channel padding
    return jnp.transpose(x, (0, 3, 1, 2)).astype(jnp.float32)


# ----------------------------------------------------------------------------
# Plain-JAX f32 reference (for numerical verification)
# ----------------------------------------------------------------------------
def reference_forward(x_nchw, params):
    x = x_nchw
    for p in params:
        x = lax.conv_general_dilated(
            x, p["w"], (p["stride"], p["stride"]), ((1, 1), (1, 1)),
            dimension_numbers=("NCHW", "OIHW", "NCHW"),
            precision=lax.Precision.HIGHEST)
        x = x + p["b"][None, :, None, None]
        if p["norm"]:
            mean = jnp.mean(x, axis=(2, 3), keepdims=True)
            var = jnp.mean((x - mean) ** 2, axis=(2, 3), keepdims=True)
            x = (x - mean) * lax.rsqrt(var + 1e-5)
        if p["act"]:
            x = jnp.where(x >= 0, x, 0.2 * x)
    return x


if __name__ == "__main__":
    key = jax.random.PRNGKey(0)
    kx, kp = jax.random.split(key)

    # Small shapes: batch=2, input_nc=3, 32x32 spatial, ndf=8, n_layers=3
    N, C, H, W = 2, 3, 32, 32
    x = jax.random.normal(kx, (N, C, H, W), jnp.float32)
    params = init_params(kp, input_nc=C, ndf=8, n_layers=3)

    fwd = jax.jit(lambda inp: patchgan_forward(inp, params))
    out = jax.block_until_ready(fwd(x))

    ref = reference_forward(x, params)
    assert out.shape == ref.shape, (out.shape, ref.shape)
    max_ref = float(jnp.max(jnp.abs(ref)))
    err = float(jnp.max(jnp.abs(out - ref)))
    # bf16 MXU operands with f32 accumulation -> allow ~4% of output range
    assert err <= 4e-2 * max_ref + 1e-3, f"max abs error {err} (ref max {max_ref})"

    print("KERNEL_OK")
</pallas_src>

<mosaic_0001>
module attributes {stable_mosaic.version = 11 : i64} {
  func.func @_conv_kernel(%arg0: i32, %arg1: i32, %arg2: i32, %arg3: memref<1x16x16x48xbf16, #tpu.memory_space<vmem>>, %arg4: memref<1x48x128xbf16, #tpu.memory_space<vmem>>, %arg5: memref<1x128xf32, #tpu.memory_space<vmem>>, %arg6: memref<1x256x128xbf16, #tpu.memory_space<vmem>>) attributes {dimension_semantics = [#tpu.dimension_semantics<parallel>, #tpu.dimension_semantics<parallel>, #tpu.dimension_semantics<parallel>], iteration_bounds = array<i64: 2, 1, 1>, scalar_prefetch = 0 : i64, scratch_operands = 0 : i64, tpu.core_type = #tpu.core_type<tc>, window_params = [{transform_indices = @transform_0, window_bounds = array<i64: 1, 16, 16, 48>}, {transform_indices = @transform_1, window_bounds = array<i64: 1, 48, 128>}, {transform_indices = @transform_2, window_bounds = array<i64: 1, 128>}, {transform_indices = @transform_3, window_bounds = array<i64: 1, 256, 128>}]} {
    %c16_i32 = arith.constant 16 : i32
    %0 = arith.muli %arg2, %c16_i32 : i32
    %1 = tpu.assume_multiple %0, 16 : i32
    %c0_i32 = arith.constant 0 : i32
    %2 = arith.addi %1, %c0_i32 : i32
    %c0 = arith.constant 0 : index
    %3 = arith.index_cast %2 : i32 to index
    %c0_0 = arith.constant 0 : index
    %c0_1 = arith.constant 0 : index
    %4 = vector.load %arg3[%c0, %3, %c0_0, %c0_1] : memref<1x16x16x48xbf16, #tpu.memory_space<vmem>>, vector<1x16x16x48xbf16>
    %5 = vector.shape_cast %4 : vector<1x16x16x48xbf16> to vector<16x16x48xbf16>
    %6 = vector.shape_cast %5 : vector<16x16x48xbf16> to vector<256x48xbf16>
    %c0_2 = arith.constant 0 : index
    %c0_3 = arith.constant 0 : index
    %c0_4 = arith.constant 0 : index
    %7 = vector.load %arg4[%c0_2, %c0_3, %c0_4] : memref<1x48x128xbf16, #tpu.memory_space<vmem>>, vector<1x48x128xbf16>
    %8 = vector.shape_cast %7 : vector<1x48x128xbf16> to vector<48x128xbf16>
    %cst = arith.constant dense<0.000000e+00> : vector<256x128xf32>
    %9 = tpu.matmul %6, %8, %cst {dimension_numbers = #tpu.dot_dimension_numbers<[1], [0], [0], [1], [0, 0, 1, 1], [], []>} : vector<256x48xbf16>, vector<48x128xbf16>, vector<256x128xf32> -> vector<256x128xf32>
    %c0_5 = arith.constant 0 : index
    %c0_6 = arith.constant 0 : index
    %10 = vector.load %arg5[%c0_5, %c0_6] : memref<1x128xf32, #tpu.memory_space<vmem>>, vector<1x128xf32>
    %11 = vector.broadcast %10 : vector<1x128xf32> to vector<256x128xf32>
    %12 = arith.addf %9, %11 : vector<256x128xf32>
    %cst_7 = arith.constant 0.000000e+00 : f32
    %13 = vector.broadcast %cst_7 : f32 to vector<256x128xf32>
    %14 = arith.cmpf oge, %12, %13 : vector<256x128xf32>
    %cst_8 = arith.constant 2.000000e-01 : f32
    %15 = vector.broadcast %cst_8 : f32 to vector<256x128xf32>
    %16 = arith.mulf %15, %12 : vector<256x128xf32>
    %17 = arith.select %14, %12, %16 : vector<256x128xi1>, vector<256x128xf32>
    %18 = arith.truncf %17 : vector<256x128xf32> to vector<256x128xbf16>
    %c0_9 = arith.constant 0 : index
    %c0_10 = arith.constant 0 : index
    %c0_11 = arith.constant 0 : index
    %19 = vector.load %arg6[%c0_9, %c0_10, %c0_11] : memref<1x256x128xbf16, #tpu.memory_space<vmem>>, vector<1x256x128xbf16>
    %20 = vector.shape_cast %19 : vector<1x256x128xbf16> to vector<256x128xbf16>
    %21 = vector.shape_cast %18 : vector<256x128xbf16> to vector<1x256x128xbf16>
    tpu.vector_store %arg6[%c0_9, %c0_10, %c0_11], %21 {strides = array<i32>} : memref<1x256x128xbf16, #tpu.memory_space<vmem>>, vector<1x256x128xbf16>,
    return
  }
  func.func @transform_0(%arg0: i32, %arg1: i32, %arg2: i32) -> (i32, i32, i32, i32) {
    %c0_i32 = arith.constant 0 : i32
    %c0_i32_0 = arith.constant 0 : i32
    %c0_i32_1 = arith.constant 0 : i32
    %c0_i32_2 = arith.constant 0 : i32
    return %arg0, %c0_i32, %c0_i32_0, %c0_i32_1 : i32, i32, i32, i32
  }
  func.func @transform_1(%arg0: i32, %arg1: i32, %arg2: i32) -> (i32, i32, i32) {
    %c0_i32 = arith.constant 0 : i32
    %c0_i32_0 = arith.constant 0 : i32
    %c0_i32_1 = arith.constant 0 : i32
    return %c0_i32, %c0_i32_0, %arg1 : i32, i32, i32
  }
  func.func @transform_2(%arg0: i32, %arg1: i32, %arg2: i32) -> (i32, i32) {
    %c0_i32 = arith.constant 0 : i32
    %c0_i32_0 = arith.constant 0 : i32
    return %c0_i32, %arg1 : i32, i32
  }
  func.func @transform_3(%arg0: i32, %arg1: i32, %arg2: i32) -> (i32, i32, i32) {
    %c0_i32 = arith.constant 0 : i32
    return %arg0, %arg2, %arg1 : i32, i32, i32
  }
}

module attributes {stable_mosaic.version = 11 : i64} {
  func.func @_conv_kernel(%arg0: i32, %arg1: i32, %arg2: i32, %arg3: memref<1x8x16x2048xbf16, #tpu.memory_space<vmem>>, %arg4: memref<1x2048x128xbf16, #tpu.memory_space<vmem>>, %arg5: memref<1x128xf32, #tpu.memory_space<vmem>>, %arg6: memref<1x128x128xbf16, #tpu.memory_space<vmem>>, %arg7: memref<1x1x128xf32, #tpu.memory_space<vmem>>, %arg8: memref<1x1x128xf32, #tpu.memory_space<vmem>>) attributes {dimension_semantics = [#tpu.dimension_semantics<parallel>, #tpu.dimension_semantics<parallel>, #tpu.dimension_semantics<arbitrary>], iteration_bounds = array<i64: 2, 1, 1>, scalar_prefetch = 0 : i64, scratch_operands = 0 : i64, tpu.core_type = #tpu.core_type<tc>, window_params = [{transform_indices = @transform_0, window_bounds = array<i64: 1, 8, 16, 2048>}, {transform_indices = @transform_1, window_bounds = array<i64: 1, 2048, 128>}, {transform_indices = @transform_2, window_bounds = array<i64: 1, 128>}, {transform_indices = @transform_3, window_bounds = array<i64: 1, 128, 128>}, {transform_indices = @transform_4, window_bounds = array<i64: 1, 1, 128>}, {transform_indices = @transform_5, window_bounds = array<i64: 1, 1, 128>}]} {
    %c8_i32 = arith.constant 8 : i32
    %0 = arith.muli %arg2, %c8_i32 : i32
    %1 = tpu.assume_multiple %0, 8 : i32
    %c0_i32 = arith.constant 0 : i32
    %2 = arith.addi %1, %c0_i32 : i32
    %c0 = arith.constant 0 : index
    %3 = arith.index_cast %2 : i32 to index
    %c0_0 = arith.constant 0 : index
    %c0_1 = arith.constant 0 : index
    %4 = vector.load %arg3[%c0, %3, %c0_0, %c0_1] : memref<1x8x16x2048xbf16, #tpu.memory_space<vmem>>, vector<1x8x16x2048xbf16>
    %5 = vector.shape_cast %4 : vector<1x8x16x2048xbf16> to vector<8x16x2048xbf16>
    %6 = vector.shape_cast %5 : vector<8x16x2048xbf16> to vector<128x2048xbf16>
    %c0_2 = arith.constant 0 : index
    %c0_3 = arith.constant 0 : index
    %c0_4 = arith.constant 0 : index
    %7 = vector.load %arg4[%c0_2, %c0_3, %c0_4] : memref<1x2048x128xbf16, #tpu.memory_space<vmem>>, vector<1x2048x128xbf16>
    %8 = vector.shape_cast %7 : vector<1x2048x128xbf16> to vector<2048x128xbf16>
    %cst = arith.constant dense<0.000000e+00> : vector<128x128xf32>
    %9 = tpu.matmul %6, %8, %cst {dimension_numbers = #tpu.dot_dimension_numbers<[1], [0], [0], [1], [0, 0, 1, 1], [], []>} : vector<128x2048xbf16>, vector<2048x128xbf16>, vector<128x128xf32> -> vector<128x128xf32>
    %c0_5 = arith.constant 0 : index
    %c0_6 = arith.constant 0 : index
    %10 = vector.load %arg5[%c0_5, %c0_6] : memref<1x128xf32, #tpu.memory_space<vmem>>, vector<1x128xf32>
    %11 = vector.broadcast %10 : vector<1x128xf32> to vector<128x128xf32>
    %12 = arith.addf %9, %11 : vector<128x128xf32>
    %13 = arith.truncf %12 : vector<128x128xf32> to vector<128x128xbf16>
    %c0_7 = arith.constant 0 : index
    %c0_8 = arith.constant 0 : index
    %c0_9 = arith.constant 0 : index
    %14 = vector.load %arg6[%c0_7, %c0_8, %c0_9] : memref<1x128x128xbf16, #tpu.memory_space<vmem>>, vector<1x128x128xbf16>
    %15 = vector.shape_cast %14 : vector<1x128x128xbf16> to vector<128x128xbf16>
    %16 = vector.shape_cast %13 : vector<128x128xbf16> to vector<1x128x128xbf16>
    tpu.vector_store %arg6[%c0_7, %c0_8, %c0_9], %16 {strides = array<i32>} : memref<1x128x128xbf16, #tpu.memory_space<vmem>>, vector<1x128x128xbf16>,
    %17 = vector.shape_cast %12 : vector<128x128xf32> to vector<8x16x128xf32>
    %18 = tpu.iota {dimensions = array<i32: 0>} : vector<8x16x128xi32>
    %19 = vector.broadcast %1 : i32 to vector<8x16x128xi32>
    %20 = arith.addi %18, %19 : vector<8x16x128xi32>
    %21 = tpu.iota {dimensions = array<i32: 1>} : vector<8x16x128xi32>
    %c8_i32_10 = arith.constant 8 : i32
    %22 = vector.broadcast %c8_i32_10 : i32 to vector<8x16x128xi32>
    %23 = arith.cmpi slt, %20, %22 : vector<8x16x128xi32>
    %c8_i32_11 = arith.constant 8 : i32
    %24 = vector.broadcast %c8_i32_11 : i32 to vector<8x16x128xi32>
    %25 = arith.cmpi slt, %21, %24 : vector<8x16x128xi32>
    %26 = arith.andi %23, %25 : vector<8x16x128xi1>
    %cst_12 = arith.constant 0.000000e+00 : f32
    %27 = vector.broadcast %cst_12 : f32 to vector<8x16x128xf32>
    %28 = arith.select %26, %17, %27 : vector<8x16x128xi1>, vector<8x16x128xf32>
    %c0_i32_13 = arith.constant 0 : i32
    %29 = arith.cmpi eq, %arg2, %c0_i32_13 : i32
    %30 = arith.extui %29 : i1 to i32
    %c0_i32_14 = arith.constant 0 : i32
    %31 = arith.cmpi ne, %30, %c0_i32_14 : i32
    scf.if %31 {
      %cst_31 = arith.constant 0.000000e+00 : f32
      %45 = vector.broadcast %cst_31 : f32 to vector<1x1x128xf32>
      %c0_32 = arith.constant 0 : index
      %c0_33 = arith.constant 0 : index
      %c0_34 = arith.constant 0 : index
      %46 = vector.load %arg7[%c0_32, %c0_33, %c0_34] : memref<1x1x128xf32, #tpu.memory_space<vmem>>, vector<1x1x128xf32>
      tpu.vector_store %arg7[%c0_32, %c0_33, %c0_34], %45 {strides = array<i32>} : memref<1x1x128xf32, #tpu.memory_space<vmem>>, vector<1x1x128xf32>,
      %cst_35 = arith.constant 0.000000e+00 : f32
      %47 = vector.broadcast %cst_35 : f32 to vector<1x1x128xf32>
      %c0_36 = arith.constant 0 : index
      %c0_37 = arith.constant 0 : index
      %c0_38 = arith.constant 0 : index
      %48 = vector.load %arg8[%c0_36, %c0_37, %c0_38] : memref<1x1x128xf32, #tpu.memory_space<vmem>>, vector<1x1x128xf32>
      tpu.vector_store %arg8[%c0_36, %c0_37, %c0_38], %47 {strides = array<i32>} : memref<1x1x128xf32, #tpu.memory_space<vmem>>, vector<1x1x128xf32>,
    } else {
    }
    %cst_15 = arith.constant dense<0.000000e+00> : vector<16x128xf32>
    %32 = vector.multi_reduction <add>, %28, %cst_15 [0] : vector<8x16x128xf32> to vector<16x128xf32>
    %cst_16 = arith.constant dense<0.000000e+00> : vector<128xf32>
    %33 = vector.multi_reduction <add>, %32, %cst_16 [0] : vector<16x128xf32> to vector<128xf32>
    %34 = arith.mulf %28, %28 : vector<8x16x128xf32>
    %cst_17 = arith.constant dense<0.000000e+00> : vector<16x128xf32>
    %35 = vector.multi_reduction <add>, %34, %cst_17 [0] : vector<8x16x128xf32> to vector<16x128xf32>
    %cst_18 = arith.constant dense<0.000000e+00> : vector<128xf32>
    %36 = vector.multi_reduction <add>, %35, %cst_18 [0] : vector<16x128xf32> to vector<128xf32>
    %c0_19 = arith.constant 0 : index
    %c0_20 = arith.constant 0 : index
    %c0_21 = arith.constant 0 : index
    %37 = vector.load %arg7[%c0_19, %c0_20, %c0_21] : memref<1x1x128xf32, #tpu.memory_space<vmem>>, vector<1x1x128xf32>
    %38 = vector.shape_cast %33 : vector<128xf32> to vector<1x1x128xf32>
    %39 = arith.addf %37, %38 : vector<1x1x128xf32>
    %c0_22 = arith.constant 0 : index
    %c0_23 = arith.constant 0 : index
    %c0_24 = arith.constant 0 : index
    %40 = vector.load %arg7[%c0_22, %c0_23, %c0_24] : memref<1x1x128xf32, #tpu.memory_space<vmem>>, vector<1x1x128xf32>
    tpu.vector_store %arg7[%c0_22, %c0_23, %c0_24], %39 {strides = array<i32>} : memref<1x1x128xf32, #tpu.memory_space<vmem>>, vector<1x1x128xf32>,
    %c0_25 = arith.constant 0 : index
    %c0_26 = arith.constant 0 : index
    %c0_27 = arith.constant 0 : index
    %41 = vector.load %arg8[%c0_25, %c0_26, %c0_27] : memref<1x1x128xf32, #tpu.memory_space<vmem>>, vector<1x1x128xf32>
    %42 = vector.shape_cast %36 : vector<128xf32> to vector<1x1x128xf32>
    %43 = arith.addf %41, %42 : vector<1x1x128xf32>
    %c0_28 = arith.constant 0 : index
    %c0_29 = arith.constant 0 : index
    %c0_30 = arith.constant 0 : index
    %44 = vector.load %arg8[%c0_28, %c0_29, %c0_30] : memref<1x1x128xf32, #tpu.memory_space<vmem>>, vector<1x1x128xf32>
    tpu.vector_store %arg8[%c0_28, %c0_29, %c0_30], %43 {strides = array<i32>} : memref<1x1x128xf32, #tpu.memory_space<vmem>>, vector<1x1x128xf32>,
    return
  }
  func.func @transform_0(%arg0: i32, %arg1: i32, %arg2: i32) -> (i32, i32, i32, i32) {
    %c0_i32 = arith.constant 0 : i32
    %c0_i32_0 = arith.constant 0 : i32
    %c0_i32_1 = arith.constant 0 : i32
    %c0_i32_2 = arith.constant 0 : i32
    return %arg0, %c0_i32, %c0_i32_0, %c0_i32_1 : i32, i32, i32, i32
  }
  func.func @transform_1(%arg0: i32, %arg1: i32, %arg2: i32) -> (i32, i32, i32) {
    %c0_i32 = arith.constant 0 : i32
    %c0_i32_0 = arith.constant 0 : i32
    %c0_i32_1 = arith.constant 0 : i32
    return %c0_i32, %c0_i32_0, %arg1 : i32, i32, i32
  }
  func.func @transform_2(%arg0: i32, %arg1: i32, %arg2: i32) -> (i32, i32) {
    %c0_i32 = arith.constant 0 : i32
    %c0_i32_0 = arith.constant 0 : i32
    return %c0_i32, %arg1 : i32, i32
  }
  func.func @transform_3(%arg0: i32, %arg1: i32, %arg2: i32) -> (i32, i32, i32) {
    %c0_i32 = arith.constant 0 : i32
    return %arg0, %arg2, %arg1 : i32, i32, i32
  }
  func.func @transform_4(%arg0: i32, %arg1: i32, %arg2: i32) -> (i32, i32, i32) {
    %c0_i32 = arith.constant 0 : i32
    %c0_i32_0 = arith.constant 0 : i32
    return %arg0, %c0_i32, %arg1 : i32, i32, i32
  }
  func.func @transform_5(%arg0: i32, %arg1: i32, %arg2: i32) -> (i32, i32, i32) {
    %c0_i32 = arith.constant 0 : i32
    %c0_i32_0 = arith.constant 0 : i32
    return %arg0, %c0_i32, %arg1 : i32, i32, i32
  }
}

module attributes {stable_mosaic.version = 11 : i64} {
  func.func @_in_norm_kernel(%arg0: i32, %arg1: i32, %arg2: memref<1x64x128xbf16, #tpu.memory_space<vmem>>, %arg3: memref<1x1x128xf32, #tpu.memory_space<vmem>>, %arg4: memref<1x1x128xf32, #tpu.memory_space<vmem>>, %arg5: memref<1x64x128xbf16, #tpu.memory_space<vmem>>) attributes {dimension_semantics = [#tpu.dimension_semantics<parallel>, #tpu.dimension_semantics<parallel>], iteration_bounds = array<i64: 2, 1>, scalar_prefetch = 0 : i64, scratch_operands = 0 : i64, tpu.core_type = #tpu.core_type<tc>, window_params = [{transform_indices = @transform_0, window_bounds = array<i64: 1, 64, 128>}, {transform_indices = @transform_1, window_bounds = array<i64: 1, 1, 128>}, {transform_indices = @transform_2, window_bounds = array<i64: 1, 1, 128>}, {transform_indices = @transform_3, window_bounds = array<i64: 1, 64, 128>}]} {
    %c0 = arith.constant 0 : index
    %c0_0 = arith.constant 0 : index
    %c0_1 = arith.constant 0 : index
    %0 = vector.load %arg2[%c0, %c0_0, %c0_1] : memref<1x64x128xbf16, #tpu.memory_space<vmem>>, vector<1x64x128xbf16>
    %1 = vector.shape_cast %0 : vector<1x64x128xbf16> to vector<64x128xbf16>
    %2 = arith.extf %1 : vector<64x128xbf16> to vector<64x128xf32>
    %c0_2 = arith.constant 0 : index
    %c0_3 = arith.constant 0 : index
    %c0_4 = arith.constant 0 : index
    %3 = vector.load %arg3[%c0_2, %c0_3, %c0_4] : memref<1x1x128xf32, #tpu.memory_space<vmem>>, vector<1x1x128xf32>
    %4 = vector.shape_cast %3 : vector<1x1x128xf32> to vector<1x128xf32>
    %cst = arith.constant 1.562500e-02 : f32
    %5 = vector.broadcast %cst : f32 to vector<1x128xf32>
    %6 = arith.mulf %4, %5 : vector<1x128xf32>
    %c0_5 = arith.constant 0 : index
    %c0_6 = arith.constant 0 : index
    %c0_7 = arith.constant 0 : index
    %7 = vector.load %arg4[%c0_5, %c0_6, %c0_7] : memref<1x1x128xf32, #tpu.memory_space<vmem>>, vector<1x1x128xf32>
    %8 = vector.shape_cast %7 : vector<1x1x128xf32> to vector<1x128xf32>
    %cst_8 = arith.constant 1.562500e-02 : f32
    %9 = vector.broadcast %cst_8 : f32 to vector<1x128xf32>
    %10 = arith.mulf %8, %9 : vector<1x128xf32>
    %11 = arith.mulf %6, %6 : vector<1x128xf32>
    %12 = arith.subf %10, %11 : vector<1x128xf32>
    %cst_9 = arith.constant 0.000000e+00 : f32
    %13 = vector.broadcast %cst_9 : f32 to vector<1x128xf32>
    %14 = arith.maximumf %12, %13 : vector<1x128xf32>
    %15 = vector.broadcast %6 : vector<1x128xf32> to vector<64x128xf32>
    %16 = arith.subf %2, %15 : vector<64x128xf32>
    %cst_10 = arith.constant 9.99999974E-6 : f32
    %17 = vector.broadcast %cst_10 : f32 to vector<1x128xf32>
    %18 = arith.addf %14, %17 : vector<1x128xf32>
    %19 = math.rsqrt %18 : vector<1x128xf32>
    %20 = vector.broadcast %19 : vector<1x128xf32> to vector<64x128xf32>
    %21 = arith.mulf %16, %20 : vector<64x128xf32>
    %cst_11 = arith.constant 0.000000e+00 : f32
    %22 = vector.broadcast %cst_11 : f32 to vector<64x128xf32>
    %23 = arith.cmpf oge, %21, %22 : vector<64x128xf32>
    %cst_12 = arith.constant 2.000000e-01 : f32
    %24 = vector.broadcast %cst_12 : f32 to vector<64x128xf32>
    %25 = arith.mulf %24, %21 : vector<64x128xf32>
    %26 = arith.select %23, %21, %25 : vector<64x128xi1>, vector<64x128xf32>
    %27 = arith.truncf %26 : vector<64x128xf32> to vector<64x128xbf16>
    %c0_13 = arith.constant 0 : index
    %c0_14 = arith.constant 0 : index
    %c0_15 = arith.constant 0 : index
    %28 = vector.load %arg5[%c0_13, %c0_14, %c0_15] : memref<1x64x128xbf16, #tpu.memory_space<vmem>>, vector<1x64x128xbf16>
    %29 = vector.shape_cast %28 : vector<1x64x128xbf16> to vector<64x128xbf16>
    %30 = vector.shape_cast %27 : vector<64x128xbf16> to vector<1x64x128xbf16>
    tpu.vector_store %arg5[%c0_13, %c0_14, %c0_15], %30 {strides = array<i32>} : memref<1x64x128xbf16, #tpu.memory_space<vmem>>, vector<1x64x128xbf16>,
    return
  }
  func.func @transform_0(%arg0: i32, %arg1: i32) -> (i32, i32, i32) {
    %c0_i32 = arith.constant 0 : i32
    %c0_i32_0 = arith.constant 0 : i32
    return %arg0, %arg1, %c0_i32 : i32, i32, i32
  }
  func.func @transform_1(%arg0: i32, %arg1: i32) -> (i32, i32, i32) {
    %c0_i32 = arith.constant 0 : i32
    %c0_i32_0 = arith.constant 0 : i32
    %c0_i32_1 = arith.constant 0 : i32
    return %arg0, %c0_i32, %c0_i32_0 : i32, i32, i32
  }
  func.func @transform_2(%arg0: i32, %arg1: i32) -> (i32, i32, i32) {
    %c0_i32 = arith.constant 0 : i32
    %c0_i32_0 = arith.constant 0 : i32
    %c0_i32_1 = arith.constant 0 : i32
    return %arg0, %c0_i32, %c0_i32_0 : i32, i32, i32
  }
  func.func @transform_3(%arg0: i32, %arg1: i32) -> (i32, i32, i32) {
    %c0_i32 = arith.constant 0 : i32
    %c0_i32_0 = arith.constant 0 : i32
    return %arg0, %arg1, %c0_i32 : i32, i32, i32
  }
}

module attributes {stable_mosaic.version = 11 : i64} {
  func.func @_conv_kernel(%arg0: i32, %arg1: i32, %arg2: i32, %arg3: memref<1x4x16x2048xbf16, #tpu.memory_space<vmem>>, %arg4: memref<1x2048x128xbf16, #tpu.memory_space<vmem>>, %arg5: memref<1x128xf32, #tpu.memory_space<vmem>>, %arg6: memref<1x64x128xbf16, #tpu.memory_space<vmem>>, %arg7: memref<1x1x128xf32, #tpu.memory_space<vmem>>, %arg8: memref<1x1x128xf32, #tpu.memory_space<vmem>>) attributes {dimension_semantics = [#tpu.dimension_semantics<parallel>, #tpu.dimension_semantics<parallel>, #tpu.dimension_semantics<arbitrary>], iteration_bounds = array<i64: 2, 1, 1>, scalar_prefetch = 0 : i64, scratch_operands = 0 : i64, tpu.core_type = #tpu.core_type<tc>, window_params = [{transform_indices = @transform_0, window_bounds = array<i64: 1, 4, 16, 2048>}, {transform_indices = @transform_1, window_bounds = array<i64: 1, 2048, 128>}, {transform_indices = @transform_2, window_bounds = array<i64: 1, 128>}, {transform_indices = @transform_3, window_bounds = array<i64: 1, 64, 128>}, {transform_indices = @transform_4, window_bounds = array<i64: 1, 1, 128>}, {transform_indices = @transform_5, window_bounds = array<i64: 1, 1, 128>}]} {
    %c4_i32 = arith.constant 4 : i32
    %0 = arith.muli %arg2, %c4_i32 : i32
    %1 = tpu.assume_multiple %0, 4 : i32
    %c0_i32 = arith.constant 0 : i32
    %2 = arith.addi %1, %c0_i32 : i32
    %c0 = arith.constant 0 : index
    %3 = arith.index_cast %2 : i32 to index
    %c0_0 = arith.constant 0 : index
    %c0_1 = arith.constant 0 : index
    %4 = vector.load %arg3[%c0, %3, %c0_0, %c0_1] : memref<1x4x16x2048xbf16, #tpu.memory_space<vmem>>, vector<1x4x16x2048xbf16>
    %5 = vector.shape_cast %4 : vector<1x4x16x2048xbf16> to vector<4x16x2048xbf16>
    %6 = vector.shape_cast %5 : vector<4x16x2048xbf16> to vector<64x2048xbf16>
    %c0_2 = arith.constant 0 : index
    %c0_3 = arith.constant 0 : index
    %c0_4 = arith.constant 0 : index
    %7 = vector.load %arg4[%c0_2, %c0_3, %c0_4] : memref<1x2048x128xbf16, #tpu.memory_space<vmem>>, vector<1x2048x128xbf16>
    %8 = vector.shape_cast %7 : vector<1x2048x128xbf16> to vector<2048x128xbf16>
    %cst = arith.constant dense<0.000000e+00> : vector<64x128xf32>
    %9 = tpu.matmul %6, %8, %cst {dimension_numbers = #tpu.dot_dimension_numbers<[1], [0], [0], [1], [0, 0, 1, 1], [], []>} : vector<64x2048xbf16>, vector<2048x128xbf16>, vector<64x128xf32> -> vector<64x128xf32>
    %c0_5 = arith.constant 0 : index
    %c0_6 = arith.constant 0 : index
    %10 = vector.load %arg5[%c0_5, %c0_6] : memref<1x128xf32, #tpu.memory_space<vmem>>, vector<1x128xf32>
    %11 = vector.broadcast %10 : vector<1x128xf32> to vector<64x128xf32>
    %12 = arith.addf %9, %11 : vector<64x128xf32>
    %13 = arith.truncf %12 : vector<64x128xf32> to vector<64x128xbf16>
    %c0_7 = arith.constant 0 : index
    %c0_8 = arith.constant 0 : index
    %c0_9 = arith.constant 0 : index
    %14 = vector.load %arg6[%c0_7, %c0_8, %c0_9] : memref<1x64x128xbf16, #tpu.memory_space<vmem>>, vector<1x64x128xbf16>
    %15 = vector.shape_cast %14 : vector<1x64x128xbf16> to vector<64x128xbf16>
    %16 = vector.shape_cast %13 : vector<64x128xbf16> to vector<1x64x128xbf16>
    tpu.vector_store %arg6[%c0_7, %c0_8, %c0_9], %16 {strides = array<i32>} : memref<1x64x128xbf16, #tpu.memory_space<vmem>>, vector<1x64x128xbf16>,
    %17 = vector.shape_cast %12 : vector<64x128xf32> to vector<4x16x128xf32>
    %18 = tpu.iota {dimensions = array<i32: 0>} : vector<4x16x128xi32>
    %19 = vector.broadcast %1 : i32 to vector<4x16x128xi32>
    %20 = arith.addi %18, %19 : vector<4x16x128xi32>
    %21 = tpu.iota {dimensions = array<i32: 1>} : vector<4x16x128xi32>
    %c4_i32_10 = arith.constant 4 : i32
    %22 = vector.broadcast %c4_i32_10 : i32 to vector<4x16x128xi32>
    %23 = arith.cmpi slt, %20, %22 : vector<4x16x128xi32>
    %c4_i32_11 = arith.constant 4 : i32
    %24 = vector.broadcast %c4_i32_11 : i32 to vector<4x16x128xi32>
    %25 = arith.cmpi slt, %21, %24 : vector<4x16x128xi32>
    %26 = arith.andi %23, %25 : vector<4x16x128xi1>
    %cst_12 = arith.constant 0.000000e+00 : f32
    %27 = vector.broadcast %cst_12 : f32 to vector<4x16x128xf32>
    %28 = arith.select %26, %17, %27 : vector<4x16x128xi1>, vector<4x16x128xf32>
    %c0_i32_13 = arith.constant 0 : i32
    %29 = arith.cmpi eq, %arg2, %c0_i32_13 : i32
    %30 = arith.extui %29 : i1 to i32
    %c0_i32_14 = arith.constant 0 : i32
    %31 = arith.cmpi ne, %30, %c0_i32_14 : i32
    scf.if %31 {
      %cst_31 = arith.constant 0.000000e+00 : f32
      %45 = vector.broadcast %cst_31 : f32 to vector<1x1x128xf32>
      %c0_32 = arith.constant 0 : index
      %c0_33 = arith.constant 0 : index
      %c0_34 = arith.constant 0 : index
      %46 = vector.load %arg7[%c0_32, %c0_33, %c0_34] : memref<1x1x128xf32, #tpu.memory_space<vmem>>, vector<1x1x128xf32>
      tpu.vector_store %arg7[%c0_32, %c0_33, %c0_34], %45 {strides = array<i32>} : memref<1x1x128xf32, #tpu.memory_space<vmem>>, vector<1x1x128xf32>,
      %cst_35 = arith.constant 0.000000e+00 : f32
      %47 = vector.broadcast %cst_35 : f32 to vector<1x1x128xf32>
      %c0_36 = arith.constant 0 : index
      %c0_37 = arith.constant 0 : index
      %c0_38 = arith.constant 0 : index
      %48 = vector.load %arg8[%c0_36, %c0_37, %c0_38] : memref<1x1x128xf32, #tpu.memory_space<vmem>>, vector<1x1x128xf32>
      tpu.vector_store %arg8[%c0_36, %c0_37, %c0_38], %47 {strides = array<i32>} : memref<1x1x128xf32, #tpu.memory_space<vmem>>, vector<1x1x128xf32>,
    } else {
    }
    %cst_15 = arith.constant dense<0.000000e+00> : vector<16x128xf32>
    %32 = vector.multi_reduction <add>, %28, %cst_15 [0] : vector<4x16x128xf32> to vector<16x128xf32>
    %cst_16 = arith.constant dense<0.000000e+00> : vector<128xf32>
    %33 = vector.multi_reduction <add>, %32, %cst_16 [0] : vector<16x128xf32> to vector<128xf32>
    %34 = arith.mulf %28, %28 : vector<4x16x128xf32>
    %cst_17 = arith.constant dense<0.000000e+00> : vector<16x128xf32>
    %35 = vector.multi_reduction <add>, %34, %cst_17 [0] : vector<4x16x128xf32> to vector<16x128xf32>
    %cst_18 = arith.constant dense<0.000000e+00> : vector<128xf32>
    %36 = vector.multi_reduction <add>, %35, %cst_18 [0] : vector<16x128xf32> to vector<128xf32>
    %c0_19 = arith.constant 0 : index
    %c0_20 = arith.constant 0 : index
    %c0_21 = arith.constant 0 : index
    %37 = vector.load %arg7[%c0_19, %c0_20, %c0_21] : memref<1x1x128xf32, #tpu.memory_space<vmem>>, vector<1x1x128xf32>
    %38 = vector.shape_cast %33 : vector<128xf32> to vector<1x1x128xf32>
    %39 = arith.addf %37, %38 : vector<1x1x128xf32>
    %c0_22 = arith.constant 0 : index
    %c0_23 = arith.constant 0 : index
    %c0_24 = arith.constant 0 : index
    %40 = vector.load %arg7[%c0_22, %c0_23, %c0_24] : memref<1x1x128xf32, #tpu.memory_space<vmem>>, vector<1x1x128xf32>
    tpu.vector_store %arg7[%c0_22, %c0_23, %c0_24], %39 {strides = array<i32>} : memref<1x1x128xf32, #tpu.memory_space<vmem>>, vector<1x1x128xf32>,
    %c0_25 = arith.constant 0 : index
    %c0_26 = arith.constant 0 : index
    %c0_27 = arith.constant 0 : index
    %41 = vector.load %arg8[%c0_25, %c0_26, %c0_27] : memref<1x1x128xf32, #tpu.memory_space<vmem>>, vector<1x1x128xf32>
    %42 = vector.shape_cast %36 : vector<128xf32> to vector<1x1x128xf32>
    %43 = arith.addf %41, %42 : vector<1x1x128xf32>
    %c0_28 = arith.constant 0 : index
    %c0_29 = arith.constant 0 : index
    %c0_30 = arith.constant 0 : index
    %44 = vector.load %arg8[%c0_28, %c0_29, %c0_30] : memref<1x1x128xf32, #tpu.memory_space<vmem>>, vector<1x1x128xf32>
    tpu.vector_store %arg8[%c0_28, %c0_29, %c0_30], %43 {strides = array<i32>} : memref<1x1x128xf32, #tpu.memory_space<vmem>>, vector<1x1x128xf32>,
    return
  }
  func.func @transform_0(%arg0: i32, %arg1: i32, %arg2: i32) -> (i32, i32, i32, i32) {
    %c0_i32 = arith.constant 0 : i32
    %c0_i32_0 = arith.constant 0 : i32
    %c0_i32_1 = arith.constant 0 : i32
    %c0_i32_2 = arith.constant 0 : i32
    return %arg0, %c0_i32, %c0_i32_0, %c0_i32_1 : i32, i32, i32, i32
  }
  func.func @transform_1(%arg0: i32, %arg1: i32, %arg2: i32) -> (i32, i32, i32) {
    %c0_i32 = arith.constant 0 : i32
    %c0_i32_0 = arith.constant 0 : i32
    %c0_i32_1 = arith.constant 0 : i32
    return %c0_i32, %c0_i32_0, %arg1 : i32, i32, i32
  }
  func.func @transform_2(%arg0: i32, %arg1: i32, %arg2: i32) -> (i32, i32) {
    %c0_i32 = arith.constant 0 : i32
    %c0_i32_0 = arith.constant 0 : i32
    return %c0_i32, %arg1 : i32, i32
  }
  func.func @transform_3(%arg0: i32, %arg1: i32, %arg2: i32) -> (i32, i32, i32) {
    %c0_i32 = arith.constant 0 : i32
    return %arg0, %arg2, %arg1 : i32, i32, i32
  }
  func.func @transform_4(%arg0: i32, %arg1: i32, %arg2: i32) -> (i32, i32, i32) {
    %c0_i32 = arith.constant 0 : i32
    %c0_i32_0 = arith.constant 0 : i32
    return %arg0, %c0_i32, %arg1 : i32, i32, i32
  }
  func.func @transform_5(%arg0: i32, %arg1: i32, %arg2: i32) -> (i32, i32, i32) {
    %c0_i32 = arith.constant 0 : i32
    %c0_i32_0 = arith.constant 0 : i32
    return %arg0, %c0_i32, %arg1 : i32, i32, i32
  }
}

module attributes {stable_mosaic.version = 11 : i64} {
  func.func @_in_norm_kernel(%arg0: i32, %arg1: i32, %arg2: memref<1x16x128xbf16, #tpu.memory_space<vmem>>, %arg3: memref<1x1x128xf32, #tpu.memory_space<vmem>>, %arg4: memref<1x1x128xf32, #tpu.memory_space<vmem>>, %arg5: memref<1x16x128xbf16, #tpu.memory_space<vmem>>) attributes {dimension_semantics = [#tpu.dimension_semantics<parallel>, #tpu.dimension_semantics<parallel>], iteration_bounds = array<i64: 2, 1>, scalar_prefetch = 0 : i64, scratch_operands = 0 : i64, tpu.core_type = #tpu.core_type<tc>, window_params = [{transform_indices = @transform_0, window_bounds = array<i64: 1, 16, 128>}, {transform_indices = @transform_1, window_bounds = array<i64: 1, 1, 128>}, {transform_indices = @transform_2, window_bounds = array<i64: 1, 1, 128>}, {transform_indices = @transform_3, window_bounds = array<i64: 1, 16, 128>}]} {
    %c0 = arith.constant 0 : index
    %c0_0 = arith.constant 0 : index
    %c0_1 = arith.constant 0 : index
    %0 = vector.load %arg2[%c0, %c0_0, %c0_1] : memref<1x16x128xbf16, #tpu.memory_space<vmem>>, vector<1x16x128xbf16>
    %1 = vector.shape_cast %0 : vector<1x16x128xbf16> to vector<16x128xbf16>
    %2 = arith.extf %1 : vector<16x128xbf16> to vector<16x128xf32>
    %c0_2 = arith.constant 0 : index
    %c0_3 = arith.constant 0 : index
    %c0_4 = arith.constant 0 : index
    %3 = vector.load %arg3[%c0_2, %c0_3, %c0_4] : memref<1x1x128xf32, #tpu.memory_space<vmem>>, vector<1x1x128xf32>
    %4 = vector.shape_cast %3 : vector<1x1x128xf32> to vector<1x128xf32>
    %cst = arith.constant 6.250000e-02 : f32
    %5 = vector.broadcast %cst : f32 to vector<1x128xf32>
    %6 = arith.mulf %4, %5 : vector<1x128xf32>
    %c0_5 = arith.constant 0 : index
    %c0_6 = arith.constant 0 : index
    %c0_7 = arith.constant 0 : index
    %7 = vector.load %arg4[%c0_5, %c0_6, %c0_7] : memref<1x1x128xf32, #tpu.memory_space<vmem>>, vector<1x1x128xf32>
    %8 = vector.shape_cast %7 : vector<1x1x128xf32> to vector<1x128xf32>
    %cst_8 = arith.constant 6.250000e-02 : f32
    %9 = vector.broadcast %cst_8 : f32 to vector<1x128xf32>
    %10 = arith.mulf %8, %9 : vector<1x128xf32>
    %11 = arith.mulf %6, %6 : vector<1x128xf32>
    %12 = arith.subf %10, %11 : vector<1x128xf32>
    %cst_9 = arith.constant 0.000000e+00 : f32
    %13 = vector.broadcast %cst_9 : f32 to vector<1x128xf32>
    %14 = arith.maximumf %12, %13 : vector<1x128xf32>
    %15 = vector.broadcast %6 : vector<1x128xf32> to vector<16x128xf32>
    %16 = arith.subf %2, %15 : vector<16x128xf32>
    %cst_10 = arith.constant 9.99999974E-6 : f32
    %17 = vector.broadcast %cst_10 : f32 to vector<1x128xf32>
    %18 = arith.addf %14, %17 : vector<1x128xf32>
    %19 = math.rsqrt %18 : vector<1x128xf32>
    %20 = vector.broadcast %19 : vector<1x128xf32> to vector<16x128xf32>
    %21 = arith.mulf %16, %20 : vector<16x128xf32>
    %cst_11 = arith.constant 0.000000e+00 : f32
    %22 = vector.broadcast %cst_11 : f32 to vector<16x128xf32>
    %23 = arith.cmpf oge, %21, %22 : vector<16x128xf32>
    %cst_12 = arith.constant 2.000000e-01 : f32
    %24 = vector.broadcast %cst_12 : f32 to vector<16x128xf32>
    %25 = arith.mulf %24, %21 : vector<16x128xf32>
    %26 = arith.select %23, %21, %25 : vector<16x128xi1>, vector<16x128xf32>
    %27 = arith.truncf %26 : vector<16x128xf32> to vector<16x128xbf16>
    %c0_13 = arith.constant 0 : index
    %c0_14 = arith.constant 0 : index
    %c0_15 = arith.constant 0 : index
    %28 = vector.load %arg5[%c0_13, %c0_14, %c0_15] : memref<1x16x128xbf16, #tpu.memory_space<vmem>>, vector<1x16x128xbf16>
    %29 = vector.shape_cast %28 : vector<1x16x128xbf16> to vector<16x128xbf16>
    %30 = vector.shape_cast %27 : vector<16x128xbf16> to vector<1x16x128xbf16>
    tpu.vector_store %arg5[%c0_13, %c0_14, %c0_15], %30 {strides = array<i32>} : memref<1x16x128xbf16, #tpu.memory_space<vmem>>, vector<1x16x128xbf16>,
    return
  }
  func.func @transform_0(%arg0: i32, %arg1: i32) -> (i32, i32, i32) {
    %c0_i32 = arith.constant 0 : i32
    %c0_i32_0 = arith.constant 0 : i32
    return %arg0, %arg1, %c0_i32 : i32, i32, i32
  }
  func.func @transform_1(%arg0: i32, %arg1: i32) -> (i32, i32, i32) {
    %c0_i32 = arith.constant 0 : i32
    %c0_i32_0 = arith.constant 0 : i32
    %c0_i32_1 = arith.constant 0 : i32
    return %arg0, %c0_i32, %c0_i32_0 : i32, i32, i32
  }
  func.func @transform_2(%arg0: i32, %arg1: i32) -> (i32, i32, i32) {
    %c0_i32 = arith.constant 0 : i32
    %c0_i32_0 = arith.constant 0 : i32
    %c0_i32_1 = arith.constant 0 : i32
    return %arg0, %c0_i32, %c0_i32_0 : i32, i32, i32
  }
  func.func @transform_3(%arg0: i32, %arg1: i32) -> (i32, i32, i32) {
    %c0_i32 = arith.constant 0 : i32
    %c0_i32_0 = arith.constant 0 : i32
    return %arg0, %arg1, %c0_i32 : i32, i32, i32
  }
}

module attributes {stable_mosaic.version = 11 : i64} {
  func.func @_in_norm_kernel(%arg0: i32, %arg1: i32, %arg2: memref<1x9x128xbf16, #tpu.memory_space<vmem>>, %arg3: memref<1x1x128xf32, #tpu.memory_space<vmem>>, %arg4: memref<1x1x128xf32, #tpu.memory_space<vmem>>, %arg5: memref<1x9x128xbf16, #tpu.memory_space<vmem>>) attributes {dimension_semantics = [#tpu.dimension_semantics<parallel>, #tpu.dimension_semantics<parallel>], iteration_bounds = array<i64: 2, 1>, scalar_prefetch = 0 : i64, scratch_operands = 0 : i64, tpu.core_type = #tpu.core_type<tc>, window_params = [{transform_indices = @transform_0, window_bounds = array<i64: 1, 9, 128>}, {transform_indices = @transform_1, window_bounds = array<i64: 1, 1, 128>}, {transform_indices = @transform_2, window_bounds = array<i64: 1, 1, 128>}, {transform_indices = @transform_3, window_bounds = array<i64: 1, 9, 128>}]} {
    %c0 = arith.constant 0 : index
    %c0_0 = arith.constant 0 : index
    %c0_1 = arith.constant 0 : index
    %0 = vector.load %arg2[%c0, %c0_0, %c0_1] : memref<1x9x128xbf16, #tpu.memory_space<vmem>>, vector<1x9x128xbf16>
    %1 = vector.shape_cast %0 : vector<1x9x128xbf16> to vector<9x128xbf16>
    %2 = arith.extf %1 : vector<9x128xbf16> to vector<9x128xf32>
    %c0_2 = arith.constant 0 : index
    %c0_3 = arith.constant 0 : index
    %c0_4 = arith.constant 0 : index
    %3 = vector.load %arg3[%c0_2, %c0_3, %c0_4] : memref<1x1x128xf32, #tpu.memory_space<vmem>>, vector<1x1x128xf32>
    %4 = vector.shape_cast %3 : vector<1x1x128xf32> to vector<1x128xf32>
    %cst = arith.constant 0.111111112 : f32
    %5 = vector.broadcast %cst : f32 to vector<1x128xf32>
    %6 = arith.mulf %4, %5 : vector<1x128xf32>
    %c0_5 = arith.constant 0 : index
    %c0_6 = arith.constant 0 : index
    %c0_7 = arith.constant 0 : index
    %7 = vector.load %arg4[%c0_5, %c0_6, %c0_7] : memref<1x1x128xf32, #tpu.memory_space<vmem>>, vector<1x1x128xf32>
    %8 = vector.shape_cast %7 : vector<1x1x128xf32> to vector<1x128xf32>
    %cst_8 = arith.constant 0.111111112 : f32
    %9 = vector.broadcast %cst_8 : f32 to vector<1x128xf32>
    %10 = arith.mulf %8, %9 : vector<1x128xf32>
    %11 = arith.mulf %6, %6 : vector<1x128xf32>
    %12 = arith.subf %10, %11 : vector<1x128xf32>
    %cst_9 = arith.constant 0.000000e+00 : f32
    %13 = vector.broadcast %cst_9 : f32 to vector<1x128xf32>
    %14 = arith.maximumf %12, %13 : vector<1x128xf32>
    %15 = vector.broadcast %6 : vector<1x128xf32> to vector<9x128xf32>
    %16 = arith.subf %2, %15 : vector<9x128xf32>
    %cst_10 = arith.constant 9.99999974E-6 : f32
    %17 = vector.broadcast %cst_10 : f32 to vector<1x128xf32>
    %18 = arith.addf %14, %17 : vector<1x128xf32>
    %19 = math.rsqrt %18 : vector<1x128xf32>
    %20 = vector.broadcast %19 : vector<1x128xf32> to vector<9x128xf32>
    %21 = arith.mulf %16, %20 : vector<9x128xf32>
    %cst_11 = arith.constant 0.000000e+00 : f32
    %22 = vector.broadcast %cst_11 : f32 to vector<9x128xf32>
    %23 = arith.cmpf oge, %21, %22 : vector<9x128xf32>
    %cst_12 = arith.constant 2.000000e-01 : f32
    %24 = vector.broadcast %cst_12 : f32 to vector<9x128xf32>
    %25 = arith.mulf %24, %21 : vector<9x128xf32>
    %26 = arith.select %23, %21, %25 : vector<9x128xi1>, vector<9x128xf32>
    %27 = arith.truncf %26 : vector<9x128xf32> to vector<9x128xbf16>
    %c0_13 = arith.constant 0 : index
    %c0_14 = arith.constant 0 : index
    %c0_15 = arith.constant 0 : index
    %28 = vector.load %arg5[%c0_13, %c0_14, %c0_15] : memref<1x9x128xbf16, #tpu.memory_space<vmem>>, vector<1x9x128xbf16>
    %29 = vector.shape_cast %28 : vector<1x9x128xbf16> to vector<9x128xbf16>
    %30 = vector.shape_cast %27 : vector<9x128xbf16> to vector<1x9x128xbf16>
    tpu.vector_store %arg5[%c0_13, %c0_14, %c0_15], %30 {strides = array<i32>} : memref<1x9x128xbf16, #tpu.memory_space<vmem>>, vector<1x9x128xbf16>,
    return
  }
  func.func @transform_0(%arg0: i32, %arg1: i32) -> (i32, i32, i32) {
    %c0_i32 = arith.constant 0 : i32
    %c0_i32_0 = arith.constant 0 : i32
    return %arg0, %arg1, %c0_i32 : i32, i32, i32
  }
  func.func @transform_1(%arg0: i32, %arg1: i32) -> (i32, i32, i32) {
    %c0_i32 = arith.constant 0 : i32
    %c0_i32_0 = arith.constant 0 : i32
    %c0_i32_1 = arith.constant 0 : i32
    return %arg0, %c0_i32, %c0_i32_0 : i32, i32, i32
  }
  func.func @transform_2(%arg0: i32, %arg1: i32) -> (i32, i32, i32) {
    %c0_i32 = arith.constant 0 : i32
    %c0_i32_0 = arith.constant 0 : i32
    %c0_i32_1 = arith.constant 0 : i32
    return %arg0, %c0_i32, %c0_i32_0 : i32, i32, i32
  }
  func.func @transform_3(%arg0: i32, %arg1: i32) -> (i32, i32, i32) {
    %c0_i32 = arith.constant 0 : i32
    %c0_i32_0 = arith.constant 0 : i32
    return %arg0, %arg1, %c0_i32 : i32, i32, i32
  }
}

module attributes {stable_mosaic.version = 11 : i64} {
  func.func @_conv_kernel(%arg0: i32, %arg1: i32, %arg2: i32, %arg3: memref<1x6x16x512xbf16, #tpu.memory_space<vmem>>, %arg4: memref<4x512x128xbf16, #tpu.memory_space<vmem>>, %arg5: memref<1x128xf32, #tpu.memory_space<vmem>>, %arg6: memref<1x48x128xbf16, #tpu.memory_space<vmem>>, %arg7: memref<1x1x128xf32, #tpu.memory_space<vmem>>, %arg8: memref<1x1x128xf32, #tpu.memory_space<vmem>>) attributes {dimension_semantics = [#tpu.dimension_semantics<parallel>, #tpu.dimension_semantics<parallel>, #tpu.dimension_semantics<arbitrary>], iteration_bounds = array<i64: 2, 1, 1>, scalar_prefetch = 0 : i64, scratch_operands = 0 : i64, tpu.core_type = #tpu.core_type<tc>, window_params = [{transform_indices = @transform_0, window_bounds = array<i64: 1, 6, 16, 512>}, {transform_indices = @transform_1, window_bounds = array<i64: 4, 512, 128>}, {transform_indices = @transform_2, window_bounds = array<i64: 1, 128>}, {transform_indices = @transform_3, window_bounds = array<i64: 1, 48, 128>}, {transform_indices = @transform_4, window_bounds = array<i64: 1, 1, 128>}, {transform_indices = @transform_5, window_bounds = array<i64: 1, 1, 128>}]} {
    %c3_i32 = arith.constant 3 : i32
    %0 = arith.muli %arg2, %c3_i32 : i32
    %1 = tpu.assume_multiple %0, 3 : i32
    %c0_i32 = arith.constant 0 : i32
    %2 = arith.addi %1, %c0_i32 : i32
    %c0 = arith.constant 0 : index
    %3 = arith.index_cast %2 : i32 to index
    %c0_0 = arith.constant 0 : index
    %c0_1 = arith.constant 0 : index
    %4 = vector.load %arg3[%c0, %3, %c0_0, %c0_1] : memref<1x6x16x512xbf16, #tpu.memory_space<vmem>>, vector<1x3x16x512xbf16>
    %5 = vector.shape_cast %4 : vector<1x3x16x512xbf16> to vector<3x16x512xbf16>
    %6 = vector.shape_cast %5 : vector<3x16x512xbf16> to vector<48x512xbf16>
    %c0_2 = arith.constant 0 : index
    %c0_3 = arith.constant 0 : index
    %c0_4 = arith.constant 0 : index
    %7 = vector.load %arg4[%c0_2, %c0_3, %c0_4] : memref<4x512x128xbf16, #tpu.memory_space<vmem>>, vector<1x512x128xbf16>
    %8 = vector.shape_cast %7 : vector<1x512x128xbf16> to vector<512x128xbf16>
    %cst = arith.constant dense<0.000000e+00> : vector<48x128xf32>
    %9 = tpu.matmul %6, %8, %cst {dimension_numbers = #tpu.dot_dimension_numbers<[1], [0], [0], [1], [0, 0, 1, 1], [], []>} : vector<48x512xbf16>, vector<512x128xbf16>, vector<48x128xf32> -> vector<48x128xf32>
    %c1_i32 = arith.constant 1 : i32
    %10 = arith.addi %1, %c1_i32 : i32
    %c0_5 = arith.constant 0 : index
    %11 = arith.index_cast %10 : i32 to index
    %c0_6 = arith.constant 0 : index
    %c0_7 = arith.constant 0 : index
    %12 = vector.load %arg3[%c0_5, %11, %c0_6, %c0_7] : memref<1x6x16x512xbf16, #tpu.memory_space<vmem>>, vector<1x3x16x512xbf16>
    %13 = vector.shape_cast %12 : vector<1x3x16x512xbf16> to vector<3x16x512xbf16>
    %14 = vector.shape_cast %13 : vector<3x16x512xbf16> to vector<48x512xbf16>
    %c1 = arith.constant 1 : index
    %c0_8 = arith.constant 0 : index
    %c0_9 = arith.constant 0 : index
    %15 = vector.load %arg4[%c1, %c0_8, %c0_9] : memref<4x512x128xbf16, #tpu.memory_space<vmem>>, vector<1x512x128xbf16>
    %16 = vector.shape_cast %15 : vector<1x512x128xbf16> to vector<512x128xbf16>
    %cst_10 = arith.constant dense<0.000000e+00> : vector<48x128xf32>
    %17 = tpu.matmul %14, %16, %cst_10 {dimension_numbers = #tpu.dot_dimension_numbers<[1], [0], [0], [1], [0, 0, 1, 1], [], []>} : vector<48x512xbf16>, vector<512x128xbf16>, vector<48x128xf32> -> vector<48x128xf32>
    %18 = arith.addf %9, %17 : vector<48x128xf32>
    %c2_i32 = arith.constant 2 : i32
    %19 = arith.addi %1, %c2_i32 : i32
    %c0_11 = arith.constant 0 : index
    %20 = arith.index_cast %19 : i32 to index
    %c0_12 = arith.constant 0 : index
    %c0_13 = arith.constant 0 : index
    %21 = vector.load %arg3[%c0_11, %20, %c0_12, %c0_13] : memref<1x6x16x512xbf16, #tpu.memory_space<vmem>>, vector<1x3x16x512xbf16>
    %22 = vector.shape_cast %21 : vector<1x3x16x512xbf16> to vector<3x16x512xbf16>
    %23 = vector.shape_cast %22 : vector<3x16x512xbf16> to vector<48x512xbf16>
    %c2 = arith.constant 2 : index
    %c0_14 = arith.constant 0 : index
    %c0_15 = arith.constant 0 : index
    %24 = vector.load %arg4[%c2, %c0_14, %c0_15] : memref<4x512x128xbf16, #tpu.memory_space<vmem>>, vector<1x512x128xbf16>
    %25 = vector.shape_cast %24 : vector<1x512x128xbf16> to vector<512x128xbf16>
    %cst_16 = arith.constant dense<0.000000e+00> : vector<48x128xf32>
    %26 = tpu.matmul %23, %25, %cst_16 {dimension_numbers = #tpu.dot_dimension_numbers<[1], [0], [0], [1], [0, 0, 1, 1], [], []>} : vector<48x512xbf16>, vector<512x128xbf16>, vector<48x128xf32> -> vector<48x128xf32>
    %27 = arith.addf %18, %26 : vector<48x128xf32>
    %c3_i32_17 = arith.constant 3 : i32
    %28 = arith.addi %1, %c3_i32_17 : i32
    %c0_18 = arith.constant 0 : index
    %29 = arith.index_cast %28 : i32 to index
    %c0_19 = arith.constant 0 : index
    %c0_20 = arith.constant 0 : index
    %30 = vector.load %arg3[%c0_18, %29, %c0_19, %c0_20] : memref<1x6x16x512xbf16, #tpu.memory_space<vmem>>, vector<1x3x16x512xbf16>
    %31 = vector.shape_cast %30 : vector<1x3x16x512xbf16> to vector<3x16x512xbf16>
    %32 = vector.shape_cast %31 : vector<3x16x512xbf16> to vector<48x512xbf16>
    %c3 = arith.constant 3 : index
    %c0_21 = arith.constant 0 : index
    %c0_22 = arith.constant 0 : index
    %33 = vector.load %arg4[%c3, %c0_21, %c0_22] : memref<4x512x128xbf16, #tpu.memory_space<vmem>>, vector<1x512x128xbf16>
    %34 = vector.shape_cast %33 : vector<1x512x128xbf16> to vector<512x128xbf16>
    %cst_23 = arith.constant dense<0.000000e+00> : vector<48x128xf32>
    %35 = tpu.matmul %32, %34, %cst_23 {dimension_numbers = #tpu.dot_dimension_numbers<[1], [0], [0], [1], [0, 0, 1, 1], [], []>} : vector<48x512xbf16>, vector<512x128xbf16>, vector<48x128xf32> -> vector<48x128xf32>
    %36 = arith.addf %27, %35 : vector<48x128xf32>
    %c0_24 = arith.constant 0 : index
    %c0_25 = arith.constant 0 : index
    %37 = vector.load %arg5[%c0_24, %c0_25] : memref<1x128xf32, #tpu.memory_space<vmem>>, vector<1x128xf32>
    %38 = vector.broadcast %37 : vector<1x128xf32> to vector<48x128xf32>
    %39 = arith.addf %36, %38 : vector<48x128xf32>
    %40 = arith.truncf %39 : vector<48x128xf32> to vector<48x128xbf16>
    %c0_26 = arith.constant 0 : index
    %c0_27 = arith.constant 0 : index
    %c0_28 = arith.constant 0 : index
    %41 = vector.load %arg6[%c0_26, %c0_27, %c0_28] : memref<1x48x128xbf16, #tpu.memory_space<vmem>>, vector<1x48x128xbf16>
    %42 = vector.shape_cast %41 : vector<1x48x128xbf16> to vector<48x128xbf16>
    %43 = vector.shape_cast %40 : vector<48x128xbf16> to vector<1x48x128xbf16>
    tpu.vector_store %arg6[%c0_26, %c0_27, %c0_28], %43 {strides = array<i32>} : memref<1x48x128xbf16, #tpu.memory_space<vmem>>, vector<1x48x128xbf16>,
    %44 = vector.shape_cast %39 : vector<48x128xf32> to vector<3x16x128xf32>
    %45 = tpu.iota {dimensions = array<i32: 0>} : vector<3x16x128xi32>
    %46 = vector.broadcast %1 : i32 to vector<3x16x128xi32>
    %47 = arith.addi %45, %46 : vector<3x16x128xi32>
    %48 = tpu.iota {dimensions = array<i32: 1>} : vector<3x16x128xi32>
    %c3_i32_29 = arith.constant 3 : i32
    %49 = vector.broadcast %c3_i32_29 : i32 to vector<3x16x128xi32>
    %50 = arith.cmpi slt, %47, %49 : vector<3x16x128xi32>
    %c3_i32_30 = arith.constant 3 : i32
    %51 = vector.broadcast %c3_i32_30 : i32 to vector<3x16x128xi32>
    %52 = arith.cmpi slt, %48, %51 : vector<3x16x128xi32>
    %53 = arith.andi %50, %52 : vector<3x16x128xi1>
    %cst_31 = arith.constant 0.000000e+00 : f32
    %54 = vector.broadcast %cst_31 : f32 to vector<3x16x128xf32>
    %55 = arith.select %53, %44, %54 : vector<3x16x128xi1>, vector<3x16x128xf32>
    %c0_i32_32 = arith.constant 0 : i32
    %56 = arith.cmpi eq, %arg2, %c0_i32_32 : i32
    %57 = arith.extui %56 : i1 to i32
    %c0_i32_33 = arith.constant 0 : i32
    %58 = arith.cmpi ne, %57, %c0_i32_33 : i32
    scf.if %58 {
      %cst_50 = arith.constant 0.000000e+00 : f32
      %72 = vector.broadcast %cst_50 : f32 to vector<1x1x128xf32>
      %c0_51 = arith.constant 0 : index
      %c0_52 = arith.constant 0 : index
      %c0_53 = arith.constant 0 : index
      %73 = vector.load %arg7[%c0_51, %c0_52, %c0_53] : memref<1x1x128xf32, #tpu.memory_space<vmem>>, vector<1x1x128xf32>
      tpu.vector_store %arg7[%c0_51, %c0_52, %c0_53], %72 {strides = array<i32>} : memref<1x1x128xf32, #tpu.memory_space<vmem>>, vector<1x1x128xf32>,
      %cst_54 = arith.constant 0.000000e+00 : f32
      %74 = vector.broadcast %cst_54 : f32 to vector<1x1x128xf32>
      %c0_55 = arith.constant 0 : index
      %c0_56 = arith.constant 0 : index
      %c0_57 = arith.constant 0 : index
      %75 = vector.load %arg8[%c0_55, %c0_56, %c0_57] : memref<1x1x128xf32, #tpu.memory_space<vmem>>, vector<1x1x128xf32>
      tpu.vector_store %arg8[%c0_55, %c0_56, %c0_57], %74 {strides = array<i32>} : memref<1x1x128xf32, #tpu.memory_space<vmem>>, vector<1x1x128xf32>,
    } else {
    }
    %cst_34 = arith.constant dense<0.000000e+00> : vector<16x128xf32>
    %59 = vector.multi_reduction <add>, %55, %cst_34 [0] : vector<3x16x128xf32> to vector<16x128xf32>
    %cst_35 = arith.constant dense<0.000000e+00> : vector<128xf32>
    %60 = vector.multi_reduction <add>, %59, %cst_35 [0] : vector<16x128xf32> to vector<128xf32>
    %61 = arith.mulf %55, %55 : vector<3x16x128xf32>
    %cst_36 = arith.constant dense<0.000000e+00> : vector<16x128xf32>
    %62 = vector.multi_reduction <add>, %61, %cst_36 [0] : vector<3x16x128xf32> to vector<16x128xf32>
    %cst_37 = arith.constant dense<0.000000e+00> : vector<128xf32>
    %63 = vector.multi_reduction <add>, %62, %cst_37 [0] : vector<16x128xf32> to vector<128xf32>
    %c0_38 = arith.constant 0 : index
    %c0_39 = arith.constant 0 : index
    %c0_40 = arith.constant 0 : index
    %64 = vector.load %arg7[%c0_38, %c0_39, %c0_40] : memref<1x1x128xf32, #tpu.memory_space<vmem>>, vector<1x1x128xf32>
    %65 = vector.shape_cast %60 : vector<128xf32> to vector<1x1x128xf32>
    %66 = arith.addf %64, %65 : vector<1x1x128xf32>
    %c0_41 = arith.constant 0 : index
    %c0_42 = arith.constant 0 : index
    %c0_43 = arith.constant 0 : index
    %67 = vector.load %arg7[%c0_41, %c0_42, %c0_43] : memref<1x1x128xf32, #tpu.memory_space<vmem>>, vector<1x1x128xf32>
    tpu.vector_store %arg7[%c0_41, %c0_42, %c0_43], %66 {strides = array<i32>} : memref<1x1x128xf32, #tpu.memory_space<vmem>>, vector<1x1x128xf32>,
    %c0_44 = arith.constant 0 : index
    %c0_45 = arith.constant 0 : index
    %c0_46 = arith.constant 0 : index
    %68 = vector.load %arg8[%c0_44, %c0_45, %c0_46] : memref<1x1x128xf32, #tpu.memory_space<vmem>>, vector<1x1x128xf32>
    %69 = vector.shape_cast %63 : vector<128xf32> to vector<1x1x128xf32>
    %70 = arith.addf %68, %69 : vector<1x1x128xf32>
    %c0_47 = arith.constant 0 : index
    %c0_48 = arith.constant 0 : index
    %c0_49 = arith.constant 0 : index
    %71 = vector.load %arg8[%c0_47, %c0_48, %c0_49] : memref<1x1x128xf32, #tpu.memory_space<vmem>>, vector<1x1x128xf32>
    tpu.vector_store %arg8[%c0_47, %c0_48, %c0_49], %70 {strides = array<i32>} : memref<1x1x128xf32, #tpu.memory_space<vmem>>, vector<1x1x128xf32>,
    return
  }
  func.func @transform_0(%arg0: i32, %arg1: i32, %arg2: i32) -> (i32, i32, i32, i32) {
    %c0_i32 = arith.constant 0 : i32
    %c0_i32_0 = arith.constant 0 : i32
    %c0_i32_1 = arith.constant 0 : i32
    %c0_i32_2 = arith.constant 0 : i32
    return %arg0, %c0_i32, %c0_i32_0, %c0_i32_1 : i32, i32, i32, i32
  }
  func.func @transform_1(%arg0: i32, %arg1: i32, %arg2: i32) -> (i32, i32, i32) {
    %c0_i32 = arith.constant 0 : i32
    %c0_i32_0 = arith.constant 0 : i32
    %c0_i32_1 = arith.constant 0 : i32
    return %c0_i32, %c0_i32_0, %arg1 : i32, i32, i32
  }
  func.func @transform_2(%arg0: i32, %arg1: i32, %arg2: i32) -> (i32, i32) {
    %c0_i32 = arith.constant 0 : i32
    %c0_i32_0 = arith.constant 0 : i32
    return %c0_i32, %arg1 : i32, i32
  }
  func.func @transform_3(%arg0: i32, %arg1: i32, %arg2: i32) -> (i32, i32, i32) {
    %c0_i32 = arith.constant 0 : i32
    return %arg0, %arg2, %arg1 : i32, i32, i32
  }
  func.func @transform_4(%arg0: i32, %arg1: i32, %arg2: i32) -> (i32, i32, i32) {
    %c0_i32 = arith.constant 0 : i32
    %c0_i32_0 = arith.constant 0 : i32
    return %arg0, %c0_i32, %arg1 : i32, i32, i32
  }
  func.func @transform_5(%arg0: i32, %arg1: i32, %arg2: i32) -> (i32, i32, i32) {
    %c0_i32 = arith.constant 0 : i32
    %c0_i32_0 = arith.constant 0 : i32
    return %arg0, %c0_i32, %arg1 : i32, i32, i32
  }
}

module attributes {stable_mosaic.version = 11 : i64} {
  func.func @_conv_kernel(%arg0: i32, %arg1: i32, %arg2: i32, %arg3: memref<1x5x16x512xbf16, #tpu.memory_space<vmem>>, %arg4: memref<4x512x128xbf16, #tpu.memory_space<vmem>>, %arg5: memref<1x128xf32, #tpu.memory_space<vmem>>, %arg6: memref<1x32x128xf32, #tpu.memory_space<vmem>>) attributes {dimension_semantics = [#tpu.dimension_semantics<parallel>, #tpu.dimension_semantics<parallel>, #tpu.dimension_semantics<parallel>], iteration_bounds = array<i64: 2, 1, 1>, scalar_prefetch = 0 : i64, scratch_operands = 0 : i64, tpu.core_type = #tpu.core_type<tc>, window_params = [{transform_indices = @transform_0, window_bounds = array<i64: 1, 5, 16, 512>}, {transform_indices = @transform_1, window_bounds = array<i64: 4, 512, 128>}, {transform_indices = @transform_2, window_bounds = array<i64: 1, 128>}, {transform_indices = @transform_3, window_bounds = array<i64: 1, 32, 128>}]} {
    %c2_i32 = arith.constant 2 : i32
    %0 = arith.muli %arg2, %c2_i32 : i32
    %1 = tpu.assume_multiple %0, 2 : i32
    %c0_i32 = arith.constant 0 : i32
    %2 = arith.addi %1, %c0_i32 : i32
    %c0 = arith.constant 0 : index
    %3 = arith.index_cast %2 : i32 to index
    %c0_0 = arith.constant 0 : index
    %c0_1 = arith.constant 0 : index
    %4 = vector.load %arg3[%c0, %3, %c0_0, %c0_1] : memref<1x5x16x512xbf16, #tpu.memory_space<vmem>>, vector<1x2x16x512xbf16>
    %5 = vector.shape_cast %4 : vector<1x2x16x512xbf16> to vector<2x16x512xbf16>
    %6 = vector.shape_cast %5 : vector<2x16x512xbf16> to vector<32x512xbf16>
    %c0_2 = arith.constant 0 : index
    %c0_3 = arith.constant 0 : index
    %c0_4 = arith.constant 0 : index
    %7 = vector.load %arg4[%c0_2, %c0_3, %c0_4] : memref<4x512x128xbf16, #tpu.memory_space<vmem>>, vector<1x512x128xbf16>
    %8 = vector.shape_cast %7 : vector<1x512x128xbf16> to vector<512x128xbf16>
    %cst = arith.constant dense<0.000000e+00> : vector<32x128xf32>
    %9 = tpu.matmul %6, %8, %cst {dimension_numbers = #tpu.dot_dimension_numbers<[1], [0], [0], [1], [0, 0, 1, 1], [], []>} : vector<32x512xbf16>, vector<512x128xbf16>, vector<32x128xf32> -> vector<32x128xf32>
    %c1_i32 = arith.constant 1 : i32
    %10 = arith.addi %1, %c1_i32 : i32
    %c0_5 = arith.constant 0 : index
    %11 = arith.index_cast %10 : i32 to index
    %c0_6 = arith.constant 0 : index
    %c0_7 = arith.constant 0 : index
    %12 = vector.load %arg3[%c0_5, %11, %c0_6, %c0_7] : memref<1x5x16x512xbf16, #tpu.memory_space<vmem>>, vector<1x2x16x512xbf16>
    %13 = vector.shape_cast %12 : vector<1x2x16x512xbf16> to vector<2x16x512xbf16>
    %14 = vector.shape_cast %13 : vector<2x16x512xbf16> to vector<32x512xbf16>
    %c1 = arith.constant 1 : index
    %c0_8 = arith.constant 0 : index
    %c0_9 = arith.constant 0 : index
    %15 = vector.load %arg4[%c1, %c0_8, %c0_9] : memref<4x512x128xbf16, #tpu.memory_space<vmem>>, vector<1x512x128xbf16>
    %16 = vector.shape_cast %15 : vector<1x512x128xbf16> to vector<512x128xbf16>
    %cst_10 = arith.constant dense<0.000000e+00> : vector<32x128xf32>
    %17 = tpu.matmul %14, %16, %cst_10 {dimension_numbers = #tpu.dot_dimension_numbers<[1], [0], [0], [1], [0, 0, 1, 1], [], []>} : vector<32x512xbf16>, vector<512x128xbf16>, vector<32x128xf32> -> vector<32x128xf32>
    %18 = arith.addf %9, %17 : vector<32x128xf32>
    %c2_i32_11 = arith.constant 2 : i32
    %19 = arith.addi %1, %c2_i32_11 : i32
    %c0_12 = arith.constant 0 : index
    %20 = arith.index_cast %19 : i32 to index
    %c0_13 = arith.constant 0 : index
    %c0_14 = arith.constant 0 : index
    %21 = vector.load %arg3[%c0_12, %20, %c0_13, %c0_14] : memref<1x5x16x512xbf16, #tpu.memory_space<vmem>>, vector<1x2x16x512xbf16>
    %22 = vector.shape_cast %21 : vector<1x2x16x512xbf16> to vector<2x16x512xbf16>
    %23 = vector.shape_cast %22 : vector<2x16x512xbf16> to vector<32x512xbf16>
    %c2 = arith.constant 2 : index
    %c0_15 = arith.constant 0 : index
    %c0_16 = arith.constant 0 : index
    %24 = vector.load %arg4[%c2, %c0_15, %c0_16] : memref<4x512x128xbf16, #tpu.memory_space<vmem>>, vector<1x512x128xbf16>
    %25 = vector.shape_cast %24 : vector<1x512x128xbf16> to vector<512x128xbf16>
    %cst_17 = arith.constant dense<0.000000e+00> : vector<32x128xf32>
    %26 = tpu.matmul %23, %25, %cst_17 {dimension_numbers = #tpu.dot_dimension_numbers<[1], [0], [0], [1], [0, 0, 1, 1], [], []>} : vector<32x512xbf16>, vector<512x128xbf16>, vector<32x128xf32> -> vector<32x128xf32>
    %27 = arith.addf %18, %26 : vector<32x128xf32>
    %c3_i32 = arith.constant 3 : i32
    %28 = arith.addi %1, %c3_i32 : i32
    %c0_18 = arith.constant 0 : index
    %29 = arith.index_cast %28 : i32 to index
    %c0_19 = arith.constant 0 : index
    %c0_20 = arith.constant 0 : index
    %30 = vector.load %arg3[%c0_18, %29, %c0_19, %c0_20] : memref<1x5x16x512xbf16, #tpu.memory_space<vmem>>, vector<1x2x16x512xbf16>
    %31 = vector.shape_cast %30 : vector<1x2x16x512xbf16> to vector<2x16x512xbf16>
    %32 = vector.shape_cast %31 : vector<2x16x512xbf16> to vector<32x512xbf16>
    %c3 = arith.constant 3 : index
    %c0_21 = arith.constant 0 : index
    %c0_22 = arith.constant 0 : index
    %33 = vector.load %arg4[%c3, %c0_21, %c0_22] : memref<4x512x128xbf16, #tpu.memory_space<vmem>>, vector<1x512x128xbf16>
    %34 = vector.shape_cast %33 : vector<1x512x128xbf16> to vector<512x128xbf16>
    %cst_23 = arith.constant dense<0.000000e+00> : vector<32x128xf32>
    %35 = tpu.matmul %32, %34, %cst_23 {dimension_numbers = #tpu.dot_dimension_numbers<[1], [0], [0], [1], [0, 0, 1, 1], [], []>} : vector<32x512xbf16>, vector<512x128xbf16>, vector<32x128xf32> -> vector<32x128xf32>
    %36 = arith.addf %27, %35 : vector<32x128xf32>
    %c0_24 = arith.constant 0 : index
    %c0_25 = arith.constant 0 : index
    %37 = vector.load %arg5[%c0_24, %c0_25] : memref<1x128xf32, #tpu.memory_space<vmem>>, vector<1x128xf32>
    %38 = vector.broadcast %37 : vector<1x128xf32> to vector<32x128xf32>
    %39 = arith.addf %36, %38 : vector<32x128xf32>
    %c0_26 = arith.constant 0 : index
    %c0_27 = arith.constant 0 : index
    %c0_28 = arith.constant 0 : index
    %40 = vector.load %arg6[%c0_26, %c0_27, %c0_28] : memref<1x32x128xf32, #tpu.memory_space<vmem>>, vector<1x32x128xf32>
    %41 = vector.shape_cast %40 : vector<1x32x128xf32> to vector<32x128xf32>
    %42 = vector.shape_cast %39 : vector<32x128xf32> to vector<1x32x128xf32>
    tpu.vector_store %arg6[%c0_26, %c0_27, %c0_28], %42 {strides = array<i32>} : memref<1x32x128xf32, #tpu.memory_space<vmem>>, vector<1x32x128xf32>,
    return
  }
  func.func @transform_0(%arg0: i32, %arg1: i32, %arg2: i32) -> (i32, i32, i32, i32) {
    %c0_i32 = arith.constant 0 : i32
    %c0_i32_0 = arith.constant 0 : i32
    %c0_i32_1 = arith.constant 0 : i32
    %c0_i32_2 = arith.constant 0 : i32
    return %arg0, %c0_i32, %c0_i32_0, %c0_i32_1 : i32, i32, i32, i32
  }
  func.func @transform_1(%arg0: i32, %arg1: i32, %arg2: i32) -> (i32, i32, i32) {
    %c0_i32 = arith.constant 0 : i32
    %c0_i32_0 = arith.constant 0 : i32
    %c0_i32_1 = arith.constant 0 : i32
    return %c0_i32, %c0_i32_0, %arg1 : i32, i32, i32
  }
  func.func @transform_2(%arg0: i32, %arg1: i32, %arg2: i32) -> (i32, i32) {
    %c0_i32 = arith.constant 0 : i32
    %c0_i32_0 = arith.constant 0 : i32
    return %c0_i32, %arg1 : i32, i32
  }
  func.func @transform_3(%arg0: i32, %arg1: i32, %arg2: i32) -> (i32, i32, i32) {
    %c0_i32 = arith.constant 0 : i32
    return %arg0, %arg2, %arg1 : i32, i32, i32
  }
}

</mosaic_0001>

<llo_original>
// kernel: _lambda_.8
$region0: #{_lambda_.8}
  #allocation0 [shape = 'u32[]', space=smem, size = 0x4, offset = 0x4, fixed_abs, tag = 'smem constant byte address 0x4 - core index']
  #allocation1 [shape = 'u32[144,128]{1,0:T(1,128)}', space=vmem, size = 0x12000, scoped, tag = 'internal scratch']
  %s0 = inlined_call_operand.vmem [shape: bf16[2,16,16,48], index: 0, kind: input, shape index: {}]
  %s1 = inlined_call_operand.vmem [shape: bf16[1,48,128], index: 1, kind: input, shape index: {}]
  %s2 = inlined_call_operand.vmem [shape: f32[1,128], index: 2, kind: input, shape index: {}]
  %s3 = inlined_call_operand.vmem [shape: bf16[2,256,128], index: 3, kind: output, shape index: {}]
  %s4 = sld [smem:[#allocation0]]
  $region45: #{_lambda_.8} parent=0
    _
  %s6 = ssub.s32 1, %s4
  %s7 = scalar_select 0, %s6, %s4
  loop: start=0, step=1, limit=4
  $region2: #{_lambda_.8} parent=0 // loop_pre_header
    _
  $region3: #{_lambda_.8} parent=0 // loop_header
    %s9 = sphi 0, %s13
    %p10 = scmp.ge.s32.totalorder %s9, 4
    %s16 = sphi 0, %s35
    %s17 = sphi 0, %s31
    %s18 = sphi 0, %s27
    %s19 = sphi 0, %s16
    %s20 = sphi 0, %s17
    %s21 = sphi 0, %s18
    %s22 = sphi 0, %s19
    %s23 = sphi 0, %s20
    %s24 = sphi 0, %s21
    %s38 = sphi 0, %s40
    %s41 = sphi 0, %s38
    %s42 = sphi 0, %s41
    %s58 = sphi 0, %s42
    %s64 = sphi 0, %s66
    %s67 = sphi 0, %s64
    %s68 = sphi 0, %s67
    %s84 = sphi 0, %s68
    %s90 = sphi 0, %s92
    %s93 = sphi 0, %s90
    %s94 = sphi 0, %s93
    %s110 = sphi 0, %s94
    %s120 = sphi 0, %s122
    %s123 = sphi 0, %s120
    %s124 = sphi 0, %s123
    %s140 = sphi 0, %s124
  $region4: #{_lambda_.8} parent=0 // loop_header_branch
    %12 = sbr.rel (%p10) target = $region8
  $region5: #{_lambda_.8} parent=0 // loop_body
    %s14 = ssub.s32 %s9, 1
    %s15 = ssub.s32 %s9, 2
    %s25 = sadd.s32 1, %s18
    %p26 = scmp.ge.s32.totalorder %s25, 1
    %s27 = scalar_select %p26, 0, %s25
    %s28 = sadd.s32 1, %s17
    %s29 = scalar_select %p26, %s28, %s17
    %p30 = scmp.ge.s32.totalorder %s29, 1
    %s31 = scalar_select %p30, 0, %s29
    %s32 = sadd.s32 1, %s16
    %s33 = scalar_select %p30, %s32, %s16
    %p34 = scmp.ge.s32.totalorder %s33, 2
    %s35 = scalar_select %p34, 0, %s33
    %s36 = ssub.s32 %s16, %s35
    %p37 = scmp.eq.s32.totalorder %s36, 0
    %s39 = sadd.s32 %s38, 1
    %s40 = scalar_select %p37, %s38, %s39
    %p43 = pneg %p37
    %p44 = scmp.eq.s32.totalorder %s9, 1
    %p45 = por %p43, %p44
    %p46 = scmp.ne.s32.totalorder %s38, %s41
    %p47 = scmp.eq.s32.totalorder %s9, 0
    %p48 = por %p46, %p47
    %p49 = scmp.ne.s32.totalorder %s38, %s41
    %p50 = scmp.eq.s32.totalorder %s14, 1
    %p51 = por %p49, %p50
    %p52 = scmp.ne.s32.totalorder %s41, %s42
    %p53 = scmp.eq.s32.totalorder %s14, 0
    %p54 = por %p52, %p53
    %p55 = scmp.ne.s32.totalorder %s41, %s42
    %p56 = scmp.eq.s32.totalorder %s15, 1
    %p57 = por %p55, %p56
    %p59 = scmp.ne.s32.totalorder %s42, %s58
    %p60 = scmp.eq.s32.totalorder %s15, 0
    %p61 = por %p59, %p60
    %s62 = ssub.s32 %s17, %s31
    %p63 = scmp.eq.s32.totalorder %s62, 0
    %s65 = sadd.s32 %s64, 1
    %s66 = scalar_select %p63, %s64, %s65
    %p69 = pneg %p63
    %p70 = scmp.eq.s32.totalorder %s9, 1
    %p71 = por %p69, %p70
    %p72 = scmp.ne.s32.totalorder %s64, %s67
    %p73 = scmp.eq.s32.totalorder %s9, 0
    %p74 = por %p72, %p73
    %p75 = scmp.ne.s32.totalorder %s64, %s67
    %p76 = scmp.eq.s32.totalorder %s14, 1
    %p77 = por %p75, %p76
    %p78 = scmp.ne.s32.totalorder %s67, %s68
    %p79 = scmp.eq.s32.totalorder %s14, 0
    %p80 = por %p78, %p79
    %p81 = scmp.ne.s32.totalorder %s67, %s68
    %p82 = scmp.eq.s32.totalorder %s15, 1
    %p83 = por %p81, %p82
    %p85 = scmp.ne.s32.totalorder %s68, %s84
    %p86 = scmp.eq.s32.totalorder %s15, 0
    %p87 = por %p85, %p86
    %s88 = ssub.s32 %s17, %s31
    %p89 = scmp.eq.s32.totalorder %s88, 0
    %s91 = sadd.s32 %s90, 1
    %s92 = scalar_select %p89, %s90, %s91
    %p95 = pneg %p89
    %p96 = scmp.eq.s32.totalorder %s9, 1
    %p97 = por %p95, %p96
    %p98 = scmp.ne.s32.totalorder %s90, %s93
    %p99 = scmp.eq.s32.totalorder %s9, 0
    %p100 = por %p98, %p99
    %p101 = scmp.ne.s32.totalorder %s90, %s93
    %p102 = scmp.eq.s32.totalorder %s14, 1
    %p103 = por %p101, %p102
    %p104 = scmp.ne.s32.totalorder %s93, %s94
    %p105 = scmp.eq.s32.totalorder %s14, 0
    %p106 = por %p104, %p105
    %p107 = scmp.ne.s32.totalorder %s93, %s94
    %p108 = scmp.eq.s32.totalorder %s15, 1
    %p109 = por %p107, %p108
    %p111 = scmp.ne.s32.totalorder %s94, %s110
    %p112 = scmp.eq.s32.totalorder %s15, 0
    %p113 = por %p111, %p112
    %s114 = ssub.s32 %s16, %s35
    %s115 = ssub.s32 %s18, %s27
    %s116 = sor.u32 %s114, %s115
    %s117 = ssub.s32 %s17, %s31
    %s118 = sor.u32 %s116, %s117
    %p119 = scmp.eq.s32.totalorder %s118, 0
    %s121 = sadd.s32 %s120, 1
    %s122 = scalar_select %p119, %s120, %s121
    %p125 = pneg %p119
    %p126 = scmp.eq.s32.totalorder %s9, 1
    %p127 = por %p125, %p126
    %p128 = scmp.ne.s32.totalorder %s120, %s123
    %p129 = scmp.eq.s32.totalorder %s9, 0
    %p130 = por %p128, %p129
    %p131 = scmp.ne.s32.totalorder %s120, %s123
    %p132 = scmp.eq.s32.totalorder %s14, 1
    %p133 = por %p131, %p132
    %p134 = scmp.ne.s32.totalorder %s123, %s124
    %p135 = scmp.eq.s32.totalorder %s14, 0
    %p136 = por %p134, %p135
    %p137 = scmp.ne.s32.totalorder %s123, %s124
    %p138 = scmp.eq.s32.totalorder %s15, 1
    %p139 = por %p137, %p138
    %p141 = scmp.ne.s32.totalorder %s124, %s140
    %p142 = scmp.eq.s32.totalorder %s15, 0
    %p143 = por %p141, %p142
    %p144 = scmp.le.s32.totalorder 1, %s9
    %p145 = scmp.lt.s32.totalorder %s9, 3
    %p146 = pnand %p144, %p145
    %p147 = pneg %p146
    // Predicated region
    $region9: #{_lambda_.8} parent=5 // pred_check
      _
    $region10: #{_lambda_.8} parent=5 // pred_check_branch
      %149 = sbr.rel (%p146) target = $region12
    $region11: #{_lambda_.8} parent=5 // pred_region
      %s150 = ssub.s32 %s9, 1
      // Predicated region
      $region13: #{_lambda_.8} parent=11 // pred_check
        %p151 = pneg %p80
      $region14: #{_lambda_.8} parent=11 // pred_check_branch
        %153 = sbr.rel (%p151) target = $region16
      $region15: #{_lambda_.8} parent=11 // pred_region
        %p154 = scmp.lt.s32.totalorder %s20, 0
        %s155 = scalar_select %p154, %s20, 0
        %s156 = smul.addr %s155, 4
        %s157 = scalar_lea.vmem %s1, %s156
      $region16: #{_lambda_.8} parent=11 // pred_fallthru
        _
      // Predicated region
      $region17: #{_lambda_.8} parent=11 // pred_check
        %p158 = pneg %p106
      $region18: #{_lambda_.8} parent=11 // pred_check_branch
        %160 = sbr.rel (%p158) target = $region20
      $region19: #{_lambda_.8} parent=11 // pred_region
        %p161 = scmp.lt.s32.totalorder %s20, 0
        %s162 = scalar_select %p161, %s20, 0
        %s163 = scalar_lea.vmem %s2, %s162
      $region20: #{_lambda_.8} parent=11 // pred_fallthru
        _
    $region12: #{_lambda_.8} parent=5 // pred_fallthru
      _
    %p164 = scmp.lt.s32.totalorder %s9, 2
    // Predicated region
    $region21: #{_lambda_.8} parent=5 // pred_check
      %p165 = pneg %p164
    $region22: #{_lambda_.8} parent=5 // pred_check_branch
      %167 = sbr.rel (%p165) target = $region24
    $region23: #{_lambda_.8} parent=5 // pred_region
      // Predicated region
      $region25: #{_lambda_.8} parent=23 // pred_check
        %p168 = pneg %p48
      $region26: #{_lambda_.8} parent=23 // pred_check_branch
        %170 = sbr.rel (%p168) target = $region28
      $region27: #{_lambda_.8} parent=23 // pred_region
        %p171 = scmp.lt.s32.totalorder %s16, 1
        %s172 = scalar_select %p171, %s16, 1
        %s173 = smul.addr %s172, 32
        %s174 = smul.addr %s173, 4
        %s175 = scalar_lea.vmem %s0, %s174
      $region28: #{_lambda_.8} parent=23 // pred_fallthru
        _
    $region24: #{_lambda_.8} parent=5 // pred_fallthru
      _
    %p176 = scmp.le.s32.totalorder 1, %s9
    %p177 = scmp.lt.s32.totalorder %s9, 3
    %p178 = pnand %p176, %p177
    %p179 = pneg %p178
    // Predicated region
    $region29: #{_lambda_.8} parent=5 // pred_check
      _
    $region30: #{_lambda_.8} parent=5 // pred_check_branch
      %181 = sbr.rel (%p178) target = $region32
    $region31: #{_lambda_.8} parent=5 // pred_region
      %s182 = ssub.s32 %s9, 1
      %p183 = scmp.lt.s32.totalorder %s19, 1
      %s184 = scalar_select %p183, %s19, 1
      %s185 = smul.addr %s184, 32
      %s186 = smul.addr %s185, 4
      %s187 = scalar_lea.vmem %s0, %s186
      %p188 = pneg %p54
      %p189 = pneg %p51
      %p190 = scmp.lt.s32.totalorder %s20, 0
      %s191 = scalar_select %p190, %s20, 0
      %s192 = smul.addr %s191, 4
      %s193 = scalar_lea.vmem %s1, %s192
      %p194 = pneg %p80
      %p195 = pneg %p77
      %p196 = scmp.lt.s32.totalorder %s20, 0
      %s197 = scalar_select %p196, %s20, 0
      %s198 = scalar_lea.vmem %s2, %s197
      %p199 = pneg %p106
      %p200 = pneg %p103
      %p201 = pneg %p136
      %p202 = pneg %p133
      %s203 = smul.u32 32, %s21
      %p204 = scmp.lt.s32.totalorder %s19, 1
      %s205 = scalar_select %p204, %s19, 1
      %p206 = scmp.lt.s32.totalorder %s203, 31
      %s207 = scalar_select %p206, %s203, 31
      %p208 = scmp.lt.s32.totalorder %s20, 0
      %s209 = scalar_select %p208, %s20, 0
      %s210 = sadd.s32 %s209, %s207
      %s211 = smul.addr %s205, 32
      %s212 = sadd.s32 %s210, %s211
      %s213 = smul.addr %s212, 4
      %s214 = scalar_lea.vmem %s3, %s213
      %p215 = scmp.lt.s32.totalorder %s19, 1
      %s216 = scalar_select %p215, %s19, 1
      %s217 = smul.addr %s216, 32
      %s218 = smul.addr %s217, 4
      %s219 = scalar_lea.vmem %s0, %s218
      %p220 = scmp.lt.s32.totalorder %s20, 0
      %s221 = scalar_select %p220, %s20, 0
      %s222 = smul.addr %s221, 4
      %s223 = scalar_lea.vmem %s1, %s222
      %p224 = scmp.lt.s32.totalorder %s20, 0
      %s225 = scalar_select %p224, %s20, 0
      %s226 = scalar_lea.vmem %s2, %s225
      %s227 = smul.u32 32, %s21
      %p228 = scmp.lt.s32.totalorder %s19, 1
      %s229 = scalar_select %p228, %s19, 1
      %p230 = scmp.lt.s32.totalorder %s227, 31
      %s231 = scalar_select %p230, %s227, 31
      %p232 = scmp.lt.s32.totalorder %s20, 0
      %s233 = scalar_select %p232, %s20, 0
      %s234 = sadd.s32 %s233, %s231
      %s235 = smul.addr %s229, 32
      %s236 = sadd.s32 %s234, %s235
      %s237 = smul.addr %s236, 4
      %s238 = scalar_lea.vmem %s3, %s237
      %s239 = smul.u32 32, %s21
      %s241 = smul.u32 %s21, 16
      %s242 = smul.u32 %s241, 2
      %s243 = smul.addr %s242, 4
      %s244 = scalar_lea.vmem %s219, %s243
      %v245 = vld [vmem:[%s244] sm:$0xf]
      %v246 = vld [vmem:[%s244 + $0x4] sm:$0xf]
      %v247 = vld [vmem:[%s244 + $0x8] sm:$0xf]
      %v248 = vld [vmem:[%s244 + $0xc] sm:$0xf]
      %v249 = vld [vmem:[%s244 + $0x10] sm:$0xf]
      %v250 = vld [vmem:[%s244 + $0x14] sm:$0xf]
      %v251 = vld [vmem:[%s244 + $0x18] sm:$0xf]
      %v252 = vld [vmem:[%s244 + $0x1c] sm:$0xf]
      %v253 = vld [vmem:[%s244 + $0x20] sm:$0xf]
      %v254 = vld [vmem:[%s244 + $0x24] sm:$0xf]
      %v255 = vld [vmem:[%s244 + $0x28] sm:$0xf]
      %v256 = vld [vmem:[%s244 + $0x2c] sm:$0xf]
      %v257 = vld [vmem:[%s244 + $0x30] sm:$0xf]
      %v258 = vld [vmem:[%s244 + $0x34] sm:$0xf]
      %v259 = vld [vmem:[%s244 + $0x38] sm:$0xf]
      %v260 = vld [vmem:[%s244 + $0x3c] sm:$0xf]
      %v261 = vld [vmem:[%s244 + $0x40] sm:$0xf]
      %v262 = vld [vmem:[%s244 + $0x44] sm:$0xf]
      %v263 = vld [vmem:[%s244 + $0x48] sm:$0xf]
      %v264 = vld [vmem:[%s244 + $0x4c] sm:$0xf]
      %v265 = vld [vmem:[%s244 + $0x50] sm:$0xf]
      %v266 = vld [vmem:[%s244 + $0x54] sm:$0xf]
      %v267 = vld [vmem:[%s244 + $0x58] sm:$0xf]
      %v268 = vld [vmem:[%s244 + $0x5c] sm:$0xf]
      %v269 = vld [vmem:[%s244 + $0x60] sm:$0xf]
      %v270 = vld [vmem:[%s244 + $0x64] sm:$0xf]
      %v271 = vld [vmem:[%s244 + $0x68] sm:$0xf]
      %v272 = vld [vmem:[%s244 + $0x6c] sm:$0xf]
      %v273 = vld [vmem:[%s244 + $0x70] sm:$0xf]
      %v274 = vld [vmem:[%s244 + $0x74] sm:$0xf]
      %v275 = vld [vmem:[%s244 + $0x78] sm:$0xf]
      %v276 = vld [vmem:[%s244 + $0x7c] sm:$0xf]
      %v277 = vld [vmem:[%s223] sm:$0xf]
      %v278 = vld [vmem:[%s223 + $0x4] sm:$0xf]
      %v279 = vld [vmem:[%s223 + $0x8] sm:$0xf]
      %v280 = vld [vmem:[%s223 + $0xc] sm:$0xf]
      %v281 = vld [vmem:[%s223 + $0x10] sm:$0xf]
      %v282 = vld [vmem:[%s223 + $0x14] sm:$0xf]
      %v283 = vld [vmem:[%s226] sm:$0x1]
      %v285 = vlaneseq
      %v286 = vshrl.u32 %v285, 7
      %v287 = vsub.s32 0, %v286
      %v288 = vrot.slane %v283, %v287
      %v322 = vunpack.c.l.b16 %v245
      %v323 = vunpack.c.l.b16 %v246
      %v324 = vunpack.c.l.b16 %v247
      %v325 = vunpack.c.l.b16 %v248
      %v326 = vunpack.c.l.b16 %v249
      %v327 = vunpack.c.l.b16 %v250
      %v328 = vunpack.c.l.b16 %v251
      %v329 = vunpack.c.l.b16 %v252
      %v330 = vunpack.c.l.b16 %v253
      %v331 = vunpack.c.l.b16 %v254
      %v332 = vunpack.c.l.b16 %v255
      %v333 = vunpack.c.l.b16 %v256
      %v334 = vunpack.c.l.b16 %v257
      %v335 = vunpack.c.l.b16 %v258
      %v336 = vunpack.c.l.b16 %v259
      %v337 = vunpack.c.l.b16 %v260
      %v338 = vunpack.c.l.b16 %v261
      %v339 = vunpack.c.l.b16 %v262
      %v340 = vunpack.c.l.b16 %v263
      %v341 = vunpack.c.l.b16 %v264
      %v342 = vunpack.c.l.b16 %v265
      %v343 = vunpack.c.l.b16 %v266
      %v344 = vunpack.c.l.b16 %v267
      %v345 = vunpack.c.l.b16 %v268
      %v346 = vunpack.c.l.b16 %v269
      %v347 = vunpack.c.l.b16 %v270
      %v348 = vunpack.c.l.b16 %v271
      %v349 = vunpack.c.l.b16 %v272
      %v350 = vunpack.c.l.b16 %v273
      %v351 = vunpack.c.l.b16 %v274
      %v352 = vunpack.c.l.b16 %v275
      %v353 = vunpack.c.l.b16 %v276
      %v354 = vpack.c.b16 %v323, %v322
      %v355 = vpack.c.b16 %v325, %v324
      %v356 = vpack.c.b16 %v327, %v326
      %v357 = vpack.c.b16 %v329, %v328
      %v358 = vpack.c.b16 %v331, %v330
      %v359 = vpack.c.b16 %v333, %v332
      %v360 = vpack.c.b16 %v335, %v334
      %v361 = vpack.c.b16 %v337, %v336
      %v362 = vpack.c.b16 %v339, %v338
      %v363 = vpack.c.b16 %v341, %v340
      %v364 = vpack.c.b16 %v343, %v342
      %v365 = vpack.c.b16 %v345, %v344
      %v366 = vpack.c.b16 %v347, %v346
      %v367 = vpack.c.b16 %v349, %v348
      %v368 = vpack.c.b16 %v351, %v350
      %v369 = vpack.c.b16 %v353, %v352
      %v376 = vunpack.c.l.b16 %v277
      %v377 = vunpack.c.l.b16 %v278
      %v378 = vunpack.c.l.b16 %v279
      %v379 = vunpack.c.l.b16 %v280
      %v380 = vunpack.c.l.b16 %v281
      %v381 = vunpack.c.l.b16 %v282
      %v382 = vpack.c.b16 %v377, %v376
      %v383 = vpack.c.b16 %v379, %v378
      %v384 = vpack.c.b16 %v381, %v380
      %vm388 = vcmask 392192
      %v390 = vsel %vm388, %v354, 0
      %v393 = vsel %vm388, %v355, 0
      %v396 = vsel %vm388, %v356, 0
      %v399 = vsel %vm388, %v357, 0
      %v402 = vsel %vm388, %v358, 0
      %v405 = vsel %vm388, %v359, 0
      %v408 = vsel %vm388, %v360, 0
      %v411 = vsel %vm388, %v361, 0
      %v414 = vsel %vm388, %v362, 0
      %v417 = vsel %vm388, %v363, 0
      %v420 = vsel %vm388, %v364, 0
      %v423 = vsel %vm388, %v365, 0
      %v426 = vsel %vm388, %v366, 0
      %v429 = vsel %vm388, %v367, 0
      %v432 = vsel %vm388, %v368, 0
      %v435 = vsel %vm388, %v369, 0
      %437 = vmatprep.subr.bf16.mxu0 0
      %438 = vmatpush1.bf16.msra.mxu0 %v382
      %439 = vmatprep.subr.bf16.mxu0 0
      %440 = vmatpush1.bf16.msra.mxu0 %v383
      %441 = vmatprep.subr.bf16.mxu0 0
      %442 = vmatpush1.bf16.msra.mxu0 %v384
      %443 = vmatprep.subr.bf16.mxu0 0
      %444 = vmatpush1.bf16.msra.mxu0 0
      %445 = vmatprep.subr.bf16.mxu0 0
      %446 = vmatpush1.bf16.msra.mxu0 0
      %447 = vmatprep.subr.bf16.mxu0 0
      %448 = vmatpush1.bf16.msra.mxu0 0
      %449 = vmatprep.subr.bf16.mxu0 0
      %450 = vmatpush1.bf16.msra.mxu0 0
      %451 = vmatprep.subr.bf16.mxu0 0
      %452 = vmatpush1.bf16.msra.mxu0 0
      %453 = vmatprep.subr.bf16.mxu0 0
      %454 = vmatpush1.bf16.msra.mxu0 0
      %455 = vmatprep.subr.bf16.mxu0 0
      %456 = vmatpush1.bf16.msra.mxu0 0
      %457 = vmatprep.subr.bf16.mxu0 0
      %458 = vmatpush1.bf16.msra.mxu0 0
      %459 = vmatprep.subr.bf16.mxu0 0
      %460 = vmatpush1.bf16.msra.mxu0 0
      %461 = vmatprep.subr.bf16.mxu0 0
      %462 = vmatpush1.bf16.msra.mxu0 0
      %463 = vmatprep.subr.bf16.mxu0 0
      %464 = vmatpush1.bf16.msra.mxu0 0
      %465 = vmatprep.subr.bf16.mxu0 0
      %466 = vmatpush1.bf16.msra.mxu0 0
      %467 = vmatprep.subr.bf16.mxu0 0
      %468 = vmatpush1.bf16.msra.mxu0 0
      %469 = vmatprep.mubr.bf16.mxu0 0
      %470 = vmatmul.mubr.bf16.gmra.mrb[0].mxu0 %v390
      %v471 = vpop.f32.mrb[0].mxu0
      %v472 = vadd.f32 %v288, %v471
      %v473 = vpop.f32.mrb[0].mxu0
      %v474 = vpop.f32.mrb[0].mxu0
      %v475 = vadd.f32 %v288, %v474
      %v476 = vpop.f32.mrb[0].mxu0
      %477 = vmatprep.mubr.bf16.mxu0 0
      %478 = vmatmul.mubr.bf16.gmra.mrb[0].mxu0 %v393
      %v479 = vpop.f32.mrb[0].mxu0
      %v480 = vadd.f32 %v288, %v479
      %v481 = vpop.f32.mrb[0].mxu0
      %v482 = vpop.f32.mrb[0].mxu0
      %v483 = vadd.f32 %v288, %v482
      %v484 = vpop.f32.mrb[0].mxu0
      %485 = vmatprep.mubr.bf16.mxu0 0
      %486 = vmatmul.mubr.bf16.gmra.mrb[0].mxu0 %v396
      %v487 = vpop.f32.mrb[0].mxu0
      %v488 = vadd.f32 %v288, %v487
      %v489 = vpop.f32.mrb[0].mxu0
      %v490 = vpop.f32.mrb[0].mxu0
      %v491 = vadd.f32 %v288, %v490
      %v492 = vpop.f32.mrb[0].mxu0
      %493 = vmatprep.mubr.bf16.mxu0 0
      %494 = vmatmul.mubr.bf16.gmra.mrb[0].mxu0 %v399
      %v495 = vpop.f32.mrb[0].mxu0
      %v496 = vadd.f32 %v288, %v495
      %v497 = vpop.f32.mrb[0].mxu0
      %v498 = vpop.f32.mrb[0].mxu0
      %v499 = vadd.f32 %v288, %v498
      %v500 = vpop.f32.mrb[0].mxu0
      %501 = vmatprep.mubr.bf16.mxu0 0
      %502 = vmatmul.mubr.bf16.gmra.mrb[0].mxu0 %v402
      %v503 = vpop.f32.mrb[0].mxu0
      %v504 = vadd.f32 %v288, %v503
      %v505 = vpop.f32.mrb[0].mxu0
      %v506 = vpop.f32.mrb[0].mxu0
      %v507 = vadd.f32 %v288, %v506
      %v508 = vpop.f32.mrb[0].mxu0
      %509 = vmatprep.mubr.bf16.mxu0 0
      %510 = vmatmul.mubr.bf16.gmra.mrb[0].mxu0 %v405
      %v511 = vpop.f32.mrb[0].mxu0
      %v512 = vadd.f32 %v288, %v511
      %v513 = vpop.f32.mrb[0].mxu0
      %v514 = vpop.f32.mrb[0].mxu0
      %v515 = vadd.f32 %v288, %v514
      %v516 = vpop.f32.mrb[0].mxu0
      %517 = vmatprep.mubr.bf16.mxu0 0
      %518 = vmatmul.mubr.bf16.gmra.mrb[0].mxu0 %v408
      %v519 = vpop.f32.mrb[0].mxu0
      %v520 = vadd.f32 %v288, %v519
      %v521 = vpop.f32.mrb[0].mxu0
      %v522 = vpop.f32.mrb[0].mxu0
      %v523 = vadd.f32 %v288, %v522
      %v524 = vpop.f32.mrb[0].mxu0
      %525 = vmatprep.mubr.bf16.mxu0 0
      %526 = vmatmul.mubr.bf16.gmra.mrb[0].mxu0 %v411
      %v527 = vpop.f32.mrb[0].mxu0
      %v528 = vadd.f32 %v288, %v527
      %v529 = vpop.f32.mrb[0].mxu0
      %v530 = vpop.f32.mrb[0].mxu0
      %v531 = vadd.f32 %v288, %v530
      %v532 = vpop.f32.mrb[0].mxu0
      %533 = vmatprep.mubr.bf16.mxu0 0
      %534 = vmatmul.mubr.bf16.gmra.mrb[0].mxu0 %v414
      %v535 = vpop.f32.mrb[0].mxu0
      %v536 = vadd.f32 %v288, %v535
      %v537 = vpop.f32.mrb[0].mxu0
      %v538 = vpop.f32.mrb[0].mxu0
      %v539 = vadd.f32 %v288, %v538
      %v540 = vpop.f32.mrb[0].mxu0
      %541 = vmatprep.mubr.bf16.mxu0 0
      %542 = vmatmul.mubr.bf16.gmra.mrb[0].mxu0 %v417
      %v543 = vpop.f32.mrb[0].mxu0
      %v544 = vadd.f32 %v288, %v543
      %v545 = vpop.f32.mrb[0].mxu0
      %v546 = vpop.f32.mrb[0].mxu0
      %v547 = vadd.f32 %v288, %v546
      %v548 = vpop.f32.mrb[0].mxu0
      %549 = vmatprep.mubr.bf16.mxu0 0
      %550 = vmatmul.mubr.bf16.gmra.mrb[0].mxu0 %v420
      %v551 = vpop.f32.mrb[0].mxu0
      %v552 = vadd.f32 %v288, %v551
      %v553 = vpop.f32.mrb[0].mxu0
      %v554 = vpop.f32.mrb[0].mxu0
      %v555 = vadd.f32 %v288, %v554
      %v556 = vpop.f32.mrb[0].mxu0
      %557 = vmatprep.mubr.bf16.mxu0 0
      %558 = vmatmul.mubr.bf16.gmra.mrb[0].mxu0 %v423
      %v559 = vpop.f32.mrb[0].mxu0
      %v560 = vadd.f32 %v288, %v559
      %v561 = vpop.f32.mrb[0].mxu0
      %v562 = vpop.f32.mrb[0].mxu0
      %v563 = vadd.f32 %v288, %v562
      %v564 = vpop.f32.mrb[0].mxu0
      %565 = vmatprep.mubr.bf16.mxu0 0
      %566 = vmatmul.mubr.bf16.gmra.mrb[0].mxu0 %v426
      %v567 = vpop.f32.mrb[0].mxu0
      %v568 = vadd.f32 %v288, %v567
      %v569 = vpop.f32.mrb[0].mxu0
      %v570 = vpop.f32.mrb[0].mxu0
      %v571 = vadd.f32 %v288, %v570
      %v572 = vpop.f32.mrb[0].mxu0
      %573 = vmatprep.mubr.bf16.mxu0 0
      %574 = vmatmul.mubr.bf16.gmra.mrb[0].mxu0 %v429
      %v575 = vpop.f32.mrb[0].mxu0
      %v576 = vadd.f32 %v288, %v575
      %v577 = vpop.f32.mrb[0].mxu0
      %v578 = vpop.f32.mrb[0].mxu0
      %v579 = vadd.f32 %v288, %v578
      %v580 = vpop.f32.mrb[0].mxu0
      %581 = vmatprep.mubr.bf16.mxu0 0
      %582 = vmatmul.mubr.bf16.gmra.mrb[0].mxu0 %v432
      %v583 = vpop.f32.mrb[0].mxu0
      %v584 = vadd.f32 %v288, %v583
      %v585 = vpop.f32.mrb[0].mxu0
      %v586 = vpop.f32.mrb[0].mxu0
      %v587 = vadd.f32 %v288, %v586
      %v588 = vpop.f32.mrb[0].mxu0
      %589 = vmatprep.mubr.bf16.mxu0 0
      %590 = vmatmul.mubr.bf16.gmra.mrb[0].mxu0 %v435
      %v591 = vpop.f32.mrb[0].mxu0
      %v592 = vadd.f32 %v288, %v591
      %v593 = vpop.f32.mrb[0].mxu0
      %v594 = vpop.f32.mrb[0].mxu0
      %v595 = vadd.f32 %v288, %v594
      %v596 = vpop.f32.mrb[0].mxu0
      %597 = vdwg.mxu0
      %vm598 = vcmp.ge.f32.partialorder %v472, 0.0
      %vm599 = vcmp.ge.f32.partialorder %v475, 0.0
      %vm600 = vcmp.ge.f32.partialorder %v480, 0.0
      %vm601 = vcmp.ge.f32.partialorder %v483, 0.0
      %vm602 = vcmp.ge.f32.partialorder %v488, 0.0
      %vm603 = vcmp.ge.f32.partialorder %v491, 0.0
      %vm604 = vcmp.ge.f32.partialorder %v496, 0.0
      %vm605 = vcmp.ge.f32.partialorder %v499, 0.0
      %vm606 = vcmp.ge.f32.partialorder %v504, 0.0
      %vm607 = vcmp.ge.f32.partialorder %v507, 0.0
      %vm608 = vcmp.ge.f32.partialorder %v512, 0.0
      %vm609 = vcmp.ge.f32.partialorder %v515, 0.0
      %vm610 = vcmp.ge.f32.partialorder %v520, 0.0
      %vm611 = vcmp.ge.f32.partialorder %v523, 0.0
      %vm612 = vcmp.ge.f32.partialorder %v528, 0.0
      %vm613 = vcmp.ge.f32.partialorder %v531, 0.0
      %vm614 = vcmp.ge.f32.partialorder %v536, 0.0
      %vm615 = vcmp.ge.f32.partialorder %v539, 0.0
      %vm616 = vcmp.ge.f32.partialorder %v544, 0.0
      %vm617 = vcmp.ge.f32.partialorder %v547, 0.0
      %vm618 = vcmp.ge.f32.partialorder %v552, 0.0
      %vm619 = vcmp.ge.f32.partialorder %v555, 0.0
      %vm620 = vcmp.ge.f32.partialorder %v560, 0.0
      %vm621 = vcmp.ge.f32.partialorder %v563, 0.0
      %vm622 = vcmp.ge.f32.partialorder %v568, 0.0
      %vm623 = vcmp.ge.f32.partialorder %v571, 0.0
      %vm624 = vcmp.ge.f32.partialorder %v576, 0.0
      %vm625 = vcmp.ge.f32.partialorder %v579, 0.0
      %vm626 = vcmp.ge.f32.partialorder %v584, 0.0
      %vm627 = vcmp.ge.f32.partialorder %v587, 0.0
      %vm628 = vcmp.ge.f32.partialorder %v592, 0.0
      %vm629 = vcmp.ge.f32.partialorder %v595, 0.0
      %v630 = vmul.f32 %v472, 0.2
      %v631 = vmul.f32 %v475, 0.2
      %v632 = vmul.f32 %v480, 0.2
      %v633 = vmul.f32 %v483, 0.2
      %v634 = vmul.f32 %v488, 0.2
      %v635 = vmul.f32 %v491, 0.2
      %v636 = vmul.f32 %v496, 0.2
      %v637 = vmul.f32 %v499, 0.2
      %v638 = vmul.f32 %v504, 0.2
      %v639 = vmul.f32 %v507, 0.2
      %v640 = vmul.f32 %v512, 0.2
      %v641 = vmul.f32 %v515, 0.2
      %v642 = vmul.f32 %v520, 0.2
      %v643 = vmul.f32 %v523, 0.2
      %v644 = vmul.f32 %v528, 0.2
      %v645 = vmul.f32 %v531, 0.2
      %v646 = vmul.f32 %v536, 0.2
      %v647 = vmul.f32 %v539, 0.2
      %v648 = vmul.f32 %v544, 0.2
      %v649 = vmul.f32 %v547, 0.2
      %v650 = vmul.f32 %v552, 0.2
      %v651 = vmul.f32 %v555, 0.2
      %v652 = vmul.f32 %v560, 0.2
      %v653 = vmul.f32 %v563, 0.2
      %v654 = vmul.f32 %v568, 0.2
      %v655 = vmul.f32 %v571, 0.2
      %v656 = vmul.f32 %v576, 0.2
      %v657 = vmul.f32 %v579, 0.2
      %v658 = vmul.f32 %v584, 0.2
      %v659 = vmul.f32 %v587, 0.2
      %v660 = vmul.f32 %v592, 0.2
      %v661 = vmul.f32 %v595, 0.2
      %v662 = vsel %vm598, %v472, %v630
      %v663 = vsel %vm599, %v475, %v631
      %v664 = vsel %vm600, %v480, %v632
      %v665 = vsel %vm601, %v483, %v633
      %v666 = vsel %vm602, %v488, %v634
      %v667 = vsel %vm603, %v491, %v635
      %v668 = vsel %vm604, %v496, %v636
      %v669 = vsel %vm605, %v499, %v637
      %v670 = vsel %vm606, %v504, %v638
      %v671 = vsel %vm607, %v507, %v639
      %v672 = vsel %vm608, %v512, %v640
      %v673 = vsel %vm609, %v515, %v641
      %v674 = vsel %vm610, %v520, %v642
      %v675 = vsel %vm611, %v523, %v643
      %v676 = vsel %vm612, %v528, %v644
      %v677 = vsel %vm613, %v531, %v645
      %v678 = vsel %vm614, %v536, %v646
      %v679 = vsel %vm615, %v539, %v647
      %v680 = vsel %vm616, %v544, %v648
      %v681 = vsel %vm617, %v547, %v649
      %v682 = vsel %vm618, %v552, %v650
      %v683 = vsel %vm619, %v555, %v651
      %v684 = vsel %vm620, %v560, %v652
      %v685 = vsel %vm621, %v563, %v653
      %v686 = vsel %vm622, %v568, %v654
      %v687 = vsel %vm623, %v571, %v655
      %v688 = vsel %vm624, %v576, %v656
      %v689 = vsel %vm625, %v579, %v657
      %v690 = vsel %vm626, %v584, %v658
      %v691 = vsel %vm627, %v587, %v659
      %v692 = vsel %vm628, %v592, %v660
      %v693 = vsel %vm629, %v595, %v661
      %v694 = vpack.c.bf16 %v663, %v662
      %v695 = vpack.c.bf16 %v665, %v664
      %v696 = vpack.c.bf16 %v667, %v666
      %v697 = vpack.c.bf16 %v669, %v668
      %v698 = vpack.c.bf16 %v671, %v670
      %v699 = vpack.c.bf16 %v673, %v672
      %v700 = vpack.c.bf16 %v675, %v674
      %v701 = vpack.c.bf16 %v677, %v676
      %v702 = vpack.c.bf16 %v679, %v678
      %v703 = vpack.c.bf16 %v681, %v680
      %v704 = vpack.c.bf16 %v683, %v682
      %v705 = vpack.c.bf16 %v685, %v684
      %v706 = vpack.c.bf16 %v687, %v686
      %v707 = vpack.c.bf16 %v689, %v688
      %v708 = vpack.c.bf16 %v691, %v690
      %v709 = vpack.c.bf16 %v693, %v692
      %v726 = vunpack.c.l.b16 %v694
      %v727 = vunpack.c.h.b16 %v694
      %v728 = vunpack.c.l.b16 %v695
      %v729 = vunpack.c.h.b16 %v695
      %v730 = vunpack.c.l.b16 %v696
      %v731 = vunpack.c.h.b16 %v696
      %v732 = vunpack.c.l.b16 %v697
      %v733 = vunpack.c.h.b16 %v697
      %v734 = vunpack.c.l.b16 %v698
      %v735 = vunpack.c.h.b16 %v698
      %v736 = vunpack.c.l.b16 %v699
      %v737 = vunpack.c.h.b16 %v699
      %v738 = vunpack.c.l.b16 %v700
      %v739 = vunpack.c.h.b16 %v700
      %v740 = vunpack.c.l.b16 %v701
      %v741 = vunpack.c.h.b16 %v701
      %v742 = vunpack.c.l.b16 %v702
      %v743 = vunpack.c.h.b16 %v702
      %v744 = vunpack.c.l.b16 %v703
      %v745 = vunpack.c.h.b16 %v703
      %v746 = vunpack.c.l.b16 %v704
      %v747 = vunpack.c.h.b16 %v704
      %v748 = vunpack.c.l.b16 %v705
      %v749 = vunpack.c.h.b16 %v705
      %v750 = vunpack.c.l.b16 %v706
      %v751 = vunpack.c.h.b16 %v706
      %v752 = vunpack.c.l.b16 %v707
      %v753 = vunpack.c.h.b16 %v707
      %v754 = vunpack.c.l.b16 %v708
      %v755 = vunpack.c.h.b16 %v708
      %v756 = vunpack.c.l.b16 %v709
      %v757 = vunpack.c.h.b16 %v709
      %v758 = vpack.c.b16 %v726, %v726
      %v759 = vpack.c.b16 %v727, %v727
      %v760 = vpack.c.b16 %v728, %v728
      %v761 = vpack.c.b16 %v729, %v729
      %v762 = vpack.c.b16 %v730, %v730
      %v763 = vpack.c.b16 %v731, %v731
      %v764 = vpack.c.b16 %v732, %v732
      %v765 = vpack.c.b16 %v733, %v733
      %v766 = vpack.c.b16 %v734, %v734
      %v767 = vpack.c.b16 %v735, %v735
      %v768 = vpack.c.b16 %v736, %v736
      %v769 = vpack.c.b16 %v737, %v737
      %v770 = vpack.c.b16 %v738, %v738
      %v771 = vpack.c.b16 %v739, %v739
      %v772 = vpack.c.b16 %v740, %v740
      %v773 = vpack.c.b16 %v741, %v741
      %v774 = vpack.c.b16 %v742, %v742
      %v775 = vpack.c.b16 %v743, %v743
      %v776 = vpack.c.b16 %v744, %v744
      %v777 = vpack.c.b16 %v745, %v745
      %v778 = vpack.c.b16 %v746, %v746
      %v779 = vpack.c.b16 %v747, %v747
      %v780 = vpack.c.b16 %v748, %v748
      %v781 = vpack.c.b16 %v749, %v749
      %v782 = vpack.c.b16 %v750, %v750
      %v783 = vpack.c.b16 %v751, %v751
      %v784 = vpack.c.b16 %v752, %v752
      %v785 = vpack.c.b16 %v753, %v753
      %v786 = vpack.c.b16 %v754, %v754
      %v787 = vpack.c.b16 %v755, %v755
      %v788 = vpack.c.b16 %v756, %v756
      %v789 = vpack.c.b16 %v757, %v757
      %822 = vst [vmem:[%s238] sm:$0xf] %v758
      %823 = vst [vmem:[%s238 + $0x4] sm:$0xf] %v759
      %824 = vst [vmem:[%s238 + $0x8] sm:$0xf] %v760
      %825 = vst [vmem:[%s238 + $0xc] sm:$0xf] %v761
      %826 = vst [vmem:[%s238 + $0x10] sm:$0xf] %v762
      %827 = vst [vmem:[%s238 + $0x14] sm:$0xf] %v763
      %828 = vst [vmem:[%s238 + $0x18] sm:$0xf] %v764
      %829 = vst [vmem:[%s238 + $0x1c] sm:$0xf] %v765
      %830 = vst [vmem:[%s238 + $0x20] sm:$0xf] %v766
      %831 = vst [vmem:[%s238 + $0x24] sm:$0xf] %v767
      %832 = vst [vmem:[%s238 + $0x28] sm:$0xf] %v768
      %833 = vst [vmem:[%s238 + $0x2c] sm:$0xf] %v769
      %834 = vst [vmem:[%s238 + $0x30] sm:$0xf] %v770
      %835 = vst [vmem:[%s238 + $0x34] sm:$0xf] %v771
      %836 = vst [vmem:[%s238 + $0x38] sm:$0xf] %v772
      %837 = vst [vmem:[%s238 + $0x3c] sm:$0xf] %v773
      %838 = vst [vmem:[%s238 + $0x40] sm:$0xf] %v774
      %839 = vst [vmem:[%s238 + $0x44] sm:$0xf] %v775
      %840 = vst [vmem:[%s238 + $0x48] sm:$0xf] %v776
      %841 = vst [vmem:[%s238 + $0x4c] sm:$0xf] %v777
      %842 = vst [vmem:[%s238 + $0x50] sm:$0xf] %v778
      %843 = vst [vmem:[%s238 + $0x54] sm:$0xf] %v779
      %844 = vst [vmem:[%s238 + $0x58] sm:$0xf] %v780
      %845 = vst [vmem:[%s238 + $0x5c] sm:$0xf] %v781
      %846 = vst [vmem:[%s238 + $0x60] sm:$0xf] %v782
      %847 = vst [vmem:[%s238 + $0x64] sm:$0xf] %v783
      %848 = vst [vmem:[%s238 + $0x68] sm:$0xf] %v784
      %849 = vst [vmem:[%s238 + $0x6c] sm:$0xf] %v785
      %850 = vst [vmem:[%s238 + $0x70] sm:$0xf] %v786
      %851 = vst [vmem:[%s238 + $0x74] sm:$0xf] %v787
      %852 = vst [vmem:[%s238 + $0x78] sm:$0xf] %v788
      %853 = vst [vmem:[%s238 + $0x7c] sm:$0xf] %v789
      %s854 = smul.u32 32, %s21
      %p855 = scmp.lt.s32.totalorder %s19, 1
      %s856 = scalar_select %p855, %s19, 1
      %p857 = scmp.lt.s32.totalorder %s854, 31
      %s858 = scalar_select %p857, %s854, 31
      %p859 = scmp.lt.s32.totalorder %s20, 0
      %s860 = scalar_select %p859, %s20, 0
      %s861 = sadd.s32 %s860, %s858
      %s862 = smul.addr %s856, 32
      %s863 = sadd.s32 %s861, %s862
      %s864 = smul.addr %s863, 4
      %s865 = scalar_lea.vmem %s3, %s864
      // Predicated region
      $region33: #{_lambda_.8} parent=31 // pred_check
        %p866 = pneg %p133
      $region34: #{_lambda_.8} parent=31 // pred_check_branch
        %868 = sbr.rel (%p866) target = $region36
      $region35: #{_lambda_.8} parent=31 // pred_region
        %s869 = smul.u32 32, %s21
      $region36: #{_lambda_.8} parent=31 // pred_fallthru
        _
    $region32: #{_lambda_.8} parent=5 // pred_fallthru
      _
    %p870 = scmp.le.s32.totalorder 2, %s9
    // Predicated region
    $region37: #{_lambda_.8} parent=5 // pred_check
      %p871 = pneg %p870
    $region38: #{_lambda_.8} parent=5 // pred_check_branch
      %873 = sbr.rel (%p871) target = $region40
    $region39: #{_lambda_.8} parent=5 // pred_region
      %s874 = ssub.s32 %s9, 2
      // Predicated region
      $region41: #{_lambda_.8} parent=39 // pred_check
        %p875 = pneg %p139
      $region42: #{_lambda_.8} parent=39 // pred_check_branch
        %877 = sbr.rel (%p875) target = $region44
      $region43: #{_lambda_.8} parent=39 // pred_region
        %s878 = smul.u32 32, %s24
        %p879 = scmp.lt.s32.totalorder %s22, 1
        %s880 = scalar_select %p879, %s22, 1
        %p881 = scmp.lt.s32.totalorder %s878, 31
        %s882 = scalar_select %p881, %s878, 31
        %p883 = scmp.lt.s32.totalorder %s23, 0
        %s884 = scalar_select %p883, %s23, 0
        %s885 = sadd.s32 %s884, %s882
        %s886 = smul.addr %s880, 32
        %s887 = sadd.s32 %s885, %s886
        %s888 = smul.addr %s887, 4
        %s889 = scalar_lea.vmem %s3, %s888
      $region44: #{_lambda_.8} parent=39 // pred_fallthru
        _
    $region40: #{_lambda_.8} parent=5 // pred_fallthru
      _
  $region6: #{_lambda_.8} parent=0 // loop_footer
    %s13 = sadd.s32 1, %s9
  $region7: #{_lambda_.8} parent=0 // loop_footer_branch
    %8 = sbr.rel target = $region3
  $region8: #{_lambda_.8} parent=0 // loop_exit
    _

// kernel: _lambda_.10
$region0: #{_lambda_.10}
  #allocation0 [shape = 'u32[]', space=smem, size = 0x4, offset = 0x4, fixed_abs, tag = 'smem constant byte address 0x4 - core index']
  #allocation1 [shape = 'u32[144,128]{1,0:T(1,128)}', space=vmem, size = 0x12000, scoped, tag = 'internal scratch']
  %s0 = inlined_call_operand.vmem [shape: bf16[2,64,128], index: 0, kind: input, shape index: {}]
  %s1 = inlined_call_operand.vmem [shape: f32[2,1,128], index: 1, kind: input, shape index: {}]
  %s2 = inlined_call_operand.vmem [shape: f32[2,1,128], index: 2, kind: input, shape index: {}]
  %s3 = inlined_call_operand.vmem [shape: bf16[2,64,128], index: 3, kind: output, shape index: {}]
  %s4 = sld [smem:[#allocation0]]
  $region45: #{_lambda_.10} parent=0
    _
  %s6 = ssub.s32 1, %s4
  %s7 = scalar_select 0, %s6, %s4
  loop: start=0, step=1, limit=4
  $region2: #{_lambda_.10} parent=0 // loop_pre_header
    _
  $region3: #{_lambda_.10} parent=0 // loop_header
    %s9 = sphi 0, %s13
    %p10 = scmp.ge.s32.totalorder %s9, 4
    %s16 = sphi 0, %s28
    %s17 = sphi 0, %s24
    %s18 = sphi 0, %s16
    %s19 = sphi 0, %s17
    %s20 = sphi 0, %s18
    %s21 = sphi 0, %s19
    %s33 = sphi 0, %s35
    %s36 = sphi 0, %s33
    %s37 = sphi 0, %s36
    %s53 = sphi 0, %s37
    %s59 = sphi 0, %s61
    %s62 = sphi 0, %s59
    %s63 = sphi 0, %s62
    %s79 = sphi 0, %s63
    %s85 = sphi 0, %s87
    %s88 = sphi 0, %s85
    %s89 = sphi 0, %s88
    %s105 = sphi 0, %s89
    %s113 = sphi 0, %s115
    %s116 = sphi 0, %s113
    %s117 = sphi 0, %s116
    %s133 = sphi 0, %s117
  $region4: #{_lambda_.10} parent=0 // loop_header_branch
    %12 = sbr.rel (%p10) target = $region8
  $region5: #{_lambda_.10} parent=0 // loop_body
    %s14 = ssub.s32 %s9, 1
    %s15 = ssub.s32 %s9, 2
    %s22 = sadd.s32 1, %s17
    %p23 = scmp.ge.s32.totalorder %s22, 1
    %s24 = scalar_select %p23, 0, %s22
    %s25 = sadd.s32 1, %s16
    %s26 = scalar_select %p23, %s25, %s16
    %p27 = scmp.ge.s32.totalorder %s26, 2
    %s28 = scalar_select %p27, 0, %s26
    %s29 = ssub.s32 %s16, %s28
    %s30 = ssub.s32 %s17, %s24
    %s31 = sor.u32 %s29, %s30
    %p32 = scmp.eq.s32.totalorder %s31, 0
    %s34 = sadd.s32 %s33, 1
    %s35 = scalar_select %p32, %s33, %s34
    %p38 = pneg %p32
    %p39 = scmp.eq.s32.totalorder %s9, 1
    %p40 = por %p38, %p39
    %p41 = scmp.ne.s32.totalorder %s33, %s36
    %p42 = scmp.eq.s32.totalorder %s9, 0
    %p43 = por %p41, %p42
    %p44 = scmp.ne.s32.totalorder %s33, %s36
    %p45 = scmp.eq.s32.totalorder %s14, 1
    %p46 = por %p44, %p45
    %p47 = scmp.ne.s32.totalorder %s36, %s37
    %p48 = scmp.eq.s32.totalorder %s14, 0
    %p49 = por %p47, %p48
    %p50 = scmp.ne.s32.totalorder %s36, %s37
    %p51 = scmp.eq.s32.totalorder %s15, 1
    %p52 = por %p50, %p51
    %p54 = scmp.ne.s32.totalorder %s37, %s53
    %p55 = scmp.eq.s32.totalorder %s15, 0
    %p56 = por %p54, %p55
    %s57 = ssub.s32 %s16, %s28
    %p58 = scmp.eq.s32.totalorder %s57, 0
    %s60 = sadd.s32 %s59, 1
    %s61 = scalar_select %p58, %s59, %s60
    %p64 = pneg %p58
    %p65 = scmp.eq.s32.totalorder %s9, 1
    %p66 = por %p64, %p65
    %p67 = scmp.ne.s32.totalorder %s59, %s62
    %p68 = scmp.eq.s32.totalorder %s9, 0
    %p69 = por %p67, %p68
    %p70 = scmp.ne.s32.totalorder %s59, %s62
    %p71 = scmp.eq.s32.totalorder %s14, 1
    %p72 = por %p70, %p71
    %p73 = scmp.ne.s32.totalorder %s62, %s63
    %p74 = scmp.eq.s32.totalorder %s14, 0
    %p75 = por %p73, %p74
    %p76 = scmp.ne.s32.totalorder %s62, %s63
    %p77 = scmp.eq.s32.totalorder %s15, 1
    %p78 = por %p76, %p77
    %p80 = scmp.ne.s32.totalorder %s63, %s79
    %p81 = scmp.eq.s32.totalorder %s15, 0
    %p82 = por %p80, %p81
    %s83 = ssub.s32 %s16, %s28
    %p84 = scmp.eq.s32.totalorder %s83, 0
    %s86 = sadd.s32 %s85, 1
    %s87 = scalar_select %p84, %s85, %s86
    %p90 = pneg %p84
    %p91 = scmp.eq.s32.totalorder %s9, 1
    %p92 = por %p90, %p91
    %p93 = scmp.ne.s32.totalorder %s85, %s88
    %p94 = scmp.eq.s32.totalorder %s9, 0
    %p95 = por %p93, %p94
    %p96 = scmp.ne.s32.totalorder %s85, %s88
    %p97 = scmp.eq.s32.totalorder %s14, 1
    %p98 = por %p96, %p97
    %p99 = scmp.ne.s32.totalorder %s88, %s89
    %p100 = scmp.eq.s32.totalorder %s14, 0
    %p101 = por %p99, %p100
    %p102 = scmp.ne.s32.totalorder %s88, %s89
    %p103 = scmp.eq.s32.totalorder %s15, 1
    %p104 = por %p102, %p103
    %p106 = scmp.ne.s32.totalorder %s89, %s105
    %p107 = scmp.eq.s32.totalorder %s15, 0
    %p108 = por %p106, %p107
    %s109 = ssub.s32 %s16, %s28
    %s110 = ssub.s32 %s17, %s24
    %s111 = sor.u32 %s109, %s110
    %p112 = scmp.eq.s32.totalorder %s111, 0
    %s114 = sadd.s32 %s113, 1
    %s115 = scalar_select %p112, %s113, %s114
    %p118 = pneg %p112
    %p119 = scmp.eq.s32.totalorder %s9, 1
    %p120 = por %p118, %p119
    %p121 = scmp.ne.s32.totalorder %s113, %s116
    %p122 = scmp.eq.s32.totalorder %s9, 0
    %p123 = por %p121, %p122
    %p124 = scmp.ne.s32.totalorder %s113, %s116
    %p125 = scmp.eq.s32.totalorder %s14, 1
    %p126 = por %p124, %p125
    %p127 = scmp.ne.s32.totalorder %s116, %s117
    %p128 = scmp.eq.s32.totalorder %s14, 0
    %p129 = por %p127, %p128
    %p130 = scmp.ne.s32.totalorder %s116, %s117
    %p131 = scmp.eq.s32.totalorder %s15, 1
    %p132 = por %p130, %p131
    %p134 = scmp.ne.s32.totalorder %s117, %s133
    %p135 = scmp.eq.s32.totalorder %s15, 0
    %p136 = por %p134, %p135
    %p137 = scmp.le.s32.totalorder 1, %s9
    %p138 = scmp.lt.s32.totalorder %s9, 3
    %p139 = pnand %p137, %p138
    %p140 = pneg %p139
    // Predicated region
    $region9: #{_lambda_.10} parent=5 // pred_check
      _
    $region10: #{_lambda_.10} parent=5 // pred_check_branch
      %142 = sbr.rel (%p139) target = $region12
    $region11: #{_lambda_.10} parent=5 // pred_region
      %s143 = ssub.s32 %s9, 1
    $region12: #{_lambda_.10} parent=5 // pred_fallthru
      _
    %p144 = scmp.lt.s32.totalorder %s9, 2
    // Predicated region
    $region13: #{_lambda_.10} parent=5 // pred_check
      %p145 = pneg %p144
    $region14: #{_lambda_.10} parent=5 // pred_check_branch
      %147 = sbr.rel (%p145) target = $region16
    $region15: #{_lambda_.10} parent=5 // pred_region
      // Predicated region
      $region17: #{_lambda_.10} parent=15 // pred_check
        %p148 = pneg %p43
      $region18: #{_lambda_.10} parent=15 // pred_check_branch
        %150 = sbr.rel (%p148) target = $region20
      $region19: #{_lambda_.10} parent=15 // pred_region
        %s151 = smul.u32 8, %s17
        %p152 = scmp.lt.s32.totalorder %s16, 1
        %s153 = scalar_select %p152, %s16, 1
        %p154 = scmp.lt.s32.totalorder %s151, 7
        %s155 = scalar_select %p154, %s151, 7
        %s156 = smul.addr %s153, 8
        %s157 = sadd.s32 %s155, %s156
        %s158 = smul.addr %s157, 4
        %s159 = scalar_lea.vmem %s0, %s158
        %s160 = smul.u32 8, %s17
      $region20: #{_lambda_.10} parent=15 // pred_fallthru
        _
      // Predicated region
      $region21: #{_lambda_.10} parent=15 // pred_check
        %p161 = pneg %p69
      $region22: #{_lambda_.10} parent=15 // pred_check_branch
        %163 = sbr.rel (%p161) target = $region24
      $region23: #{_lambda_.10} parent=15 // pred_region
        %p164 = scmp.lt.s32.totalorder %s16, 1
        %s165 = scalar_select %p164, %s16, 1
        %s166 = scalar_lea.vmem %s1, %s165
      $region24: #{_lambda_.10} parent=15 // pred_fallthru
        _
      // Predicated region
      $region25: #{_lambda_.10} parent=15 // pred_check
        %p167 = pneg %p95
      $region26: #{_lambda_.10} parent=15 // pred_check_branch
        %169 = sbr.rel (%p167) target = $region28
      $region27: #{_lambda_.10} parent=15 // pred_region
        %p170 = scmp.lt.s32.totalorder %s16, 1
        %s171 = scalar_select %p170, %s16, 1
        %s172 = scalar_lea.vmem %s2, %s171
      $region28: #{_lambda_.10} parent=15 // pred_fallthru
        _
    $region16: #{_lambda_.10} parent=5 // pred_fallthru
      _
    %p173 = scmp.le.s32.totalorder 1, %s9
    %p174 = scmp.lt.s32.totalorder %s9, 3
    %p175 = pnand %p173, %p174
    %p176 = pneg %p175
    // Predicated region
    $region29: #{_lambda_.10} parent=5 // pred_check
      _
    $region30: #{_lambda_.10} parent=5 // pred_check_branch
      %178 = sbr.rel (%p175) target = $region32
    $region31: #{_lambda_.10} parent=5 // pred_region
      %s179 = ssub.s32 %s9, 1
      %s180 = smul.u32 8, %s19
      %p181 = scmp.lt.s32.totalorder %s18, 1
      %s182 = scalar_select %p181, %s18, 1
      %p183 = scmp.lt.s32.totalorder %s180, 7
      %s184 = scalar_select %p183, %s180, 7
      %s185 = smul.addr %s182, 8
      %s186 = sadd.s32 %s184, %s185
      %s187 = smul.addr %s186, 4
      %s188 = scalar_lea.vmem %s0, %s187
      %p189 = pneg %p49
      %p190 = pneg %p46
      %p191 = scmp.lt.s32.totalorder %s18, 1
      %s192 = scalar_select %p191, %s18, 1
      %s193 = scalar_lea.vmem %s1, %s192
      %p194 = pneg %p75
      %p195 = pneg %p72
      %p196 = scmp.lt.s32.totalorder %s18, 1
      %s197 = scalar_select %p196, %s18, 1
      %s198 = scalar_lea.vmem %s2, %s197
      %p199 = pneg %p101
      %p200 = pneg %p98
      %p201 = pneg %p129
      %p202 = pneg %p126
      %s203 = smul.u32 8, %s19
      %p204 = scmp.lt.s32.totalorder %s18, 1
      %s205 = scalar_select %p204, %s18, 1
      %p206 = scmp.lt.s32.totalorder %s203, 7
      %s207 = scalar_select %p206, %s203, 7
      %s208 = smul.addr %s205, 8
      %s209 = sadd.s32 %s207, %s208
      %s210 = smul.addr %s209, 4
      %s211 = scalar_lea.vmem %s3, %s210
      %s212 = smul.u32 8, %s19
      %p213 = scmp.lt.s32.totalorder %s18, 1
      %s214 = scalar_select %p213, %s18, 1
      %p215 = scmp.lt.s32.totalorder %s212, 7
      %s216 = scalar_select %p215, %s212, 7
      %s217 = smul.addr %s214, 8
      %s218 = sadd.s32 %s216, %s217
      %s219 = smul.addr %s218, 4
      %s220 = scalar_lea.vmem %s0, %s219
      %s221 = smul.u32 8, %s19
      %p222 = scmp.lt.s32.totalorder %s18, 1
      %s223 = scalar_select %p222, %s18, 1
      %s224 = scalar_lea.vmem %s1, %s223
      %p225 = scmp.lt.s32.totalorder %s18, 1
      %s226 = scalar_select %p225, %s18, 1
      %s227 = scalar_lea.vmem %s2, %s226
      %s228 = smul.u32 8, %s19
      %p229 = scmp.lt.s32.totalorder %s18, 1
      %s230 = scalar_select %p229, %s18, 1
      %p231 = scmp.lt.s32.totalorder %s228, 7
      %s232 = scalar_select %p231, %s228, 7
      %s233 = smul.addr %s230, 8
      %s234 = sadd.s32 %s232, %s233
      %s235 = smul.addr %s234, 4
      %s236 = scalar_lea.vmem %s3, %s235
      %s237 = smul.u32 8, %s19
      %v238 = vld [vmem:[%s220] sm:$0xf]
      %v239 = vld [vmem:[%s220 + $0x4] sm:$0xf]
      %v240 = vld [vmem:[%s220 + $0x8] sm:$0xf]
      %v241 = vld [vmem:[%s220 + $0xc] sm:$0xf]
      %v242 = vld [vmem:[%s220 + $0x10] sm:$0xf]
      %v243 = vld [vmem:[%s220 + $0x14] sm:$0xf]
      %v244 = vld [vmem:[%s220 + $0x18] sm:$0xf]
      %v245 = vld [vmem:[%s220 + $0x1c] sm:$0xf]
      %v246 = vunpack.c.l.bf16 %v238
      %v247 = vunpack.c.l.bf16 %v239
      %v248 = vunpack.c.l.bf16 %v240
      %v249 = vunpack.c.l.bf16 %v241
      %v250 = vunpack.c.l.bf16 %v242
      %v251 = vunpack.c.l.bf16 %v243
      %v252 = vunpack.c.l.bf16 %v244
      %v253 = vunpack.c.l.bf16 %v245
      %v254 = vld [vmem:[%s224] sm:$0x1]
      %v255 = vmul.f32 %v254, 0.015625
      %v256 = vld [vmem:[%s227] sm:$0x1]
      %v257 = vmul.f32 %v256, 0.015625
      %v258 = vmul.f32 %v255, %v255
      %v259 = vsub.f32 %v257, %v258
      %v260 = vmax.f32 %v259, 0.0
      %v262 = vlaneseq
      %v263 = vshrl.u32 %v262, 7
      %v264 = vsub.s32 0, %v263
      %v265 = vrot.slane %v255, %v264
      %v267 = vsub.f32 %v246, %v265
      %v268 = vsub.f32 %v247, %v265
      %v269 = vsub.f32 %v248, %v265
      %v270 = vsub.f32 %v249, %v265
      %v271 = vsub.f32 %v250, %v265
      %v272 = vsub.f32 %v251, %v265
      %v273 = vsub.f32 %v252, %v265
      %v274 = vsub.f32 %v253, %v265
      %v275 = vadd.f32 %v260, 1e-05
      %v276 = vrsqrt.pop %v275
      %v278 = vlaneseq
      %v279 = vshrl.u32 %v278, 7
      %v280 = vsub.s32 0, %v279
      %v281 = vrot.slane %v276, %v280
      %v283 = vmul.f32 %v267, %v281
      %v284 = vmul.f32 %v268, %v281
      %v285 = vmul.f32 %v269, %v281
      %v286 = vmul.f32 %v270, %v281
      %v287 = vmul.f32 %v271, %v281
      %v288 = vmul.f32 %v272, %v281
      %v289 = vmul.f32 %v273, %v281
      %v290 = vmul.f32 %v274, %v281
      %vm291 = vcmp.ge.f32.partialorder %v283, 0.0
      %vm292 = vcmp.ge.f32.partialorder %v284, 0.0
      %vm293 = vcmp.ge.f32.partialorder %v285, 0.0
      %vm294 = vcmp.ge.f32.partialorder %v286, 0.0
      %vm295 = vcmp.ge.f32.partialorder %v287, 0.0
      %vm296 = vcmp.ge.f32.partialorder %v288, 0.0
      %vm297 = vcmp.ge.f32.partialorder %v289, 0.0
      %vm298 = vcmp.ge.f32.partialorder %v290, 0.0
      %v299 = vmul.f32 %v283, 0.2
      %v300 = vmul.f32 %v284, 0.2
      %v301 = vmul.f32 %v285, 0.2
      %v302 = vmul.f32 %v286, 0.2
      %v303 = vmul.f32 %v287, 0.2
      %v304 = vmul.f32 %v288, 0.2
      %v305 = vmul.f32 %v289, 0.2
      %v306 = vmul.f32 %v290, 0.2
      %v307 = vsel %vm291, %v283, %v299
      %v308 = vsel %vm292, %v284, %v300
      %v309 = vsel %vm293, %v285, %v301
      %v310 = vsel %vm294, %v286, %v302
      %v311 = vsel %vm295, %v287, %v303
      %v312 = vsel %vm296, %v288, %v304
      %v313 = vsel %vm297, %v289, %v305
      %v314 = vsel %vm298, %v290, %v306
      %v315 = vpack.c.bf16 %v308, %v307
      %v316 = vpack.c.bf16 %v310, %v309
      %v317 = vpack.c.bf16 %v312, %v311
      %v318 = vpack.c.bf16 %v314, %v313
      %v323 = vunpack.c.l.b16 %v315
      %v324 = vunpack.c.h.b16 %v315
      %v325 = vunpack.c.l.b16 %v316
      %v326 = vunpack.c.h.b16 %v316
      %v327 = vunpack.c.l.b16 %v317
      %v328 = vunpack.c.h.b16 %v317
      %v329 = vunpack.c.l.b16 %v318
      %v330 = vunpack.c.h.b16 %v318
      %v331 = vpack.c.b16 %v323, %v323
      %v332 = vpack.c.b16 %v324, %v324
      %v333 = vpack.c.b16 %v325, %v325
      %v334 = vpack.c.b16 %v326, %v326
      %v335 = vpack.c.b16 %v327, %v327
      %v336 = vpack.c.b16 %v328, %v328
      %v337 = vpack.c.b16 %v329, %v329
      %v338 = vpack.c.b16 %v330, %v330
      %347 = vst [vmem:[%s236] sm:$0xf] %v331
      %348 = vst [vmem:[%s236 + $0x4] sm:$0xf] %v332
      %349 = vst [vmem:[%s236 + $0x8] sm:$0xf] %v333
      %350 = vst [vmem:[%s236 + $0xc] sm:$0xf] %v334
      %351 = vst [vmem:[%s236 + $0x10] sm:$0xf] %v335
      %352 = vst [vmem:[%s236 + $0x14] sm:$0xf] %v336
      %353 = vst [vmem:[%s236 + $0x18] sm:$0xf] %v337
      %354 = vst [vmem:[%s236 + $0x1c] sm:$0xf] %v338
      %s355 = smul.u32 8, %s19
      %p356 = scmp.lt.s32.totalorder %s18, 1
      %s357 = scalar_select %p356, %s18, 1
      %p358 = scmp.lt.s32.totalorder %s355, 7
      %s359 = scalar_select %p358, %s355, 7
      %s360 = smul.addr %s357, 8
      %s361 = sadd.s32 %s359, %s360
      %s362 = smul.addr %s361, 4
      %s363 = scalar_lea.vmem %s3, %s362
      // Predicated region
      $region33: #{_lambda_.10} parent=31 // pred_check
        %p364 = pneg %p126
      $region34: #{_lambda_.10} parent=31 // pred_check_branch
        %366 = sbr.rel (%p364) target = $region36
      $region35: #{_lambda_.10} parent=31 // pred_region
        %s367 = smul.u32 8, %s19
      $region36: #{_lambda_.10} parent=31 // pred_fallthru
        _
    $region32: #{_lambda_.10} parent=5 // pred_fallthru
      _
    %p368 = scmp.le.s32.totalorder 2, %s9
    // Predicated region
    $region37: #{_lambda_.10} parent=5 // pred_check
      %p369 = pneg %p368
    $region38: #{_lambda_.10} parent=5 // pred_check_branch
      %371 = sbr.rel (%p369) target = $region40
    $region39: #{_lambda_.10} parent=5 // pred_region
      %s372 = ssub.s32 %s9, 2
      // Predicated region
      $region41: #{_lambda_.10} parent=39 // pred_check
        %p373 = pneg %p132
      $region42: #{_lambda_.10} parent=39 // pred_check_branch
        %375 = sbr.rel (%p373) target = $region44
      $region43: #{_lambda_.10} parent=39 // pred_region
        %s376 = smul.u32 8, %s21
        %p377 = scmp.lt.s32.totalorder %s20, 1
        %s378 = scalar_select %p377, %s20, 1
        %p379 = scmp.lt.s32.totalorder %s376, 7
        %s380 = scalar_select %p379, %s376, 7
        %s381 = smul.addr %s378, 8
        %s382 = sadd.s32 %s380, %s381
        %s383 = smul.addr %s382, 4
        %s384 = scalar_lea.vmem %s3, %s383
      $region44: #{_lambda_.10} parent=39 // pred_fallthru
        _
    $region40: #{_lambda_.10} parent=5 // pred_fallthru
      _
  $region6: #{_lambda_.10} parent=0 // loop_footer
    %s13 = sadd.s32 1, %s9
  $region7: #{_lambda_.10} parent=0 // loop_footer_branch
    %8 = sbr.rel target = $region3
  $region8: #{_lambda_.10} parent=0 // loop_exit
    _

// kernel: _lambda_.9
$region0: #{_lambda_.9}
  #allocation0 [shape = 'u32[]', space=smem, size = 0x4, offset = 0x4, fixed_abs, tag = 'smem constant byte address 0x4 - core index']
  #allocation1 [shape = 'u32[144,128]{1,0:T(1,128)}', space=vmem, size = 0x12000, scoped, tag = 'internal scratch']
  %s0 = inlined_call_operand.vmem [shape: bf16[2,8,16,2048], index: 0, kind: input, shape index: {}]
  %s1 = inlined_call_operand.vmem [shape: bf16[1,2048,128], index: 1, kind: input, shape index: {}]
  %s2 = inlined_call_operand.vmem [shape: f32[1,128], index: 2, kind: input, shape index: {}]
  %s3 = inlined_call_operand.vmem [shape: bf16[2,128,128], index: 3, kind: output, shape index: {0}]
  %s4 = inlined_call_operand.vmem [shape: f32[2,1,128], index: 4, kind: output, shape index: {1}]
  %s5 = inlined_call_operand.vmem [shape: f32[2,1,128], index: 5, kind: output, shape index: {2}]
  %6 = xla_tuple %s3, %s4, %s5
  %s7 = sld [smem:[#allocation0]]
  $region65: #{_lambda_.9} parent=0
    _
  %s9 = ssub.s32 1, %s7
  %s10 = scalar_select 0, %s9, %s7
  loop: start=0, step=1, limit=4
  $region2: #{_lambda_.9} parent=0 // loop_pre_header
    _
  $region3: #{_lambda_.9} parent=0 // loop_header
    %s12 = sphi 0, %s16
    %p13 = scmp.ge.s32.totalorder %s12, 4
    %s19 = sphi 0, %s38
    %s20 = sphi 0, %s34
    %s21 = sphi 0, %s30
    %s22 = sphi 0, %s19
    %s23 = sphi 0, %s20
    %s24 = sphi 0, %s21
    %s25 = sphi 0, %s22
    %s26 = sphi 0, %s23
    %s27 = sphi 0, %s24
    %s41 = sphi 0, %s43
    %s44 = sphi 0, %s41
    %s45 = sphi 0, %s44
    %s61 = sphi 0, %s45
    %s67 = sphi 0, %s69
    %s70 = sphi 0, %s67
    %s71 = sphi 0, %s70
    %s87 = sphi 0, %s71
    %s93 = sphi 0, %s95
    %s96 = sphi 0, %s93
    %s97 = sphi 0, %s96
    %s113 = sphi 0, %s97
    %s123 = sphi 0, %s125
    %s126 = sphi 0, %s123
    %s127 = sphi 0, %s126
    %s143 = sphi 0, %s127
    %s151 = sphi 0, %s153
    %s154 = sphi 0, %s151
    %s155 = sphi 0, %s154
    %s171 = sphi 0, %s155
    %s179 = sphi 0, %s181
    %s182 = sphi 0, %s179
    %s183 = sphi 0, %s182
    %s199 = sphi 0, %s183
  $region4: #{_lambda_.9} parent=0 // loop_header_branch
    %15 = sbr.rel (%p13) target = $region8
  $region5: #{_lambda_.9} parent=0 // loop_body
    %s17 = ssub.s32 %s12, 1
    %s18 = ssub.s32 %s12, 2
    %s28 = sadd.s32 1, %s21
    %p29 = scmp.ge.s32.totalorder %s28, 1
    %s30 = scalar_select %p29, 0, %s28
    %s31 = sadd.s32 1, %s20
    %s32 = scalar_select %p29, %s31, %s20
    %p33 = scmp.ge.s32.totalorder %s32, 1
    %s34 = scalar_select %p33, 0, %s32
    %s35 = sadd.s32 1, %s19
    %s36 = scalar_select %p33, %s35, %s19
    %p37 = scmp.ge.s32.totalorder %s36, 2
    %s38 = scalar_select %p37, 0, %s36
    %s39 = ssub.s32 %s19, %s38
    %p40 = scmp.eq.s32.totalorder %s39, 0
    %s42 = sadd.s32 %s41, 1
    %s43 = scalar_select %p40, %s41, %s42
    %p46 = pneg %p40
    %p47 = scmp.eq.s32.totalorder %s12, 1
    %p48 = por %p46, %p47
    %p49 = scmp.ne.s32.totalorder %s41, %s44
    %p50 = scmp.eq.s32.totalorder %s12, 0
    %p51 = por %p49, %p50
    %p52 = scmp.ne.s32.totalorder %s41, %s44
    %p53 = scmp.eq.s32.totalorder %s17, 1
    %p54 = por %p52, %p53
    %p55 = scmp.ne.s32.totalorder %s44, %s45
    %p56 = scmp.eq.s32.totalorder %s17, 0
    %p57 = por %p55, %p56
    %p58 = scmp.ne.s32.totalorder %s44, %s45
    %p59 = scmp.eq.s32.totalorder %s18, 1
    %p60 = por %p58, %p59
    %p62 = scmp.ne.s32.totalorder %s45, %s61
    %p63 = scmp.eq.s32.totalorder %s18, 0
    %p64 = por %p62, %p63
    %s65 = ssub.s32 %s20, %s34
    %p66 = scmp.eq.s32.totalorder %s65, 0
    %s68 = sadd.s32 %s67, 1
    %s69 = scalar_select %p66, %s67, %s68
    %p72 = pneg %p66
    %p73 = scmp.eq.s32.totalorder %s12, 1
    %p74 = por %p72, %p73
    %p75 = scmp.ne.s32.totalorder %s67, %s70
    %p76 = scmp.eq.s32.totalorder %s12, 0
    %p77 = por %p75, %p76
    %p78 = scmp.ne.s32.totalorder %s67, %s70
    %p79 = scmp.eq.s32.totalorder %s17, 1
    %p80 = por %p78, %p79
    %p81 = scmp.ne.s32.totalorder %s70, %s71
    %p82 = scmp.eq.s32.totalorder %s17, 0
    %p83 = por %p81, %p82
    %p84 = scmp.ne.s32.totalorder %s70, %s71
    %p85 = scmp.eq.s32.totalorder %s18, 1
    %p86 = por %p84, %p85
    %p88 = scmp.ne.s32.totalorder %s71, %s87
    %p89 = scmp.eq.s32.totalorder %s18, 0
    %p90 = por %p88, %p89
    %s91 = ssub.s32 %s20, %s34
    %p92 = scmp.eq.s32.totalorder %s91, 0
    %s94 = sadd.s32 %s93, 1
    %s95 = scalar_select %p92, %s93, %s94
    %p98 = pneg %p92
    %p99 = scmp.eq.s32.totalorder %s12, 1
    %p100 = por %p98, %p99
    %p101 = scmp.ne.s32.totalorder %s93, %s96
    %p102 = scmp.eq.s32.totalorder %s12, 0
    %p103 = por %p101, %p102
    %p104 = scmp.ne.s32.totalorder %s93, %s96
    %p105 = scmp.eq.s32.totalorder %s17, 1
    %p106 = por %p104, %p105
    %p107 = scmp.ne.s32.totalorder %s96, %s97
    %p108 = scmp.eq.s32.totalorder %s17, 0
    %p109 = por %p107, %p108
    %p110 = scmp.ne.s32.totalorder %s96, %s97
    %p111 = scmp.eq.s32.totalorder %s18, 1
    %p112 = por %p110, %p111
    %p114 = scmp.ne.s32.totalorder %s97, %s113
    %p115 = scmp.eq.s32.totalorder %s18, 0
    %p116 = por %p114, %p115
    %s117 = ssub.s32 %s19, %s38
    %s118 = ssub.s32 %s21, %s30
    %s119 = sor.u32 %s117, %s118
    %s120 = ssub.s32 %s20, %s34
    %s121 = sor.u32 %s119, %s120
    %p122 = scmp.eq.s32.totalorder %s121, 0
    %s124 = sadd.s32 %s123, 1
    %s125 = scalar_select %p122, %s123, %s124
    %p128 = pneg %p122
    %p129 = scmp.eq.s32.totalorder %s12, 1
    %p130 = por %p128, %p129
    %p131 = scmp.ne.s32.totalorder %s123, %s126
    %p132 = scmp.eq.s32.totalorder %s12, 0
    %p133 = por %p131, %p132
    %p134 = scmp.ne.s32.totalorder %s123, %s126
    %p135 = scmp.eq.s32.totalorder %s17, 1
    %p136 = por %p134, %p135
    %p137 = scmp.ne.s32.totalorder %s126, %s127
    %p138 = scmp.eq.s32.totalorder %s17, 0
    %p139 = por %p137, %p138
    %p140 = scmp.ne.s32.totalorder %s126, %s127
    %p141 = scmp.eq.s32.totalorder %s18, 1
    %p142 = por %p140, %p141
    %p144 = scmp.ne.s32.totalorder %s127, %s143
    %p145 = scmp.eq.s32.totalorder %s18, 0
    %p146 = por %p144, %p145
    %s147 = ssub.s32 %s19, %s38
    %s148 = ssub.s32 %s20, %s34
    %s149 = sor.u32 %s147, %s148
    %p150 = scmp.eq.s32.totalorder %s149, 0
    %s152 = sadd.s32 %s151, 1
    %s153 = scalar_select %p150, %s151, %s152
    %p156 = pneg %p150
    %p157 = scmp.eq.s32.totalorder %s12, 1
    %p158 = por %p156, %p157
    %p159 = scmp.ne.s32.totalorder %s151, %s154
    %p160 = scmp.eq.s32.totalorder %s12, 0
    %p161 = por %p159, %p160
    %p162 = scmp.ne.s32.totalorder %s151, %s154
    %p163 = scmp.eq.s32.totalorder %s17, 1
    %p164 = por %p162, %p163
    %p165 = scmp.ne.s32.totalorder %s154, %s155
    %p166 = scmp.eq.s32.totalorder %s17, 0
    %p167 = por %p165, %p166
    %p168 = scmp.ne.s32.totalorder %s154, %s155
    %p169 = scmp.eq.s32.totalorder %s18, 1
    %p170 = por %p168, %p169
    %p172 = scmp.ne.s32.totalorder %s155, %s171
    %p173 = scmp.eq.s32.totalorder %s18, 0
    %p174 = por %p172, %p173
    %s175 = ssub.s32 %s19, %s38
    %s176 = ssub.s32 %s20, %s34
    %s177 = sor.u32 %s175, %s176
    %p178 = scmp.eq.s32.totalorder %s177, 0
    %s180 = sadd.s32 %s179, 1
    %s181 = scalar_select %p178, %s179, %s180
    %p184 = pneg %p178
    %p185 = scmp.eq.s32.totalorder %s12, 1
    %p186 = por %p184, %p185
    %p187 = scmp.ne.s32.totalorder %s179, %s182
    %p188 = scmp.eq.s32.totalorder %s12, 0
    %p189 = por %p187, %p188
    %p190 = scmp.ne.s32.totalorder %s179, %s182
    %p191 = scmp.eq.s32.totalorder %s17, 1
    %p192 = por %p190, %p191
    %p193 = scmp.ne.s32.totalorder %s182, %s183
    %p194 = scmp.eq.s32.totalorder %s17, 0
    %p195 = por %p193, %p194
    %p196 = scmp.ne.s32.totalorder %s182, %s183
    %p197 = scmp.eq.s32.totalorder %s18, 1
    %p198 = por %p196, %p197
    %p200 = scmp.ne.s32.totalorder %s183, %s199
    %p201 = scmp.eq.s32.totalorder %s18, 0
    %p202 = por %p200, %p201
    %p203 = scmp.le.s32.totalorder 1, %s12
    %p204 = scmp.lt.s32.totalorder %s12, 3
    %p205 = pnand %p203, %p204
    %p206 = pneg %p205
    // Predicated region
    $region9: #{_lambda_.9} parent=5 // pred_check
      _
    $region10: #{_lambda_.9} parent=5 // pred_check_branch
      %208 = sbr.rel (%p205) target = $region12
    $region11: #{_lambda_.9} parent=5 // pred_region
      %s209 = ssub.s32 %s12, 1
      // Predicated region
      $region13: #{_lambda_.9} parent=11 // pred_check
        %p210 = pneg %p83
      $region14: #{_lambda_.9} parent=11 // pred_check_branch
        %212 = sbr.rel (%p210) target = $region16
      $region15: #{_lambda_.9} parent=11 // pred_region
        %p213 = scmp.lt.s32.totalorder %s23, 0
        %s214 = scalar_select %p213, %s23, 0
        %s215 = smul.addr %s214, 4
        %s216 = scalar_lea.vmem %s1, %s215
      $region16: #{_lambda_.9} parent=11 // pred_fallthru
        _
      // Predicated region
      $region17: #{_lambda_.9} parent=11 // pred_check
        %p217 = pneg %p109
      $region18: #{_lambda_.9} parent=11 // pred_check_branch
        %219 = sbr.rel (%p217) target = $region20
      $region19: #{_lambda_.9} parent=11 // pred_region
        %p220 = scmp.lt.s32.totalorder %s23, 0
        %s221 = scalar_select %p220, %s23, 0
        %s222 = scalar_lea.vmem %s2, %s221
      $region20: #{_lambda_.9} parent=11 // pred_fallthru
        _
    $region12: #{_lambda_.9} parent=5 // pred_fallthru
      _
    %p223 = scmp.lt.s32.totalorder %s12, 2
    // Predicated region
    $region21: #{_lambda_.9} parent=5 // pred_check
      %p224 = pneg %p223
    $region22: #{_lambda_.9} parent=5 // pred_check_branch
      %226 = sbr.rel (%p224) target = $region24
    $region23: #{_lambda_.9} parent=5 // pred_region
      // Predicated region
      $region25: #{_lambda_.9} parent=23 // pred_check
        %p227 = pneg %p51
      $region26: #{_lambda_.9} parent=23 // pred_check_branch
        %229 = sbr.rel (%p227) target = $region28
      $region27: #{_lambda_.9} parent=23 // pred_region
        %p230 = scmp.lt.s32.totalorder %s19, 1
        %s231 = scalar_select %p230, %s19, 1
        %s232 = smul.addr %s231, 256
        %s233 = smul.addr %s232, 4
        %s234 = scalar_lea.vmem %s0, %s233
      $region28: #{_lambda_.9} parent=23 // pred_fallthru
        _
    $region24: #{_lambda_.9} parent=5 // pred_fallthru
      _
    %p235 = scmp.le.s32.totalorder 1, %s12
    %p236 = scmp.lt.s32.totalorder %s12, 3
    %p237 = pnand %p235, %p236
    %p238 = pneg %p237
    // Predicated region
    $region29: #{_lambda_.9} parent=5 // pred_check
      _
    $region30: #{_lambda_.9} parent=5 // pred_check_branch
      %240 = sbr.rel (%p237) target = $region32
    $region31: #{_lambda_.9} parent=5 // pred_region
      %s241 = ssub.s32 %s12, 1
      %p242 = scmp.lt.s32.totalorder %s22, 1
      %s243 = scalar_select %p242, %s22, 1
      %s244 = smul.addr %s243, 256
      %s245 = smul.addr %s244, 4
      %s246 = scalar_lea.vmem %s0, %s245
      %p247 = pneg %p57
      %p248 = pneg %p54
      %p249 = scmp.lt.s32.totalorder %s23, 0
      %s250 = scalar_select %p249, %s23, 0
      %s251 = smul.addr %s250, 4
      %s252 = scalar_lea.vmem %s1, %s251
      %p253 = pneg %p83
      %p254 = pneg %p80
      %p255 = scmp.lt.s32.totalorder %s23, 0
      %s256 = scalar_select %p255, %s23, 0
      %s257 = scalar_lea.vmem %s2, %s256
      %p258 = pneg %p109
      %p259 = pneg %p106
      %p260 = pneg %p139
      %p261 = pneg %p136
      %s262 = smul.u32 16, %s24
      %p263 = scmp.lt.s32.totalorder %s22, 1
      %s264 = scalar_select %p263, %s22, 1
      %p265 = scmp.lt.s32.totalorder %s262, 15
      %s266 = scalar_select %p265, %s262, 15
      %p267 = scmp.lt.s32.totalorder %s23, 0
      %s268 = scalar_select %p267, %s23, 0
      %s269 = sadd.s32 %s268, %s266
      %s270 = smul.addr %s264, 16
      %s271 = sadd.s32 %s269, %s270
      %s272 = smul.addr %s271, 4
      %s273 = scalar_lea.vmem %s3, %s272
      %p274 = pneg %p167
      %p275 = pneg %p164
      %p276 = scmp.lt.s32.totalorder %s22, 1
      %s277 = scalar_select %p276, %s22, 1
      %p278 = scmp.lt.s32.totalorder %s23, 0
      %s279 = scalar_select %p278, %s23, 0
      %s280 = sadd.s32 %s279, %s277
      %s281 = scalar_lea.vmem %s4, %s280
      %p282 = pneg %p195
      %p283 = pneg %p192
      %p284 = scmp.lt.s32.totalorder %s22, 1
      %s285 = scalar_select %p284, %s22, 1
      %p286 = scmp.lt.s32.totalorder %s23, 0
      %s287 = scalar_select %p286, %s23, 0
      %s288 = sadd.s32 %s287, %s285
      %s289 = scalar_lea.vmem %s5, %s288
      %p290 = scmp.lt.s32.totalorder %s22, 1
      %s291 = scalar_select %p290, %s22, 1
      %s292 = smul.addr %s291, 256
      %s293 = smul.addr %s292, 4
      %s294 = scalar_lea.vmem %s0, %s293
      %p295 = scmp.lt.s32.totalorder %s23, 0
      %s296 = scalar_select %p295, %s23, 0
      %s297 = smul.addr %s296, 4
      %s298 = scalar_lea.vmem %s1, %s297
      %p299 = scmp.lt.s32.totalorder %s23, 0
      %s300 = scalar_select %p299, %s23, 0
      %s301 = scalar_lea.vmem %s2, %s300
      %s302 = smul.u32 16, %s24
      %p303 = scmp.lt.s32.totalorder %s22, 1
      %s304 = scalar_select %p303, %s22, 1
      %p305 = scmp.lt.s32.totalorder %s302, 15
      %s306 = scalar_select %p305, %s302, 15
      %p307 = scmp.lt.s32.totalorder %s23, 0
      %s308 = scalar_select %p307, %s23, 0
      %s309 = sadd.s32 %s308, %s306
      %s310 = smul.addr %s304, 16
      %s311 = sadd.s32 %s309, %s310
      %s312 = smul.addr %s311, 4
      %s313 = scalar_lea.vmem %s3, %s312
      %s314 = smul.u32 16, %s24
      %p315 = scmp.lt.s32.totalorder %s22, 1
      %s316 = scalar_select %p315, %s22, 1
      %p317 = scmp.lt.s32.totalorder %s23, 0
      %s318 = scalar_select %p317, %s23, 0
      %s319 = sadd.s32 %s318, %s316
      %s320 = scalar_lea.vmem %s4, %s319
      %p321 = scmp.lt.s32.totalorder %s22, 1
      %s322 = scalar_select %p321, %s22, 1
      %p323 = scmp.lt.s32.totalorder %s23, 0
      %s324 = scalar_select %p323, %s23, 0
      %s325 = sadd.s32 %s324, %s322
      %s326 = scalar_lea.vmem %s5, %s325
      %s328 = smul.u32 %s24, 8
      %s329 = smul.u32 %s328, 32
      %s330 = smul.addr %s329, 4
      %s331 = scalar_lea.vmem %s294, %s330
      %v332 = vld [vmem:[%s331] sm:$0xff]
      %v333 = vld [vmem:[%s331 + $0x8] sm:$0xff]
      %v334 = vld [vmem:[%s331 + $0x10] sm:$0xff]
      %v335 = vld [vmem:[%s331 + $0x18] sm:$0xff]
      %v336 = vld [vmem:[%s331 + $0x20] sm:$0xff]
      %v337 = vld [vmem:[%s331 + $0x28] sm:$0xff]
      %v338 = vld [vmem:[%s331 + $0x30] sm:$0xff]
      %v339 = vld [vmem:[%s331 + $0x38] sm:$0xff]
      %v340 = vld [vmem:[%s331 + $0x40] sm:$0xff]
      %v341 = vld [vmem:[%s331 + $0x48] sm:$0xff]
      %v342 = vld [vmem:[%s331 + $0x50] sm:$0xff]
      %v343 = vld [vmem:[%s331 + $0x58] sm:$0xff]
      %v344 = vld [vmem:[%s331 + $0x60] sm:$0xff]
      %v345 = vld [vmem:[%s331 + $0x68] sm:$0xff]
      %v346 = vld [vmem:[%s331 + $0x70] sm:$0xff]
      %v347 = vld [vmem:[%s331 + $0x78] sm:$0xff]
      %v348 = vld [vmem:[%s331 + $0x80] sm:$0xff]
      %v349 = vld [vmem:[%s331 + $0x88] sm:$0xff]
      %v350 = vld [vmem:[%s331 + $0x90] sm:$0xff]
      %v351 = vld [vmem:[%s331 + $0x98] sm:$0xff]
      %v352 = vld [vmem:[%s331 + $0xa0] sm:$0xff]
      %v353 = vld [vmem:[%s331 + $0xa8] sm:$0xff]
      %v354 = vld [vmem:[%s331 + $0xb0] sm:$0xff]
      %v355 = vld [vmem:[%s331 + $0xb8] sm:$0xff]
      %v356 = vld [vmem:[%s331 + $0xc0] sm:$0xff]
      %v357 = vld [vmem:[%s331 + $0xc8] sm:$0xff]
      %v358 = vld [vmem:[%s331 + $0xd0] sm:$0xff]
      %v359 = vld [vmem:[%s331 + $0xd8] sm:$0xff]
      %v360 = vld [vmem:[%s331 + $0xe0] sm:$0xff]
      %v361 = vld [vmem:[%s331 + $0xe8] sm:$0xff]
      %v362 = vld [vmem:[%s331 + $0xf0] sm:$0xff]
      %v363 = vld [vmem:[%s331 + $0xf8] sm:$0xff]
      %v364 = vld [vmem:[%s331 + $0x100] sm:$0xff]
      %v365 = vld [vmem:[%s331 + $0x108] sm:$0xff]
      %v366 = vld [vmem:[%s331 + $0x110] sm:$0xff]
      %v367 = vld [vmem:[%s331 + $0x118] sm:$0xff]
      %v368 = vld [vmem:[%s331 + $0x120] sm:$0xff]
      %v369 = vld [vmem:[%s331 + $0x128] sm:$0xff]
      %v370 = vld [vmem:[%s331 + $0x130] sm:$0xff]
      %v371 = vld [vmem:[%s331 + $0x138] sm:$0xff]
      %v372 = vld [vmem:[%s331 + $0x140] sm:$0xff]
      %v373 = vld [vmem:[%s331 + $0x148] sm:$0xff]
      %v374 = vld [vmem:[%s331 + $0x150] sm:$0xff]
      %v375 = vld [vmem:[%s331 + $0x158] sm:$0xff]
      %v376 = vld [vmem:[%s331 + $0x160] sm:$0xff]
      %v377 = vld [vmem:[%s331 + $0x168] sm:$0xff]
      %v378 = vld [vmem:[%s331 + $0x170] sm:$0xff]
      %v379 = vld [vmem:[%s331 + $0x178] sm:$0xff]
      %v380 = vld [vmem:[%s331 + $0x180] sm:$0xff]
      %v381 = vld [vmem:[%s331 + $0x188] sm:$0xff]
      %v382 = vld [vmem:[%s331 + $0x190] sm:$0xff]
      %v383 = vld [vmem:[%s331 + $0x198] sm:$0xff]
      %v384 = vld [vmem:[%s331 + $0x1a0] sm:$0xff]
      %v385 = vld [vmem:[%s331 + $0x1a8] sm:$0xff]
      %v386 = vld [vmem:[%s331 + $0x1b0] sm:$0xff]
      %v387 = vld [vmem:[%s331 + $0x1b8] sm:$0xff]
      %v388 = vld [vmem:[%s331 + $0x1c0] sm:$0xff]
      %v389 = vld [vmem:[%s331 + $0x1c8] sm:$0xff]
      %v390 = vld [vmem:[%s331 + $0x1d0] sm:$0xff]
      %v391 = vld [vmem:[%s331 + $0x1d8] sm:$0xff]
      %v392 = vld [vmem:[%s331 + $0x1e0] sm:$0xff]
      %v393 = vld [vmem:[%s331 + $0x1e8] sm:$0xff]
      %v394 = vld [vmem:[%s331 + $0x1f0] sm:$0xff]
      %v395 = vld [vmem:[%s331 + $0x1f8] sm:$0xff]
      %v396 = vld [vmem:[%s331 + $0x200] sm:$0xff]
      %v397 = vld [vmem:[%s331 + $0x208] sm:$0xff]
      %v398 = vld [vmem:[%s331 + $0x210] sm:$0xff]
      %v399 = vld [vmem:[%s331 + $0x218] sm:$0xff]
      %v400 = vld [vmem:[%s331 + $0x220] sm:$0xff]
      %v401 = vld [vmem:[%s331 + $0x228] sm:$0xff]
      %v402 = vld [vmem:[%s331 + $0x230] sm:$0xff]
      %v403 = vld [vmem:[%s331 + $0x238] sm:$0xff]
      %v404 = vld [vmem:[%s331 + $0x240] sm:$0xff]
      %v405 = vld [vmem:[%s331 + $0x248] sm:$0xff]
      %v406 = vld [vmem:[%s331 + $0x250] sm:$0xff]
      %v407 = vld [vmem:[%s331 + $0x258] sm:$0xff]
      %v408 = vld [vmem:[%s331 + $0x260] sm:$0xff]
      %v409 = vld [vmem:[%s331 + $0x268] sm:$0xff]
      %v410 = vld [vmem:[%s331 + $0x270] sm:$0xff]
      %v411 = vld [vmem:[%s331 + $0x278] sm:$0xff]
      %v412 = vld [vmem:[%s331 + $0x280] sm:$0xff]
      %v413 = vld [vmem:[%s331 + $0x288] sm:$0xff]
      %v414 = vld [vmem:[%s331 + $0x290] sm:$0xff]
      %v415 = vld [vmem:[%s331 + $0x298] sm:$0xff]
      %v416 = vld [vmem:[%s331 + $0x2a0] sm:$0xff]
      %v417 = vld [vmem:[%s331 + $0x2a8] sm:$0xff]
      %v418 = vld [vmem:[%s331 + $0x2b0] sm:$0xff]
      %v419 = vld [vmem:[%s331 + $0x2b8] sm:$0xff]
      %v420 = vld [vmem:[%s331 + $0x2c0] sm:$0xff]
      %v421 = vld [vmem:[%s331 + $0x2c8] sm:$0xff]
      %v422 = vld [vmem:[%s331 + $0x2d0] sm:$0xff]
      %v423 = vld [vmem:[%s331 + $0x2d8] sm:$0xff]
      %v424 = vld [vmem:[%s331 + $0x2e0] sm:$0xff]
      %v425 = vld [vmem:[%s331 + $0x2e8] sm:$0xff]
      %v426 = vld [vmem:[%s331 + $0x2f0] sm:$0xff]
      %v427 = vld [vmem:[%s331 + $0x2f8] sm:$0xff]
      %v428 = vld [vmem:[%s331 + $0x300] sm:$0xff]
      %v429 = vld [vmem:[%s331 + $0x308] sm:$0xff]
      %v430 = vld [vmem:[%s331 + $0x310] sm:$0xff]
      %v431 = vld [vmem:[%s331 + $0x318] sm:$0xff]
      %v432 = vld [vmem:[%s331 + $0x320] sm:$0xff]
      %v433 = vld [vmem:[%s331 + $0x328] sm:$0xff]
      %v434 = vld [vmem:[%s331 + $0x330] sm:$0xff]
      %v435 = vld [vmem:[%s331 + $0x338] sm:$0xff]
      %v436 = vld [vmem:[%s331 + $0x340] sm:$0xff]
      %v437 = vld [vmem:[%s331 + $0x348] sm:$0xff]
      %v438 = vld [vmem:[%s331 + $0x350] sm:$0xff]
      %v439 = vld [vmem:[%s331 + $0x358] sm:$0xff]
      %v440 = vld [vmem:[%s331 + $0x360] sm:$0xff]
      %v441 = vld [vmem:[%s331 + $0x368] sm:$0xff]
      %v442 = vld [vmem:[%s331 + $0x370] sm:$0xff]
      %v443 = vld [vmem:[%s331 + $0x378] sm:$0xff]
      %v444 = vld [vmem:[%s331 + $0x380] sm:$0xff]
      %v445 = vld [vmem:[%s331 + $0x388] sm:$0xff]
      %v446 = vld [vmem:[%s331 + $0x390] sm:$0xff]
      %v447 = vld [vmem:[%s331 + $0x398] sm:$0xff]
      %v448 = vld [vmem:[%s331 + $0x3a0] sm:$0xff]
      %v449 = vld [vmem:[%s331 + $0x3a8] sm:$0xff]
      %v450 = vld [vmem:[%s331 + $0x3b0] sm:$0xff]
      %v451 = vld [vmem:[%s331 + $0x3b8] sm:$0xff]
      %v452 = vld [vmem:[%s331 + $0x3c0] sm:$0xff]
      %v453 = vld [vmem:[%s331 + $0x3c8] sm:$0xff]
      %v454 = vld [vmem:[%s331 + $0x3d0] sm:$0xff]
      %v455 = vld [vmem:[%s331 + $0x3d8] sm:$0xff]
      %v456 = vld [vmem:[%s331 + $0x3e0] sm:$0xff]
      %v457 = vld [vmem:[%s331 + $0x3e8] sm:$0xff]
      %v458 = vld [vmem:[%s331 + $0x3f0] sm:$0xff]
      %v459 = vld [vmem:[%s331 + $0x3f8] sm:$0xff]
      %v460 = vld [vmem:[%s298] sm:$0xf]
      %v461 = vld [vmem:[%s298 + $0x4] sm:$0xf]
      %v462 = vld [vmem:[%s298 + $0x8] sm:$0xf]
      %v463 = vld [vmem:[%s298 + $0xc] sm:$0xf]
      %v464 = vld [vmem:[%s298 + $0x10] sm:$0xf]
      %v465 = vld [vmem:[%s298 + $0x14] sm:$0xf]
      %v466 = vld [vmem:[%s298 + $0x18] sm:$0xf]
      %v467 = vld [vmem:[%s298 + $0x1c] sm:$0xf]
      %v468 = vld [vmem:[%s298 + $0x20] sm:$0xf]
      %v469 = vld [vmem:[%s298 + $0x24] sm:$0xf]
      %v470 = vld [vmem:[%s298 + $0x28] sm:$0xf]
      %v471 = vld [vmem:[%s298 + $0x2c] sm:$0xf]
      %v472 = vld [vmem:[%s298 + $0x30] sm:$0xf]
      %v473 = vld [vmem:[%s298 + $0x34] sm:$0xf]
      %v474 = vld [vmem:[%s298 + $0x38] sm:$0xf]
      %v475 = vld [vmem:[%s298 + $0x3c] sm:$0xf]
      %v476 = vld [vmem:[%s298 + $0x40] sm:$0xf]
      %v477 = vld [vmem:[%s298 + $0x44] sm:$0xf]
      %v478 = vld [vmem:[%s298 + $0x48] sm:$0xf]
      %v479 = vld [vmem:[%s298 + $0x4c] sm:$0xf]
      %v480 = vld [vmem:[%s298 + $0x50] sm:$0xf]
      %v481 = vld [vmem:[%s298 + $0x54] sm:$0xf]
      %v482 = vld [vmem:[%s298 + $0x58] sm:$0xf]
      %v483 = vld [vmem:[%s298 + $0x5c] sm:$0xf]
      %v484 = vld [vmem:[%s298 + $0x60] sm:$0xf]
      %v485 = vld [vmem:[%s298 + $0x64] sm:$0xf]
      %v486 = vld [vmem:[%s298 + $0x68] sm:$0xf]
      %v487 = vld [vmem:[%s298 + $0x6c] sm:$0xf]
      %v488 = vld [vmem:[%s298 + $0x70] sm:$0xf]
      %v489 = vld [vmem:[%s298 + $0x74] sm:$0xf]
      %v490 = vld [vmem:[%s298 + $0x78] sm:$0xf]
      %v491 = vld [vmem:[%s298 + $0x7c] sm:$0xf]
      %v492 = vld [vmem:[%s298 + $0x80] sm:$0xf]
      %v493 = vld [vmem:[%s298 + $0x84] sm:$0xf]
      %v494 = vld [vmem:[%s298 + $0x88] sm:$0xf]
      %v495 = vld [vmem:[%s298 + $0x8c] sm:$0xf]
      %v496 = vld [vmem:[%s298 + $0x90] sm:$0xf]
      %v497 = vld [vmem:[%s298 + $0x94] sm:$0xf]
      %v498 = vld [vmem:[%s298 + $0x98] sm:$0xf]
      %v499 = vld [vmem:[%s298 + $0x9c] sm:$0xf]
      %v500 = vld [vmem:[%s298 + $0xa0] sm:$0xf]
      %v501 = vld [vmem:[%s298 + $0xa4] sm:$0xf]
      %v502 = vld [vmem:[%s298 + $0xa8] sm:$0xf]
      %v503 = vld [vmem:[%s298 + $0xac] sm:$0xf]
      %v504 = vld [vmem:[%s298 + $0xb0] sm:$0xf]
      %v505 = vld [vmem:[%s298 + $0xb4] sm:$0xf]
      %v506 = vld [vmem:[%s298 + $0xb8] sm:$0xf]
      %v507 = vld [vmem:[%s298 + $0xbc] sm:$0xf]
      %v508 = vld [vmem:[%s298 + $0xc0] sm:$0xf]
      %v509 = vld [vmem:[%s298 + $0xc4] sm:$0xf]
      %v510 = vld [vmem:[%s298 + $0xc8] sm:$0xf]
      %v511 = vld [vmem:[%s298 + $0xcc] sm:$0xf]
      %v512 = vld [vmem:[%s298 + $0xd0] sm:$0xf]
      %v513 = vld [vmem:[%s298 + $0xd4] sm:$0xf]
      %v514 = vld [vmem:[%s298 + $0xd8] sm:$0xf]
      %v515 = vld [vmem:[%s298 + $0xdc] sm:$0xf]
      %v516 = vld [vmem:[%s298 + $0xe0] sm:$0xf]
      %v517 = vld [vmem:[%s298 + $0xe4] sm:$0xf]
      %v518 = vld [vmem:[%s298 + $0xe8] sm:$0xf]
      %v519 = vld [vmem:[%s298 + $0xec] sm:$0xf]
      %v520 = vld [vmem:[%s298 + $0xf0] sm:$0xf]
      %v521 = vld [vmem:[%s298 + $0xf4] sm:$0xf]
      %v522 = vld [vmem:[%s298 + $0xf8] sm:$0xf]
      %v523 = vld [vmem:[%s298 + $0xfc] sm:$0xf]
      %v524 = vld [vmem:[%s298 + $0x100] sm:$0xf]
      %v525 = vld [vmem:[%s298 + $0x104] sm:$0xf]
      %v526 = vld [vmem:[%s298 + $0x108] sm:$0xf]
      %v527 = vld [vmem:[%s298 + $0x10c] sm:$0xf]
      %v528 = vld [vmem:[%s298 + $0x110] sm:$0xf]
      %v529 = vld [vmem:[%s298 + $0x114] sm:$0xf]
      %v530 = vld [vmem:[%s298 + $0x118] sm:$0xf]
      %v531 = vld [vmem:[%s298 + $0x11c] sm:$0xf]
      %v532 = vld [vmem:[%s298 + $0x120] sm:$0xf]
      %v533 = vld [vmem:[%s298 + $0x124] sm:$0xf]
      %v534 = vld [vmem:[%s298 + $0x128] sm:$0xf]
      %v535 = vld [vmem:[%s298 + $0x12c] sm:$0xf]
      %v536 = vld [vmem:[%s298 + $0x130] sm:$0xf]
      %v537 = vld [vmem:[%s298 + $0x134] sm:$0xf]
      %v538 = vld [vmem:[%s298 + $0x138] sm:$0xf]
      %v539 = vld [vmem:[%s298 + $0x13c] sm:$0xf]
      %v540 = vld [vmem:[%s298 + $0x140] sm:$0xf]
      %v541 = vld [vmem:[%s298 + $0x144] sm:$0xf]
      %v542 = vld [vmem:[%s298 + $0x148] sm:$0xf]
      %v543 = vld [vmem:[%s298 + $0x14c] sm:$0xf]
      %v544 = vld [vmem:[%s298 + $0x150] sm:$0xf]
      %v545 = vld [vmem:[%s298 + $0x154] sm:$0xf]
      %v546 = vld [vmem:[%s298 + $0x158] sm:$0xf]
      %v547 = vld [vmem:[%s298 + $0x15c] sm:$0xf]
      %v548 = vld [vmem:[%s298 + $0x160] sm:$0xf]
      %v549 = vld [vmem:[%s298 + $0x164] sm:$0xf]
      %v550 = vld [vmem:[%s298 + $0x168] sm:$0xf]
      %v551 = vld [vmem:[%s298 + $0x16c] sm:$0xf]
      %v552 = vld [vmem:[%s298 + $0x170] sm:$0xf]
      %v553 = vld [vmem:[%s298 + $0x174] sm:$0xf]
      %v554 = vld [vmem:[%s298 + $0x178] sm:$0xf]
      %v555 = vld [vmem:[%s298 + $0x17c] sm:$0xf]
      %v556 = vld [vmem:[%s298 + $0x180] sm:$0xf]
      %v557 = vld [vmem:[%s298 + $0x184] sm:$0xf]
      %v558 = vld [vmem:[%s298 + $0x188] sm:$0xf]
      %v559 = vld [vmem:[%s298 + $0x18c] sm:$0xf]
      %v560 = vld [vmem:[%s298 + $0x190] sm:$0xf]
      %v561 = vld [vmem:[%s298 + $0x194] sm:$0xf]
      %v562 = vld [vmem:[%s298 + $0x198] sm:$0xf]
      %v563 = vld [vmem:[%s298 + $0x19c] sm:$0xf]
      %v564 = vld [vmem:[%s298 + $0x1a0] sm:$0xf]
      %v565 = vld [vmem:[%s298 + $0x1a4] sm:$0xf]
      %v566 = vld [vmem:[%s298 + $0x1a8] sm:$0xf]
      %v567 = vld [vmem:[%s298 + $0x1ac] sm:$0xf]
      %v568 = vld [vmem:[%s298 + $0x1b0] sm:$0xf]
      %v569 = vld [vmem:[%s298 + $0x1b4] sm:$0xf]
      %v570 = vld [vmem:[%s298 + $0x1b8] sm:$0xf]
      %v571 = vld [vmem:[%s298 + $0x1bc] sm:$0xf]
      %v572 = vld [vmem:[%s298 + $0x1c0] sm:$0xf]
      %v573 = vld [vmem:[%s298 + $0x1c4] sm:$0xf]
      %v574 = vld [vmem:[%s298 + $0x1c8] sm:$0xf]
      %v575 = vld [vmem:[%s298 + $0x1cc] sm:$0xf]
      %v576 = vld [vmem:[%s298 + $0x1d0] sm:$0xf]
      %v577 = vld [vmem:[%s298 + $0x1d4] sm:$0xf]
      %v578 = vld [vmem:[%s298 + $0x1d8] sm:$0xf]
      %v579 = vld [vmem:[%s298 + $0x1dc] sm:$0xf]
      %v580 = vld [vmem:[%s298 + $0x1e0] sm:$0xf]
      %v581 = vld [vmem:[%s298 + $0x1e4] sm:$0xf]
      %v582 = vld [vmem:[%s298 + $0x1e8] sm:$0xf]
      %v583 = vld [vmem:[%s298 + $0x1ec] sm:$0xf]
      %v584 = vld [vmem:[%s298 + $0x1f0] sm:$0xf]
      %v585 = vld [vmem:[%s298 + $0x1f4] sm:$0xf]
      %v586 = vld [vmem:[%s298 + $0x1f8] sm:$0xf]
      %v587 = vld [vmem:[%s298 + $0x1fc] sm:$0xf]
      %v588 = vld [vmem:[%s298 + $0x200] sm:$0xf]
      %v589 = vld [vmem:[%s298 + $0x204] sm:$0xf]
      %v590 = vld [vmem:[%s298 + $0x208] sm:$0xf]
      %v591 = vld [vmem:[%s298 + $0x20c] sm:$0xf]
      %v592 = vld [vmem:[%s298 + $0x210] sm:$0xf]
      %v593 = vld [vmem:[%s298 + $0x214] sm:$0xf]
      %v594 = vld [vmem:[%s298 + $0x218] sm:$0xf]
      %v595 = vld [vmem:[%s298 + $0x21c] sm:$0xf]
      %v596 = vld [vmem:[%s298 + $0x220] sm:$0xf]
      %v597 = vld [vmem:[%s298 + $0x224] sm:$0xf]
      %v598 = vld [vmem:[%s298 + $0x228] sm:$0xf]
      %v599 = vld [vmem:[%s298 + $0x22c] sm:$0xf]
      %v600 = vld [vmem:[%s298 + $0x230] sm:$0xf]
      %v601 = vld [vmem:[%s298 + $0x234] sm:$0xf]
      %v602 = vld [vmem:[%s298 + $0x238] sm:$0xf]
      %v603 = vld [vmem:[%s298 + $0x23c] sm:$0xf]
      %v604 = vld [vmem:[%s298 + $0x240] sm:$0xf]
      %v605 = vld [vmem:[%s298 + $0x244] sm:$0xf]
      %v606 = vld [vmem:[%s298 + $0x248] sm:$0xf]
      %v607 = vld [vmem:[%s298 + $0x24c] sm:$0xf]
      %v608 = vld [vmem:[%s298 + $0x250] sm:$0xf]
      %v609 = vld [vmem:[%s298 + $0x254] sm:$0xf]
      %v610 = vld [vmem:[%s298 + $0x258] sm:$0xf]
      %v611 = vld [vmem:[%s298 + $0x25c] sm:$0xf]
      %v612 = vld [vmem:[%s298 + $0x260] sm:$0xf]
      %v613 = vld [vmem:[%s298 + $0x264] sm:$0xf]
      %v614 = vld [vmem:[%s298 + $0x268] sm:$0xf]
      %v615 = vld [vmem:[%s298 + $0x26c] sm:$0xf]
      %v616 = vld [vmem:[%s298 + $0x270] sm:$0xf]
      %v617 = vld [vmem:[%s298 + $0x274] sm:$0xf]
      %v618 = vld [vmem:[%s298 + $0x278] sm:$0xf]
      %v619 = vld [vmem:[%s298 + $0x27c] sm:$0xf]
      %v620 = vld [vmem:[%s298 + $0x280] sm:$0xf]
      %v621 = vld [vmem:[%s298 + $0x284] sm:$0xf]
      %v622 = vld [vmem:[%s298 + $0x288] sm:$0xf]
      %v623 = vld [vmem:[%s298 + $0x28c] sm:$0xf]
      %v624 = vld [vmem:[%s298 + $0x290] sm:$0xf]
      %v625 = vld [vmem:[%s298 + $0x294] sm:$0xf]
      %v626 = vld [vmem:[%s298 + $0x298] sm:$0xf]
      %v627 = vld [vmem:[%s298 + $0x29c] sm:$0xf]
      %v628 = vld [vmem:[%s298 + $0x2a0] sm:$0xf]
      %v629 = vld [vmem:[%s298 + $0x2a4] sm:$0xf]
      %v630 = vld [vmem:[%s298 + $0x2a8] sm:$0xf]
      %v631 = vld [vmem:[%s298 + $0x2ac] sm:$0xf]
      %v632 = vld [vmem:[%s298 + $0x2b0] sm:$0xf]
      %v633 = vld [vmem:[%s298 + $0x2b4] sm:$0xf]
      %v634 = vld [vmem:[%s298 + $0x2b8] sm:$0xf]
      %v635 = vld [vmem:[%s298 + $0x2bc] sm:$0xf]
      %v636 = vld [vmem:[%s298 + $0x2c0] sm:$0xf]
      %v637 = vld [vmem:[%s298 + $0x2c4] sm:$0xf]
      %v638 = vld [vmem:[%s298 + $0x2c8] sm:$0xf]
      %v639 = vld [vmem:[%s298 + $0x2cc] sm:$0xf]
      %v640 = vld [vmem:[%s298 + $0x2d0] sm:$0xf]
      %v641 = vld [vmem:[%s298 + $0x2d4] sm:$0xf]
      %v642 = vld [vmem:[%s298 + $0x2d8] sm:$0xf]
      %v643 = vld [vmem:[%s298 + $0x2dc] sm:$0xf]
      %v644 = vld [vmem:[%s298 + $0x2e0] sm:$0xf]
      %v645 = vld [vmem:[%s298 + $0x2e4] sm:$0xf]
      %v646 = vld [vmem:[%s298 + $0x2e8] sm:$0xf]
      %v647 = vld [vmem:[%s298 + $0x2ec] sm:$0xf]
      %v648 = vld [vmem:[%s298 + $0x2f0] sm:$0xf]
      %v649 = vld [vmem:[%s298 + $0x2f4] sm:$0xf]
      %v650 = vld [vmem:[%s298 + $0x2f8] sm:$0xf]
      %v651 = vld [vmem:[%s298 + $0x2fc] sm:$0xf]
      %v652 = vld [vmem:[%s298 + $0x300] sm:$0xf]
      %v653 = vld [vmem:[%s298 + $0x304] sm:$0xf]
      %v654 = vld [vmem:[%s298 + $0x308] sm:$0xf]
      %v655 = vld [vmem:[%s298 + $0x30c] sm:$0xf]
      %v656 = vld [vmem:[%s298 + $0x310] sm:$0xf]
      %v657 = vld [vmem:[%s298 + $0x314] sm:$0xf]
      %v658 = vld [vmem:[%s298 + $0x318] sm:$0xf]
      %v659 = vld [vmem:[%s298 + $0x31c] sm:$0xf]
      %v660 = vld [vmem:[%s298 + $0x320] sm:$0xf]
      %v661 = vld [vmem:[%s298 + $0x324] sm:$0xf]
      %v662 = vld [vmem:[%s298 + $0x328] sm:$0xf]
      %v663 = vld [vmem:[%s298 + $0x32c] sm:$0xf]
      %v664 = vld [vmem:[%s298 + $0x330] sm:$0xf]
      %v665 = vld [vmem:[%s298 + $0x334] sm:$0xf]
      %v666 = vld [vmem:[%s298 + $0x338] sm:$0xf]
      %v667 = vld [vmem:[%s298 + $0x33c] sm:$0xf]
      %v668 = vld [vmem:[%s298 + $0x340] sm:$0xf]
      %v669 = vld [vmem:[%s298 + $0x344] sm:$0xf]
      %v670 = vld [vmem:[%s298 + $0x348] sm:$0xf]
      %v671 = vld [vmem:[%s298 + $0x34c] sm:$0xf]
      %v672 = vld [vmem:[%s298 + $0x350] sm:$0xf]
      %v673 = vld [vmem:[%s298 + $0x354] sm:$0xf]
      %v674 = vld [vmem:[%s298 + $0x358] sm:$0xf]
      %v675 = vld [vmem:[%s298 + $0x35c] sm:$0xf]
      %v676 = vld [vmem:[%s298 + $0x360] sm:$0xf]
      %v677 = vld [vmem:[%s298 + $0x364] sm:$0xf]
      %v678 = vld [vmem:[%s298 + $0x368] sm:$0xf]
      %v679 = vld [vmem:[%s298 + $0x36c] sm:$0xf]
      %v680 = vld [vmem:[%s298 + $0x370] sm:$0xf]
      %v681 = vld [vmem:[%s298 + $0x374] sm:$0xf]
      %v682 = vld [vmem:[%s298 + $0x378] sm:$0xf]
      %v683 = vld [vmem:[%s298 + $0x37c] sm:$0xf]
      %v684 = vld [vmem:[%s298 + $0x380] sm:$0xf]
      %v685 = vld [vmem:[%s298 + $0x384] sm:$0xf]
      %v686 = vld [vmem:[%s298 + $0x388] sm:$0xf]
      %v687 = vld [vmem:[%s298 + $0x38c] sm:$0xf]
      %v688 = vld [vmem:[%s298 + $0x390] sm:$0xf]
      %v689 = vld [vmem:[%s298 + $0x394] sm:$0xf]
      %v690 = vld [vmem:[%s298 + $0x398] sm:$0xf]
      %v691 = vld [vmem:[%s298 + $0x39c] sm:$0xf]
      %v692 = vld [vmem:[%s298 + $0x3a0] sm:$0xf]
      %v693 = vld [vmem:[%s298 + $0x3a4] sm:$0xf]
      %v694 = vld [vmem:[%s298 + $0x3a8] sm:$0xf]
      %v695 = vld [vmem:[%s298 + $0x3ac] sm:$0xf]
      %v696 = vld [vmem:[%s298 + $0x3b0] sm:$0xf]
      %v697 = vld [vmem:[%s298 + $0x3b4] sm:$0xf]
      %v698 = vld [vmem:[%s298 + $0x3b8] sm:$0xf]
      %v699 = vld [vmem:[%s298 + $0x3bc] sm:$0xf]
      %v700 = vld [vmem:[%s298 + $0x3c0] sm:$0xf]
      %v701 = vld [vmem:[%s298 + $0x3c4] sm:$0xf]
      %v702 = vld [vmem:[%s298 + $0x3c8] sm:$0xf]
      %v703 = vld [vmem:[%s298 + $0x3cc] sm:$0xf]
      %v704 = vld [vmem:[%s298 + $0x3d0] sm:$0xf]
      %v705 = vld [vmem:[%s298 + $0x3d4] sm:$0xf]
      %v706 = vld [vmem:[%s298 + $0x3d8] sm:$0xf]
      %v707 = vld [vmem:[%s298 + $0x3dc] sm:$0xf]
      %v708 = vld [vmem:[%s298 + $0x3e0] sm:$0xf]
      %v709 = vld [vmem:[%s298 + $0x3e4] sm:$0xf]
      %v710 = vld [vmem:[%s298 + $0x3e8] sm:$0xf]
      %v711 = vld [vmem:[%s298 + $0x3ec] sm:$0xf]
      %v712 = vld [vmem:[%s298 + $0x3f0] sm:$0xf]
      %v713 = vld [vmem:[%s298 + $0x3f4] sm:$0xf]
      %v714 = vld [vmem:[%s298 + $0x3f8] sm:$0xf]
      %v715 = vld [vmem:[%s298 + $0x3fc] sm:$0xf]
      %v716 = vld [vmem:[%s301] sm:$0x1]
      %v718 = vlaneseq
      %v719 = vshrl.u32 %v718, 7
      %v720 = vsub.s32 0, %v719
      %v721 = vrot.slane %v716, %v720
      %v851 = vunpack.c.l.b16 %v332
      %v852 = vunpack.c.h.b16 %v332
      %v853 = vunpack.c.l.b16 %v333
      %v854 = vunpack.c.h.b16 %v333
      %v855 = vunpack.c.l.b16 %v334
      %v856 = vunpack.c.h.b16 %v334
      %v857 = vunpack.c.l.b16 %v335
      %v858 = vunpack.c.h.b16 %v335
      %v859 = vunpack.c.l.b16 %v336
      %v860 = vunpack.c.h.b16 %v336
      %v861 = vunpack.c.l.b16 %v337
      %v862 = vunpack.c.h.b16 %v337
      %v863 = vunpack.c.l.b16 %v338
      %v864 = vunpack.c.h.b16 %v338
      %v865 = vunpack.c.l.b16 %v339
      %v866 = vunpack.c.h.b16 %v339
      %v867 = vunpack.c.l.b16 %v340
      %v868 = vunpack.c.h.b16 %v340
      %v869 = vunpack.c.l.b16 %v341
      %v870 = vunpack.c.h.b16 %v341
      %v871 = vunpack.c.l.b16 %v342
      %v872 = vunpack.c.h.b16 %v342
      %v873 = vunpack.c.l.b16 %v343
      %v874 = vunpack.c.h.b16 %v343
      %v875 = vunpack.c.l.b16 %v344
      %v876 = vunpack.c.h.b16 %v344
      %v877 = vunpack.c.l.b16 %v345
      %v878 = vunpack.c.h.b16 %v345
      %v879 = vunpack.c.l.b16 %v346
      %v880 = vunpack.c.h.b16 %v346
      %v881 = vunpack.c.l.b16 %v347
      %v882 = vunpack.c.h.b16 %v347
      %v883 = vunpack.c.l.b16 %v348
      %v884 = vunpack.c.h.b16 %v348
      %v885 = vunpack.c.l.b16 %v349
      %v886 = vunpack.c.h.b16 %v349
      %v887 = vunpack.c.l.b16 %v350
      %v888 = vunpack.c.h.b16 %v350
      %v889 = vunpack.c.l.b16 %v351
      %v890 = vunpack.c.h.b16 %v351
      %v891 = vunpack.c.l.b16 %v352
      %v892 = vunpack.c.h.b16 %v352
      %v893 = vunpack.c.l.b16 %v353
      %v894 = vunpack.c.h.b16 %v353
      %v895 = vunpack.c.l.b16 %v354
      %v896 = vunpack.c.h.b16 %v354
      %v897 = vunpack.c.l.b16 %v355
      %v898 = vunpack.c.h.b16 %v355
      %v899 = vunpack.c.l.b16 %v356
      %v900 = vunpack.c.h.b16 %v356
      %v901 = vunpack.c.l.b16 %v357
      %v902 = vunpack.c.h.b16 %v357
      %v903 = vunpack.c.l.b16 %v358
      %v904 = vunpack.c.h.b16 %v358
      %v905 = vunpack.c.l.b16 %v359
      %v906 = vunpack.c.h.b16 %v359
      %v907 = vunpack.c.l.b16 %v360
      %v908 = vunpack.c.h.b16 %v360
      %v909 = vunpack.c.l.b16 %v361
      %v910 = vunpack.c.h.b16 %v361
      %v911 = vunpack.c.l.b16 %v362
      %v912 = vunpack.c.h.b16 %v362
      %v913 = vunpack.c.l.b16 %v363
      %v914 = vunpack.c.h.b16 %v363
      %v915 = vunpack.c.l.b16 %v364
      %v916 = vunpack.c.h.b16 %v364
      %v917 = vunpack.c.l.b16 %v365
      %v918 = vunpack.c.h.b16 %v365
      %v919 = vunpack.c.l.b16 %v366
      %v920 = vunpack.c.h.b16 %v366
      %v921 = vunpack.c.l.b16 %v367
      %v922 = vunpack.c.h.b16 %v367
      %v923 = vunpack.c.l.b16 %v368
      %v924 = vunpack.c.h.b16 %v368
      %v925 = vunpack.c.l.b16 %v369
      %v926 = vunpack.c.h.b16 %v369
      %v927 = vunpack.c.l.b16 %v370
      %v928 = vunpack.c.h.b16 %v370
      %v929 = vunpack.c.l.b16 %v371
      %v930 = vunpack.c.h.b16 %v371
      %v931 = vunpack.c.l.b16 %v372
      %v932 = vunpack.c.h.b16 %v372
      %v933 = vunpack.c.l.b16 %v373
      %v934 = vunpack.c.h.b16 %v373
      %v935 = vunpack.c.l.b16 %v374
      %v936 = vunpack.c.h.b16 %v374
      %v937 = vunpack.c.l.b16 %v375
      %v938 = vunpack.c.h.b16 %v375
      %v939 = vunpack.c.l.b16 %v376
      %v940 = vunpack.c.h.b16 %v376
      %v941 = vunpack.c.l.b16 %v377
      %v942 = vunpack.c.h.b16 %v377
      %v943 = vunpack.c.l.b16 %v378
      %v944 = vunpack.c.h.b16 %v378
      %v945 = vunpack.c.l.b16 %v379
      %v946 = vunpack.c.h.b16 %v379
      %v947 = vunpack.c.l.b16 %v380
      %v948 = vunpack.c.h.b16 %v380
      %v949 = vunpack.c.l.b16 %v381
      %v950 = vunpack.c.h.b16 %v381
      %v951 = vunpack.c.l.b16 %v382
      %v952 = vunpack.c.h.b16 %v382
      %v953 = vunpack.c.l.b16 %v383
      %v954 = vunpack.c.h.b16 %v383
      %v955 = vunpack.c.l.b16 %v384
      %v956 = vunpack.c.h.b16 %v384
      %v957 = vunpack.c.l.b16 %v385
      %v958 = vunpack.c.h.b16 %v385
      %v959 = vunpack.c.l.b16 %v386
      %v960 = vunpack.c.h.b16 %v386
      %v961 = vunpack.c.l.b16 %v387
      %v962 = vunpack.c.h.b16 %v387
      %v963 = vunpack.c.l.b16 %v388
      %v964 = vunpack.c.h.b16 %v388
      %v965 = vunpack.c.l.b16 %v389
      %v966 = vunpack.c.h.b16 %v389
      %v967 = vunpack.c.l.b16 %v390
      %v968 = vunpack.c.h.b16 %v390
      %v969 = vunpack.c.l.b16 %v391
      %v970 = vunpack.c.h.b16 %v391
      %v971 = vunpack.c.l.b16 %v392
      %v972 = vunpack.c.h.b16 %v392
      %v973 = vunpack.c.l.b16 %v393
      %v974 = vunpack.c.h.b16 %v393
      %v975 = vunpack.c.l.b16 %v394
      %v976 = vunpack.c.h.b16 %v394
      %v977 = vunpack.c.l.b16 %v395
      %v978 = vunpack.c.h.b16 %v395
      %v979 = vunpack.c.l.b16 %v396
      %v980 = vunpack.c.h.b16 %v396
      %v981 = vunpack.c.l.b16 %v397
      %v982 = vunpack.c.h.b16 %v397
      %v983 = vunpack.c.l.b16 %v398
      %v984 = vunpack.c.h.b16 %v398
      %v985 = vunpack.c.l.b16 %v399
      %v986 = vunpack.c.h.b16 %v399
      %v987 = vunpack.c.l.b16 %v400
      %v988 = vunpack.c.h.b16 %v400
      %v989 = vunpack.c.l.b16 %v401
      %v990 = vunpack.c.h.b16 %v401
      %v991 = vunpack.c.l.b16 %v402
      %v992 = vunpack.c.h.b16 %v402
      %v993 = vunpack.c.l.b16 %v403
      %v994 = vunpack.c.h.b16 %v403
      %v995 = vunpack.c.l.b16 %v404
      %v996 = vunpack.c.h.b16 %v404
      %v997 = vunpack.c.l.b16 %v405
      %v998 = vunpack.c.h.b16 %v405
      %v999 = vunpack.c.l.b16 %v406
      %v1000 = vunpack.c.h.b16 %v406
      %v1001 = vunpack.c.l.b16 %v407
      %v1002 = vunpack.c.h.b16 %v407
      %v1003 = vunpack.c.l.b16 %v408
      %v1004 = vunpack.c.h.b16 %v408
      %v1005 = vunpack.c.l.b16 %v409
      %v1006 = vunpack.c.h.b16 %v409
      %v1007 = vunpack.c.l.b16 %v410
      %v1008 = vunpack.c.h.b16 %v410
      %v1009 = vunpack.c.l.b16 %v411
      %v1010 = vunpack.c.h.b16 %v411
      %v1011 = vunpack.c.l.b16 %v412
      %v1012 = vunpack.c.h.b16 %v412
      %v1013 = vunpack.c.l.b16 %v413
      %v1014 = vunpack.c.h.b16 %v413
      %v1015 = vunpack.c.l.b16 %v414
      %v1016 = vunpack.c.h.b16 %v414
      %v1017 = vunpack.c.l.b16 %v415
      %v1018 = vunpack.c.h.b16 %v415
      %v1019 = vunpack.c.l.b16 %v416
      %v1020 = vunpack.c.h.b16 %v416
      %v1021 = vunpack.c.l.b16 %v417
      %v1022 = vunpack.c.h.b16 %v417
      %v1023 = vunpack.c.l.b16 %v418
      %v1024 = vunpack.c.h.b16 %v418
      %v1025 = vunpack.c.l.b16 %v419
      %v1026 = vunpack.c.h.b16 %v419
      %v1027 = vunpack.c.l.b16 %v420
      %v1028 = vunpack.c.h.b16 %v420
      %v1029 = vunpack.c.l.b16 %v421
      %v1030 = vunpack.c.h.b16 %v421
      %v1031 = vunpack.c.l.b16 %v422
      %v1032 = vunpack.c.h.b16 %v422
      %v1033 = vunpack.c.l.b16 %v423
      %v1034 = vunpack.c.h.b16 %v423
      %v1035 = vunpack.c.l.b16 %v424
      %v1036 = vunpack.c.h.b16 %v424
      %v1037 = vunpack.c.l.b16 %v425
      %v1038 = vunpack.c.h.b16 %v425
      %v1039 = vunpack.c.l.b16 %v426
      %v1040 = vunpack.c.h.b16 %v426
      %v1041 = vunpack.c.l.b16 %v427
      %v1042 = vunpack.c.h.b16 %v427
      %v1043 = vunpack.c.l.b16 %v428
      %v1044 = vunpack.c.h.b16 %v428
      %v1045 = vunpack.c.l.b16 %v429
      %v1046 = vunpack.c.h.b16 %v429
      %v1047 = vunpack.c.l.b16 %v430
      %v1048 = vunpack.c.h.b16 %v430
      %v1049 = vunpack.c.l.b16 %v431
      %v1050 = vunpack.c.h.b16 %v431
      %v1051 = vunpack.c.l.b16 %v432
      %v1052 = vunpack.c.h.b16 %v432
      %v1053 = vunpack.c.l.b16 %v433
      %v1054 = vunpack.c.h.b16 %v433
      %v1055 = vunpack.c.l.b16 %v434
      %v1056 = vunpack.c.h.b16 %v434
      %v1057 = vunpack.c.l.b16 %v435
      %v1058 = vunpack.c.h.b16 %v435
      %v1059 = vunpack.c.l.b16 %v436
      %v1060 = vunpack.c.h.b16 %v436
      %v1061 = vunpack.c.l.b16 %v437
      %v1062 = vunpack.c.h.b16 %v437
      %v1063 = vunpack.c.l.b16 %v438
      %v1064 = vunpack.c.h.b16 %v438
      %v1065 = vunpack.c.l.b16 %v439
      %v1066 = vunpack.c.h.b16 %v439
      %v1067 = vunpack.c.l.b16 %v440
      %v1068 = vunpack.c.h.b16 %v440
      %v1069 = vunpack.c.l.b16 %v441
      %v1070 = vunpack.c.h.b16 %v441
      %v1071 = vunpack.c.l.b16 %v442
      %v1072 = vunpack.c.h.b16 %v442
      %v1073 = vunpack.c.l.b16 %v443
      %v1074 = vunpack.c.h.b16 %v443
      %v1075 = vunpack.c.l.b16 %v444
      %v1076 = vunpack.c.h.b16 %v444
      %v1077 = vunpack.c.l.b16 %v445
      %v1078 = vunpack.c.h.b16 %v445
      %v1079 = vunpack.c.l.b16 %v446
      %v1080 = vunpack.c.h.b16 %v446
      %v1081 = vunpack.c.l.b16 %v447
      %v1082 = vunpack.c.h.b16 %v447
      %v1083 = vunpack.c.l.b16 %v448
      %v1084 = vunpack.c.h.b16 %v448
      %v1085 = vunpack.c.l.b16 %v449
      %v1086 = vunpack.c.h.b16 %v449
      %v1087 = vunpack.c.l.b16 %v450
      %v1088 = vunpack.c.h.b16 %v450
      %v1089 = vunpack.c.l.b16 %v451
      %v1090 = vunpack.c.h.b16 %v451
      %v1091 = vunpack.c.l.b16 %v452
      %v1092 = vunpack.c.h.b16 %v452
      %v1093 = vunpack.c.l.b16 %v453
      %v1094 = vunpack.c.h.b16 %v453
      %v1095 = vunpack.c.l.b16 %v454
      %v1096 = vunpack.c.h.b16 %v454
      %v1097 = vunpack.c.l.b16 %v455
      %v1098 = vunpack.c.h.b16 %v455
      %v1099 = vunpack.c.l.b16 %v456
      %v1100 = vunpack.c.h.b16 %v456
      %v1101 = vunpack.c.l.b16 %v457
      %v1102 = vunpack.c.h.b16 %v457
      %v1103 = vunpack.c.l.b16 %v458
      %v1104 = vunpack.c.h.b16 %v458
      %v1105 = vunpack.c.l.b16 %v459
      %v1106 = vunpack.c.h.b16 %v459
      %v1107 = vpack.c.b16 %v867, %v851
      %v1108 = vpack.c.b16 %v868, %v852
      %v1109 = vpack.c.b16 %v869, %v853
      %v1110 = vpack.c.b16 %v870, %v854
      %v1111 = vpack.c.b16 %v871, %v855
      %v1112 = vpack.c.b16 %v872, %v856
      %v1113 = vpack.c.b16 %v873, %v857
      %v1114 = vpack.c.b16 %v874, %v858
      %v1115 = vpack.c.b16 %v875, %v859
      %v1116 = vpack.c.b16 %v876, %v860
      %v1117 = vpack.c.b16 %v877, %v861
      %v1118 = vpack.c.b16 %v878, %v862
      %v1119 = vpack.c.b16 %v879, %v863
      %v1120 = vpack.c.b16 %v880, %v864
      %v1121 = vpack.c.b16 %v881, %v865
      %v1122 = vpack.c.b16 %v882, %v866
      %v1123 = vpack.c.b16 %v899, %v883
      %v1124 = vpack.c.b16 %v900, %v884
      %v1125 = vpack.c.b16 %v901, %v885
      %v1126 = vpack.c.b16 %v902, %v886
      %v1127 = vpack.c.b16 %v903, %v887
      %v1128 = vpack.c.b16 %v904, %v888
      %v1129 = vpack.c.b16 %v905, %v889
      %v1130 = vpack.c.b16 %v906, %v890
      %v1131 = vpack.c.b16 %v907, %v891
      %v1132 = vpack.c.b16 %v908, %v892
      %v1133 = vpack.c.b16 %v909, %v893
      %v1134 = vpack.c.b16 %v910, %v894
      %v1135 = vpack.c.b16 %v911, %v895
      %v1136 = vpack.c.b16 %v912, %v896
      %v1137 = vpack.c.b16 %v913, %v897
      %v1138 = vpack.c.b16 %v914, %v898
      %v1139 = vpack.c.b16 %v931, %v915
      %v1140 = vpack.c.b16 %v932, %v916
      %v1141 = vpack.c.b16 %v933, %v917
      %v1142 = vpack.c.b16 %v934, %v918
      %v1143 = vpack.c.b16 %v935, %v919
      %v1144 = vpack.c.b16 %v936, %v920
      %v1145 = vpack.c.b16 %v937, %v921
      %v1146 = vpack.c.b16 %v938, %v922
      %v1147 = vpack.c.b16 %v939, %v923
      %v1148 = vpack.c.b16 %v940, %v924
      %v1149 = vpack.c.b16 %v941, %v925
      %v1150 = vpack.c.b16 %v942, %v926
      %v1151 = vpack.c.b16 %v943, %v927
      %v1152 = vpack.c.b16 %v944, %v928
      %v1153 = vpack.c.b16 %v945, %v929
      %v1154 = vpack.c.b16 %v946, %v930
      %v1155 = vpack.c.b16 %v963, %v947
      %v1156 = vpack.c.b16 %v964, %v948
      %v1157 = vpack.c.b16 %v965, %v949
      %v1158 = vpack.c.b16 %v966, %v950
      %v1159 = vpack.c.b16 %v967, %v951
      %v1160 = vpack.c.b16 %v968, %v952
      %v1161 = vpack.c.b16 %v969, %v953
      %v1162 = vpack.c.b16 %v970, %v954
      %v1163 = vpack.c.b16 %v971, %v955
      %v1164 = vpack.c.b16 %v972, %v956
      %v1165 = vpack.c.b16 %v973, %v957
      %v1166 = vpack.c.b16 %v974, %v958
      %v1167 = vpack.c.b16 %v975, %v959
      %v1168 = vpack.c.b16 %v976, %v960
      %v1169 = vpack.c.b16 %v977, %v961
      %v1170 = vpack.c.b16 %v978, %v962
      %v1171 = vpack.c.b16 %v995, %v979
      %v1172 = vpack.c.b16 %v996, %v980
      %v1173 = vpack.c.b16 %v997, %v981
      %v1174 = vpack.c.b16 %v998, %v982
      %v1175 = vpack.c.b16 %v999, %v983
      %v1176 = vpack.c.b16 %v1000, %v984
      %v1177 = vpack.c.b16 %v1001, %v985
      %v1178 = vpack.c.b16 %v1002, %v986
      %v1179 = vpack.c.b16 %v1003, %v987
      %v1180 = vpack.c.b16 %v1004, %v988
      %v1181 = vpack.c.b16 %v1005, %v989
      %v1182 = vpack.c.b16 %v1006, %v990
      %v1183 = vpack.c.b16 %v1007, %v991
      %v1184 = vpack.c.b16 %v1008, %v992
      %v1185 = vpack.c.b16 %v1009, %v993
      %v1186 = vpack.c.b16 %v1010, %v994
      %v1187 = vpack.c.b16 %v1027, %v1011
      %v1188 = vpack.c.b16 %v1028, %v1012
      %v1189 = vpack.c.b16 %v1029, %v1013
      %v1190 = vpack.c.b16 %v1030, %v1014
      %v1191 = vpack.c.b16 %v1031, %v1015
      %v1192 = vpack.c.b16 %v1032, %v1016
      %v1193 = vpack.c.b16 %v1033, %v1017
      %v1194 = vpack.c.b16 %v1034, %v1018
      %v1195 = vpack.c.b16 %v1035, %v1019
      %v1196 = vpack.c.b16 %v1036, %v1020
      %v1197 = vpack.c.b16 %v1037, %v1021
      %v1198 = vpack.c.b16 %v1038, %v1022
      %v1199 = vpack.c.b16 %v1039, %v1023
      %v1200 = vpack.c.b16 %v1040, %v1024
      %v1201 = vpack.c.b16 %v1041, %v1025
      %v1202 = vpack.c.b16 %v1042, %v1026
      %v1203 = vpack.c.b16 %v1059, %v1043
      %v1204 = vpack.c.b16 %v1060, %v1044
      %v1205 = vpack.c.b16 %v1061, %v1045
      %v1206 = vpack.c.b16 %v1062, %v1046
      %v1207 = vpack.c.b16 %v1063, %v1047
      %v1208 = vpack.c.b16 %v1064, %v1048
      %v1209 = vpack.c.b16 %v1065, %v1049
      %v1210 = vpack.c.b16 %v1066, %v1050
      %v1211 = vpack.c.b16 %v1067, %v1051
      %v1212 = vpack.c.b16 %v1068, %v1052
      %v1213 = vpack.c.b16 %v1069, %v1053
      %v1214 = vpack.c.b16 %v1070, %v1054
      %v1215 = vpack.c.b16 %v1071, %v1055
      %v1216 = vpack.c.b16 %v1072, %v1056
      %v1217 = vpack.c.b16 %v1073, %v1057
      %v1218 = vpack.c.b16 %v1074, %v1058
      %v1219 = vpack.c.b16 %v1091, %v1075
      %v1220 = vpack.c.b16 %v1092, %v1076
      %v1221 = vpack.c.b16 %v1093, %v1077
      %v1222 = vpack.c.b16 %v1094, %v1078
      %v1223 = vpack.c.b16 %v1095, %v1079
      %v1224 = vpack.c.b16 %v1096, %v1080
      %v1225 = vpack.c.b16 %v1097, %v1081
      %v1226 = vpack.c.b16 %v1098, %v1082
      %v1227 = vpack.c.b16 %v1099, %v1083
      %v1228 = vpack.c.b16 %v1100, %v1084
      %v1229 = vpack.c.b16 %v1101, %v1085
      %v1230 = vpack.c.b16 %v1102, %v1086
      %v1231 = vpack.c.b16 %v1103, %v1087
      %v1232 = vpack.c.b16 %v1104, %v1088
      %v1233 = vpack.c.b16 %v1105, %v1089
      %v1234 = vpack.c.b16 %v1106, %v1090
      %v1619 = vunpack.c.l.b16 %v460
      %v1620 = vunpack.c.l.b16 %v461
      %v1621 = vunpack.c.l.b16 %v462
      %v1622 = vunpack.c.l.b16 %v463
      %v1623 = vunpack.c.l.b16 %v464
      %v1624 = vunpack.c.l.b16 %v465
      %v1625 = vunpack.c.l.b16 %v466
      %v1626 = vunpack.c.l.b16 %v467
      %v1627 = vunpack.c.l.b16 %v468
      %v1628 = vunpack.c.l.b16 %v469
      %v1629 = vunpack.c.l.b16 %v470
      %v1630 = vunpack.c.l.b16 %v471
      %v1631 = vunpack.c.l.b16 %v472
      %v1632 = vunpack.c.l.b16 %v473
      %v1633 = vunpack.c.l.b16 %v474
      %v1634 = vunpack.c.l.b16 %v475
      %v1635 = vunpack.c.l.b16 %v476
      %v1636 = vunpack.c.l.b16 %v477
      %v1637 = vunpack.c.l.b16 %v478
      %v1638 = vunpack.c.l.b16 %v479
      %v1639 = vunpack.c.l.b16 %v480
      %v1640 = vunpack.c.l.b16 %v481
      %v1641 = vunpack.c.l.b16 %v482
      %v1642 = vunpack.c.l.b16 %v483
      %v1643 = vunpack.c.l.b16 %v484
      %v1644 = vunpack.c.l.b16 %v485
      %v1645 = vunpack.c.l.b16 %v486
      %v1646 = vunpack.c.l.b16 %v487
      %v1647 = vunpack.c.l.b16 %v488
      %v1648 = vunpack.c.l.b16 %v489
      %v1649 = vunpack.c.l.b16 %v490
      %v1650 = vunpack.c.l.b16 %v491
      %v1651 = vunpack.c.l.b16 %v492
      %v1652 = vunpack.c.l.b16 %v493
      %v1653 = vunpack.c.l.b16 %v494
      %v1654 = vunpack.c.l.b16 %v495
      %v1655 = vunpack.c.l.b16 %v496
      %v1656 = vunpack.c.l.b16 %v497
      %v1657 = vunpack.c.l.b16 %v498
      %v1658 = vunpack.c.l.b16 %v499
      %v1659 = vunpack.c.l.b16 %v500
      %v1660 = vunpack.c.l.b16 %v501
      %v1661 = vunpack.c.l.b16 %v502
      %v1662 = vunpack.c.l.b16 %v503
      %v1663 = vunpack.c.l.b16 %v504
      %v1664 = vunpack.c.l.b16 %v505
      %v1665 = vunpack.c.l.b16 %v506
      %v1666 = vunpack.c.l.b16 %v507
      %v1667 = vunpack.c.l.b16 %v508
      %v1668 = vunpack.c.l.b16 %v509
      %v1669 = vunpack.c.l.b16 %v510
      %v1670 = vunpack.c.l.b16 %v511
      %v1671 = vunpack.c.l.b16 %v512
      %v1672 = vunpack.c.l.b16 %v513
      %v1673 = vunpack.c.l.b16 %v514
      %v1674 = vunpack.c.l.b16 %v515
      %v1675 = vunpack.c.l.b16 %v516
      %v1676 = vunpack.c.l.b16 %v517
      %v1677 = vunpack.c.l.b16 %v518
      %v1678 = vunpack.c.l.b16 %v519
      %v1679 = vunpack.c.l.b16 %v520
      %v1680 = vunpack.c.l.b16 %v521
      %v1681 = vunpack.c.l.b16 %v522
      %v1682 = vunpack.c.l.b16 %v523
      %v1683 = vunpack.c.l.b16 %v524
      %v1684 = vunpack.c.l.b16 %v525
      %v1685 = vunpack.c.l.b16 %v526
      %v1686 = vunpack.c.l.b16 %v527
      %v1687 = vunpack.c.l.b16 %v528
      %v1688 = vunpack.c.l.b16 %v529
      %v1689 = vunpack.c.l.b16 %v530
      %v1690 = vunpack.c.l.b16 %v531
      %v1691 = vunpack.c.l.b16 %v532
      %v1692 = vunpack.c.l.b16 %v533
      %v1693 = vunpack.c.l.b16 %v534
      %v1694 = vunpack.c.l.b16 %v535
      %v1695 = vunpack.c.l.b16 %v536
      %v1696 = vunpack.c.l.b16 %v537
      %v1697 = vunpack.c.l.b16 %v538
      %v1698 = vunpack.c.l.b16 %v539
      %v1699 = vunpack.c.l.b16 %v540
      %v1700 = vunpack.c.l.b16 %v541
      %v1701 = vunpack.c.l.b16 %v542
      %v1702 = vunpack.c.l.b16 %v543
      %v1703 = vunpack.c.l.b16 %v544
      %v1704 = vunpack.c.l.b16 %v545
      %v1705 = vunpack.c.l.b16 %v546
      %v1706 = vunpack.c.l.b16 %v547
      %v1707 = vunpack.c.l.b16 %v548
      %v1708 = vunpack.c.l.b16 %v549
      %v1709 = vunpack.c.l.b16 %v550
      %v1710 = vunpack.c.l.b16 %v551
      %v1711 = vunpack.c.l.b16 %v552
      %v1712 = vunpack.c.l.b16 %v553
      %v1713 = vunpack.c.l.b16 %v554
      %v1714 = vunpack.c.l.b16 %v555
      %v1715 = vunpack.c.l.b16 %v556
      %v1716 = vunpack.c.l.b16 %v557
      %v1717 = vunpack.c.l.b16 %v558
      %v1718 = vunpack.c.l.b16 %v559
      %v1719 = vunpack.c.l.b16 %v560
      %v1720 = vunpack.c.l.b16 %v561
      %v1721 = vunpack.c.l.b16 %v562
      %v1722 = vunpack.c.l.b16 %v563
      %v1723 = vunpack.c.l.b16 %v564
      %v1724 = vunpack.c.l.b16 %v565
      %v1725 = vunpack.c.l.b16 %v566
      %v1726 = vunpack.c.l.b16 %v567
      %v1727 = vunpack.c.l.b16 %v568
      %v1728 = vunpack.c.l.b16 %v569
      %v1729 = vunpack.c.l.b16 %v570
      %v1730 = vunpack.c.l.b16 %v571
      %v1731 = vunpack.c.l.b16 %v572
      %v1732 = vunpack.c.l.b16 %v573
      %v1733 = vunpack.c.l.b16 %v574
      %v1734 = vunpack.c.l.b16 %v575
      %v1735 = vunpack.c.l.b16 %v576
      %v1736 = vunpack.c.l.b16 %v577
      %v1737 = vunpack.c.l.b16 %v578
      %v1738 = vunpack.c.l.b16 %v579
      %v1739 = vunpack.c.l.b16 %v580
      %v1740 = vunpack.c.l.b16 %v581
      %v1741 = vunpack.c.l.b16 %v582
      %v1742 = vunpack.c.l.b16 %v583
      %v1743 = vunpack.c.l.b16 %v584
      %v1744 = vunpack.c.l.b16 %v585
      %v1745 = vunpack.c.l.b16 %v586
      %v1746 = vunpack.c.l.b16 %v587
      %v1747 = vunpack.c.l.b16 %v588
      %v1748 = vunpack.c.l.b16 %v589
      %v1749 = vunpack.c.l.b16 %v590
      %v1750 = vunpack.c.l.b16 %v591
      %v1751 = vunpack.c.l.b16 %v592
      %v1752 = vunpack.c.l.b16 %v593
      %v1753 = vunpack.c.l.b16 %v594
      %v1754 = vunpack.c.l.b16 %v595
      %v1755 = vunpack.c.l.b16 %v596
      %v1756 = vunpack.c.l.b16 %v597
      %v1757 = vunpack.c.l.b16 %v598
      %v1758 = vunpack.c.l.b16 %v599
      %v1759 = vunpack.c.l.b16 %v600
      %v1760 = vunpack.c.l.b16 %v601
      %v1761 = vunpack.c.l.b16 %v602
      %v1762 = vunpack.c.l.b16 %v603
      %v1763 = vunpack.c.l.b16 %v604
      %v1764 = vunpack.c.l.b16 %v605
      %v1765 = vunpack.c.l.b16 %v606
      %v1766 = vunpack.c.l.b16 %v607
      %v1767 = vunpack.c.l.b16 %v608
      %v1768 = vunpack.c.l.b16 %v609
      %v1769 = vunpack.c.l.b16 %v610
      %v1770 = vunpack.c.l.b16 %v611
      %v1771 = vunpack.c.l.b16 %v612
      %v1772 = vunpack.c.l.b16 %v613
      %v1773 = vunpack.c.l.b16 %v614
      %v1774 = vunpack.c.l.b16 %v615
      %v1775 = vunpack.c.l.b16 %v616
      %v1776 = vunpack.c.l.b16 %v617
      %v1777 = vunpack.c.l.b16 %v618
      %v1778 = vunpack.c.l.b16 %v619
      %v1779 = vunpack.c.l.b16 %v620
      %v1780 = vunpack.c.l.b16 %v621
      %v1781 = vunpack.c.l.b16 %v622
      %v1782 = vunpack.c.l.b16 %v623
      %v1783 = vunpack.c.l.b16 %v624
      %v1784 = vunpack.c.l.b16 %v625
      %v1785 = vunpack.c.l.b16 %v626
      %v1786 = vunpack.c.l.b16 %v627
      %v1787 = vunpack.c.l.b16 %v628
      %v1788 = vunpack.c.l.b16 %v629
      %v1789 = vunpack.c.l.b16 %v630
      %v1790 = vunpack.c.l.b16 %v631
      %v1791 = vunpack.c.l.b16 %v632
      %v1792 = vunpack.c.l.b16 %v633
      %v1793 = vunpack.c.l.b16 %v634
      %v1794 = vunpack.c.l.b16 %v635
      %v1795 = vunpack.c.l.b16 %v636
      %v1796 = vunpack.c.l.b16 %v637
      %v1797 = vunpack.c.l.b16 %v638
      %v1798 = vunpack.c.l.b16 %v639
      %v1799 = vunpack.c.l.b16 %v640
      %v1800 = vunpack.c.l.b16 %v641
      %v1801 = vunpack.c.l.b16 %v642
      %v1802 = vunpack.c.l.b16 %v643
      %v1803 = vunpack.c.l.b16 %v644
      %v1804 = vunpack.c.l.b16 %v645
      %v1805 = vunpack.c.l.b16 %v646
      %v1806 = vunpack.c.l.b16 %v647
      %v1807 = vunpack.c.l.b16 %v648
      %v1808 = vunpack.c.l.b16 %v649
      %v1809 = vunpack.c.l.b16 %v650
      %v1810 = vunpack.c.l.b16 %v651
      %v1811 = vunpack.c.l.b16 %v652
      %v1812 = vunpack.c.l.b16 %v653
      %v1813 = vunpack.c.l.b16 %v654
      %v1814 = vunpack.c.l.b16 %v655
      %v1815 = vunpack.c.l.b16 %v656
      %v1816 = vunpack.c.l.b16 %v657
      %v1817 = vunpack.c.l.b16 %v658
      %v1818 = vunpack.c.l.b16 %v659
      %v1819 = vunpack.c.l.b16 %v660
      %v1820 = vunpack.c.l.b16 %v661
      %v1821 = vunpack.c.l.b16 %v662
      %v1822 = vunpack.c.l.b16 %v663
      %v1823 = vunpack.c.l.b16 %v664
      %v1824 = vunpack.c.l.b16 %v665
      %v1825 = vunpack.c.l.b16 %v666
      %v1826 = vunpack.c.l.b16 %v667
      %v1827 = vunpack.c.l.b16 %v668
      %v1828 = vunpack.c.l.b16 %v669
      %v1829 = vunpack.c.l.b16 %v670
      %v1830 = vunpack.c.l.b16 %v671
      %v1831 = vunpack.c.l.b16 %v672
      %v1832 = vunpack.c.l.b16 %v673
      %v1833 = vunpack.c.l.b16 %v674
      %v1834 = vunpack.c.l.b16 %v675
      %v1835 = vunpack.c.l.b16 %v676
      %v1836 = vunpack.c.l.b16 %v677
      %v1837 = vunpack.c.l.b16 %v678
      %v1838 = vunpack.c.l.b16 %v679
      %v1839 = vunpack.c.l.b16 %v680
      %v1840 = vunpack.c.l.b16 %v681
      %v1841 = vunpack.c.l.b16 %v682
      %v1842 = vunpack.c.l.b16 %v683
      %v1843 = vunpack.c.l.b16 %v684
      %v1844 = vunpack.c.l.b16 %v685
      %v1845 = vunpack.c.l.b16 %v686
      %v1846 = vunpack.c.l.b16 %v687
      %v1847 = vunpack.c.l.b16 %v688
      %v1848 = vunpack.c.l.b16 %v689
      %v1849 = vunpack.c.l.b16 %v690
      %v1850 = vunpack.c.l.b16 %v691
      %v1851 = vunpack.c.l.b16 %v692
      %v1852 = vunpack.c.l.b16 %v693
      %v1853 = vunpack.c.l.b16 %v694
      %v1854 = vunpack.c.l.b16 %v695
      %v1855 = vunpack.c.l.b16 %v696
      %v1856 = vunpack.c.l.b16 %v697
      %v1857 = vunpack.c.l.b16 %v698
      %v1858 = vunpack.c.l.b16 %v699
      %v1859 = vunpack.c.l.b16 %v700
      %v1860 = vunpack.c.l.b16 %v701
      %v1861 = vunpack.c.l.b16 %v702
      %v1862 = vunpack.c.l.b16 %v703
      %v1863 = vunpack.c.l.b16 %v704
      %v1864 = vunpack.c.l.b16 %v705
      %v1865 = vunpack.c.l.b16 %v706
      %v1866 = vunpack.c.l.b16 %v707
      %v1867 = vunpack.c.l.b16 %v708
      %v1868 = vunpack.c.l.b16 %v709
      %v1869 = vunpack.c.l.b16 %v710
      %v1870 = vunpack.c.l.b16 %v711
      %v1871 = vunpack.c.l.b16 %v712
      %v1872 = vunpack.c.l.b16 %v713
      %v1873 = vunpack.c.l.b16 %v714
      %v1874 = vunpack.c.l.b16 %v715
      %v1875 = vpack.c.b16 %v1620, %v1619
      %v1876 = vpack.c.b16 %v1622, %v1621
      %v1877 = vpack.c.b16 %v1624, %v1623
      %v1878 = vpack.c.b16 %v1626, %v1625
      %v1879 = vpack.c.b16 %v1628, %v1627
      %v1880 = vpack.c.b16 %v1630, %v1629
      %v1881 = vpack.c.b16 %v1632, %v1631
      %v1882 = vpack.c.b16 %v1634, %v1633
      %v1883 = vpack.c.b16 %v1636, %v1635
      %v1884 = vpack.c.b16 %v1638, %v1637
      %v1885 = vpack.c.b16 %v1640, %v1639
      %v1886 = vpack.c.b16 %v1642, %v1641
      %v1887 = vpack.c.b16 %v1644, %v1643
      %v1888 = vpack.c.b16 %v1646, %v1645
      %v1889 = vpack.c.b16 %v1648, %v1647
      %v1890 = vpack.c.b16 %v1650, %v1649
      %v1891 = vpack.c.b16 %v1652, %v1651
      %v1892 = vpack.c.b16 %v1654, %v1653
      %v1893 = vpack.c.b16 %v1656, %v1655
      %v1894 = vpack.c.b16 %v1658, %v1657
      %v1895 = vpack.c.b16 %v1660, %v1659
      %v1896 = vpack.c.b16 %v1662, %v1661
      %v1897 = vpack.c.b16 %v1664, %v1663
      %v1898 = vpack.c.b16 %v1666, %v1665
      %v1899 = vpack.c.b16 %v1668, %v1667
      %v1900 = vpack.c.b16 %v1670, %v1669
      %v1901 = vpack.c.b16 %v1672, %v1671
      %v1902 = vpack.c.b16 %v1674, %v1673
      %v1903 = vpack.c.b16 %v1676, %v1675
      %v1904 = vpack.c.b16 %v1678, %v1677
      %v1905 = vpack.c.b16 %v1680, %v1679
      %v1906 = vpack.c.b16 %v1682, %v1681
      %v1907 = vpack.c.b16 %v1684, %v1683
      %v1908 = vpack.c.b16 %v1686, %v1685
      %v1909 = vpack.c.b16 %v1688, %v1687
      %v1910 = vpack.c.b16 %v1690, %v1689
      %v1911 = vpack.c.b16 %v1692, %v1691
      %v1912 = vpack.c.b16 %v1694, %v1693
      %v1913 = vpack.c.b16 %v1696, %v1695
      %v1914 = vpack.c.b16 %v1698, %v1697
      %v1915 = vpack.c.b16 %v1700, %v1699
      %v1916 = vpack.c.b16 %v1702, %v1701
      %v1917 = vpack.c.b16 %v1704, %v1703
      %v1918 = vpack.c.b16 %v1706, %v1705
      %v1919 = vpack.c.b16 %v1708, %v1707
      %v1920 = vpack.c.b16 %v1710, %v1709
      %v1921 = vpack.c.b16 %v1712, %v1711
      %v1922 = vpack.c.b16 %v1714, %v1713
      %v1923 = vpack.c.b16 %v1716, %v1715
      %v1924 = vpack.c.b16 %v1718, %v1717
      %v1925 = vpack.c.b16 %v1720, %v1719
      %v1926 = vpack.c.b16 %v1722, %v1721
      %v1927 = vpack.c.b16 %v1724, %v1723
      %v1928 = vpack.c.b16 %v1726, %v1725
      %v1929 = vpack.c.b16 %v1728, %v1727
      %v1930 = vpack.c.b16 %v1730, %v1729
      %v1931 = vpack.c.b16 %v1732, %v1731
      %v1932 = vpack.c.b16 %v1734, %v1733
      %v1933 = vpack.c.b16 %v1736, %v1735
      %v1934 = vpack.c.b16 %v1738, %v1737
      %v1935 = vpack.c.b16 %v1740, %v1739
      %v1936 = vpack.c.b16 %v1742, %v1741
      %v1937 = vpack.c.b16 %v1744, %v1743
      %v1938 = vpack.c.b16 %v1746, %v1745
      %v1939 = vpack.c.b16 %v1748, %v1747
      %v1940 = vpack.c.b16 %v1750, %v1749
      %v1941 = vpack.c.b16 %v1752, %v1751
      %v1942 = vpack.c.b16 %v1754, %v1753
      %v1943 = vpack.c.b16 %v1756, %v1755
      %v1944 = vpack.c.b16 %v1758, %v1757
      %v1945 = vpack.c.b16 %v1760, %v1759
      %v1946 = vpack.c.b16 %v1762, %v1761
      %v1947 = vpack.c.b16 %v1764, %v1763
      %v1948 = vpack.c.b16 %v1766, %v1765
      %v1949 = vpack.c.b16 %v1768, %v1767
      %v1950 = vpack.c.b16 %v1770, %v1769
      %v1951 = vpack.c.b16 %v1772, %v1771
      %v1952 = vpack.c.b16 %v1774, %v1773
      %v1953 = vpack.c.b16 %v1776, %v1775
      %v1954 = vpack.c.b16 %v1778, %v1777
      %v1955 = vpack.c.b16 %v1780, %v1779
      %v1956 = vpack.c.b16 %v1782, %v1781
      %v1957 = vpack.c.b16 %v1784, %v1783
      %v1958 = vpack.c.b16 %v1786, %v1785
      %v1959 = vpack.c.b16 %v1788, %v1787
      %v1960 = vpack.c.b16 %v1790, %v1789
      %v1961 = vpack.c.b16 %v1792, %v1791
      %v1962 = vpack.c.b16 %v1794, %v1793
      %v1963 = vpack.c.b16 %v1796, %v1795
      %v1964 = vpack.c.b16 %v1798, %v1797
      %v1965 = vpack.c.b16 %v1800, %v1799
      %v1966 = vpack.c.b16 %v1802, %v1801
      %v1967 = vpack.c.b16 %v1804, %v1803
      %v1968 = vpack.c.b16 %v1806, %v1805
      %v1969 = vpack.c.b16 %v1808, %v1807
      %v1970 = vpack.c.b16 %v1810, %v1809
      %v1971 = vpack.c.b16 %v1812, %v1811
      %v1972 = vpack.c.b16 %v1814, %v1813
      %v1973 = vpack.c.b16 %v1816, %v1815
      %v1974 = vpack.c.b16 %v1818, %v1817
      %v1975 = vpack.c.b16 %v1820, %v1819
      %v1976 = vpack.c.b16 %v1822, %v1821
      %v1977 = vpack.c.b16 %v1824, %v1823
      %v1978 = vpack.c.b16 %v1826, %v1825
      %v1979 = vpack.c.b16 %v1828, %v1827
      %v1980 = vpack.c.b16 %v1830, %v1829
      %v1981 = vpack.c.b16 %v1832, %v1831
      %v1982 = vpack.c.b16 %v1834, %v1833
      %v1983 = vpack.c.b16 %v1836, %v1835
      %v1984 = vpack.c.b16 %v1838, %v1837
      %v1985 = vpack.c.b16 %v1840, %v1839
      %v1986 = vpack.c.b16 %v1842, %v1841
      %v1987 = vpack.c.b16 %v1844, %v1843
      %v1988 = vpack.c.b16 %v1846, %v1845
      %v1989 = vpack.c.b16 %v1848, %v1847
      %v1990 = vpack.c.b16 %v1850, %v1849
      %v1991 = vpack.c.b16 %v1852, %v1851
      %v1992 = vpack.c.b16 %v1854, %v1853
      %v1993 = vpack.c.b16 %v1856, %v1855
      %v1994 = vpack.c.b16 %v1858, %v1857
      %v1995 = vpack.c.b16 %v1860, %v1859
      %v1996 = vpack.c.b16 %v1862, %v1861
      %v1997 = vpack.c.b16 %v1864, %v1863
      %v1998 = vpack.c.b16 %v1866, %v1865
      %v1999 = vpack.c.b16 %v1868, %v1867
      %v2000 = vpack.c.b16 %v1870, %v1869
      %v2001 = vpack.c.b16 %v1872, %v1871
      %v2002 = vpack.c.b16 %v1874, %v1873
      %2131 = vmatprep.subr.bf16.mxu0 0
      %2132 = vmatpush1.bf16.msra.mxu0 %v1875
      %2133 = vmatprep.subr.bf16.mxu0 0
      %2134 = vmatpush1.bf16.msra.mxu0 %v1876
      %2135 = vmatprep.subr.bf16.mxu0 0
      %2136 = vmatpush1.bf16.msra.mxu0 %v1877
      %2137 = vmatprep.subr.bf16.mxu0 0
      %2138 = vmatpush1.bf16.msra.mxu0 %v1878
      %2139 = vmatprep.subr.bf16.mxu0 0
      %2140 = vmatpush1.bf16.msra.mxu0 %v1879
      %2141 = vmatprep.subr.bf16.mxu0 0
      %2142 = vmatpush1.bf16.msra.mxu0 %v1880
      %2143 = vmatprep.subr.bf16.mxu0 0
      %2144 = vmatpush1.bf16.msra.mxu0 %v1881
      %2145 = vmatprep.subr.bf16.mxu0 0
      %2146 = vmatpush1.bf16.msra.mxu0 %v1882
      %2147 = vmatprep.subr.bf16.mxu0 0
      %2148 = vmatpush1.bf16.msra.mxu0 %v1883
      %2149 = vmatprep.subr.bf16.mxu0 0
      %2150 = vmatpush1.bf16.msra.mxu0 %v1884
      %2151 = vmatprep.subr.bf16.mxu0 0
      %2152 = vmatpush1.bf16.msra.mxu0 %v1885
      %2153 = vmatprep.subr.bf16.mxu0 0
      %2154 = vmatpush1.bf16.msra.mxu0 %v1886
      %2155 = vmatprep.subr.bf16.mxu0 0
      %2156 = vmatpush1.bf16.msra.mxu0 %v1887
      %2157 = vmatprep.subr.bf16.mxu0 0
      %2158 = vmatpush1.bf16.msra.mxu0 %v1888
      %2159 = vmatprep.subr.bf16.mxu0 0
      %2160 = vmatpush1.bf16.msra.mxu0 %v1889
      %2161 = vmatprep.subr.bf16.mxu0 0
      %2162 = vmatpush1.bf16.msra.mxu0 %v1890
      %2163 = vmatprep.mubr.bf16.mxu0 %v1108
      %2164 = vmatmul.mubr.bf16.gmra.mrb[0].mxu0 %v1107
      %v2165 = vpop.f32.mrb[0].mxu0
      %v2166 = vadd.f32 %v721, %v2165
      %v2167 = vpop.f32.mrb[0].mxu0
      %v2168 = vpop.f32.mrb[0].mxu0
      %v2169 = vadd.f32 %v721, %v2168
      %v2170 = vpop.f32.mrb[0].mxu0
      %2171 = vmatprep.mubr.bf16.mxu0 %v1124
      %2172 = vmatmul.mubr.bf16.gmra.mrb[0].mxu0 %v1123
      %v2173 = vpop.f32.mrb[0].mxu0
      %v2174 = vadd.f32 %v721, %v2173
      %v2175 = vpop.f32.mrb[0].mxu0
      %v2176 = vpop.f32.mrb[0].mxu0
      %v2177 = vadd.f32 %v721, %v2176
      %v2178 = vpop.f32.mrb[0].mxu0
      %2179 = vmatprep.mubr.bf16.mxu0 %v1140
      %2180 = vmatmul.mubr.bf16.gmra.mrb[0].mxu0 %v1139
      %v2181 = vpop.f32.mrb[0].mxu0
      %v2182 = vadd.f32 %v721, %v2181
      %v2183 = vpop.f32.mrb[0].mxu0
      %v2184 = vpop.f32.mrb[0].mxu0
      %v2185 = vadd.f32 %v721, %v2184
      %v2186 = vpop.f32.mrb[0].mxu0
      %2187 = vmatprep.mubr.bf16.mxu0 %v1156
      %2188 = vmatmul.mubr.bf16.gmra.mrb[0].mxu0 %v1155
      %v2189 = vpop.f32.mrb[0].mxu0
      %v2190 = vadd.f32 %v721, %v2189
      %v2191 = vpop.f32.mrb[0].mxu0
      %v2192 = vpop.f32.mrb[0].mxu0
      %v2193 = vadd.f32 %v721, %v2192
      %v2194 = vpop.f32.mrb[0].mxu0
      %2195 = vmatprep.mubr.bf16.mxu0 %v1172
      %2196 = vmatmul.mubr.bf16.gmra.mrb[0].mxu0 %v1171
      %v2197 = vpop.f32.mrb[0].mxu0
      %v2198 = vadd.f32 %v721, %v2197
      %v2199 = vpop.f32.mrb[0].mxu0
      %v2200 = vpop.f32.mrb[0].mxu0
      %v2201 = vadd.f32 %v721, %v2200
      %v2202 = vpop.f32.mrb[0].mxu0
      %2203 = vmatprep.mubr.bf16.mxu0 %v1188
      %2204 = vmatmul.mubr.bf16.gmra.mrb[0].mxu0 %v1187
      %v2205 = vpop.f32.mrb[0].mxu0
      %v2206 = vadd.f32 %v721, %v2205
      %v2207 = vpop.f32.mrb[0].mxu0
      %v2208 = vpop.f32.mrb[0].mxu0
      %v2209 = vadd.f32 %v721, %v2208
      %v2210 = vpop.f32.mrb[0].mxu0
      %2211 = vmatprep.mubr.bf16.mxu0 %v1204
      %2212 = vmatmul.mubr.bf16.gmra.mrb[0].mxu0 %v1203
      %v2213 = vpop.f32.mrb[0].mxu0
      %v2214 = vadd.f32 %v721, %v2213
      %v2215 = vpop.f32.mrb[0].mxu0
      %v2216 = vpop.f32.mrb[0].mxu0
      %v2217 = vadd.f32 %v721, %v2216
      %v2218 = vpop.f32.mrb[0].mxu0
      %2219 = vmatprep.mubr.bf16.mxu0 %v1220
      %2220 = vmatmul.mubr.bf16.gmra.mrb[0].mxu0 %v1219
      %v2221 = vpop.f32.mrb[0].mxu0
      %v2222 = vadd.f32 %v721, %v2221
      %v2223 = vpop.f32.mrb[0].mxu0
      %v2224 = vpop.f32.mrb[0].mxu0
      %v2225 = vadd.f32 %v721, %v2224
      %v2226 = vpop.f32.mrb[0].mxu0
      %2227 = vdwg.mxu0
      %2228 = vmatprep.subr.bf16.mxu0 0
      %2229 = vmatpush1.bf16.msra.mxu0 %v1891
      %2230 = vmatprep.subr.bf16.mxu0 0
      %2231 = vmatpush1.bf16.msra.mxu0 %v1892
      %2232 = vmatprep.subr.bf16.mxu0 0
      %2233 = vmatpush1.bf16.msra.mxu0 %v1893
      %2234 = vmatprep.subr.bf16.mxu0 0
      %2235 = vmatpush1.bf16.msra.mxu0 %v1894
      %2236 = vmatprep.subr.bf16.mxu0 0
      %2237 = vmatpush1.bf16.msra.mxu0 %v1895
      %2238 = vmatprep.subr.bf16.mxu0 0
      %2239 = vmatpush1.bf16.msra.mxu0 %v1896
      %2240 = vmatprep.subr.bf16.mxu0 0
      %2241 = vmatpush1.bf16.msra.mxu0 %v1897
      %2242 = vmatprep.subr.bf16.mxu0 0
      %2243 = vmatpush1.bf16.msra.mxu0 %v1898
      %2244 = vmatprep.subr.bf16.mxu0 0
      %2245 = vmatpush1.bf16.msra.mxu0 %v1899
      %2246 = vmatprep.subr.bf16.mxu0 0
      %2247 = vmatpush1.bf16.msra.mxu0 %v1900
      %2248 = vmatprep.subr.bf16.mxu0 0
      %2249 = vmatpush1.bf16.msra.mxu0 %v1901
      %2250 = vmatprep.subr.bf16.mxu0 0
      %2251 = vmatpush1.bf16.msra.mxu0 %v1902
      %2252 = vmatprep.subr.bf16.mxu0 0
      %2253 = vmatpush1.bf16.msra.mxu0 %v1903
      %2254 = vmatprep.subr.bf16.mxu0 0
      %2255 = vmatpush1.bf16.msra.mxu0 %v1904
      %2256 = vmatprep.subr.bf16.mxu0 0
      %2257 = vmatpush1.bf16.msra.mxu0 %v1905
      %2258 = vmatprep.subr.bf16.mxu0 0
      %2259 = vmatpush1.bf16.msra.mxu0 %v1906
      %2260 = vmatprep.mubr.bf16.mxu0 %v1110
      %2261 = vmatmul.mubr.bf16.gmra.mrb[0].mxu0 %v1109
      %v2262 = vpop.f32.mrb[0].mxu0
      %v2263 = vadd.f32 %v2166, %v2262
      %v2264 = vpop.f32.mrb[0].mxu0
      %v2265 = vpop.f32.mrb[0].mxu0
      %v2266 = vadd.f32 %v2169, %v2265
      %v2267 = vpop.f32.mrb[0].mxu0
      %2268 = vmatprep.mubr.bf16.mxu0 %v1126
      %2269 = vmatmul.mubr.bf16.gmra.mrb[0].mxu0 %v1125
      %v2270 = vpop.f32.mrb[0].mxu0
      %v2271 = vadd.f32 %v2174, %v2270
      %v2272 = vpop.f32.mrb[0].mxu0
      %v2273 = vpop.f32.mrb[0].mxu0
      %v2274 = vadd.f32 %v2177, %v2273
      %v2275 = vpop.f32.mrb[0].mxu0
      %2276 = vmatprep.mubr.bf16.mxu0 %v1142
      %2277 = vmatmul.mubr.bf16.gmra.mrb[0].mxu0 %v1141
      %v2278 = vpop.f32.mrb[0].mxu0
      %v2279 = vadd.f32 %v2182, %v2278
      %v2280 = vpop.f32.mrb[0].mxu0
      %v2281 = vpop.f32.mrb[0].mxu0
      %v2282 = vadd.f32 %v2185, %v2281
      %v2283 = vpop.f32.mrb[0].mxu0
      %2284 = vmatprep.mubr.bf16.mxu0 %v1158
      %2285 = vmatmul.mubr.bf16.gmra.mrb[0].mxu0 %v1157
      %v2286 = vpop.f32.mrb[0].mxu0
      %v2287 = vadd.f32 %v2190, %v2286
      %v2288 = vpop.f32.mrb[0].mxu0
      %v2289 = vpop.f32.mrb[0].mxu0
      %v2290 = vadd.f32 %v2193, %v2289
      %v2291 = vpop.f32.mrb[0].mxu0
      %2292 = vmatprep.mubr.bf16.mxu0 %v1174
      %2293 = vmatmul.mubr.bf16.gmra.mrb[0].mxu0 %v1173
      %v2294 = vpop.f32.mrb[0].mxu0
      %v2295 = vadd.f32 %v2198, %v2294
      %v2296 = vpop.f32.mrb[0].mxu0
      %v2297 = vpop.f32.mrb[0].mxu0
      %v2298 = vadd.f32 %v2201, %v2297
      %v2299 = vpop.f32.mrb[0].mxu0
      %2300 = vmatprep.mubr.bf16.mxu0 %v1190
      %2301 = vmatmul.mubr.bf16.gmra.mrb[0].mxu0 %v1189
      %v2302 = vpop.f32.mrb[0].mxu0
      %v2303 = vadd.f32 %v2206, %v2302
      %v2304 = vpop.f32.mrb[0].mxu0
      %v2305 = vpop.f32.mrb[0].mxu0
      %v2306 = vadd.f32 %v2209, %v2305
      %v2307 = vpop.f32.mrb[0].mxu0
      %2308 = vmatprep.mubr.bf16.mxu0 %v1206
      %2309 = vmatmul.mubr.bf16.gmra.mrb[0].mxu0 %v1205
      %v2310 = vpop.f32.mrb[0].mxu0
      %v2311 = vadd.f32 %v2214, %v2310
      %v2312 = vpop.f32.mrb[0].mxu0
      %v2313 = vpop.f32.mrb[0].mxu0
      %v2314 = vadd.f32 %v2217, %v2313
      %v2315 = vpop.f32.mrb[0].mxu0
      %2316 = vmatprep.mubr.bf16.mxu0 %v1222
      %2317 = vmatmul.mubr.bf16.gmra.mrb[0].mxu0 %v1221
      %v2318 = vpop.f32.mrb[0].mxu0
      %v2319 = vadd.f32 %v2222, %v2318
      %v2320 = vpop.f32.mrb[0].mxu0
      %v2321 = vpop.f32.mrb[0].mxu0
      %v2322 = vadd.f32 %v2225, %v2321
      %v2323 = vpop.f32.mrb[0].mxu0
      %2324 = vdwg.mxu0
      %2325 = vmatprep.subr.bf16.mxu0 0
      %2326 = vmatpush1.bf16.msra.mxu0 %v1907
      %2327 = vmatprep.subr.bf16.mxu0 0
      %2328 = vmatpush1.bf16.msra.mxu0 %v1908
      %2329 = vmatprep.subr.bf16.mxu0 0
      %2330 = vmatpush1.bf16.msra.mxu0 %v1909
      %2331 = vmatprep.subr.bf16.mxu0 0
      %2332 = vmatpush1.bf16.msra.mxu0 %v1910
      %2333 = vmatprep.subr.bf16.mxu0 0
      %2334 = vmatpush1.bf16.msra.mxu0 %v1911
      %2335 = vmatprep.subr.bf16.mxu0 0
      %2336 = vmatpush1.bf16.msra.mxu0 %v1912
      %2337 = vmatprep.subr.bf16.mxu0 0
      %2338 = vmatpush1.bf16.msra.mxu0 %v1913
      %2339 = vmatprep.subr.bf16.mxu0 0
      %2340 = vmatpush1.bf16.msra.mxu0 %v1914
      %2341 = vmatprep.subr.bf16.mxu0 0
      %2342 = vmatpush1.bf16.msra.mxu0 %v1915
      %2343 = vmatprep.subr.bf16.mxu0 0
      %2344 = vmatpush1.bf16.msra.mxu0 %v1916
      %2345 = vmatprep.subr.bf16.mxu0 0
      %2346 = vmatpush1.bf16.msra.mxu0 %v1917
      %2347 = vmatprep.subr.bf16.mxu0 0
      %2348 = vmatpush1.bf16.msra.mxu0 %v1918
      %2349 = vmatprep.subr.bf16.mxu0 0
      %2350 = vmatpush1.bf16.msra.mxu0 %v1919
      %2351 = vmatprep.subr.bf16.mxu0 0
      %2352 = vmatpush1.bf16.msra.mxu0 %v1920
      %2353 = vmatprep.subr.bf16.mxu0 0
      %2354 = vmatpush1.bf16.msra.mxu0 %v1921
      %2355 = vmatprep.subr.bf16.mxu0 0
      %2356 = vmatpush1.bf16.msra.mxu0 %v1922
      %2357 = vmatprep.mubr.bf16.mxu0 %v1112
      %2358 = vmatmul.mubr.bf16.gmra.mrb[0].mxu0 %v1111
      %v2359 = vpop.f32.mrb[0].mxu0
      %v2360 = vadd.f32 %v2263, %v2359
      %v2361 = vpop.f32.mrb[0].mxu0
      %v2362 = vpop.f32.mrb[0].mxu0
      %v2363 = vadd.f32 %v2266, %v2362
      %v2364 = vpop.f32.mrb[0].mxu0
      %2365 = vmatprep.mubr.bf16.mxu0 %v1128
      %2366 = vmatmul.mubr.bf16.gmra.mrb[0].mxu0 %v1127
      %v2367 = vpop.f32.mrb[0].mxu0
      %v2368 = vadd.f32 %v2271, %v2367
      %v2369 = vpop.f32.mrb[0].mxu0
      %v2370 = vpop.f32.mrb[0].mxu0
      %v2371 = vadd.f32 %v2274, %v2370
      %v2372 = vpop.f32.mrb[0].mxu0
      %2373 = vmatprep.mubr.bf16.mxu0 %v1144
      %2374 = vmatmul.mubr.bf16.gmra.mrb[0].mxu0 %v1143
      %v2375 = vpop.f32.mrb[0].mxu0
      %v2376 = vadd.f32 %v2279, %v2375
      %v2377 = vpop.f32.mrb[0].mxu0
      %v2378 = vpop.f32.mrb[0].mxu0
      %v2379 = vadd.f32 %v2282, %v2378
      %v2380 = vpop.f32.mrb[0].mxu0
      %2381 = vmatprep.mubr.bf16.mxu0 %v1160
      %2382 = vmatmul.mubr.bf16.gmra.mrb[0].mxu0 %v1159
      %v2383 = vpop.f32.mrb[0].mxu0
      %v2384 = vadd.f32 %v2287, %v2383
      %v2385 = vpop.f32.mrb[0].mxu0
      %v2386 = vpop.f32.mrb[0].mxu0
      %v2387 = vadd.f32 %v2290, %v2386
      %v2388 = vpop.f32.mrb[0].mxu0
      %2389 = vmatprep.mubr.bf16.mxu0 %v1176
      %2390 = vmatmul.mubr.bf16.gmra.mrb[0].mxu0 %v1175
      %v2391 = vpop.f32.mrb[0].mxu0
      %v2392 = vadd.f32 %v2295, %v2391
      %v2393 = vpop.f32.mrb[0].mxu0
      %v2394 = vpop.f32.mrb[0].mxu0
      %v2395 = vadd.f32 %v2298, %v2394
      %v2396 = vpop.f32.mrb[0].mxu0
      %2397 = vmatprep.mubr.bf16.mxu0 %v1192
      %2398 = vmatmul.mubr.bf16.gmra.mrb[0].mxu0 %v1191
      %v2399 = vpop.f32.mrb[0].mxu0
      %v2400 = vadd.f32 %v2303, %v2399
      %v2401 = vpop.f32.mrb[0].mxu0
      %v2402 = vpop.f32.mrb[0].mxu0
      %v2403 = vadd.f32 %v2306, %v2402
      %v2404 = vpop.f32.mrb[0].mxu0
      %2405 = vmatprep.mubr.bf16.mxu0 %v1208
      %2406 = vmatmul.mubr.bf16.gmra.mrb[0].mxu0 %v1207
      %v2407 = vpop.f32.mrb[0].mxu0
      %v2408 = vadd.f32 %v2311, %v2407
      %v2409 = vpop.f32.mrb[0].mxu0
      %v2410 = vpop.f32.mrb[0].mxu0
      %v2411 = vadd.f32 %v2314, %v2410
      %v2412 = vpop.f32.mrb[0].mxu0
      %2413 = vmatprep.mubr.bf16.mxu0 %v1224
      %2414 = vmatmul.mubr.bf16.gmra.mrb[0].mxu0 %v1223
      %v2415 = vpop.f32.mrb[0].mxu0
      %v2416 = vadd.f32 %v2319, %v2415
      %v2417 = vpop.f32.mrb[0].mxu0
      %v2418 = vpop.f32.mrb[0].mxu0
      %v2419 = vadd.f32 %v2322, %v2418
      %v2420 = vpop.f32.mrb[0].mxu0
      %2421 = vdwg.mxu0
      %2422 = vmatprep.subr.bf16.mxu0 0
      %2423 = vmatpush1.bf16.msra.mxu0 %v1923
      %2424 = vmatprep.subr.bf16.mxu0 0
      %2425 = vmatpush1.bf16.msra.mxu0 %v1924
      %2426 = vmatprep.subr.bf16.mxu0 0
      %2427 = vmatpush1.bf16.msra.mxu0 %v1925
      %2428 = vmatprep.subr.bf16.mxu0 0
      %2429 = vmatpush1.bf16.msra.mxu0 %v1926
      %2430 = vmatprep.subr.bf16.mxu0 0
      %2431 = vmatpush1.bf16.msra.mxu0 %v1927
      %2432 = vmatprep.subr.bf16.mxu0 0
      %2433 = vmatpush1.bf16.msra.mxu0 %v1928
      %2434 = vmatprep.subr.bf16.mxu0 0
      %2435 = vmatpush1.bf16.msra.mxu0 %v1929
      %2436 = vmatprep.subr.bf16.mxu0 0
      %2437 = vmatpush1.bf16.msra.mxu0 %v1930
      %2438 = vmatprep.subr.bf16.mxu0 0
      %2439 = vmatpush1.bf16.msra.mxu0 %v1931
      %2440 = vmatprep.subr.bf16.mxu0 0
      %2441 = vmatpush1.bf16.msra.mxu0 %v1932
      %2442 = vmatprep.subr.bf16.mxu0 0
      %2443 = vmatpush1.bf16.msra.mxu0 %v1933
      %2444 = vmatprep.subr.bf16.mxu0 0
      %2445 = vmatpush1.bf16.msra.mxu0 %v1934
      %2446 = vmatprep.subr.bf16.mxu0 0
      %2447 = vmatpush1.bf16.msra.mxu0 %v1935
      %2448 = vmatprep.subr.bf16.mxu0 0
      %2449 = vmatpush1.bf16.msra.mxu0 %v1936
      %2450 = vmatprep.subr.bf16.mxu0 0
      %2451 = vmatpush1.bf16.msra.mxu0 %v1937
      %2452 = vmatprep.subr.bf16.mxu0 0
      %2453 = vmatpush1.bf16.msra.mxu0 %v1938
      %2454 = vmatprep.mubr.bf16.mxu0 %v1114
      %2455 = vmatmul.mubr.bf16.gmra.mrb[0].mxu0 %v1113
      %v2456 = vpop.f32.mrb[0].mxu0
      %v2457 = vadd.f32 %v2360, %v2456
      %v2458 = vpop.f32.mrb[0].mxu0
      %v2459 = vpop.f32.mrb[0].mxu0
      %v2460 = vadd.f32 %v2363, %v2459
      %v2461 = vpop.f32.mrb[0].mxu0
      %2462 = vmatprep.mubr.bf16.mxu0 %v1130
      %2463 = vmatmul.mubr.bf16.gmra.mrb[0].mxu0 %v1129
      %v2464 = vpop.f32.mrb[0].mxu0
      %v2465 = vadd.f32 %v2368, %v2464
      %v2466 = vpop.f32.mrb[0].mxu0
      %v2467 = vpop.f32.mrb[0].mxu0
      %v2468 = vadd.f32 %v2371, %v2467
      %v2469 = vpop.f32.mrb[0].mxu0
      %2470 = vmatprep.mubr.bf16.mxu0 %v1146
      %2471 = vmatmul.mubr.bf16.gmra.mrb[0].mxu0 %v1145
      %v2472 = vpop.f32.mrb[0].mxu0
      %v2473 = vadd.f32 %v2376, %v2472
      %v2474 = vpop.f32.mrb[0].mxu0
      %v2475 = vpop.f32.mrb[0].mxu0
      %v2476 = vadd.f32 %v2379, %v2475
      %v2477 = vpop.f32.mrb[0].mxu0
      %2478 = vmatprep.mubr.bf16.mxu0 %v1162
      %2479 = vmatmul.mubr.bf16.gmra.mrb[0].mxu0 %v1161
      %v2480 = vpop.f32.mrb[0].mxu0
      %v2481 = vadd.f32 %v2384, %v2480
      %v2482 = vpop.f32.mrb[0].mxu0
      %v2483 = vpop.f32.mrb[0].mxu0
      %v2484 = vadd.f32 %v2387, %v2483
      %v2485 = vpop.f32.mrb[0].mxu0
      %2486 = vmatprep.mubr.bf16.mxu0 %v1178
      %2487 = vmatmul.mubr.bf16.gmra.mrb[0].mxu0 %v1177
      %v2488 = vpop.f32.mrb[0].mxu0
      %v2489 = vadd.f32 %v2392, %v2488
      %v2490 = vpop.f32.mrb[0].mxu0
      %v2491 = vpop.f32.mrb[0].mxu0
      %v2492 = vadd.f32 %v2395, %v2491
      %v2493 = vpop.f32.mrb[0].mxu0
      %2494 = vmatprep.mubr.bf16.mxu0 %v1194
      %2495 = vmatmul.mubr.bf16.gmra.mrb[0].mxu0 %v1193
      %v2496 = vpop.f32.mrb[0].mxu0
      %v2497 = vadd.f32 %v2400, %v2496
      %v2498 = vpop.f32.mrb[0].mxu0
      %v2499 = vpop.f32.mrb[0].mxu0
      %v2500 = vadd.f32 %v2403, %v2499
      %v2501 = vpop.f32.mrb[0].mxu0
      %2502 = vmatprep.mubr.bf16.mxu0 %v1210
      %2503 = vmatmul.mubr.bf16.gmra.mrb[0].mxu0 %v1209
      %v2504 = vpop.f32.mrb[0].mxu0
      %v2505 = vadd.f32 %v2408, %v2504
      %v2506 = vpop.f32.mrb[0].mxu0
      %v2507 = vpop.f32.mrb[0].mxu0
      %v2508 = vadd.f32 %v2411, %v2507
      %v2509 = vpop.f32.mrb[0].mxu0
      %2510 = vmatprep.mubr.bf16.mxu0 %v1226
      %2511 = vmatmul.mubr.bf16.gmra.mrb[0].mxu0 %v1225
      %v2512 = vpop.f32.mrb[0].mxu0
      %v2513 = vadd.f32 %v2416, %v2512
      %v2514 = vpop.f32.mrb[0].mxu0
      %v2515 = vpop.f32.mrb[0].mxu0
      %v2516 = vadd.f32 %v2419, %v2515
      %v2517 = vpop.f32.mrb[0].mxu0
      %2518 = vdwg.mxu0
      %2519 = vmatprep.subr.bf16.mxu0 0
      %2520 = vmatpush1.bf16.msra.mxu0 %v1939
      %2521 = vmatprep.subr.bf16.mxu0 0
      %2522 = vmatpush1.bf16.msra.mxu0 %v1940
      %2523 = vmatprep.subr.bf16.mxu0 0
      %2524 = vmatpush1.bf16.msra.mxu0 %v1941
      %2525 = vmatprep.subr.bf16.mxu0 0
      %2526 = vmatpush1.bf16.msra.mxu0 %v1942
      %2527 = vmatprep.subr.bf16.mxu0 0
      %2528 = vmatpush1.bf16.msra.mxu0 %v1943
      %2529 = vmatprep.subr.bf16.mxu0 0
      %2530 = vmatpush1.bf16.msra.mxu0 %v1944
      %2531 = vmatprep.subr.bf16.mxu0 0
      %2532 = vmatpush1.bf16.msra.mxu0 %v1945
      %2533 = vmatprep.subr.bf16.mxu0 0
      %2534 = vmatpush1.bf16.msra.mxu0 %v1946
      %2535 = vmatprep.subr.bf16.mxu0 0
      %2536 = vmatpush1.bf16.msra.mxu0 %v1947
      %2537 = vmatprep.subr.bf16.mxu0 0
      %2538 = vmatpush1.bf16.msra.mxu0 %v1948
      %2539 = vmatprep.subr.bf16.mxu0 0
      %2540 = vmatpush1.bf16.msra.mxu0 %v1949
      %2541 = vmatprep.subr.bf16.mxu0 0
      %2542 = vmatpush1.bf16.msra.mxu0 %v1950
      %2543 = vmatprep.subr.bf16.mxu0 0
      %2544 = vmatpush1.bf16.msra.mxu0 %v1951
      %2545 = vmatprep.subr.bf16.mxu0 0
      %2546 = vmatpush1.bf16.msra.mxu0 %v1952
      %2547 = vmatprep.subr.bf16.mxu0 0
      %2548 = vmatpush1.bf16.msra.mxu0 %v1953
      %2549 = vmatprep.subr.bf16.mxu0 0
      %2550 = vmatpush1.bf16.msra.mxu0 %v1954
      %2551 = vmatprep.mubr.bf16.mxu0 %v1116
      %2552 = vmatmul.mubr.bf16.gmra.mrb[0].mxu0 %v1115
      %v2553 = vpop.f32.mrb[0].mxu0
      %v2554 = vadd.f32 %v2457, %v2553
      %v2555 = vpop.f32.mrb[0].mxu0
      %v2556 = vpop.f32.mrb[0].mxu0
      %v2557 = vadd.f32 %v2460, %v2556
      %v2558 = vpop.f32.mrb[0].mxu0
      %2559 = vmatprep.mubr.bf16.mxu0 %v1132
      %2560 = vmatmul.mubr.bf16.gmra.mrb[0].mxu0 %v1131
      %v2561 = vpop.f32.mrb[0].mxu0
      %v2562 = vadd.f32 %v2465, %v2561
      %v2563 = vpop.f32.mrb[0].mxu0
      %v2564 = vpop.f32.mrb[0].mxu0
      %v2565 = vadd.f32 %v2468, %v2564
      %v2566 = vpop.f32.mrb[0].mxu0
      %2567 = vmatprep.mubr.bf16.mxu0 %v1148
      %2568 = vmatmul.mubr.bf16.gmra.mrb[0].mxu0 %v1147
      %v2569 = vpop.f32.mrb[0].mxu0
      %v2570 = vadd.f32 %v2473, %v2569
      %v2571 = vpop.f32.mrb[0].mxu0
      %v2572 = vpop.f32.mrb[0].mxu0
      %v2573 = vadd.f32 %v2476, %v2572
      %v2574 = vpop.f32.mrb[0].mxu0
      %2575 = vmatprep.mubr.bf16.mxu0 %v1164
      %2576 = vmatmul.mubr.bf16.gmra.mrb[0].mxu0 %v1163
      %v2577 = vpop.f32.mrb[0].mxu0
      %v2578 = vadd.f32 %v2481, %v2577
      %v2579 = vpop.f32.mrb[0].mxu0
      %v2580 = vpop.f32.mrb[0].mxu0
      %v2581 = vadd.f32 %v2484, %v2580
      %v2582 = vpop.f32.mrb[0].mxu0
      %2583 = vmatprep.mubr.bf16.mxu0 %v1180
      %2584 = vmatmul.mubr.bf16.gmra.mrb[0].mxu0 %v1179
      %v2585 = vpop.f32.mrb[0].mxu0
      %v2586 = vadd.f32 %v2489, %v2585
      %v2587 = vpop.f32.mrb[0].mxu0
      %v2588 = vpop.f32.mrb[0].mxu0
      %v2589 = vadd.f32 %v2492, %v2588
      %v2590 = vpop.f32.mrb[0].mxu0
      %2591 = vmatprep.mubr.bf16.mxu0 %v1196
      %2592 = vmatmul.mubr.bf16.gmra.mrb[0].mxu0 %v1195
      %v2593 = vpop.f32.mrb[0].mxu0
      %v2594 = vadd.f32 %v2497, %v2593
      %v2595 = vpop.f32.mrb[0].mxu0
      %v2596 = vpop.f32.mrb[0].mxu0
      %v2597 = vadd.f32 %v2500, %v2596
      %v2598 = vpop.f32.mrb[0].mxu0
      %2599 = vmatprep.mubr.bf16.mxu0 %v1212
      %2600 = vmatmul.mubr.bf16.gmra.mrb[0].mxu0 %v1211
      %v2601 = vpop.f32.mrb[0].mxu0
      %v2602 = vadd.f32 %v2505, %v2601
      %v2603 = vpop.f32.mrb[0].mxu0
      %v2604 = vpop.f32.mrb[0].mxu0
      %v2605 = vadd.f32 %v2508, %v2604
      %v2606 = vpop.f32.mrb[0].mxu0
      %2607 = vmatprep.mubr.bf16.mxu0 %v1228
      %2608 = vmatmul.mubr.bf16.gmra.mrb[0].mxu0 %v1227
      %v2609 = vpop.f32.mrb[0].mxu0
      %v2610 = vadd.f32 %v2513, %v2609
      %v2611 = vpop.f32.mrb[0].mxu0
      %v2612 = vpop.f32.mrb[0].mxu0
      %v2613 = vadd.f32 %v2516, %v2612
      %v2614 = vpop.f32.mrb[0].mxu0
      %2615 = vdwg.mxu0
      %2616 = vmatprep.subr.bf16.mxu0 0
      %2617 = vmatpush1.bf16.msra.mxu0 %v1955
      %2618 = vmatprep.subr.bf16.mxu0 0
      %2619 = vmatpush1.bf16.msra.mxu0 %v1956
      %2620 = vmatprep.subr.bf16.mxu0 0
      %2621 = vmatpush1.bf16.msra.mxu0 %v1957
      %2622 = vmatprep.subr.bf16.mxu0 0
      %2623 = vmatpush1.bf16.msra.mxu0 %v1958
      %2624 = vmatprep.subr.bf16.mxu0 0
      %2625 = vmatpush1.bf16.msra.mxu0 %v1959
      %2626 = vmatprep.subr.bf16.mxu0 0
      %2627 = vmatpush1.bf16.msra.mxu0 %v1960
      %2628 = vmatprep.subr.bf16.mxu0 0
      %2629 = vmatpush1.bf16.msra.mxu0 %v1961
      %2630 = vmatprep.subr.bf16.mxu0 0
      %2631 = vmatpush1.bf16.msra.mxu0 %v1962
      %2632 = vmatprep.subr.bf16.mxu0 0
      %2633 = vmatpush1.bf16.msra.mxu0 %v1963
      %2634 = vmatprep.subr.bf16.mxu0 0
      %2635 = vmatpush1.bf16.msra.mxu0 %v1964
      %2636 = vmatprep.subr.bf16.mxu0 0
      %2637 = vmatpush1.bf16.msra.mxu0 %v1965
      %2638 = vmatprep.subr.bf16.mxu0 0
      %2639 = vmatpush1.bf16.msra.mxu0 %v1966
      %2640 = vmatprep.subr.bf16.mxu0 0
      %2641 = vmatpush1.bf16.msra.mxu0 %v1967
      %2642 = vmatprep.subr.bf16.mxu0 0
      %2643 = vmatpush1.bf16.msra.mxu0 %v1968
      %2644 = vmatprep.subr.bf16.mxu0 0
      %2645 = vmatpush1.bf16.msra.mxu0 %v1969
      %2646 = vmatprep.subr.bf16.mxu0 0
      %2647 = vmatpush1.bf16.msra.mxu0 %v1970
      %2648 = vmatprep.mubr.bf16.mxu0 %v1118
      %2649 = vmatmul.mubr.bf16.gmra.mrb[0].mxu0 %v1117
      %v2650 = vpop.f32.mrb[0].mxu0
      %v2651 = vadd.f32 %v2554, %v2650
      %v2652 = vpop.f32.mrb[0].mxu0
      %v2653 = vpop.f32.mrb[0].mxu0
      %v2654 = vadd.f32 %v2557, %v2653
      %v2655 = vpop.f32.mrb[0].mxu0
      %2656 = vmatprep.mubr.bf16.mxu0 %v1134
      %2657 = vmatmul.mubr.bf16.gmra.mrb[0].mxu0 %v1133
      %v2658 = vpop.f32.mrb[0].mxu0
      %v2659 = vadd.f32 %v2562, %v2658
      %v2660 = vpop.f32.mrb[0].mxu0
      %v2661 = vpop.f32.mrb[0].mxu0
      %v2662 = vadd.f32 %v2565, %v2661
      %v2663 = vpop.f32.mrb[0].mxu0
      %2664 = vmatprep.mubr.bf16.mxu0 %v1150
      %2665 = vmatmul.mubr.bf16.gmra.mrb[0].mxu0 %v1149
      %v2666 = vpop.f32.mrb[0].mxu0
      %v2667 = vadd.f32 %v2570, %v2666
      %v2668 = vpop.f32.mrb[0].mxu0
      %v2669 = vpop.f32.mrb[0].mxu0
      %v2670 = vadd.f32 %v2573, %v2669
      %v2671 = vpop.f32.mrb[0].mxu0
      %2672 = vmatprep.mubr.bf16.mxu0 %v1166
      %2673 = vmatmul.mubr.bf16.gmra.mrb[0].mxu0 %v1165
      %v2674 = vpop.f32.mrb[0].mxu0
      %v2675 = vadd.f32 %v2578, %v2674
      %v2676 = vpop.f32.mrb[0].mxu0
      %v2677 = vpop.f32.mrb[0].mxu0
      %v2678 = vadd.f32 %v2581, %v2677
      %v2679 = vpop.f32.mrb[0].mxu0
      %2680 = vmatprep.mubr.bf16.mxu0 %v1182
      %2681 = vmatmul.mubr.bf16.gmra.mrb[0].mxu0 %v1181
      %v2682 = vpop.f32.mrb[0].mxu0
      %v2683 = vadd.f32 %v2586, %v2682
      %v2684 = vpop.f32.mrb[0].mxu0
      %v2685 = vpop.f32.mrb[0].mxu0
      %v2686 = vadd.f32 %v2589, %v2685
      %v2687 = vpop.f32.mrb[0].mxu0
      %2688 = vmatprep.mubr.bf16.mxu0 %v1198
      %2689 = vmatmul.mubr.bf16.gmra.mrb[0].mxu0 %v1197
      %v2690 = vpop.f32.mrb[0].mxu0
      %v2691 = vadd.f32 %v2594, %v2690
      %v2692 = vpop.f32.mrb[0].mxu0
      %v2693 = vpop.f32.mrb[0].mxu0
      %v2694 = vadd.f32 %v2597, %v2693
      %v2695 = vpop.f32.mrb[0].mxu0
      %2696 = vmatprep.mubr.bf16.mxu0 %v1214
      %2697 = vmatmul.mubr.bf16.gmra.mrb[0].mxu0 %v1213
      %v2698 = vpop.f32.mrb[0].mxu0
      %v2699 = vadd.f32 %v2602, %v2698
      %v2700 = vpop.f32.mrb[0].mxu0
      %v2701 = vpop.f32.mrb[0].mxu0
      %v2702 = vadd.f32 %v2605, %v2701
      %v2703 = vpop.f32.mrb[0].mxu0
      %2704 = vmatprep.mubr.bf16.mxu0 %v1230
      %2705 = vmatmul.mubr.bf16.gmra.mrb[0].mxu0 %v1229
      %v2706 = vpop.f32.mrb[0].mxu0
      %v2707 = vadd.f32 %v2610, %v2706
      %v2708 = vpop.f32.mrb[0].mxu0
      %v2709 = vpop.f32.mrb[0].mxu0
      %v2710 = vadd.f32 %v2613, %v2709
      %v2711 = vpop.f32.mrb[0].mxu0
      %2712 = vdwg.mxu0
      %2713 = vmatprep.subr.bf16.mxu0 0
      %2714 = vmatpush1.bf16.msra.mxu0 %v1971
      %2715 = vmatprep.subr.bf16.mxu0 0
      %2716 = vmatpush1.bf16.msra.mxu0 %v1972
      %2717 = vmatprep.subr.bf16.mxu0 0
      %2718 = vmatpush1.bf16.msra.mxu0 %v1973
      %2719 = vmatprep.subr.bf16.mxu0 0
      %2720 = vmatpush1.bf16.msra.mxu0 %v1974
      %2721 = vmatprep.subr.bf16.mxu0 0
      %2722 = vmatpush1.bf16.msra.mxu0 %v1975
      %2723 = vmatprep.subr.bf16.mxu0 0
      %2724 = vmatpush1.bf16.msra.mxu0 %v1976
      %2725 = vmatprep.subr.bf16.mxu0 0
      %2726 = vmatpush1.bf16.msra.mxu0 %v1977
      %2727 = vmatprep.subr.bf16.mxu0 0
      %2728 = vmatpush1.bf16.msra.mxu0 %v1978
      %2729 = vmatprep.subr.bf16.mxu0 0
      %2730 = vmatpush1.bf16.msra.mxu0 %v1979
      %2731 = vmatprep.subr.bf16.mxu0 0
      %2732 = vmatpush1.bf16.msra.mxu0 %v1980
      %2733 = vmatprep.subr.bf16.mxu0 0
      %2734 = vmatpush1.bf16.msra.mxu0 %v1981
      %2735 = vmatprep.subr.bf16.mxu0 0
      %2736 = vmatpush1.bf16.msra.mxu0 %v1982
      %2737 = vmatprep.subr.bf16.mxu0 0
      %2738 = vmatpush1.bf16.msra.mxu0 %v1983
      %2739 = vmatprep.subr.bf16.mxu0 0
      %2740 = vmatpush1.bf16.msra.mxu0 %v1984
      %2741 = vmatprep.subr.bf16.mxu0 0
      %2742 = vmatpush1.bf16.msra.mxu0 %v1985
      %2743 = vmatprep.subr.bf16.mxu0 0
      %2744 = vmatpush1.bf16.msra.mxu0 %v1986
      %2745 = vmatprep.mubr.bf16.mxu0 %v1120
      %2746 = vmatmul.mubr.bf16.gmra.mrb[0].mxu0 %v1119
      %v2747 = vpop.f32.mrb[0].mxu0
      %v2748 = vadd.f32 %v2651, %v2747
      %v2749 = vpop.f32.mrb[0].mxu0
      %v2750 = vpop.f32.mrb[0].mxu0
      %v2751 = vadd.f32 %v2654, %v2750
      %v2752 = vpop.f32.mrb[0].mxu0
      %2753 = vmatprep.mubr.bf16.mxu0 %v1136
      %2754 = vmatmul.mubr.bf16.gmra.mrb[0].mxu0 %v1135
      %v2755 = vpop.f32.mrb[0].mxu0
      %v2756 = vadd.f32 %v2659, %v2755
      %v2757 = vpop.f32.mrb[0].mxu0
      %v2758 = vpop.f32.mrb[0].mxu0
      %v2759 = vadd.f32 %v2662, %v2758
      %v2760 = vpop.f32.mrb[0].mxu0
      %2761 = vmatprep.mubr.bf16.mxu0 %v1152
      %2762 = vmatmul.mubr.bf16.gmra.mrb[0].mxu0 %v1151
      %v2763 = vpop.f32.mrb[0].mxu0
      %v2764 = vadd.f32 %v2667, %v2763
      %v2765 = vpop.f32.mrb[0].mxu0
      %v2766 = vpop.f32.mrb[0].mxu0
      %v2767 = vadd.f32 %v2670, %v2766
      %v2768 = vpop.f32.mrb[0].mxu0
      %2769 = vmatprep.mubr.bf16.mxu0 %v1168
      %2770 = vmatmul.mubr.bf16.gmra.mrb[0].mxu0 %v1167
      %v2771 = vpop.f32.mrb[0].mxu0
      %v2772 = vadd.f32 %v2675, %v2771
      %v2773 = vpop.f32.mrb[0].mxu0
      %v2774 = vpop.f32.mrb[0].mxu0
      %v2775 = vadd.f32 %v2678, %v2774
      %v2776 = vpop.f32.mrb[0].mxu0
      %2777 = vmatprep.mubr.bf16.mxu0 %v1184
      %2778 = vmatmul.mubr.bf16.gmra.mrb[0].mxu0 %v1183
      %v2779 = vpop.f32.mrb[0].mxu0
      %v2780 = vadd.f32 %v2683, %v2779
      %v2781 = vpop.f32.mrb[0].mxu0
      %v2782 = vpop.f32.mrb[0].mxu0
      %v2783 = vadd.f32 %v2686, %v2782
      %v2784 = vpop.f32.mrb[0].mxu0
      %2785 = vmatprep.mubr.bf16.mxu0 %v1200
      %2786 = vmatmul.mubr.bf16.gmra.mrb[0].mxu0 %v1199
      %v2787 = vpop.f32.mrb[0].mxu0
      %v2788 = vadd.f32 %v2691, %v2787
      %v2789 = vpop.f32.mrb[0].mxu0
      %v2790 = vpop.f32.mrb[0].mxu0
      %v2791 = vadd.f32 %v2694, %v2790
      %v2792 = vpop.f32.mrb[0].mxu0
      %2793 = vmatprep.mubr.bf16.mxu0 %v1216
      %2794 = vmatmul.mubr.bf16.gmra.mrb[0].mxu0 %v1215
      %v2795 = vpop.f32.mrb[0].mxu0
      %v2796 = vadd.f32 %v2699, %v2795
      %v2797 = vpop.f32.mrb[0].mxu0
      %v2798 = vpop.f32.mrb[0].mxu0
      %v2799 = vadd.f32 %v2702, %v2798
      %v2800 = vpop.f32.mrb[0].mxu0
      %2801 = vmatprep.mubr.bf16.mxu0 %v1232
      %2802 = vmatmul.mubr.bf16.gmra.mrb[0].mxu0 %v1231
      %v2803 = vpop.f32.mrb[0].mxu0
      %v2804 = vadd.f32 %v2707, %v2803
      %v2805 = vpop.f32.mrb[0].mxu0
      %v2806 = vpop.f32.mrb[0].mxu0
      %v2807 = vadd.f32 %v2710, %v2806
      %v2808 = vpop.f32.mrb[0].mxu0
      %2809 = vdwg.mxu0
      %2810 = vmatprep.subr.bf16.mxu0 0
      %2811 = vmatpush1.bf16.msra.mxu0 %v1987
      %2812 = vmatprep.subr.bf16.mxu0 0
      %2813 = vmatpush1.bf16.msra.mxu0 %v1988
      %2814 = vmatprep.subr.bf16.mxu0 0
      %2815 = vmatpush1.bf16.msra.mxu0 %v1989
      %2816 = vmatprep.subr.bf16.mxu0 0
      %2817 = vmatpush1.bf16.msra.mxu0 %v1990
      %2818 = vmatprep.subr.bf16.mxu0 0
      %2819 = vmatpush1.bf16.msra.mxu0 %v1991
      %2820 = vmatprep.subr.bf16.mxu0 0
      %2821 = vmatpush1.bf16.msra.mxu0 %v1992
      %2822 = vmatprep.subr.bf16.mxu0 0
      %2823 = vmatpush1.bf16.msra.mxu0 %v1993
      %2824 = vmatprep.subr.bf16.mxu0 0
      %2825 = vmatpush1.bf16.msra.mxu0 %v1994
      %2826 = vmatprep.subr.bf16.mxu0 0
      %2827 = vmatpush1.bf16.msra.mxu0 %v1995
      %2828 = vmatprep.subr.bf16.mxu0 0
      %2829 = vmatpush1.bf16.msra.mxu0 %v1996
      %2830 = vmatprep.subr.bf16.mxu0 0
      %2831 = vmatpush1.bf16.msra.mxu0 %v1997
      %2832 = vmatprep.subr.bf16.mxu0 0
      %2833 = vmatpush1.bf16.msra.mxu0 %v1998
      %2834 = vmatprep.subr.bf16.mxu0 0
      %2835 = vmatpush1.bf16.msra.mxu0 %v1999
      %2836 = vmatprep.subr.bf16.mxu0 0
      %2837 = vmatpush1.bf16.msra.mxu0 %v2000
      %2838 = vmatprep.subr.bf16.mxu0 0
      %2839 = vmatpush1.bf16.msra.mxu0 %v2001
      %2840 = vmatprep.subr.bf16.mxu0 0
      %2841 = vmatpush1.bf16.msra.mxu0 %v2002
      %2842 = vmatprep.mubr.bf16.mxu0 %v1122
      %2843 = vmatmul.mubr.bf16.gmra.mrb[0].mxu0 %v1121
      %v2844 = vpop.f32.mrb[0].mxu0
      %v2845 = vadd.f32 %v2748, %v2844
      %v2846 = vpop.f32.mrb[0].mxu0
      %v2847 = vpop.f32.mrb[0].mxu0
      %v2848 = vadd.f32 %v2751, %v2847
      %v2849 = vpop.f32.mrb[0].mxu0
      %2850 = vmatprep.mubr.bf16.mxu0 %v1138
      %2851 = vmatmul.mubr.bf16.gmra.mrb[0].mxu0 %v1137
      %v2852 = vpop.f32.mrb[0].mxu0
      %v2853 = vadd.f32 %v2756, %v2852
      %v2854 = vpop.f32.mrb[0].mxu0
      %v2855 = vpop.f32.mrb[0].mxu0
      %v2856 = vadd.f32 %v2759, %v2855
      %v2857 = vpop.f32.mrb[0].mxu0
      %2858 = vmatprep.mubr.bf16.mxu0 %v1154
      %2859 = vmatmul.mubr.bf16.gmra.mrb[0].mxu0 %v1153
      %v2860 = vpop.f32.mrb[0].mxu0
      %v2861 = vadd.f32 %v2764, %v2860
      %v2862 = vpop.f32.mrb[0].mxu0
      %v2863 = vpop.f32.mrb[0].mxu0
      %v2864 = vadd.f32 %v2767, %v2863
      %v2865 = vpop.f32.mrb[0].mxu0
      %2866 = vmatprep.mubr.bf16.mxu0 %v1170
      %2867 = vmatmul.mubr.bf16.gmra.mrb[0].mxu0 %v1169
      %v2868 = vpop.f32.mrb[0].mxu0
      %v2869 = vadd.f32 %v2772, %v2868
      %v2870 = vpop.f32.mrb[0].mxu0
      %v2871 = vpop.f32.mrb[0].mxu0
      %v2872 = vadd.f32 %v2775, %v2871
      %v2873 = vpop.f32.mrb[0].mxu0
      %2874 = vmatprep.mubr.bf16.mxu0 %v1186
      %2875 = vmatmul.mubr.bf16.gmra.mrb[0].mxu0 %v1185
      %v2876 = vpop.f32.mrb[0].mxu0
      %v2877 = vadd.f32 %v2780, %v2876
      %v2878 = vpop.f32.mrb[0].mxu0
      %v2879 = vpop.f32.mrb[0].mxu0
      %v2880 = vadd.f32 %v2783, %v2879
      %v2881 = vpop.f32.mrb[0].mxu0
      %2882 = vmatprep.mubr.bf16.mxu0 %v1202
      %2883 = vmatmul.mubr.bf16.gmra.mrb[0].mxu0 %v1201
      %v2884 = vpop.f32.mrb[0].mxu0
      %v2885 = vadd.f32 %v2788, %v2884
      %v2886 = vpop.f32.mrb[0].mxu0
      %v2887 = vpop.f32.mrb[0].mxu0
      %v2888 = vadd.f32 %v2791, %v2887
      %v2889 = vpop.f32.mrb[0].mxu0
      %2890 = vmatprep.mubr.bf16.mxu0 %v1218
      %2891 = vmatmul.mubr.bf16.gmra.mrb[0].mxu0 %v1217
      %v2892 = vpop.f32.mrb[0].mxu0
      %v2893 = vadd.f32 %v2796, %v2892
      %v2894 = vpop.f32.mrb[0].mxu0
      %v2895 = vpop.f32.mrb[0].mxu0
      %v2896 = vadd.f32 %v2799, %v2895
      %v2897 = vpop.f32.mrb[0].mxu0
      %2898 = vmatprep.mubr.bf16.mxu0 %v1234
      %2899 = vmatmul.mubr.bf16.gmra.mrb[0].mxu0 %v1233
      %v2900 = vpop.f32.mrb[0].mxu0
      %v2901 = vadd.f32 %v2804, %v2900
      %v2902 = vpop.f32.mrb[0].mxu0
      %v2903 = vpop.f32.mrb[0].mxu0
      %v2904 = vadd.f32 %v2807, %v2903
      %v2905 = vpop.f32.mrb[0].mxu0
      %2906 = vdwg.mxu0
      %v2907 = vpack.c.bf16 %v2848, %v2845
      %v2908 = vpack.c.bf16 %v2856, %v2853
      %v2909 = vpack.c.bf16 %v2864, %v2861
      %v2910 = vpack.c.bf16 %v2872, %v2869
      %v2911 = vpack.c.bf16 %v2880, %v2877
      %v2912 = vpack.c.bf16 %v2888, %v2885
      %v2913 = vpack.c.bf16 %v2896, %v2893
      %v2914 = vpack.c.bf16 %v2904, %v2901
      %v2923 = vunpack.c.l.b16 %v2907
      %v2924 = vunpack.c.h.b16 %v2907
      %v2925 = vunpack.c.l.b16 %v2908
      %v2926 = vunpack.c.h.b16 %v2908
      %v2927 = vunpack.c.l.b16 %v2909
      %v2928 = vunpack.c.h.b16 %v2909
      %v2929 = vunpack.c.l.b16 %v2910
      %v2930 = vunpack.c.h.b16 %v2910
      %v2931 = vunpack.c.l.b16 %v2911
      %v2932 = vunpack.c.h.b16 %v2911
      %v2933 = vunpack.c.l.b16 %v2912
      %v2934 = vunpack.c.h.b16 %v2912
      %v2935 = vunpack.c.l.b16 %v2913
      %v2936 = vunpack.c.h.b16 %v2913
      %v2937 = vunpack.c.l.b16 %v2914
      %v2938 = vunpack.c.h.b16 %v2914
      %v2939 = vpack.c.b16 %v2923, %v2923
      %v2940 = vpack.c.b16 %v2924, %v2924
      %v2941 = vpack.c.b16 %v2925, %v2925
      %v2942 = vpack.c.b16 %v2926, %v2926
      %v2943 = vpack.c.b16 %v2927, %v2927
      %v2944 = vpack.c.b16 %v2928, %v2928
      %v2945 = vpack.c.b16 %v2929, %v2929
      %v2946 = vpack.c.b16 %v2930, %v2930
      %v2947 = vpack.c.b16 %v2931, %v2931
      %v2948 = vpack.c.b16 %v2932, %v2932
      %v2949 = vpack.c.b16 %v2933, %v2933
      %v2950 = vpack.c.b16 %v2934, %v2934
      %v2951 = vpack.c.b16 %v2935, %v2935
      %v2952 = vpack.c.b16 %v2936, %v2936
      %v2953 = vpack.c.b16 %v2937, %v2937
      %v2954 = vpack.c.b16 %v2938, %v2938
      %2971 = vst [vmem:[%s313] sm:$0xf] %v2939
      %2972 = vst [vmem:[%s313 + $0x4] sm:$0xf] %v2940
      %2973 = vst [vmem:[%s313 + $0x8] sm:$0xf] %v2941
      %2974 = vst [vmem:[%s313 + $0xc] sm:$0xf] %v2942
      %2975 = vst [vmem:[%s313 + $0x10] sm:$0xf] %v2943
      %2976 = vst [vmem:[%s313 + $0x14] sm:$0xf] %v2944
      %2977 = vst [vmem:[%s313 + $0x18] sm:$0xf] %v2945
      %2978 = vst [vmem:[%s313 + $0x1c] sm:$0xf] %v2946
      %2979 = vst [vmem:[%s313 + $0x20] sm:$0xf] %v2947
      %2980 = vst [vmem:[%s313 + $0x24] sm:$0xf] %v2948
      %2981 = vst [vmem:[%s313 + $0x28] sm:$0xf] %v2949
      %2982 = vst [vmem:[%s313 + $0x2c] sm:$0xf] %v2950
      %2983 = vst [vmem:[%s313 + $0x30] sm:$0xf] %v2951
      %2984 = vst [vmem:[%s313 + $0x34] sm:$0xf] %v2952
      %2985 = vst [vmem:[%s313 + $0x38] sm:$0xf] %v2953
      %2986 = vst [vmem:[%s313 + $0x3c] sm:$0xf] %v2954
      %v2987 = vstv %s328
      %v2988 = vadd.s32 %v2987, 1
      %v2989 = vadd.s32 %v2987, 2
      %v2990 = vadd.s32 %v2987, 3
      %v2991 = vadd.s32 %v2987, 4
      %v2992 = vadd.s32 %v2987, 5
      %v2993 = vadd.s32 %v2987, 6
      %v2994 = vadd.s32 %v2987, 7
      %v2995 = vlaneseq
      %v2996 = vshrl.u32 %v2995, 7
      %v2997 = vadd.s32 %v2996, 8
      %vm2998 = vcmp.lt.s32.totalorder %v2987, 8
      %vm2999 = vcmp.lt.s32.totalorder %v2988, 8
      %vm3000 = vcmp.lt.s32.totalorder %v2989, 8
      %vm3001 = vcmp.lt.s32.totalorder %v2990, 8
      %vm3002 = vcmp.lt.s32.totalorder %v2991, 8
      %vm3003 = vcmp.lt.s32.totalorder %v2992, 8
      %vm3004 = vcmp.lt.s32.totalorder %v2993, 8
      %vm3005 = vcmp.lt.s32.totalorder %v2994, 8
      %vm3006 = vcmp.lt.s32.totalorder %v2996, 8
      %vm3007 = vcmp.lt.s32.totalorder %v2997, 8
      %vm3008 = vmand %vm2998, %vm3006
      %vm3009 = vmand %vm2998, %vm3007
      %vm3010 = vmand %vm2999, %vm3006
      %vm3011 = vmand %vm2999, %vm3007
      %vm3012 = vmand %vm3000, %vm3006
      %vm3013 = vmand %vm3000, %vm3007
      %vm3014 = vmand %vm3001, %vm3006
      %vm3015 = vmand %vm3001, %vm3007
      %vm3016 = vmand %vm3002, %vm3006
      %vm3017 = vmand %vm3002, %vm3007
      %vm3018 = vmand %vm3003, %vm3006
      %vm3019 = vmand %vm3003, %vm3007
      %vm3020 = vmand %vm3004, %vm3006
      %vm3021 = vmand %vm3004, %vm3007
      %vm3022 = vmand %vm3005, %vm3006
      %vm3023 = vmand %vm3005, %vm3007
      %v3024 = vsel %vm3008, %v2845, 0.0
      %v3025 = vsel %vm3009, %v2848, 0.0
      %v3026 = vsel %vm3010, %v2853, 0.0
      %v3027 = vsel %vm3011, %v2856, 0.0
      %v3028 = vsel %vm3012, %v2861, 0.0
      %v3029 = vsel %vm3013, %v2864, 0.0
      %v3030 = vsel %vm3014, %v2869, 0.0
      %v3031 = vsel %vm3015, %v2872, 0.0
      %v3032 = vsel %vm3016, %v2877, 0.0
      %v3033 = vsel %vm3017, %v2880, 0.0
      %v3034 = vsel %vm3018, %v2885, 0.0
      %v3035 = vsel %vm3019, %v2888, 0.0
      %v3036 = vsel %vm3020, %v2893, 0.0
      %v3037 = vsel %vm3021, %v2896, 0.0
      %v3038 = vsel %vm3022, %v2901, 0.0
      %v3039 = vsel %vm3023, %v2904, 0.0
      %p3040 = scmp.eq.s32.totalorder %s24, 0
      // Predicated region
      $region33: #{_lambda_.9} parent=31 // pred_check
        %p3041 = pneg %p3040
      $region34: #{_lambda_.9} parent=31 // pred_check_branch
        %3043 = sbr.rel (%p3041) target = $region36
      $region35: #{_lambda_.9} parent=31 // pred_region
        %3044 = vst [vmem:[%s320] sm:$0x1] 0.0
        %3045 = vst [vmem:[%s326] sm:$0x1] 0.0
      $region36: #{_lambda_.9} parent=31 // pred_fallthru
        _
      %v3046 = vadd.f32 %v3024, %v3026
      %v3047 = vadd.f32 %v3046, %v3028
      %v3048 = vadd.f32 %v3047, %v3030
      %v3049 = vadd.f32 %v3048, %v3032
      %v3050 = vadd.f32 %v3049, %v3034
      %v3051 = vadd.f32 %v3050, %v3036
      %v3052 = vadd.f32 %v3051, %v3038
      %v3053 = vadd.f32 %v3025, %v3027
      %v3054 = vadd.f32 %v3053, %v3029
      %v3055 = vadd.f32 %v3054, %v3031
      %v3056 = vadd.f32 %v3055, %v3033
      %v3057 = vadd.f32 %v3056, %v3035
      %v3058 = vadd.f32 %v3057, %v3037
      %v3059 = vadd.f32 %v3058, %v3039
      %v3060 = vadd.f32 %v3052, %v3059
      %v3061 = vrot.slane %v3060, 4
      %v3062 = vadd.f32 %v3060, %v3061
      %v3063 = vrot.slane %v3062, 2
      %v3064 = vadd.f32 %v3062, %v3063
      %v3065 = vrot.slane %v3064, 1
      %v3066 = vadd.f32 %v3064, %v3065
      %v3067 = vmul.f32 %v3024, %v3024
      %v3068 = vmul.f32 %v3025, %v3025
      %v3069 = vmul.f32 %v3026, %v3026
      %v3070 = vmul.f32 %v3027, %v3027
      %v3071 = vmul.f32 %v3028, %v3028
      %v3072 = vmul.f32 %v3029, %v3029
      %v3073 = vmul.f32 %v3030, %v3030
      %v3074 = vmul.f32 %v3031, %v3031
      %v3075 = vmul.f32 %v3032, %v3032
      %v3076 = vmul.f32 %v3033, %v3033
      %v3077 = vmul.f32 %v3034, %v3034
      %v3078 = vmul.f32 %v3035, %v3035
      %v3079 = vmul.f32 %v3036, %v3036
      %v3080 = vmul.f32 %v3037, %v3037
      %v3081 = vmul.f32 %v3038, %v3038
      %v3082 = vmul.f32 %v3039, %v3039
      %v3083 = vadd.f32 %v3067, %v3069
      %v3084 = vadd.f32 %v3083, %v3071
      %v3085 = vadd.f32 %v3084, %v3073
      %v3086 = vadd.f32 %v3085, %v3075
      %v3087 = vadd.f32 %v3086, %v3077
      %v3088 = vadd.f32 %v3087, %v3079
      %v3089 = vadd.f32 %v3088, %v3081
      %v3090 = vadd.f32 %v3068, %v3070
      %v3091 = vadd.f32 %v3090, %v3072
      %v3092 = vadd.f32 %v3091, %v3074
      %v3093 = vadd.f32 %v3092, %v3076
      %v3094 = vadd.f32 %v3093, %v3078
      %v3095 = vadd.f32 %v3094, %v3080
      %v3096 = vadd.f32 %v3095, %v3082
      %v3097 = vadd.f32 %v3089, %v3096
      %v3098 = vrot.slane %v3097, 4
      %v3099 = vadd.f32 %v3097, %v3098
      %v3100 = vrot.slane %v3099, 2
      %v3101 = vadd.f32 %v3099, %v3100
      %v3102 = vrot.slane %v3101, 1
      %v3103 = vadd.f32 %v3101, %v3102
      %v3104 = vld [vmem:[%s320] sm:$0x1]
      %v3105 = vadd.f32 %v3104, %v3066
      %3106 = vst [vmem:[%s320] sm:$0x1] %v3105
      %v3107 = vld [vmem:[%s326] sm:$0x1]
      %v3108 = vadd.f32 %v3107, %v3103
      %3109 = vst [vmem:[%s326] sm:$0x1] %v3108
      %s3110 = smul.u32 16, %s24
      %p3111 = scmp.lt.s32.totalorder %s22, 1
      %s3112 = scalar_select %p3111, %s22, 1
      %p3113 = scmp.lt.s32.totalorder %s3110, 15
      %s3114 = scalar_select %p3113, %s3110, 15
      %p3115 = scmp.lt.s32.totalorder %s23, 0
      %s3116 = scalar_select %p3115, %s23, 0
      %s3117 = sadd.s32 %s3116, %s3114
      %s3118 = smul.addr %s3112, 16
      %s3119 = sadd.s32 %s3117, %s3118
      %s3120 = smul.addr %s3119, 4
      %s3121 = scalar_lea.vmem %s3, %s3120
      %p3122 = scmp.lt.s32.totalorder %s22, 1
      %s3123 = scalar_select %p3122, %s22, 1
      %p3124 = scmp.lt.s32.totalorder %s23, 0
      %s3125 = scalar_select %p3124, %s23, 0
      %s3126 = sadd.s32 %s3125, %s3123
      %s3127 = scalar_lea.vmem %s4, %s3126
      %p3128 = scmp.lt.s32.totalorder %s22, 1
      %s3129 = scalar_select %p3128, %s22, 1
      %p3130 = scmp.lt.s32.totalorder %s23, 0
      %s3131 = scalar_select %p3130, %s23, 0
      %s3132 = sadd.s32 %s3131, %s3129
      %s3133 = scalar_lea.vmem %s5, %s3132
      // Predicated region
      $region37: #{_lambda_.9} parent=31 // pred_check
        %p3134 = pneg %p136
      $region38: #{_lambda_.9} parent=31 // pred_check_branch
        %3136 = sbr.rel (%p3134) target = $region40
      $region39: #{_lambda_.9} parent=31 // pred_region
        %s3137 = smul.u32 16, %s24
      $region40: #{_lambda_.9} parent=31 // pred_fallthru
        _
      // Predicated region
      $region41: #{_lambda_.9} parent=31 // pred_check
        %p3138 = pneg %p164
      $region42: #{_lambda_.9} parent=31 // pred_check_branch
        %3140 = sbr.rel (%p3138) target = $region44
      $region43: #{_lambda_.9} parent=31 // pred_region
        _
      $region44: #{_lambda_.9} parent=31 // pred_fallthru
        _
      // Predicated region
      $region45: #{_lambda_.9} parent=31 // pred_check
        %p3141 = pneg %p192
      $region46: #{_lambda_.9} parent=31 // pred_check_branch
        %3143 = sbr.rel (%p3141) target = $region48
      $region47: #{_lambda_.9} parent=31 // pred_region
        _
      $region48: #{_lambda_.9} parent=31 // pred_fallthru
        _
    $region32: #{_lambda_.9} parent=5 // pred_fallthru
      _
    %p3144 = scmp.le.s32.totalorder 2, %s12
    // Predicated region
    $region49: #{_lambda_.9} parent=5 // pred_check
      %p3145 = pneg %p3144
    $region50: #{_lambda_.9} parent=5 // pred_check_branch
      %3147 = sbr.rel (%p3145) target = $region52
    $region51: #{_lambda_.9} parent=5 // pred_region
      %s3148 = ssub.s32 %s12, 2
      // Predicated region
      $region53: #{_lambda_.9} parent=51 // pred_check
        %p3149 = pneg %p142
      $region54: #{_lambda_.9} parent=51 // pred_check_branch
        %3151 = sbr.rel (%p3149) target = $region56
      $region55: #{_lambda_.9} parent=51 // pred_region
        %s3152 = smul.u32 16, %s27
        %p3153 = scmp.lt.s32.totalorder %s25, 1
        %s3154 = scalar_select %p3153, %s25, 1
        %p3155 = scmp.lt.s32.totalorder %s3152, 15
        %s3156 = scalar_select %p3155, %s3152, 15
        %p3157 = scmp.lt.s32.totalorder %s26, 0
        %s3158 = scalar_select %p3157, %s26, 0
        %s3159 = sadd.s32 %s3158, %s3156
        %s3160 = smul.addr %s3154, 16
        %s3161 = sadd.s32 %s3159, %s3160
        %s3162 = smul.addr %s3161, 4
        %s3163 = scalar_lea.vmem %s3, %s3162
      $region56: #{_lambda_.9} parent=51 // pred_fallthru
        _
      // Predicated region
      $region57: #{_lambda_.9} parent=51 // pred_check
        %p3164 = pneg %p170
      $region58: #{_lambda_.9} parent=51 // pred_check_branch
        %3166 = sbr.rel (%p3164) target = $region60
      $region59: #{_lambda_.9} parent=51 // pred_region
        %p3167 = scmp.lt.s32.totalorder %s25, 1
        %s3168 = scalar_select %p3167, %s25, 1
        %p3169 = scmp.lt.s32.totalorder %s26, 0
        %s3170 = scalar_select %p3169, %s26, 0
        %s3171 = sadd.s32 %s3170, %s3168
        %s3172 = scalar_lea.vmem %s4, %s3171
      $region60: #{_lambda_.9} parent=51 // pred_fallthru
        _
      // Predicated region
      $region61: #{_lambda_.9} parent=51 // pred_check
        %p3173 = pneg %p198
      $region62: #{_lambda_.9} parent=51 // pred_check_branch
        %3175 = sbr.rel (%p3173) target = $region64
      $region63: #{_lambda_.9} parent=51 // pred_region
        %p3176 = scmp.lt.s32.totalorder %s25, 1
        %s3177 = scalar_select %p3176, %s25, 1
        %p3178 = scmp.lt.s32.totalorder %s26, 0
        %s3179 = scalar_select %p3178, %s26, 0
        %s3180 = sadd.s32 %s3179, %s3177
        %s3181 = scalar_lea.vmem %s5, %s3180
      $region64: #{_lambda_.9} parent=51 // pred_fallthru
        _
    $region52: #{_lambda_.9} parent=5 // pred_fallthru
      _
  $region6: #{_lambda_.9} parent=0 // loop_footer
    %s16 = sadd.s32 1, %s12
  $region7: #{_lambda_.9} parent=0 // loop_footer_branch
    %11 = sbr.rel target = $region3
  $region8: #{_lambda_.9} parent=0 // loop_exit
    _

// kernel: _lambda_.12
$region0: #{_lambda_.12}
  #allocation0 [shape = 'u32[]', space=smem, size = 0x4, offset = 0x4, fixed_abs, tag = 'smem constant byte address 0x4 - core index']
  #allocation1 [shape = 'u32[144,128]{1,0:T(1,128)}', space=vmem, size = 0x12000, scoped, tag = 'internal scratch']
  %s0 = inlined_call_operand.vmem [shape: bf16[2,16,128], index: 0, kind: input, shape index: {}]
  %s1 = inlined_call_operand.vmem [shape: f32[2,1,128], index: 1, kind: input, shape index: {}]
  %s2 = inlined_call_operand.vmem [shape: f32[2,1,128], index: 2, kind: input, shape index: {}]
  %s3 = inlined_call_operand.vmem [shape: bf16[2,16,128], index: 3, kind: output, shape index: {}]
  %s4 = sld [smem:[#allocation0]]
  $region45: #{_lambda_.12} parent=0
    _
  %s6 = ssub.s32 1, %s4
  %s7 = scalar_select 0, %s6, %s4
  loop: start=0, step=1, limit=4
  $region2: #{_lambda_.12} parent=0 // loop_pre_header
    _
  $region3: #{_lambda_.12} parent=0 // loop_header
    %s9 = sphi 0, %s13
    %p10 = scmp.ge.s32.totalorder %s9, 4
    %s16 = sphi 0, %s28
    %s17 = sphi 0, %s24
    %s18 = sphi 0, %s16
    %s19 = sphi 0, %s17
    %s20 = sphi 0, %s18
    %s21 = sphi 0, %s19
    %s33 = sphi 0, %s35
    %s36 = sphi 0, %s33
    %s37 = sphi 0, %s36
    %s53 = sphi 0, %s37
    %s59 = sphi 0, %s61
    %s62 = sphi 0, %s59
    %s63 = sphi 0, %s62
    %s79 = sphi 0, %s63
    %s85 = sphi 0, %s87
    %s88 = sphi 0, %s85
    %s89 = sphi 0, %s88
    %s105 = sphi 0, %s89
    %s113 = sphi 0, %s115
    %s116 = sphi 0, %s113
    %s117 = sphi 0, %s116
    %s133 = sphi 0, %s117
  $region4: #{_lambda_.12} parent=0 // loop_header_branch
    %12 = sbr.rel (%p10) target = $region8
  $region5: #{_lambda_.12} parent=0 // loop_body
    %s14 = ssub.s32 %s9, 1
    %s15 = ssub.s32 %s9, 2
    %s22 = sadd.s32 1, %s17
    %p23 = scmp.ge.s32.totalorder %s22, 1
    %s24 = scalar_select %p23, 0, %s22
    %s25 = sadd.s32 1, %s16
    %s26 = scalar_select %p23, %s25, %s16
    %p27 = scmp.ge.s32.totalorder %s26, 2
    %s28 = scalar_select %p27, 0, %s26
    %s29 = ssub.s32 %s16, %s28
    %s30 = ssub.s32 %s17, %s24
    %s31 = sor.u32 %s29, %s30
    %p32 = scmp.eq.s32.totalorder %s31, 0
    %s34 = sadd.s32 %s33, 1
    %s35 = scalar_select %p32, %s33, %s34
    %p38 = pneg %p32
    %p39 = scmp.eq.s32.totalorder %s9, 1
    %p40 = por %p38, %p39
    %p41 = scmp.ne.s32.totalorder %s33, %s36
    %p42 = scmp.eq.s32.totalorder %s9, 0
    %p43 = por %p41, %p42
    %p44 = scmp.ne.s32.totalorder %s33, %s36
    %p45 = scmp.eq.s32.totalorder %s14, 1
    %p46 = por %p44, %p45
    %p47 = scmp.ne.s32.totalorder %s36, %s37
    %p48 = scmp.eq.s32.totalorder %s14, 0
    %p49 = por %p47, %p48
    %p50 = scmp.ne.s32.totalorder %s36, %s37
    %p51 = scmp.eq.s32.totalorder %s15, 1
    %p52 = por %p50, %p51
    %p54 = scmp.ne.s32.totalorder %s37, %s53
    %p55 = scmp.eq.s32.totalorder %s15, 0
    %p56 = por %p54, %p55
    %s57 = ssub.s32 %s16, %s28
    %p58 = scmp.eq.s32.totalorder %s57, 0
    %s60 = sadd.s32 %s59, 1
    %s61 = scalar_select %p58, %s59, %s60
    %p64 = pneg %p58
    %p65 = scmp.eq.s32.totalorder %s9, 1
    %p66 = por %p64, %p65
    %p67 = scmp.ne.s32.totalorder %s59, %s62
    %p68 = scmp.eq.s32.totalorder %s9, 0
    %p69 = por %p67, %p68
    %p70 = scmp.ne.s32.totalorder %s59, %s62
    %p71 = scmp.eq.s32.totalorder %s14, 1
    %p72 = por %p70, %p71
    %p73 = scmp.ne.s32.totalorder %s62, %s63
    %p74 = scmp.eq.s32.totalorder %s14, 0
    %p75 = por %p73, %p74
    %p76 = scmp.ne.s32.totalorder %s62, %s63
    %p77 = scmp.eq.s32.totalorder %s15, 1
    %p78 = por %p76, %p77
    %p80 = scmp.ne.s32.totalorder %s63, %s79
    %p81 = scmp.eq.s32.totalorder %s15, 0
    %p82 = por %p80, %p81
    %s83 = ssub.s32 %s16, %s28
    %p84 = scmp.eq.s32.totalorder %s83, 0
    %s86 = sadd.s32 %s85, 1
    %s87 = scalar_select %p84, %s85, %s86
    %p90 = pneg %p84
    %p91 = scmp.eq.s32.totalorder %s9, 1
    %p92 = por %p90, %p91
    %p93 = scmp.ne.s32.totalorder %s85, %s88
    %p94 = scmp.eq.s32.totalorder %s9, 0
    %p95 = por %p93, %p94
    %p96 = scmp.ne.s32.totalorder %s85, %s88
    %p97 = scmp.eq.s32.totalorder %s14, 1
    %p98 = por %p96, %p97
    %p99 = scmp.ne.s32.totalorder %s88, %s89
    %p100 = scmp.eq.s32.totalorder %s14, 0
    %p101 = por %p99, %p100
    %p102 = scmp.ne.s32.totalorder %s88, %s89
    %p103 = scmp.eq.s32.totalorder %s15, 1
    %p104 = por %p102, %p103
    %p106 = scmp.ne.s32.totalorder %s89, %s105
    %p107 = scmp.eq.s32.totalorder %s15, 0
    %p108 = por %p106, %p107
    %s109 = ssub.s32 %s16, %s28
    %s110 = ssub.s32 %s17, %s24
    %s111 = sor.u32 %s109, %s110
    %p112 = scmp.eq.s32.totalorder %s111, 0
    %s114 = sadd.s32 %s113, 1
    %s115 = scalar_select %p112, %s113, %s114
    %p118 = pneg %p112
    %p119 = scmp.eq.s32.totalorder %s9, 1
    %p120 = por %p118, %p119
    %p121 = scmp.ne.s32.totalorder %s113, %s116
    %p122 = scmp.eq.s32.totalorder %s9, 0
    %p123 = por %p121, %p122
    %p124 = scmp.ne.s32.totalorder %s113, %s116
    %p125 = scmp.eq.s32.totalorder %s14, 1
    %p126 = por %p124, %p125
    %p127 = scmp.ne.s32.totalorder %s116, %s117
    %p128 = scmp.eq.s32.totalorder %s14, 0
    %p129 = por %p127, %p128
    %p130 = scmp.ne.s32.totalorder %s116, %s117
    %p131 = scmp.eq.s32.totalorder %s15, 1
    %p132 = por %p130, %p131
    %p134 = scmp.ne.s32.totalorder %s117, %s133
    %p135 = scmp.eq.s32.totalorder %s15, 0
    %p136 = por %p134, %p135
    %p137 = scmp.le.s32.totalorder 1, %s9
    %p138 = scmp.lt.s32.totalorder %s9, 3
    %p139 = pnand %p137, %p138
    %p140 = pneg %p139
    // Predicated region
    $region9: #{_lambda_.12} parent=5 // pred_check
      _
    $region10: #{_lambda_.12} parent=5 // pred_check_branch
      %142 = sbr.rel (%p139) target = $region12
    $region11: #{_lambda_.12} parent=5 // pred_region
      %s143 = ssub.s32 %s9, 1
    $region12: #{_lambda_.12} parent=5 // pred_fallthru
      _
    %p144 = scmp.lt.s32.totalorder %s9, 2
    // Predicated region
    $region13: #{_lambda_.12} parent=5 // pred_check
      %p145 = pneg %p144
    $region14: #{_lambda_.12} parent=5 // pred_check_branch
      %147 = sbr.rel (%p145) target = $region16
    $region15: #{_lambda_.12} parent=5 // pred_region
      // Predicated region
      $region17: #{_lambda_.12} parent=15 // pred_check
        %p148 = pneg %p43
      $region18: #{_lambda_.12} parent=15 // pred_check_branch
        %150 = sbr.rel (%p148) target = $region20
      $region19: #{_lambda_.12} parent=15 // pred_region
        %s151 = smul.u32 2, %s17
        %p152 = scmp.lt.s32.totalorder %s16, 1
        %s153 = scalar_select %p152, %s16, 1
        %p154 = scmp.lt.s32.totalorder %s151, 1
        %s155 = scalar_select %p154, %s151, 1
        %s156 = smul.addr %s153, 2
        %s157 = sadd.s32 %s155, %s156
        %s158 = smul.addr %s157, 4
        %s159 = scalar_lea.vmem %s0, %s158
        %s160 = smul.u32 2, %s17
      $region20: #{_lambda_.12} parent=15 // pred_fallthru
        _
      // Predicated region
      $region21: #{_lambda_.12} parent=15 // pred_check
        %p161 = pneg %p69
      $region22: #{_lambda_.12} parent=15 // pred_check_branch
        %163 = sbr.rel (%p161) target = $region24
      $region23: #{_lambda_.12} parent=15 // pred_region
        %p164 = scmp.lt.s32.totalorder %s16, 1
        %s165 = scalar_select %p164, %s16, 1
        %s166 = scalar_lea.vmem %s1, %s165
      $region24: #{_lambda_.12} parent=15 // pred_fallthru
        _
      // Predicated region
      $region25: #{_lambda_.12} parent=15 // pred_check
        %p167 = pneg %p95
      $region26: #{_lambda_.12} parent=15 // pred_check_branch
        %169 = sbr.rel (%p167) target = $region28
      $region27: #{_lambda_.12} parent=15 // pred_region
        %p170 = scmp.lt.s32.totalorder %s16, 1
        %s171 = scalar_select %p170, %s16, 1
        %s172 = scalar_lea.vmem %s2, %s171
      $region28: #{_lambda_.12} parent=15 // pred_fallthru
        _
    $region16: #{_lambda_.12} parent=5 // pred_fallthru
      _
    %p173 = scmp.le.s32.totalorder 1, %s9
    %p174 = scmp.lt.s32.totalorder %s9, 3
    %p175 = pnand %p173, %p174
    %p176 = pneg %p175
    // Predicated region
    $region29: #{_lambda_.12} parent=5 // pred_check
      _
    $region30: #{_lambda_.12} parent=5 // pred_check_branch
      %178 = sbr.rel (%p175) target = $region32
    $region31: #{_lambda_.12} parent=5 // pred_region
      %s179 = ssub.s32 %s9, 1
      %s180 = smul.u32 2, %s19
      %p181 = scmp.lt.s32.totalorder %s18, 1
      %s182 = scalar_select %p181, %s18, 1
      %p183 = scmp.lt.s32.totalorder %s180, 1
      %s184 = scalar_select %p183, %s180, 1
      %s185 = smul.addr %s182, 2
      %s186 = sadd.s32 %s184, %s185
      %s187 = smul.addr %s186, 4
      %s188 = scalar_lea.vmem %s0, %s187
      %p189 = pneg %p49
      %p190 = pneg %p46
      %p191 = scmp.lt.s32.totalorder %s18, 1
      %s192 = scalar_select %p191, %s18, 1
      %s193 = scalar_lea.vmem %s1, %s192
      %p194 = pneg %p75
      %p195 = pneg %p72
      %p196 = scmp.lt.s32.totalorder %s18, 1
      %s197 = scalar_select %p196, %s18, 1
      %s198 = scalar_lea.vmem %s2, %s197
      %p199 = pneg %p101
      %p200 = pneg %p98
      %p201 = pneg %p129
      %p202 = pneg %p126
      %s203 = smul.u32 2, %s19
      %p204 = scmp.lt.s32.totalorder %s18, 1
      %s205 = scalar_select %p204, %s18, 1
      %p206 = scmp.lt.s32.totalorder %s203, 1
      %s207 = scalar_select %p206, %s203, 1
      %s208 = smul.addr %s205, 2
      %s209 = sadd.s32 %s207, %s208
      %s210 = smul.addr %s209, 4
      %s211 = scalar_lea.vmem %s3, %s210
      %s212 = smul.u32 2, %s19
      %p213 = scmp.lt.s32.totalorder %s18, 1
      %s214 = scalar_select %p213, %s18, 1
      %p215 = scmp.lt.s32.totalorder %s212, 1
      %s216 = scalar_select %p215, %s212, 1
      %s217 = smul.addr %s214, 2
      %s218 = sadd.s32 %s216, %s217
      %s219 = smul.addr %s218, 4
      %s220 = scalar_lea.vmem %s0, %s219
      %s221 = smul.u32 2, %s19
      %p222 = scmp.lt.s32.totalorder %s18, 1
      %s223 = scalar_select %p222, %s18, 1
      %s224 = scalar_lea.vmem %s1, %s223
      %p225 = scmp.lt.s32.totalorder %s18, 1
      %s226 = scalar_select %p225, %s18, 1
      %s227 = scalar_lea.vmem %s2, %s226
      %s228 = smul.u32 2, %s19
      %p229 = scmp.lt.s32.totalorder %s18, 1
      %s230 = scalar_select %p229, %s18, 1
      %p231 = scmp.lt.s32.totalorder %s228, 1
      %s232 = scalar_select %p231, %s228, 1
      %s233 = smul.addr %s230, 2
      %s234 = sadd.s32 %s232, %s233
      %s235 = smul.addr %s234, 4
      %s236 = scalar_lea.vmem %s3, %s235
      %s237 = smul.u32 2, %s19
      %v238 = vld [vmem:[%s220] sm:$0xf]
      %v239 = vld [vmem:[%s220 + $0x4] sm:$0xf]
      %v240 = vunpack.c.l.bf16 %v238
      %v241 = vunpack.c.l.bf16 %v239
      %v242 = vld [vmem:[%s224] sm:$0x1]
      %v243 = vmul.f32 %v242, 0.0625
      %v244 = vld [vmem:[%s227] sm:$0x1]
      %v245 = vmul.f32 %v244, 0.0625
      %v246 = vmul.f32 %v243, %v243
      %v247 = vsub.f32 %v245, %v246
      %v248 = vmax.f32 %v247, 0.0
      %v250 = vlaneseq
      %v251 = vshrl.u32 %v250, 7
      %v252 = vsub.s32 0, %v251
      %v253 = vrot.slane %v243, %v252
      %v255 = vsub.f32 %v240, %v253
      %v256 = vsub.f32 %v241, %v253
      %v257 = vadd.f32 %v248, 1e-05
      %v258 = vrsqrt.pop %v257
      %v260 = vlaneseq
      %v261 = vshrl.u32 %v260, 7
      %v262 = vsub.s32 0, %v261
      %v263 = vrot.slane %v258, %v262
      %v265 = vmul.f32 %v255, %v263
      %v266 = vmul.f32 %v256, %v263
      %vm267 = vcmp.ge.f32.partialorder %v265, 0.0
      %vm268 = vcmp.ge.f32.partialorder %v266, 0.0
      %v269 = vmul.f32 %v265, 0.2
      %v270 = vmul.f32 %v266, 0.2
      %v271 = vsel %vm267, %v265, %v269
      %v272 = vsel %vm268, %v266, %v270
      %v273 = vpack.c.bf16 %v272, %v271
      %v275 = vunpack.c.l.b16 %v273
      %v276 = vunpack.c.h.b16 %v273
      %v277 = vpack.c.b16 %v275, %v275
      %v278 = vpack.c.b16 %v276, %v276
      %281 = vst [vmem:[%s236] sm:$0xf] %v277
      %282 = vst [vmem:[%s236 + $0x4] sm:$0xf] %v278
      %s283 = smul.u32 2, %s19
      %p284 = scmp.lt.s32.totalorder %s18, 1
      %s285 = scalar_select %p284, %s18, 1
      %p286 = scmp.lt.s32.totalorder %s283, 1
      %s287 = scalar_select %p286, %s283, 1
      %s288 = smul.addr %s285, 2
      %s289 = sadd.s32 %s287, %s288
      %s290 = smul.addr %s289, 4
      %s291 = scalar_lea.vmem %s3, %s290
      // Predicated region
      $region33: #{_lambda_.12} parent=31 // pred_check
        %p292 = pneg %p126
      $region34: #{_lambda_.12} parent=31 // pred_check_branch
        %294 = sbr.rel (%p292) target = $region36
      $region35: #{_lambda_.12} parent=31 // pred_region
        %s295 = smul.u32 2, %s19
      $region36: #{_lambda_.12} parent=31 // pred_fallthru
        _
    $region32: #{_lambda_.12} parent=5 // pred_fallthru
      _
    %p296 = scmp.le.s32.totalorder 2, %s9
    // Predicated region
    $region37: #{_lambda_.12} parent=5 // pred_check
      %p297 = pneg %p296
    $region38: #{_lambda_.12} parent=5 // pred_check_branch
      %299 = sbr.rel (%p297) target = $region40
    $region39: #{_lambda_.12} parent=5 // pred_region
      %s300 = ssub.s32 %s9, 2
      // Predicated region
      $region41: #{_lambda_.12} parent=39 // pred_check
        %p301 = pneg %p132
      $region42: #{_lambda_.12} parent=39 // pred_check_branch
        %303 = sbr.rel (%p301) target = $region44
      $region43: #{_lambda_.12} parent=39 // pred_region
        %s304 = smul.u32 2, %s21
        %p305 = scmp.lt.s32.totalorder %s20, 1
        %s306 = scalar_select %p305, %s20, 1
        %p307 = scmp.lt.s32.totalorder %s304, 1
        %s308 = scalar_select %p307, %s304, 1
        %s309 = smul.addr %s306, 2
        %s310 = sadd.s32 %s308, %s309
        %s311 = smul.addr %s310, 4
        %s312 = scalar_lea.vmem %s3, %s311
      $region44: #{_lambda_.12} parent=39 // pred_fallthru
        _
    $region40: #{_lambda_.12} parent=5 // pred_fallthru
      _
  $region6: #{_lambda_.12} parent=0 // loop_footer
    %s13 = sadd.s32 1, %s9
  $region7: #{_lambda_.12} parent=0 // loop_footer_branch
    %8 = sbr.rel target = $region3
  $region8: #{_lambda_.12} parent=0 // loop_exit
    _

// kernel: _lambda_.14
$region0: #{_lambda_.14}
  #allocation0 [shape = 'u32[]', space=smem, size = 0x4, offset = 0x4, fixed_abs, tag = 'smem constant byte address 0x4 - core index']
  #allocation1 [shape = 'u32[144,128]{1,0:T(1,128)}', space=vmem, size = 0x12000, scoped, tag = 'internal scratch']
  %s0 = inlined_call_operand.vmem [shape: bf16[2,9,128], index: 0, kind: input, shape index: {}]
  %s1 = inlined_call_operand.vmem [shape: f32[2,1,128], index: 1, kind: input, shape index: {}]
  %s2 = inlined_call_operand.vmem [shape: f32[2,1,128], index: 2, kind: input, shape index: {}]
  %s3 = inlined_call_operand.vmem [shape: bf16[2,9,128], index: 3, kind: output, shape index: {}]
  %s4 = sld [smem:[#allocation0]]
  $region45: #{_lambda_.14} parent=0
    _
  %s6 = ssub.s32 1, %s4
  %s7 = scalar_select 0, %s6, %s4
  loop: start=0, step=1, limit=4
  $region2: #{_lambda_.14} parent=0 // loop_pre_header
    _
  $region3: #{_lambda_.14} parent=0 // loop_header
    %s9 = sphi 0, %s13
    %p10 = scmp.ge.s32.totalorder %s9, 4
    %s16 = sphi 0, %s28
    %s17 = sphi 0, %s24
    %s18 = sphi 0, %s16
    %s19 = sphi 0, %s17
    %s20 = sphi 0, %s18
    %s21 = sphi 0, %s19
    %s33 = sphi 0, %s35
    %s36 = sphi 0, %s33
    %s37 = sphi 0, %s36
    %s53 = sphi 0, %s37
    %s59 = sphi 0, %s61
    %s62 = sphi 0, %s59
    %s63 = sphi 0, %s62
    %s79 = sphi 0, %s63
    %s85 = sphi 0, %s87
    %s88 = sphi 0, %s85
    %s89 = sphi 0, %s88
    %s105 = sphi 0, %s89
    %s113 = sphi 0, %s115
    %s116 = sphi 0, %s113
    %s117 = sphi 0, %s116
    %s133 = sphi 0, %s117
  $region4: #{_lambda_.14} parent=0 // loop_header_branch
    %12 = sbr.rel (%p10) target = $region8
  $region5: #{_lambda_.14} parent=0 // loop_body
    %s14 = ssub.s32 %s9, 1
    %s15 = ssub.s32 %s9, 2
    %s22 = sadd.s32 1, %s17
    %p23 = scmp.ge.s32.totalorder %s22, 1
    %s24 = scalar_select %p23, 0, %s22
    %s25 = sadd.s32 1, %s16
    %s26 = scalar_select %p23, %s25, %s16
    %p27 = scmp.ge.s32.totalorder %s26, 2
    %s28 = scalar_select %p27, 0, %s26
    %s29 = ssub.s32 %s16, %s28
    %s30 = ssub.s32 %s17, %s24
    %s31 = sor.u32 %s29, %s30
    %p32 = scmp.eq.s32.totalorder %s31, 0
    %s34 = sadd.s32 %s33, 1
    %s35 = scalar_select %p32, %s33, %s34
    %p38 = pneg %p32
    %p39 = scmp.eq.s32.totalorder %s9, 1
    %p40 = por %p38, %p39
    %p41 = scmp.ne.s32.totalorder %s33, %s36
    %p42 = scmp.eq.s32.totalorder %s9, 0
    %p43 = por %p41, %p42
    %p44 = scmp.ne.s32.totalorder %s33, %s36
    %p45 = scmp.eq.s32.totalorder %s14, 1
    %p46 = por %p44, %p45
    %p47 = scmp.ne.s32.totalorder %s36, %s37
    %p48 = scmp.eq.s32.totalorder %s14, 0
    %p49 = por %p47, %p48
    %p50 = scmp.ne.s32.totalorder %s36, %s37
    %p51 = scmp.eq.s32.totalorder %s15, 1
    %p52 = por %p50, %p51
    %p54 = scmp.ne.s32.totalorder %s37, %s53
    %p55 = scmp.eq.s32.totalorder %s15, 0
    %p56 = por %p54, %p55
    %s57 = ssub.s32 %s16, %s28
    %p58 = scmp.eq.s32.totalorder %s57, 0
    %s60 = sadd.s32 %s59, 1
    %s61 = scalar_select %p58, %s59, %s60
    %p64 = pneg %p58
    %p65 = scmp.eq.s32.totalorder %s9, 1
    %p66 = por %p64, %p65
    %p67 = scmp.ne.s32.totalorder %s59, %s62
    %p68 = scmp.eq.s32.totalorder %s9, 0
    %p69 = por %p67, %p68
    %p70 = scmp.ne.s32.totalorder %s59, %s62
    %p71 = scmp.eq.s32.totalorder %s14, 1
    %p72 = por %p70, %p71
    %p73 = scmp.ne.s32.totalorder %s62, %s63
    %p74 = scmp.eq.s32.totalorder %s14, 0
    %p75 = por %p73, %p74
    %p76 = scmp.ne.s32.totalorder %s62, %s63
    %p77 = scmp.eq.s32.totalorder %s15, 1
    %p78 = por %p76, %p77
    %p80 = scmp.ne.s32.totalorder %s63, %s79
    %p81 = scmp.eq.s32.totalorder %s15, 0
    %p82 = por %p80, %p81
    %s83 = ssub.s32 %s16, %s28
    %p84 = scmp.eq.s32.totalorder %s83, 0
    %s86 = sadd.s32 %s85, 1
    %s87 = scalar_select %p84, %s85, %s86
    %p90 = pneg %p84
    %p91 = scmp.eq.s32.totalorder %s9, 1
    %p92 = por %p90, %p91
    %p93 = scmp.ne.s32.totalorder %s85, %s88
    %p94 = scmp.eq.s32.totalorder %s9, 0
    %p95 = por %p93, %p94
    %p96 = scmp.ne.s32.totalorder %s85, %s88
    %p97 = scmp.eq.s32.totalorder %s14, 1
    %p98 = por %p96, %p97
    %p99 = scmp.ne.s32.totalorder %s88, %s89
    %p100 = scmp.eq.s32.totalorder %s14, 0
    %p101 = por %p99, %p100
    %p102 = scmp.ne.s32.totalorder %s88, %s89
    %p103 = scmp.eq.s32.totalorder %s15, 1
    %p104 = por %p102, %p103
    %p106 = scmp.ne.s32.totalorder %s89, %s105
    %p107 = scmp.eq.s32.totalorder %s15, 0
    %p108 = por %p106, %p107
    %s109 = ssub.s32 %s16, %s28
    %s110 = ssub.s32 %s17, %s24
    %s111 = sor.u32 %s109, %s110
    %p112 = scmp.eq.s32.totalorder %s111, 0
    %s114 = sadd.s32 %s113, 1
    %s115 = scalar_select %p112, %s113, %s114
    %p118 = pneg %p112
    %p119 = scmp.eq.s32.totalorder %s9, 1
    %p120 = por %p118, %p119
    %p121 = scmp.ne.s32.totalorder %s113, %s116
    %p122 = scmp.eq.s32.totalorder %s9, 0
    %p123 = por %p121, %p122
    %p124 = scmp.ne.s32.totalorder %s113, %s116
    %p125 = scmp.eq.s32.totalorder %s14, 1
    %p126 = por %p124, %p125
    %p127 = scmp.ne.s32.totalorder %s116, %s117
    %p128 = scmp.eq.s32.totalorder %s14, 0
    %p129 = por %p127, %p128
    %p130 = scmp.ne.s32.totalorder %s116, %s117
    %p131 = scmp.eq.s32.totalorder %s15, 1
    %p132 = por %p130, %p131
    %p134 = scmp.ne.s32.totalorder %s117, %s133
    %p135 = scmp.eq.s32.totalorder %s15, 0
    %p136 = por %p134, %p135
    %p137 = scmp.le.s32.totalorder 1, %s9
    %p138 = scmp.lt.s32.totalorder %s9, 3
    %p139 = pnand %p137, %p138
    %p140 = pneg %p139
    // Predicated region
    $region9: #{_lambda_.14} parent=5 // pred_check
      _
    $region10: #{_lambda_.14} parent=5 // pred_check_branch
      %142 = sbr.rel (%p139) target = $region12
    $region11: #{_lambda_.14} parent=5 // pred_region
      %s143 = ssub.s32 %s9, 1
    $region12: #{_lambda_.14} parent=5 // pred_fallthru
      _
    %p144 = scmp.lt.s32.totalorder %s9, 2
    // Predicated region
    $region13: #{_lambda_.14} parent=5 // pred_check
      %p145 = pneg %p144
    $region14: #{_lambda_.14} parent=5 // pred_check_branch
      %147 = sbr.rel (%p145) target = $region16
    $region15: #{_lambda_.14} parent=5 // pred_region
      // Predicated region
      $region17: #{_lambda_.14} parent=15 // pred_check
        %p148 = pneg %p43
      $region18: #{_lambda_.14} parent=15 // pred_check_branch
        %150 = sbr.rel (%p148) target = $region20
      $region19: #{_lambda_.14} parent=15 // pred_region
        %s151 = smul.u32 2, %s17
        %p152 = scmp.lt.s32.totalorder %s16, 1
        %s153 = scalar_select %p152, %s16, 1
        %p154 = scmp.lt.s32.totalorder %s151, 1
        %s155 = scalar_select %p154, %s151, 1
        %s156 = smul.addr %s153, 2
        %s157 = sadd.s32 %s155, %s156
        %s158 = smul.addr %s157, 4
        %s159 = scalar_lea.vmem %s0, %s158
        %s160 = smul.u32 2, %s17
      $region20: #{_lambda_.14} parent=15 // pred_fallthru
        _
      // Predicated region
      $region21: #{_lambda_.14} parent=15 // pred_check
        %p161 = pneg %p69
      $region22: #{_lambda_.14} parent=15 // pred_check_branch
        %163 = sbr.rel (%p161) target = $region24
      $region23: #{_lambda_.14} parent=15 // pred_region
        %p164 = scmp.lt.s32.totalorder %s16, 1
        %s165 = scalar_select %p164, %s16, 1
        %s166 = scalar_lea.vmem %s1, %s165
      $region24: #{_lambda_.14} parent=15 // pred_fallthru
        _
      // Predicated region
      $region25: #{_lambda_.14} parent=15 // pred_check
        %p167 = pneg %p95
      $region26: #{_lambda_.14} parent=15 // pred_check_branch
        %169 = sbr.rel (%p167) target = $region28
      $region27: #{_lambda_.14} parent=15 // pred_region
        %p170 = scmp.lt.s32.totalorder %s16, 1
        %s171 = scalar_select %p170, %s16, 1
        %s172 = scalar_lea.vmem %s2, %s171
      $region28: #{_lambda_.14} parent=15 // pred_fallthru
        _
    $region16: #{_lambda_.14} parent=5 // pred_fallthru
      _
    %p173 = scmp.le.s32.totalorder 1, %s9
    %p174 = scmp.lt.s32.totalorder %s9, 3
    %p175 = pnand %p173, %p174
    %p176 = pneg %p175
    // Predicated region
    $region29: #{_lambda_.14} parent=5 // pred_check
      _
    $region30: #{_lambda_.14} parent=5 // pred_check_branch
      %178 = sbr.rel (%p175) target = $region32
    $region31: #{_lambda_.14} parent=5 // pred_region
      %s179 = ssub.s32 %s9, 1
      %s180 = smul.u32 2, %s19
      %p181 = scmp.lt.s32.totalorder %s18, 1
      %s182 = scalar_select %p181, %s18, 1
      %p183 = scmp.lt.s32.totalorder %s180, 1
      %s184 = scalar_select %p183, %s180, 1
      %s185 = smul.addr %s182, 2
      %s186 = sadd.s32 %s184, %s185
      %s187 = smul.addr %s186, 4
      %s188 = scalar_lea.vmem %s0, %s187
      %p189 = pneg %p49
      %p190 = pneg %p46
      %p191 = scmp.lt.s32.totalorder %s18, 1
      %s192 = scalar_select %p191, %s18, 1
      %s193 = scalar_lea.vmem %s1, %s192
      %p194 = pneg %p75
      %p195 = pneg %p72
      %p196 = scmp.lt.s32.totalorder %s18, 1
      %s197 = scalar_select %p196, %s18, 1
      %s198 = scalar_lea.vmem %s2, %s197
      %p199 = pneg %p101
      %p200 = pneg %p98
      %p201 = pneg %p129
      %p202 = pneg %p126
      %s203 = smul.u32 2, %s19
      %p204 = scmp.lt.s32.totalorder %s18, 1
      %s205 = scalar_select %p204, %s18, 1
      %p206 = scmp.lt.s32.totalorder %s203, 1
      %s207 = scalar_select %p206, %s203, 1
      %s208 = smul.addr %s205, 2
      %s209 = sadd.s32 %s207, %s208
      %s210 = smul.addr %s209, 4
      %s211 = scalar_lea.vmem %s3, %s210
      %s212 = smul.u32 2, %s19
      %p213 = scmp.lt.s32.totalorder %s18, 1
      %s214 = scalar_select %p213, %s18, 1
      %p215 = scmp.lt.s32.totalorder %s212, 1
      %s216 = scalar_select %p215, %s212, 1
      %s217 = smul.addr %s214, 2
      %s218 = sadd.s32 %s216, %s217
      %s219 = smul.addr %s218, 4
      %s220 = scalar_lea.vmem %s0, %s219
      %s221 = smul.u32 2, %s19
      %p222 = scmp.lt.s32.totalorder %s18, 1
      %s223 = scalar_select %p222, %s18, 1
      %s224 = scalar_lea.vmem %s1, %s223
      %p225 = scmp.lt.s32.totalorder %s18, 1
      %s226 = scalar_select %p225, %s18, 1
      %s227 = scalar_lea.vmem %s2, %s226
      %s228 = smul.u32 2, %s19
      %p229 = scmp.lt.s32.totalorder %s18, 1
      %s230 = scalar_select %p229, %s18, 1
      %p231 = scmp.lt.s32.totalorder %s228, 1
      %s232 = scalar_select %p231, %s228, 1
      %s233 = smul.addr %s230, 2
      %s234 = sadd.s32 %s232, %s233
      %s235 = smul.addr %s234, 4
      %s236 = scalar_lea.vmem %s3, %s235
      %s237 = smul.u32 2, %s19
      %v238 = vld [vmem:[%s220] sm:$0xf]
      %v239 = vld [vmem:[%s220 + $0x4] sm:$0x1]
      %v240 = vunpack.c.l.bf16 %v238
      %v241 = vunpack.c.l.bf16 %v239
      %v242 = vld [vmem:[%s224] sm:$0x1]
      %v243 = vmul.f32 %v242, 0.11111111
      %v244 = vld [vmem:[%s227] sm:$0x1]
      %v245 = vmul.f32 %v244, 0.11111111
      %v246 = vmul.f32 %v243, %v243
      %v247 = vsub.f32 %v245, %v246
      %v248 = vmax.f32 %v247, 0.0
      %v250 = vlaneseq
      %v251 = vshrl.u32 %v250, 7
      %v252 = vsub.s32 0, %v251
      %v253 = vrot.slane %v243, %v252
      %v255 = vsub.f32 %v240, %v253
      %v256 = vsub.f32 %v241, %v253
      %v257 = vadd.f32 %v248, 1e-05
      %v258 = vrsqrt.pop %v257
      %v260 = vlaneseq
      %v261 = vshrl.u32 %v260, 7
      %v262 = vsub.s32 0, %v261
      %v263 = vrot.slane %v258, %v262
      %v265 = vmul.f32 %v255, %v263
      %v266 = vmul.f32 %v256, %v263
      %vm267 = vcmp.ge.f32.partialorder %v265, 0.0
      %vm268 = vcmp.ge.f32.partialorder %v266, 0.0
      %v269 = vmul.f32 %v265, 0.2
      %v270 = vmul.f32 %v266, 0.2
      %v271 = vsel %vm267, %v265, %v269
      %v272 = vsel %vm268, %v266, %v270
      %v273 = vpack.c.bf16 %v272, %v271
      %v275 = vunpack.c.l.b16 %v273
      %v276 = vunpack.c.h.b16 %v273
      %v277 = vpack.c.b16 %v275, %v275
      %v278 = vpack.c.b16 %v276, %v276
      %281 = vst [vmem:[%s236] sm:$0xf] %v277
      %vm282 = vcmask 1040384
      %vm283 = vsmask.f32 256
      %vm284 = vmand %vm282, %vm283
      %v285 = vld [vmem:[%s236 + $0x4] sm:$0x1]
      %v286 = vsel %vm284, %v278, %v285
      %287 = vst [vmem:[%s236 + $0x4] sm:$0x1] %v286
      %s288 = smul.u32 2, %s19
      %p289 = scmp.lt.s32.totalorder %s18, 1
      %s290 = scalar_select %p289, %s18, 1
      %p291 = scmp.lt.s32.totalorder %s288, 1
      %s292 = scalar_select %p291, %s288, 1
      %s293 = smul.addr %s290, 2
      %s294 = sadd.s32 %s292, %s293
      %s295 = smul.addr %s294, 4
      %s296 = scalar_lea.vmem %s3, %s295
      // Predicated region
      $region33: #{_lambda_.14} parent=31 // pred_check
        %p297 = pneg %p126
      $region34: #{_lambda_.14} parent=31 // pred_check_branch
        %299 = sbr.rel (%p297) target = $region36
      $region35: #{_lambda_.14} parent=31 // pred_region
        %s300 = smul.u32 2, %s19
      $region36: #{_lambda_.14} parent=31 // pred_fallthru
        _
    $region32: #{_lambda_.14} parent=5 // pred_fallthru
      _
    %p301 = scmp.le.s32.totalorder 2, %s9
    // Predicated region
    $region37: #{_lambda_.14} parent=5 // pred_check
      %p302 = pneg %p301
    $region38: #{_lambda_.14} parent=5 // pred_check_branch
      %304 = sbr.rel (%p302) target = $region40
    $region39: #{_lambda_.14} parent=5 // pred_region
      %s305 = ssub.s32 %s9, 2
      // Predicated region
      $region41: #{_lambda_.14} parent=39 // pred_check
        %p306 = pneg %p132
      $region42: #{_lambda_.14} parent=39 // pred_check_branch
        %308 = sbr.rel (%p306) target = $region44
      $region43: #{_lambda_.14} parent=39 // pred_region
        %s309 = smul.u32 2, %s21
        %p310 = scmp.lt.s32.totalorder %s20, 1
        %s311 = scalar_select %p310, %s20, 1
        %p312 = scmp.lt.s32.totalorder %s309, 1
        %s313 = scalar_select %p312, %s309, 1
        %s314 = smul.addr %s311, 2
        %s315 = sadd.s32 %s313, %s314
        %s316 = smul.addr %s315, 4
        %s317 = scalar_lea.vmem %s3, %s316
      $region44: #{_lambda_.14} parent=39 // pred_fallthru
        _
    $region40: #{_lambda_.14} parent=5 // pred_fallthru
      _
  $region6: #{_lambda_.14} parent=0 // loop_footer
    %s13 = sadd.s32 1, %s9
  $region7: #{_lambda_.14} parent=0 // loop_footer_branch
    %8 = sbr.rel target = $region3
  $region8: #{_lambda_.14} parent=0 // loop_exit
    _

// kernel: _lambda_.11
$region0: #{_lambda_.11}
  #allocation0 [shape = 'u32[]', space=smem, size = 0x4, offset = 0x4, fixed_abs, tag = 'smem constant byte address 0x4 - core index']
  #allocation1 [shape = 'u32[144,128]{1,0:T(1,128)}', space=vmem, size = 0x12000, scoped, tag = 'internal scratch']
  %s0 = inlined_call_operand.vmem [shape: bf16[2,4,16,2048], index: 0, kind: input, shape index: {}]
  %s1 = inlined_call_operand.vmem [shape: bf16[1,2048,128], index: 1, kind: input, shape index: {}]
  %s2 = inlined_call_operand.vmem [shape: f32[1,128], index: 2, kind: input, shape index: {}]
  %s3 = inlined_call_operand.vmem [shape: bf16[2,64,128], index: 3, kind: output, shape index: {0}]
  %s4 = inlined_call_operand.vmem [shape: f32[2,1,128], index: 4, kind: output, shape index: {1}]
  %s5 = inlined_call_operand.vmem [shape: f32[2,1,128], index: 5, kind: output, shape index: {2}]
  %6 = xla_tuple %s3, %s4, %s5
  %s7 = sld [smem:[#allocation0]]
  $region65: #{_lambda_.11} parent=0
    _
  %s9 = ssub.s32 1, %s7
  %s10 = scalar_select 0, %s9, %s7
  loop: start=0, step=1, limit=4
  $region2: #{_lambda_.11} parent=0 // loop_pre_header
    _
  $region3: #{_lambda_.11} parent=0 // loop_header
    %s12 = sphi 0, %s16
    %p13 = scmp.ge.s32.totalorder %s12, 4
    %s19 = sphi 0, %s38
    %s20 = sphi 0, %s34
    %s21 = sphi 0, %s30
    %s22 = sphi 0, %s19
    %s23 = sphi 0, %s20
    %s24 = sphi 0, %s21
    %s25 = sphi 0, %s22
    %s26 = sphi 0, %s23
    %s27 = sphi 0, %s24
    %s41 = sphi 0, %s43
    %s44 = sphi 0, %s41
    %s45 = sphi 0, %s44
    %s61 = sphi 0, %s45
    %s67 = sphi 0, %s69
    %s70 = sphi 0, %s67
    %s71 = sphi 0, %s70
    %s87 = sphi 0, %s71
    %s93 = sphi 0, %s95
    %s96 = sphi 0, %s93
    %s97 = sphi 0, %s96
    %s113 = sphi 0, %s97
    %s123 = sphi 0, %s125
    %s126 = sphi 0, %s123
    %s127 = sphi 0, %s126
    %s143 = sphi 0, %s127
    %s151 = sphi 0, %s153
    %s154 = sphi 0, %s151
    %s155 = sphi 0, %s154
    %s171 = sphi 0, %s155
    %s179 = sphi 0, %s181
    %s182 = sphi 0, %s179
    %s183 = sphi 0, %s182
    %s199 = sphi 0, %s183
  $region4: #{_lambda_.11} parent=0 // loop_header_branch
    %15 = sbr.rel (%p13) target = $region8
  $region5: #{_lambda_.11} parent=0 // loop_body
    %s17 = ssub.s32 %s12, 1
    %s18 = ssub.s32 %s12, 2
    %s28 = sadd.s32 1, %s21
    %p29 = scmp.ge.s32.totalorder %s28, 1
    %s30 = scalar_select %p29, 0, %s28
    %s31 = sadd.s32 1, %s20
    %s32 = scalar_select %p29, %s31, %s20
    %p33 = scmp.ge.s32.totalorder %s32, 1
    %s34 = scalar_select %p33, 0, %s32
    %s35 = sadd.s32 1, %s19
    %s36 = scalar_select %p33, %s35, %s19
    %p37 = scmp.ge.s32.totalorder %s36, 2
    %s38 = scalar_select %p37, 0, %s36
    %s39 = ssub.s32 %s19, %s38
    %p40 = scmp.eq.s32.totalorder %s39, 0
    %s42 = sadd.s32 %s41, 1
    %s43 = scalar_select %p40, %s41, %s42
    %p46 = pneg %p40
    %p47 = scmp.eq.s32.totalorder %s12, 1
    %p48 = por %p46, %p47
    %p49 = scmp.ne.s32.totalorder %s41, %s44
    %p50 = scmp.eq.s32.totalorder %s12, 0
    %p51 = por %p49, %p50
    %p52 = scmp.ne.s32.totalorder %s41, %s44
    %p53 = scmp.eq.s32.totalorder %s17, 1
    %p54 = por %p52, %p53
    %p55 = scmp.ne.s32.totalorder %s44, %s45
    %p56 = scmp.eq.s32.totalorder %s17, 0
    %p57 = por %p55, %p56
    %p58 = scmp.ne.s32.totalorder %s44, %s45
    %p59 = scmp.eq.s32.totalorder %s18, 1
    %p60 = por %p58, %p59
    %p62 = scmp.ne.s32.totalorder %s45, %s61
    %p63 = scmp.eq.s32.totalorder %s18, 0
    %p64 = por %p62, %p63
    %s65 = ssub.s32 %s20, %s34
    %p66 = scmp.eq.s32.totalorder %s65, 0
    %s68 = sadd.s32 %s67, 1
    %s69 = scalar_select %p66, %s67, %s68
    %p72 = pneg %p66
    %p73 = scmp.eq.s32.totalorder %s12, 1
    %p74 = por %p72, %p73
    %p75 = scmp.ne.s32.totalorder %s67, %s70
    %p76 = scmp.eq.s32.totalorder %s12, 0
    %p77 = por %p75, %p76
    %p78 = scmp.ne.s32.totalorder %s67, %s70
    %p79 = scmp.eq.s32.totalorder %s17, 1
    %p80 = por %p78, %p79
    %p81 = scmp.ne.s32.totalorder %s70, %s71
    %p82 = scmp.eq.s32.totalorder %s17, 0
    %p83 = por %p81, %p82
    %p84 = scmp.ne.s32.totalorder %s70, %s71
    %p85 = scmp.eq.s32.totalorder %s18, 1
    %p86 = por %p84, %p85
    %p88 = scmp.ne.s32.totalorder %s71, %s87
    %p89 = scmp.eq.s32.totalorder %s18, 0
    %p90 = por %p88, %p89
    %s91 = ssub.s32 %s20, %s34
    %p92 = scmp.eq.s32.totalorder %s91, 0
    %s94 = sadd.s32 %s93, 1
    %s95 = scalar_select %p92, %s93, %s94
    %p98 = pneg %p92
    %p99 = scmp.eq.s32.totalorder %s12, 1
    %p100 = por %p98, %p99
    %p101 = scmp.ne.s32.totalorder %s93, %s96
    %p102 = scmp.eq.s32.totalorder %s12, 0
    %p103 = por %p101, %p102
    %p104 = scmp.ne.s32.totalorder %s93, %s96
    %p105 = scmp.eq.s32.totalorder %s17, 1
    %p106 = por %p104, %p105
    %p107 = scmp.ne.s32.totalorder %s96, %s97
    %p108 = scmp.eq.s32.totalorder %s17, 0
    %p109 = por %p107, %p108
    %p110 = scmp.ne.s32.totalorder %s96, %s97
    %p111 = scmp.eq.s32.totalorder %s18, 1
    %p112 = por %p110, %p111
    %p114 = scmp.ne.s32.totalorder %s97, %s113
    %p115 = scmp.eq.s32.totalorder %s18, 0
    %p116 = por %p114, %p115
    %s117 = ssub.s32 %s19, %s38
    %s118 = ssub.s32 %s21, %s30
    %s119 = sor.u32 %s117, %s118
    %s120 = ssub.s32 %s20, %s34
    %s121 = sor.u32 %s119, %s120
    %p122 = scmp.eq.s32.totalorder %s121, 0
    %s124 = sadd.s32 %s123, 1
    %s125 = scalar_select %p122, %s123, %s124
    %p128 = pneg %p122
    %p129 = scmp.eq.s32.totalorder %s12, 1
    %p130 = por %p128, %p129
    %p131 = scmp.ne.s32.totalorder %s123, %s126
    %p132 = scmp.eq.s32.totalorder %s12, 0
    %p133 = por %p131, %p132
    %p134 = scmp.ne.s32.totalorder %s123, %s126
    %p135 = scmp.eq.s32.totalorder %s17, 1
    %p136 = por %p134, %p135
    %p137 = scmp.ne.s32.totalorder %s126, %s127
    %p138 = scmp.eq.s32.totalorder %s17, 0
    %p139 = por %p137, %p138
    %p140 = scmp.ne.s32.totalorder %s126, %s127
    %p141 = scmp.eq.s32.totalorder %s18, 1
    %p142 = por %p140, %p141
    %p144 = scmp.ne.s32.totalorder %s127, %s143
    %p145 = scmp.eq.s32.totalorder %s18, 0
    %p146 = por %p144, %p145
    %s147 = ssub.s32 %s19, %s38
    %s148 = ssub.s32 %s20, %s34
    %s149 = sor.u32 %s147, %s148
    %p150 = scmp.eq.s32.totalorder %s149, 0
    %s152 = sadd.s32 %s151, 1
    %s153 = scalar_select %p150, %s151, %s152
    %p156 = pneg %p150
    %p157 = scmp.eq.s32.totalorder %s12, 1
    %p158 = por %p156, %p157
    %p159 = scmp.ne.s32.totalorder %s151, %s154
    %p160 = scmp.eq.s32.totalorder %s12, 0
    %p161 = por %p159, %p160
    %p162 = scmp.ne.s32.totalorder %s151, %s154
    %p163 = scmp.eq.s32.totalorder %s17, 1
    %p164 = por %p162, %p163
    %p165 = scmp.ne.s32.totalorder %s154, %s155
    %p166 = scmp.eq.s32.totalorder %s17, 0
    %p167 = por %p165, %p166
    %p168 = scmp.ne.s32.totalorder %s154, %s155
    %p169 = scmp.eq.s32.totalorder %s18, 1
    %p170 = por %p168, %p169
    %p172 = scmp.ne.s32.totalorder %s155, %s171
    %p173 = scmp.eq.s32.totalorder %s18, 0
    %p174 = por %p172, %p173
    %s175 = ssub.s32 %s19, %s38
    %s176 = ssub.s32 %s20, %s34
    %s177 = sor.u32 %s175, %s176
    %p178 = scmp.eq.s32.totalorder %s177, 0
    %s180 = sadd.s32 %s179, 1
    %s181 = scalar_select %p178, %s179, %s180
    %p184 = pneg %p178
    %p185 = scmp.eq.s32.totalorder %s12, 1
    %p186 = por %p184, %p185
    %p187 = scmp.ne.s32.totalorder %s179, %s182
    %p188 = scmp.eq.s32.totalorder %s12, 0
    %p189 = por %p187, %p188
    %p190 = scmp.ne.s32.totalorder %s179, %s182
    %p191 = scmp.eq.s32.totalorder %s17, 1
    %p192 = por %p190, %p191
    %p193 = scmp.ne.s32.totalorder %s182, %s183
    %p194 = scmp.eq.s32.totalorder %s17, 0
    %p195 = por %p193, %p194
    %p196 = scmp.ne.s32.totalorder %s182, %s183
    %p197 = scmp.eq.s32.totalorder %s18, 1
    %p198 = por %p196, %p197
    %p200 = scmp.ne.s32.totalorder %s183, %s199
    %p201 = scmp.eq.s32.totalorder %s18, 0
    %p202 = por %p200, %p201
    %p203 = scmp.le.s32.totalorder 1, %s12
    %p204 = scmp.lt.s32.totalorder %s12, 3
    %p205 = pnand %p203, %p204
    %p206 = pneg %p205
    // Predicated region
    $region9: #{_lambda_.11} parent=5 // pred_check
      _
    $region10: #{_lambda_.11} parent=5 // pred_check_branch
      %208 = sbr.rel (%p205) target = $region12
    $region11: #{_lambda_.11} parent=5 // pred_region
      %s209 = ssub.s32 %s12, 1
      // Predicated region
      $region13: #{_lambda_.11} parent=11 // pred_check
        %p210 = pneg %p83
      $region14: #{_lambda_.11} parent=11 // pred_check_branch
        %212 = sbr.rel (%p210) target = $region16
      $region15: #{_lambda_.11} parent=11 // pred_region
        %p213 = scmp.lt.s32.totalorder %s23, 0
        %s214 = scalar_select %p213, %s23, 0
        %s215 = smul.addr %s214, 4
        %s216 = scalar_lea.vmem %s1, %s215
      $region16: #{_lambda_.11} parent=11 // pred_fallthru
        _
      // Predicated region
      $region17: #{_lambda_.11} parent=11 // pred_check
        %p217 = pneg %p109
      $region18: #{_lambda_.11} parent=11 // pred_check_branch
        %219 = sbr.rel (%p217) target = $region20
      $region19: #{_lambda_.11} parent=11 // pred_region
        %p220 = scmp.lt.s32.totalorder %s23, 0
        %s221 = scalar_select %p220, %s23, 0
        %s222 = scalar_lea.vmem %s2, %s221
      $region20: #{_lambda_.11} parent=11 // pred_fallthru
        _
    $region12: #{_lambda_.11} parent=5 // pred_fallthru
      _
    %p223 = scmp.lt.s32.totalorder %s12, 2
    // Predicated region
    $region21: #{_lambda_.11} parent=5 // pred_check
      %p224 = pneg %p223
    $region22: #{_lambda_.11} parent=5 // pred_check_branch
      %226 = sbr.rel (%p224) target = $region24
    $region23: #{_lambda_.11} parent=5 // pred_region
      // Predicated region
      $region25: #{_lambda_.11} parent=23 // pred_check
        %p227 = pneg %p51
      $region26: #{_lambda_.11} parent=23 // pred_check_branch
        %229 = sbr.rel (%p227) target = $region28
      $region27: #{_lambda_.11} parent=23 // pred_region
        %p230 = scmp.lt.s32.totalorder %s19, 1
        %s231 = scalar_select %p230, %s19, 1
        %s232 = smul.addr %s231, 128
        %s233 = smul.addr %s232, 4
        %s234 = scalar_lea.vmem %s0, %s233
      $region28: #{_lambda_.11} parent=23 // pred_fallthru
        _
    $region24: #{_lambda_.11} parent=5 // pred_fallthru
      _
    %p235 = scmp.le.s32.totalorder 1, %s12
    %p236 = scmp.lt.s32.totalorder %s12, 3
    %p237 = pnand %p235, %p236
    %p238 = pneg %p237
    // Predicated region
    $region29: #{_lambda_.11} parent=5 // pred_check
      _
    $region30: #{_lambda_.11} parent=5 // pred_check_branch
      %240 = sbr.rel (%p237) target = $region32
    $region31: #{_lambda_.11} parent=5 // pred_region
      %s241 = ssub.s32 %s12, 1
      %p242 = scmp.lt.s32.totalorder %s22, 1
      %s243 = scalar_select %p242, %s22, 1
      %s244 = smul.addr %s243, 128
      %s245 = smul.addr %s244, 4
      %s246 = scalar_lea.vmem %s0, %s245
      %p247 = pneg %p57
      %p248 = pneg %p54
      %p249 = scmp.lt.s32.totalorder %s23, 0
      %s250 = scalar_select %p249, %s23, 0
      %s251 = smul.addr %s250, 4
      %s252 = scalar_lea.vmem %s1, %s251
      %p253 = pneg %p83
      %p254 = pneg %p80
      %p255 = scmp.lt.s32.totalorder %s23, 0
      %s256 = scalar_select %p255, %s23, 0
      %s257 = scalar_lea.vmem %s2, %s256
      %p258 = pneg %p109
      %p259 = pneg %p106
      %p260 = pneg %p139
      %p261 = pneg %p136
      %s262 = smul.u32 8, %s24
      %p263 = scmp.lt.s32.totalorder %s22, 1
      %s264 = scalar_select %p263, %s22, 1
      %p265 = scmp.lt.s32.totalorder %s262, 7
      %s266 = scalar_select %p265, %s262, 7
      %p267 = scmp.lt.s32.totalorder %s23, 0
      %s268 = scalar_select %p267, %s23, 0
      %s269 = sadd.s32 %s268, %s266
      %s270 = smul.addr %s264, 8
      %s271 = sadd.s32 %s269, %s270
      %s272 = smul.addr %s271, 4
      %s273 = scalar_lea.vmem %s3, %s272
      %p274 = pneg %p167
      %p275 = pneg %p164
      %p276 = scmp.lt.s32.totalorder %s22, 1
      %s277 = scalar_select %p276, %s22, 1
      %p278 = scmp.lt.s32.totalorder %s23, 0
      %s279 = scalar_select %p278, %s23, 0
      %s280 = sadd.s32 %s279, %s277
      %s281 = scalar_lea.vmem %s4, %s280
      %p282 = pneg %p195
      %p283 = pneg %p192
      %p284 = scmp.lt.s32.totalorder %s22, 1
      %s285 = scalar_select %p284, %s22, 1
      %p286 = scmp.lt.s32.totalorder %s23, 0
      %s287 = scalar_select %p286, %s23, 0
      %s288 = sadd.s32 %s287, %s285
      %s289 = scalar_lea.vmem %s5, %s288
      %p290 = scmp.lt.s32.totalorder %s22, 1
      %s291 = scalar_select %p290, %s22, 1
      %s292 = smul.addr %s291, 128
      %s293 = smul.addr %s292, 4
      %s294 = scalar_lea.vmem %s0, %s293
      %p295 = scmp.lt.s32.totalorder %s23, 0
      %s296 = scalar_select %p295, %s23, 0
      %s297 = smul.addr %s296, 4
      %s298 = scalar_lea.vmem %s1, %s297
      %p299 = scmp.lt.s32.totalorder %s23, 0
      %s300 = scalar_select %p299, %s23, 0
      %s301 = scalar_lea.vmem %s2, %s300
      %s302 = smul.u32 8, %s24
      %p303 = scmp.lt.s32.totalorder %s22, 1
      %s304 = scalar_select %p303, %s22, 1
      %p305 = scmp.lt.s32.totalorder %s302, 7
      %s306 = scalar_select %p305, %s302, 7
      %p307 = scmp.lt.s32.totalorder %s23, 0
      %s308 = scalar_select %p307, %s23, 0
      %s309 = sadd.s32 %s308, %s306
      %s310 = smul.addr %s304, 8
      %s311 = sadd.s32 %s309, %s310
      %s312 = smul.addr %s311, 4
      %s313 = scalar_lea.vmem %s3, %s312
      %s314 = smul.u32 8, %s24
      %p315 = scmp.lt.s32.totalorder %s22, 1
      %s316 = scalar_select %p315, %s22, 1
      %p317 = scmp.lt.s32.totalorder %s23, 0
      %s318 = scalar_select %p317, %s23, 0
      %s319 = sadd.s32 %s318, %s316
      %s320 = scalar_lea.vmem %s4, %s319
      %p321 = scmp.lt.s32.totalorder %s22, 1
      %s322 = scalar_select %p321, %s22, 1
      %p323 = scmp.lt.s32.totalorder %s23, 0
      %s324 = scalar_select %p323, %s23, 0
      %s325 = sadd.s32 %s324, %s322
      %s326 = scalar_lea.vmem %s5, %s325
      %s328 = smul.u32 %s24, 4
      %s329 = smul.u32 %s328, 32
      %s330 = smul.addr %s329, 4
      %s331 = scalar_lea.vmem %s294, %s330
      %v332 = vld [vmem:[%s331] sm:$0xff]
      %v333 = vld [vmem:[%s331 + $0x8] sm:$0xff]
      %v334 = vld [vmem:[%s331 + $0x10] sm:$0xff]
      %v335 = vld [vmem:[%s331 + $0x18] sm:$0xff]
      %v336 = vld [vmem:[%s331 + $0x20] sm:$0xff]
      %v337 = vld [vmem:[%s331 + $0x28] sm:$0xff]
      %v338 = vld [vmem:[%s331 + $0x30] sm:$0xff]
      %v339 = vld [vmem:[%s331 + $0x38] sm:$0xff]
      %v340 = vld [vmem:[%s331 + $0x40] sm:$0xff]
      %v341 = vld [vmem:[%s331 + $0x48] sm:$0xff]
      %v342 = vld [vmem:[%s331 + $0x50] sm:$0xff]
      %v343 = vld [vmem:[%s331 + $0x58] sm:$0xff]
      %v344 = vld [vmem:[%s331 + $0x60] sm:$0xff]
      %v345 = vld [vmem:[%s331 + $0x68] sm:$0xff]
      %v346 = vld [vmem:[%s331 + $0x70] sm:$0xff]
      %v347 = vld [vmem:[%s331 + $0x78] sm:$0xff]
      %v348 = vld [vmem:[%s331 + $0x80] sm:$0xff]
      %v349 = vld [vmem:[%s331 + $0x88] sm:$0xff]
      %v350 = vld [vmem:[%s331 + $0x90] sm:$0xff]
      %v351 = vld [vmem:[%s331 + $0x98] sm:$0xff]
      %v352 = vld [vmem:[%s331 + $0xa0] sm:$0xff]
      %v353 = vld [vmem:[%s331 + $0xa8] sm:$0xff]
      %v354 = vld [vmem:[%s331 + $0xb0] sm:$0xff]
      %v355 = vld [vmem:[%s331 + $0xb8] sm:$0xff]
      %v356 = vld [vmem:[%s331 + $0xc0] sm:$0xff]
      %v357 = vld [vmem:[%s331 + $0xc8] sm:$0xff]
      %v358 = vld [vmem:[%s331 + $0xd0] sm:$0xff]
      %v359 = vld [vmem:[%s331 + $0xd8] sm:$0xff]
      %v360 = vld [vmem:[%s331 + $0xe0] sm:$0xff]
      %v361 = vld [vmem:[%s331 + $0xe8] sm:$0xff]
      %v362 = vld [vmem:[%s331 + $0xf0] sm:$0xff]
      %v363 = vld [vmem:[%s331 + $0xf8] sm:$0xff]
      %v364 = vld [vmem:[%s331 + $0x100] sm:$0xff]
      %v365 = vld [vmem:[%s331 + $0x108] sm:$0xff]
      %v366 = vld [vmem:[%s331 + $0x110] sm:$0xff]
      %v367 = vld [vmem:[%s331 + $0x118] sm:$0xff]
      %v368 = vld [vmem:[%s331 + $0x120] sm:$0xff]
      %v369 = vld [vmem:[%s331 + $0x128] sm:$0xff]
      %v370 = vld [vmem:[%s331 + $0x130] sm:$0xff]
      %v371 = vld [vmem:[%s331 + $0x138] sm:$0xff]
      %v372 = vld [vmem:[%s331 + $0x140] sm:$0xff]
      %v373 = vld [vmem:[%s331 + $0x148] sm:$0xff]
      %v374 = vld [vmem:[%s331 + $0x150] sm:$0xff]
      %v375 = vld [vmem:[%s331 + $0x158] sm:$0xff]
      %v376 = vld [vmem:[%s331 + $0x160] sm:$0xff]
      %v377 = vld [vmem:[%s331 + $0x168] sm:$0xff]
      %v378 = vld [vmem:[%s331 + $0x170] sm:$0xff]
      %v379 = vld [vmem:[%s331 + $0x178] sm:$0xff]
      %v380 = vld [vmem:[%s331 + $0x180] sm:$0xff]
      %v381 = vld [vmem:[%s331 + $0x188] sm:$0xff]
      %v382 = vld [vmem:[%s331 + $0x190] sm:$0xff]
      %v383 = vld [vmem:[%s331 + $0x198] sm:$0xff]
      %v384 = vld [vmem:[%s331 + $0x1a0] sm:$0xff]
      %v385 = vld [vmem:[%s331 + $0x1a8] sm:$0xff]
      %v386 = vld [vmem:[%s331 + $0x1b0] sm:$0xff]
      %v387 = vld [vmem:[%s331 + $0x1b8] sm:$0xff]
      %v388 = vld [vmem:[%s331 + $0x1c0] sm:$0xff]
      %v389 = vld [vmem:[%s331 + $0x1c8] sm:$0xff]
      %v390 = vld [vmem:[%s331 + $0x1d0] sm:$0xff]
      %v391 = vld [vmem:[%s331 + $0x1d8] sm:$0xff]
      %v392 = vld [vmem:[%s331 + $0x1e0] sm:$0xff]
      %v393 = vld [vmem:[%s331 + $0x1e8] sm:$0xff]
      %v394 = vld [vmem:[%s331 + $0x1f0] sm:$0xff]
      %v395 = vld [vmem:[%s331 + $0x1f8] sm:$0xff]
      %v396 = vld [vmem:[%s298] sm:$0xf]
      %v397 = vld [vmem:[%s298 + $0x4] sm:$0xf]
      %v398 = vld [vmem:[%s298 + $0x8] sm:$0xf]
      %v399 = vld [vmem:[%s298 + $0xc] sm:$0xf]
      %v400 = vld [vmem:[%s298 + $0x10] sm:$0xf]
      %v401 = vld [vmem:[%s298 + $0x14] sm:$0xf]
      %v402 = vld [vmem:[%s298 + $0x18] sm:$0xf]
      %v403 = vld [vmem:[%s298 + $0x1c] sm:$0xf]
      %v404 = vld [vmem:[%s298 + $0x20] sm:$0xf]
      %v405 = vld [vmem:[%s298 + $0x24] sm:$0xf]
      %v406 = vld [vmem:[%s298 + $0x28] sm:$0xf]
      %v407 = vld [vmem:[%s298 + $0x2c] sm:$0xf]
      %v408 = vld [vmem:[%s298 + $0x30] sm:$0xf]
      %v409 = vld [vmem:[%s298 + $0x34] sm:$0xf]
      %v410 = vld [vmem:[%s298 + $0x38] sm:$0xf]
      %v411 = vld [vmem:[%s298 + $0x3c] sm:$0xf]
      %v412 = vld [vmem:[%s298 + $0x40] sm:$0xf]
      %v413 = vld [vmem:[%s298 + $0x44] sm:$0xf]
      %v414 = vld [vmem:[%s298 + $0x48] sm:$0xf]
      %v415 = vld [vmem:[%s298 + $0x4c] sm:$0xf]
      %v416 = vld [vmem:[%s298 + $0x50] sm:$0xf]
      %v417 = vld [vmem:[%s298 + $0x54] sm:$0xf]
      %v418 = vld [vmem:[%s298 + $0x58] sm:$0xf]
      %v419 = vld [vmem:[%s298 + $0x5c] sm:$0xf]
      %v420 = vld [vmem:[%s298 + $0x60] sm:$0xf]
      %v421 = vld [vmem:[%s298 + $0x64] sm:$0xf]
      %v422 = vld [vmem:[%s298 + $0x68] sm:$0xf]
      %v423 = vld [vmem:[%s298 + $0x6c] sm:$0xf]
      %v424 = vld [vmem:[%s298 + $0x70] sm:$0xf]
      %v425 = vld [vmem:[%s298 + $0x74] sm:$0xf]
      %v426 = vld [vmem:[%s298 + $0x78] sm:$0xf]
      %v427 = vld [vmem:[%s298 + $0x7c] sm:$0xf]
      %v428 = vld [vmem:[%s298 + $0x80] sm:$0xf]
      %v429 = vld [vmem:[%s298 + $0x84] sm:$0xf]
      %v430 = vld [vmem:[%s298 + $0x88] sm:$0xf]
      %v431 = vld [vmem:[%s298 + $0x8c] sm:$0xf]
      %v432 = vld [vmem:[%s298 + $0x90] sm:$0xf]
      %v433 = vld [vmem:[%s298 + $0x94] sm:$0xf]
      %v434 = vld [vmem:[%s298 + $0x98] sm:$0xf]
      %v435 = vld [vmem:[%s298 + $0x9c] sm:$0xf]
      %v436 = vld [vmem:[%s298 + $0xa0] sm:$0xf]
      %v437 = vld [vmem:[%s298 + $0xa4] sm:$0xf]
      %v438 = vld [vmem:[%s298 + $0xa8] sm:$0xf]
      %v439 = vld [vmem:[%s298 + $0xac] sm:$0xf]
      %v440 = vld [vmem:[%s298 + $0xb0] sm:$0xf]
      %v441 = vld [vmem:[%s298 + $0xb4] sm:$0xf]
      %v442 = vld [vmem:[%s298 + $0xb8] sm:$0xf]
      %v443 = vld [vmem:[%s298 + $0xbc] sm:$0xf]
      %v444 = vld [vmem:[%s298 + $0xc0] sm:$0xf]
      %v445 = vld [vmem:[%s298 + $0xc4] sm:$0xf]
      %v446 = vld [vmem:[%s298 + $0xc8] sm:$0xf]
      %v447 = vld [vmem:[%s298 + $0xcc] sm:$0xf]
      %v448 = vld [vmem:[%s298 + $0xd0] sm:$0xf]
      %v449 = vld [vmem:[%s298 + $0xd4] sm:$0xf]
      %v450 = vld [vmem:[%s298 + $0xd8] sm:$0xf]
      %v451 = vld [vmem:[%s298 + $0xdc] sm:$0xf]
      %v452 = vld [vmem:[%s298 + $0xe0] sm:$0xf]
      %v453 = vld [vmem:[%s298 + $0xe4] sm:$0xf]
      %v454 = vld [vmem:[%s298 + $0xe8] sm:$0xf]
      %v455 = vld [vmem:[%s298 + $0xec] sm:$0xf]
      %v456 = vld [vmem:[%s298 + $0xf0] sm:$0xf]
      %v457 = vld [vmem:[%s298 + $0xf4] sm:$0xf]
      %v458 = vld [vmem:[%s298 + $0xf8] sm:$0xf]
      %v459 = vld [vmem:[%s298 + $0xfc] sm:$0xf]
      %v460 = vld [vmem:[%s298 + $0x100] sm:$0xf]
      %v461 = vld [vmem:[%s298 + $0x104] sm:$0xf]
      %v462 = vld [vmem:[%s298 + $0x108] sm:$0xf]
      %v463 = vld [vmem:[%s298 + $0x10c] sm:$0xf]
      %v464 = vld [vmem:[%s298 + $0x110] sm:$0xf]
      %v465 = vld [vmem:[%s298 + $0x114] sm:$0xf]
      %v466 = vld [vmem:[%s298 + $0x118] sm:$0xf]
      %v467 = vld [vmem:[%s298 + $0x11c] sm:$0xf]
      %v468 = vld [vmem:[%s298 + $0x120] sm:$0xf]
      %v469 = vld [vmem:[%s298 + $0x124] sm:$0xf]
      %v470 = vld [vmem:[%s298 + $0x128] sm:$0xf]
      %v471 = vld [vmem:[%s298 + $0x12c] sm:$0xf]
      %v472 = vld [vmem:[%s298 + $0x130] sm:$0xf]
      %v473 = vld [vmem:[%s298 + $0x134] sm:$0xf]
      %v474 = vld [vmem:[%s298 + $0x138] sm:$0xf]
      %v475 = vld [vmem:[%s298 + $0x13c] sm:$0xf]
      %v476 = vld [vmem:[%s298 + $0x140] sm:$0xf]
      %v477 = vld [vmem:[%s298 + $0x144] sm:$0xf]
      %v478 = vld [vmem:[%s298 + $0x148] sm:$0xf]
      %v479 = vld [vmem:[%s298 + $0x14c] sm:$0xf]
      %v480 = vld [vmem:[%s298 + $0x150] sm:$0xf]
      %v481 = vld [vmem:[%s298 + $0x154] sm:$0xf]
      %v482 = vld [vmem:[%s298 + $0x158] sm:$0xf]
      %v483 = vld [vmem:[%s298 + $0x15c] sm:$0xf]
      %v484 = vld [vmem:[%s298 + $0x160] sm:$0xf]
      %v485 = vld [vmem:[%s298 + $0x164] sm:$0xf]
      %v486 = vld [vmem:[%s298 + $0x168] sm:$0xf]
      %v487 = vld [vmem:[%s298 + $0x16c] sm:$0xf]
      %v488 = vld [vmem:[%s298 + $0x170] sm:$0xf]
      %v489 = vld [vmem:[%s298 + $0x174] sm:$0xf]
      %v490 = vld [vmem:[%s298 + $0x178] sm:$0xf]
      %v491 = vld [vmem:[%s298 + $0x17c] sm:$0xf]
      %v492 = vld [vmem:[%s298 + $0x180] sm:$0xf]
      %v493 = vld [vmem:[%s298 + $0x184] sm:$0xf]
      %v494 = vld [vmem:[%s298 + $0x188] sm:$0xf]
      %v495 = vld [vmem:[%s298 + $0x18c] sm:$0xf]
      %v496 = vld [vmem:[%s298 + $0x190] sm:$0xf]
      %v497 = vld [vmem:[%s298 + $0x194] sm:$0xf]
      %v498 = vld [vmem:[%s298 + $0x198] sm:$0xf]
      %v499 = vld [vmem:[%s298 + $0x19c] sm:$0xf]
      %v500 = vld [vmem:[%s298 + $0x1a0] sm:$0xf]
      %v501 = vld [vmem:[%s298 + $0x1a4] sm:$0xf]
      %v502 = vld [vmem:[%s298 + $0x1a8] sm:$0xf]
      %v503 = vld [vmem:[%s298 + $0x1ac] sm:$0xf]
      %v504 = vld [vmem:[%s298 + $0x1b0] sm:$0xf]
      %v505 = vld [vmem:[%s298 + $0x1b4] sm:$0xf]
      %v506 = vld [vmem:[%s298 + $0x1b8] sm:$0xf]
      %v507 = vld [vmem:[%s298 + $0x1bc] sm:$0xf]
      %v508 = vld [vmem:[%s298 + $0x1c0] sm:$0xf]
      %v509 = vld [vmem:[%s298 + $0x1c4] sm:$0xf]
      %v510 = vld [vmem:[%s298 + $0x1c8] sm:$0xf]
      %v511 = vld [vmem:[%s298 + $0x1cc] sm:$0xf]
      %v512 = vld [vmem:[%s298 + $0x1d0] sm:$0xf]
      %v513 = vld [vmem:[%s298 + $0x1d4] sm:$0xf]
      %v514 = vld [vmem:[%s298 + $0x1d8] sm:$0xf]
      %v515 = vld [vmem:[%s298 + $0x1dc] sm:$0xf]
      %v516 = vld [vmem:[%s298 + $0x1e0] sm:$0xf]
      %v517 = vld [vmem:[%s298 + $0x1e4] sm:$0xf]
      %v518 = vld [vmem:[%s298 + $0x1e8] sm:$0xf]
      %v519 = vld [vmem:[%s298 + $0x1ec] sm:$0xf]
      %v520 = vld [vmem:[%s298 + $0x1f0] sm:$0xf]
      %v521 = vld [vmem:[%s298 + $0x1f4] sm:$0xf]
      %v522 = vld [vmem:[%s298 + $0x1f8] sm:$0xf]
      %v523 = vld [vmem:[%s298 + $0x1fc] sm:$0xf]
      %v524 = vld [vmem:[%s298 + $0x200] sm:$0xf]
      %v525 = vld [vmem:[%s298 + $0x204] sm:$0xf]
      %v526 = vld [vmem:[%s298 + $0x208] sm:$0xf]
      %v527 = vld [vmem:[%s298 + $0x20c] sm:$0xf]
      %v528 = vld [vmem:[%s298 + $0x210] sm:$0xf]
      %v529 = vld [vmem:[%s298 + $0x214] sm:$0xf]
      %v530 = vld [vmem:[%s298 + $0x218] sm:$0xf]
      %v531 = vld [vmem:[%s298 + $0x21c] sm:$0xf]
      %v532 = vld [vmem:[%s298 + $0x220] sm:$0xf]
      %v533 = vld [vmem:[%s298 + $0x224] sm:$0xf]
      %v534 = vld [vmem:[%s298 + $0x228] sm:$0xf]
      %v535 = vld [vmem:[%s298 + $0x22c] sm:$0xf]
      %v536 = vld [vmem:[%s298 + $0x230] sm:$0xf]
      %v537 = vld [vmem:[%s298 + $0x234] sm:$0xf]
      %v538 = vld [vmem:[%s298 + $0x238] sm:$0xf]
      %v539 = vld [vmem:[%s298 + $0x23c] sm:$0xf]
      %v540 = vld [vmem:[%s298 + $0x240] sm:$0xf]
      %v541 = vld [vmem:[%s298 + $0x244] sm:$0xf]
      %v542 = vld [vmem:[%s298 + $0x248] sm:$0xf]
      %v543 = vld [vmem:[%s298 + $0x24c] sm:$0xf]
      %v544 = vld [vmem:[%s298 + $0x250] sm:$0xf]
      %v545 = vld [vmem:[%s298 + $0x254] sm:$0xf]
      %v546 = vld [vmem:[%s298 + $0x258] sm:$0xf]
      %v547 = vld [vmem:[%s298 + $0x25c] sm:$0xf]
      %v548 = vld [vmem:[%s298 + $0x260] sm:$0xf]
      %v549 = vld [vmem:[%s298 + $0x264] sm:$0xf]
      %v550 = vld [vmem:[%s298 + $0x268] sm:$0xf]
      %v551 = vld [vmem:[%s298 + $0x26c] sm:$0xf]
      %v552 = vld [vmem:[%s298 + $0x270] sm:$0xf]
      %v553 = vld [vmem:[%s298 + $0x274] sm:$0xf]
      %v554 = vld [vmem:[%s298 + $0x278] sm:$0xf]
      %v555 = vld [vmem:[%s298 + $0x27c] sm:$0xf]
      %v556 = vld [vmem:[%s298 + $0x280] sm:$0xf]
      %v557 = vld [vmem:[%s298 + $0x284] sm:$0xf]
      %v558 = vld [vmem:[%s298 + $0x288] sm:$0xf]
      %v559 = vld [vmem:[%s298 + $0x28c] sm:$0xf]
      %v560 = vld [vmem:[%s298 + $0x290] sm:$0xf]
      %v561 = vld [vmem:[%s298 + $0x294] sm:$0xf]
      %v562 = vld [vmem:[%s298 + $0x298] sm:$0xf]
      %v563 = vld [vmem:[%s298 + $0x29c] sm:$0xf]
      %v564 = vld [vmem:[%s298 + $0x2a0] sm:$0xf]
      %v565 = vld [vmem:[%s298 + $0x2a4] sm:$0xf]
      %v566 = vld [vmem:[%s298 + $0x2a8] sm:$0xf]
      %v567 = vld [vmem:[%s298 + $0x2ac] sm:$0xf]
      %v568 = vld [vmem:[%s298 + $0x2b0] sm:$0xf]
      %v569 = vld [vmem:[%s298 + $0x2b4] sm:$0xf]
      %v570 = vld [vmem:[%s298 + $0x2b8] sm:$0xf]
      %v571 = vld [vmem:[%s298 + $0x2bc] sm:$0xf]
      %v572 = vld [vmem:[%s298 + $0x2c0] sm:$0xf]
      %v573 = vld [vmem:[%s298 + $0x2c4] sm:$0xf]
      %v574 = vld [vmem:[%s298 + $0x2c8] sm:$0xf]
      %v575 = vld [vmem:[%s298 + $0x2cc] sm:$0xf]
      %v576 = vld [vmem:[%s298 + $0x2d0] sm:$0xf]
      %v577 = vld [vmem:[%s298 + $0x2d4] sm:$0xf]
      %v578 = vld [vmem:[%s298 + $0x2d8] sm:$0xf]
      %v579 = vld [vmem:[%s298 + $0x2dc] sm:$0xf]
      %v580 = vld [vmem:[%s298 + $0x2e0] sm:$0xf]
      %v581 = vld [vmem:[%s298 + $0x2e4] sm:$0xf]
      %v582 = vld [vmem:[%s298 + $0x2e8] sm:$0xf]
      %v583 = vld [vmem:[%s298 + $0x2ec] sm:$0xf]
      %v584 = vld [vmem:[%s298 + $0x2f0] sm:$0xf]
      %v585 = vld [vmem:[%s298 + $0x2f4] sm:$0xf]
      %v586 = vld [vmem:[%s298 + $0x2f8] sm:$0xf]
      %v587 = vld [vmem:[%s298 + $0x2fc] sm:$0xf]
      %v588 = vld [vmem:[%s298 + $0x300] sm:$0xf]
      %v589 = vld [vmem:[%s298 + $0x304] sm:$0xf]
      %v590 = vld [vmem:[%s298 + $0x308] sm:$0xf]
      %v591 = vld [vmem:[%s298 + $0x30c] sm:$0xf]
      %v592 = vld [vmem:[%s298 + $0x310] sm:$0xf]
      %v593 = vld [vmem:[%s298 + $0x314] sm:$0xf]
      %v594 = vld [vmem:[%s298 + $0x318] sm:$0xf]
      %v595 = vld [vmem:[%s298 + $0x31c] sm:$0xf]
      %v596 = vld [vmem:[%s298 + $0x320] sm:$0xf]
      %v597 = vld [vmem:[%s298 + $0x324] sm:$0xf]
      %v598 = vld [vmem:[%s298 + $0x328] sm:$0xf]
      %v599 = vld [vmem:[%s298 + $0x32c] sm:$0xf]
      %v600 = vld [vmem:[%s298 + $0x330] sm:$0xf]
      %v601 = vld [vmem:[%s298 + $0x334] sm:$0xf]
      %v602 = vld [vmem:[%s298 + $0x338] sm:$0xf]
      %v603 = vld [vmem:[%s298 + $0x33c] sm:$0xf]
      %v604 = vld [vmem:[%s298 + $0x340] sm:$0xf]
      %v605 = vld [vmem:[%s298 + $0x344] sm:$0xf]
      %v606 = vld [vmem:[%s298 + $0x348] sm:$0xf]
      %v607 = vld [vmem:[%s298 + $0x34c] sm:$0xf]
      %v608 = vld [vmem:[%s298 + $0x350] sm:$0xf]
      %v609 = vld [vmem:[%s298 + $0x354] sm:$0xf]
      %v610 = vld [vmem:[%s298 + $0x358] sm:$0xf]
      %v611 = vld [vmem:[%s298 + $0x35c] sm:$0xf]
      %v612 = vld [vmem:[%s298 + $0x360] sm:$0xf]
      %v613 = vld [vmem:[%s298 + $0x364] sm:$0xf]
      %v614 = vld [vmem:[%s298 + $0x368] sm:$0xf]
      %v615 = vld [vmem:[%s298 + $0x36c] sm:$0xf]
      %v616 = vld [vmem:[%s298 + $0x370] sm:$0xf]
      %v617 = vld [vmem:[%s298 + $0x374] sm:$0xf]
      %v618 = vld [vmem:[%s298 + $0x378] sm:$0xf]
      %v619 = vld [vmem:[%s298 + $0x37c] sm:$0xf]
      %v620 = vld [vmem:[%s298 + $0x380] sm:$0xf]
      %v621 = vld [vmem:[%s298 + $0x384] sm:$0xf]
      %v622 = vld [vmem:[%s298 + $0x388] sm:$0xf]
      %v623 = vld [vmem:[%s298 + $0x38c] sm:$0xf]
      %v624 = vld [vmem:[%s298 + $0x390] sm:$0xf]
      %v625 = vld [vmem:[%s298 + $0x394] sm:$0xf]
      %v626 = vld [vmem:[%s298 + $0x398] sm:$0xf]
      %v627 = vld [vmem:[%s298 + $0x39c] sm:$0xf]
      %v628 = vld [vmem:[%s298 + $0x3a0] sm:$0xf]
      %v629 = vld [vmem:[%s298 + $0x3a4] sm:$0xf]
      %v630 = vld [vmem:[%s298 + $0x3a8] sm:$0xf]
      %v631 = vld [vmem:[%s298 + $0x3ac] sm:$0xf]
      %v632 = vld [vmem:[%s298 + $0x3b0] sm:$0xf]
      %v633 = vld [vmem:[%s298 + $0x3b4] sm:$0xf]
      %v634 = vld [vmem:[%s298 + $0x3b8] sm:$0xf]
      %v635 = vld [vmem:[%s298 + $0x3bc] sm:$0xf]
      %v636 = vld [vmem:[%s298 + $0x3c0] sm:$0xf]
      %v637 = vld [vmem:[%s298 + $0x3c4] sm:$0xf]
      %v638 = vld [vmem:[%s298 + $0x3c8] sm:$0xf]
      %v639 = vld [vmem:[%s298 + $0x3cc] sm:$0xf]
      %v640 = vld [vmem:[%s298 + $0x3d0] sm:$0xf]
      %v641 = vld [vmem:[%s298 + $0x3d4] sm:$0xf]
      %v642 = vld [vmem:[%s298 + $0x3d8] sm:$0xf]
      %v643 = vld [vmem:[%s298 + $0x3dc] sm:$0xf]
      %v644 = vld [vmem:[%s298 + $0x3e0] sm:$0xf]
      %v645 = vld [vmem:[%s298 + $0x3e4] sm:$0xf]
      %v646 = vld [vmem:[%s298 + $0x3e8] sm:$0xf]
      %v647 = vld [vmem:[%s298 + $0x3ec] sm:$0xf]
      %v648 = vld [vmem:[%s298 + $0x3f0] sm:$0xf]
      %v649 = vld [vmem:[%s298 + $0x3f4] sm:$0xf]
      %v650 = vld [vmem:[%s298 + $0x3f8] sm:$0xf]
      %v651 = vld [vmem:[%s298 + $0x3fc] sm:$0xf]
      %v652 = vld [vmem:[%s301] sm:$0x1]
      %v654 = vlaneseq
      %v655 = vshrl.u32 %v654, 7
      %v656 = vsub.s32 0, %v655
      %v657 = vrot.slane %v652, %v656
      %v723 = vunpack.c.l.b16 %v332
      %v724 = vunpack.c.h.b16 %v332
      %v725 = vunpack.c.l.b16 %v333
      %v726 = vunpack.c.h.b16 %v333
      %v727 = vunpack.c.l.b16 %v334
      %v728 = vunpack.c.h.b16 %v334
      %v729 = vunpack.c.l.b16 %v335
      %v730 = vunpack.c.h.b16 %v335
      %v731 = vunpack.c.l.b16 %v336
      %v732 = vunpack.c.h.b16 %v336
      %v733 = vunpack.c.l.b16 %v337
      %v734 = vunpack.c.h.b16 %v337
      %v735 = vunpack.c.l.b16 %v338
      %v736 = vunpack.c.h.b16 %v338
      %v737 = vunpack.c.l.b16 %v339
      %v738 = vunpack.c.h.b16 %v339
      %v739 = vunpack.c.l.b16 %v340
      %v740 = vunpack.c.h.b16 %v340
      %v741 = vunpack.c.l.b16 %v341
      %v742 = vunpack.c.h.b16 %v341
      %v743 = vunpack.c.l.b16 %v342
      %v744 = vunpack.c.h.b16 %v342
      %v745 = vunpack.c.l.b16 %v343
      %v746 = vunpack.c.h.b16 %v343
      %v747 = vunpack.c.l.b16 %v344
      %v748 = vunpack.c.h.b16 %v344
      %v749 = vunpack.c.l.b16 %v345
      %v750 = vunpack.c.h.b16 %v345
      %v751 = vunpack.c.l.b16 %v346
      %v752 = vunpack.c.h.b16 %v346
      %v753 = vunpack.c.l.b16 %v347
      %v754 = vunpack.c.h.b16 %v347
      %v755 = vunpack.c.l.b16 %v348
      %v756 = vunpack.c.h.b16 %v348
      %v757 = vunpack.c.l.b16 %v349
      %v758 = vunpack.c.h.b16 %v349
      %v759 = vunpack.c.l.b16 %v350
      %v760 = vunpack.c.h.b16 %v350
      %v761 = vunpack.c.l.b16 %v351
      %v762 = vunpack.c.h.b16 %v351
      %v763 = vunpack.c.l.b16 %v352
      %v764 = vunpack.c.h.b16 %v352
      %v765 = vunpack.c.l.b16 %v353
      %v766 = vunpack.c.h.b16 %v353
      %v767 = vunpack.c.l.b16 %v354
      %v768 = vunpack.c.h.b16 %v354
      %v769 = vunpack.c.l.b16 %v355
      %v770 = vunpack.c.h.b16 %v355
      %v771 = vunpack.c.l.b16 %v356
      %v772 = vunpack.c.h.b16 %v356
      %v773 = vunpack.c.l.b16 %v357
      %v774 = vunpack.c.h.b16 %v357
      %v775 = vunpack.c.l.b16 %v358
      %v776 = vunpack.c.h.b16 %v358
      %v777 = vunpack.c.l.b16 %v359
      %v778 = vunpack.c.h.b16 %v359
      %v779 = vunpack.c.l.b16 %v360
      %v780 = vunpack.c.h.b16 %v360
      %v781 = vunpack.c.l.b16 %v361
      %v782 = vunpack.c.h.b16 %v361
      %v783 = vunpack.c.l.b16 %v362
      %v784 = vunpack.c.h.b16 %v362
      %v785 = vunpack.c.l.b16 %v363
      %v786 = vunpack.c.h.b16 %v363
      %v787 = vunpack.c.l.b16 %v364
      %v788 = vunpack.c.h.b16 %v364
      %v789 = vunpack.c.l.b16 %v365
      %v790 = vunpack.c.h.b16 %v365
      %v791 = vunpack.c.l.b16 %v366
      %v792 = vunpack.c.h.b16 %v366
      %v793 = vunpack.c.l.b16 %v367
      %v794 = vunpack.c.h.b16 %v367
      %v795 = vunpack.c.l.b16 %v368
      %v796 = vunpack.c.h.b16 %v368
      %v797 = vunpack.c.l.b16 %v369
      %v798 = vunpack.c.h.b16 %v369
      %v799 = vunpack.c.l.b16 %v370
      %v800 = vunpack.c.h.b16 %v370
      %v801 = vunpack.c.l.b16 %v371
      %v802 = vunpack.c.h.b16 %v371
      %v803 = vunpack.c.l.b16 %v372
      %v804 = vunpack.c.h.b16 %v372
      %v805 = vunpack.c.l.b16 %v373
      %v806 = vunpack.c.h.b16 %v373
      %v807 = vunpack.c.l.b16 %v374
      %v808 = vunpack.c.h.b16 %v374
      %v809 = vunpack.c.l.b16 %v375
      %v810 = vunpack.c.h.b16 %v375
      %v811 = vunpack.c.l.b16 %v376
      %v812 = vunpack.c.h.b16 %v376
      %v813 = vunpack.c.l.b16 %v377
      %v814 = vunpack.c.h.b16 %v377
      %v815 = vunpack.c.l.b16 %v378
      %v816 = vunpack.c.h.b16 %v378
      %v817 = vunpack.c.l.b16 %v379
      %v818 = vunpack.c.h.b16 %v379
      %v819 = vunpack.c.l.b16 %v380
      %v820 = vunpack.c.h.b16 %v380
      %v821 = vunpack.c.l.b16 %v381
      %v822 = vunpack.c.h.b16 %v381
      %v823 = vunpack.c.l.b16 %v382
      %v824 = vunpack.c.h.b16 %v382
      %v825 = vunpack.c.l.b16 %v383
      %v826 = vunpack.c.h.b16 %v383
      %v827 = vunpack.c.l.b16 %v384
      %v828 = vunpack.c.h.b16 %v384
      %v829 = vunpack.c.l.b16 %v385
      %v830 = vunpack.c.h.b16 %v385
      %v831 = vunpack.c.l.b16 %v386
      %v832 = vunpack.c.h.b16 %v386
      %v833 = vunpack.c.l.b16 %v387
      %v834 = vunpack.c.h.b16 %v387
      %v835 = vunpack.c.l.b16 %v388
      %v836 = vunpack.c.h.b16 %v388
      %v837 = vunpack.c.l.b16 %v389
      %v838 = vunpack.c.h.b16 %v389
      %v839 = vunpack.c.l.b16 %v390
      %v840 = vunpack.c.h.b16 %v390
      %v841 = vunpack.c.l.b16 %v391
      %v842 = vunpack.c.h.b16 %v391
      %v843 = vunpack.c.l.b16 %v392
      %v844 = vunpack.c.h.b16 %v392
      %v845 = vunpack.c.l.b16 %v393
      %v846 = vunpack.c.h.b16 %v393
      %v847 = vunpack.c.l.b16 %v394
      %v848 = vunpack.c.h.b16 %v394
      %v849 = vunpack.c.l.b16 %v395
      %v850 = vunpack.c.h.b16 %v395
      %v851 = vpack.c.b16 %v739, %v723
      %v852 = vpack.c.b16 %v740, %v724
      %v853 = vpack.c.b16 %v741, %v725
      %v854 = vpack.c.b16 %v742, %v726
      %v855 = vpack.c.b16 %v743, %v727
      %v856 = vpack.c.b16 %v744, %v728
      %v857 = vpack.c.b16 %v745, %v729
      %v858 = vpack.c.b16 %v746, %v730
      %v859 = vpack.c.b16 %v747, %v731
      %v860 = vpack.c.b16 %v748, %v732
      %v861 = vpack.c.b16 %v749, %v733
      %v862 = vpack.c.b16 %v750, %v734
      %v863 = vpack.c.b16 %v751, %v735
      %v864 = vpack.c.b16 %v752, %v736
      %v865 = vpack.c.b16 %v753, %v737
      %v866 = vpack.c.b16 %v754, %v738
      %v867 = vpack.c.b16 %v771, %v755
      %v868 = vpack.c.b16 %v772, %v756
      %v869 = vpack.c.b16 %v773, %v757
      %v870 = vpack.c.b16 %v774, %v758
      %v871 = vpack.c.b16 %v775, %v759
      %v872 = vpack.c.b16 %v776, %v760
      %v873 = vpack.c.b16 %v777, %v761
      %v874 = vpack.c.b16 %v778, %v762
      %v875 = vpack.c.b16 %v779, %v763
      %v876 = vpack.c.b16 %v780, %v764
      %v877 = vpack.c.b16 %v781, %v765
      %v878 = vpack.c.b16 %v782, %v766
      %v879 = vpack.c.b16 %v783, %v767
      %v880 = vpack.c.b16 %v784, %v768
      %v881 = vpack.c.b16 %v785, %v769
      %v882 = vpack.c.b16 %v786, %v770
      %v883 = vpack.c.b16 %v803, %v787
      %v884 = vpack.c.b16 %v804, %v788
      %v885 = vpack.c.b16 %v805, %v789
      %v886 = vpack.c.b16 %v806, %v790
      %v887 = vpack.c.b16 %v807, %v791
      %v888 = vpack.c.b16 %v808, %v792
      %v889 = vpack.c.b16 %v809, %v793
      %v890 = vpack.c.b16 %v810, %v794
      %v891 = vpack.c.b16 %v811, %v795
      %v892 = vpack.c.b16 %v812, %v796
      %v893 = vpack.c.b16 %v813, %v797
      %v894 = vpack.c.b16 %v814, %v798
      %v895 = vpack.c.b16 %v815, %v799
      %v896 = vpack.c.b16 %v816, %v800
      %v897 = vpack.c.b16 %v817, %v801
      %v898 = vpack.c.b16 %v818, %v802
      %v899 = vpack.c.b16 %v835, %v819
      %v900 = vpack.c.b16 %v836, %v820
      %v901 = vpack.c.b16 %v837, %v821
      %v902 = vpack.c.b16 %v838, %v822
      %v903 = vpack.c.b16 %v839, %v823
      %v904 = vpack.c.b16 %v840, %v824
      %v905 = vpack.c.b16 %v841, %v825
      %v906 = vpack.c.b16 %v842, %v826
      %v907 = vpack.c.b16 %v843, %v827
      %v908 = vpack.c.b16 %v844, %v828
      %v909 = vpack.c.b16 %v845, %v829
      %v910 = vpack.c.b16 %v846, %v830
      %v911 = vpack.c.b16 %v847, %v831
      %v912 = vpack.c.b16 %v848, %v832
      %v913 = vpack.c.b16 %v849, %v833
      %v914 = vpack.c.b16 %v850, %v834
      %v1235 = vunpack.c.l.b16 %v396
      %v1236 = vunpack.c.l.b16 %v397
      %v1237 = vunpack.c.l.b16 %v398
      %v1238 = vunpack.c.l.b16 %v399
      %v1239 = vunpack.c.l.b16 %v400
      %v1240 = vunpack.c.l.b16 %v401
      %v1241 = vunpack.c.l.b16 %v402
      %v1242 = vunpack.c.l.b16 %v403
      %v1243 = vunpack.c.l.b16 %v404
      %v1244 = vunpack.c.l.b16 %v405
      %v1245 = vunpack.c.l.b16 %v406
      %v1246 = vunpack.c.l.b16 %v407
      %v1247 = vunpack.c.l.b16 %v408
      %v1248 = vunpack.c.l.b16 %v409
      %v1249 = vunpack.c.l.b16 %v410
      %v1250 = vunpack.c.l.b16 %v411
      %v1251 = vunpack.c.l.b16 %v412
      %v1252 = vunpack.c.l.b16 %v413
      %v1253 = vunpack.c.l.b16 %v414
      %v1254 = vunpack.c.l.b16 %v415
      %v1255 = vunpack.c.l.b16 %v416
      %v1256 = vunpack.c.l.b16 %v417
      %v1257 = vunpack.c.l.b16 %v418
      %v1258 = vunpack.c.l.b16 %v419
      %v1259 = vunpack.c.l.b16 %v420
      %v1260 = vunpack.c.l.b16 %v421
      %v1261 = vunpack.c.l.b16 %v422
      %v1262 = vunpack.c.l.b16 %v423
      %v1263 = vunpack.c.l.b16 %v424
      %v1264 = vunpack.c.l.b16 %v425
      %v1265 = vunpack.c.l.b16 %v426
      %v1266 = vunpack.c.l.b16 %v427
      %v1267 = vunpack.c.l.b16 %v428
      %v1268 = vunpack.c.l.b16 %v429
      %v1269 = vunpack.c.l.b16 %v430
      %v1270 = vunpack.c.l.b16 %v431
      %v1271 = vunpack.c.l.b16 %v432
      %v1272 = vunpack.c.l.b16 %v433
      %v1273 = vunpack.c.l.b16 %v434
      %v1274 = vunpack.c.l.b16 %v435
      %v1275 = vunpack.c.l.b16 %v436
      %v1276 = vunpack.c.l.b16 %v437
      %v1277 = vunpack.c.l.b16 %v438
      %v1278 = vunpack.c.l.b16 %v439
      %v1279 = vunpack.c.l.b16 %v440
      %v1280 = vunpack.c.l.b16 %v441
      %v1281 = vunpack.c.l.b16 %v442
      %v1282 = vunpack.c.l.b16 %v443
      %v1283 = vunpack.c.l.b16 %v444
      %v1284 = vunpack.c.l.b16 %v445
      %v1285 = vunpack.c.l.b16 %v446
      %v1286 = vunpack.c.l.b16 %v447
      %v1287 = vunpack.c.l.b16 %v448
      %v1288 = vunpack.c.l.b16 %v449
      %v1289 = vunpack.c.l.b16 %v450
      %v1290 = vunpack.c.l.b16 %v451
      %v1291 = vunpack.c.l.b16 %v452
      %v1292 = vunpack.c.l.b16 %v453
      %v1293 = vunpack.c.l.b16 %v454
      %v1294 = vunpack.c.l.b16 %v455
      %v1295 = vunpack.c.l.b16 %v456
      %v1296 = vunpack.c.l.b16 %v457
      %v1297 = vunpack.c.l.b16 %v458
      %v1298 = vunpack.c.l.b16 %v459
      %v1299 = vunpack.c.l.b16 %v460
      %v1300 = vunpack.c.l.b16 %v461
      %v1301 = vunpack.c.l.b16 %v462
      %v1302 = vunpack.c.l.b16 %v463
      %v1303 = vunpack.c.l.b16 %v464
      %v1304 = vunpack.c.l.b16 %v465
      %v1305 = vunpack.c.l.b16 %v466
      %v1306 = vunpack.c.l.b16 %v467
      %v1307 = vunpack.c.l.b16 %v468
      %v1308 = vunpack.c.l.b16 %v469
      %v1309 = vunpack.c.l.b16 %v470
      %v1310 = vunpack.c.l.b16 %v471
      %v1311 = vunpack.c.l.b16 %v472
      %v1312 = vunpack.c.l.b16 %v473
      %v1313 = vunpack.c.l.b16 %v474
      %v1314 = vunpack.c.l.b16 %v475
      %v1315 = vunpack.c.l.b16 %v476
      %v1316 = vunpack.c.l.b16 %v477
      %v1317 = vunpack.c.l.b16 %v478
      %v1318 = vunpack.c.l.b16 %v479
      %v1319 = vunpack.c.l.b16 %v480
      %v1320 = vunpack.c.l.b16 %v481
      %v1321 = vunpack.c.l.b16 %v482
      %v1322 = vunpack.c.l.b16 %v483
      %v1323 = vunpack.c.l.b16 %v484
      %v1324 = vunpack.c.l.b16 %v485
      %v1325 = vunpack.c.l.b16 %v486
      %v1326 = vunpack.c.l.b16 %v487
      %v1327 = vunpack.c.l.b16 %v488
      %v1328 = vunpack.c.l.b16 %v489
      %v1329 = vunpack.c.l.b16 %v490
      %v1330 = vunpack.c.l.b16 %v491
      %v1331 = vunpack.c.l.b16 %v492
      %v1332 = vunpack.c.l.b16 %v493
      %v1333 = vunpack.c.l.b16 %v494
      %v1334 = vunpack.c.l.b16 %v495
      %v1335 = vunpack.c.l.b16 %v496
      %v1336 = vunpack.c.l.b16 %v497
      %v1337 = vunpack.c.l.b16 %v498
      %v1338 = vunpack.c.l.b16 %v499
      %v1339 = vunpack.c.l.b16 %v500
      %v1340 = vunpack.c.l.b16 %v501
      %v1341 = vunpack.c.l.b16 %v502
      %v1342 = vunpack.c.l.b16 %v503
      %v1343 = vunpack.c.l.b16 %v504
      %v1344 = vunpack.c.l.b16 %v505
      %v1345 = vunpack.c.l.b16 %v506
      %v1346 = vunpack.c.l.b16 %v507
      %v1347 = vunpack.c.l.b16 %v508
      %v1348 = vunpack.c.l.b16 %v509
      %v1349 = vunpack.c.l.b16 %v510
      %v1350 = vunpack.c.l.b16 %v511
      %v1351 = vunpack.c.l.b16 %v512
      %v1352 = vunpack.c.l.b16 %v513
      %v1353 = vunpack.c.l.b16 %v514
      %v1354 = vunpack.c.l.b16 %v515
      %v1355 = vunpack.c.l.b16 %v516
      %v1356 = vunpack.c.l.b16 %v517
      %v1357 = vunpack.c.l.b16 %v518
      %v1358 = vunpack.c.l.b16 %v519
      %v1359 = vunpack.c.l.b16 %v520
      %v1360 = vunpack.c.l.b16 %v521
      %v1361 = vunpack.c.l.b16 %v522
      %v1362 = vunpack.c.l.b16 %v523
      %v1363 = vunpack.c.l.b16 %v524
      %v1364 = vunpack.c.l.b16 %v525
      %v1365 = vunpack.c.l.b16 %v526
      %v1366 = vunpack.c.l.b16 %v527
      %v1367 = vunpack.c.l.b16 %v528
      %v1368 = vunpack.c.l.b16 %v529
      %v1369 = vunpack.c.l.b16 %v530
      %v1370 = vunpack.c.l.b16 %v531
      %v1371 = vunpack.c.l.b16 %v532
      %v1372 = vunpack.c.l.b16 %v533
      %v1373 = vunpack.c.l.b16 %v534
      %v1374 = vunpack.c.l.b16 %v535
      %v1375 = vunpack.c.l.b16 %v536
      %v1376 = vunpack.c.l.b16 %v537
      %v1377 = vunpack.c.l.b16 %v538
      %v1378 = vunpack.c.l.b16 %v539
      %v1379 = vunpack.c.l.b16 %v540
      %v1380 = vunpack.c.l.b16 %v541
      %v1381 = vunpack.c.l.b16 %v542
      %v1382 = vunpack.c.l.b16 %v543
      %v1383 = vunpack.c.l.b16 %v544
      %v1384 = vunpack.c.l.b16 %v545
      %v1385 = vunpack.c.l.b16 %v546
      %v1386 = vunpack.c.l.b16 %v547
      %v1387 = vunpack.c.l.b16 %v548
      %v1388 = vunpack.c.l.b16 %v549
      %v1389 = vunpack.c.l.b16 %v550
      %v1390 = vunpack.c.l.b16 %v551
      %v1391 = vunpack.c.l.b16 %v552
      %v1392 = vunpack.c.l.b16 %v553
      %v1393 = vunpack.c.l.b16 %v554
      %v1394 = vunpack.c.l.b16 %v555
      %v1395 = vunpack.c.l.b16 %v556
      %v1396 = vunpack.c.l.b16 %v557
      %v1397 = vunpack.c.l.b16 %v558
      %v1398 = vunpack.c.l.b16 %v559
      %v1399 = vunpack.c.l.b16 %v560
      %v1400 = vunpack.c.l.b16 %v561
      %v1401 = vunpack.c.l.b16 %v562
      %v1402 = vunpack.c.l.b16 %v563
      %v1403 = vunpack.c.l.b16 %v564
      %v1404 = vunpack.c.l.b16 %v565
      %v1405 = vunpack.c.l.b16 %v566
      %v1406 = vunpack.c.l.b16 %v567
      %v1407 = vunpack.c.l.b16 %v568
      %v1408 = vunpack.c.l.b16 %v569
      %v1409 = vunpack.c.l.b16 %v570
      %v1410 = vunpack.c.l.b16 %v571
      %v1411 = vunpack.c.l.b16 %v572
      %v1412 = vunpack.c.l.b16 %v573
      %v1413 = vunpack.c.l.b16 %v574
      %v1414 = vunpack.c.l.b16 %v575
      %v1415 = vunpack.c.l.b16 %v576
      %v1416 = vunpack.c.l.b16 %v577
      %v1417 = vunpack.c.l.b16 %v578
      %v1418 = vunpack.c.l.b16 %v579
      %v1419 = vunpack.c.l.b16 %v580
      %v1420 = vunpack.c.l.b16 %v581
      %v1421 = vunpack.c.l.b16 %v582
      %v1422 = vunpack.c.l.b16 %v583
      %v1423 = vunpack.c.l.b16 %v584
      %v1424 = vunpack.c.l.b16 %v585
      %v1425 = vunpack.c.l.b16 %v586
      %v1426 = vunpack.c.l.b16 %v587
      %v1427 = vunpack.c.l.b16 %v588
      %v1428 = vunpack.c.l.b16 %v589
      %v1429 = vunpack.c.l.b16 %v590
      %v1430 = vunpack.c.l.b16 %v591
      %v1431 = vunpack.c.l.b16 %v592
      %v1432 = vunpack.c.l.b16 %v593
      %v1433 = vunpack.c.l.b16 %v594
      %v1434 = vunpack.c.l.b16 %v595
      %v1435 = vunpack.c.l.b16 %v596
      %v1436 = vunpack.c.l.b16 %v597
      %v1437 = vunpack.c.l.b16 %v598
      %v1438 = vunpack.c.l.b16 %v599
      %v1439 = vunpack.c.l.b16 %v600
      %v1440 = vunpack.c.l.b16 %v601
      %v1441 = vunpack.c.l.b16 %v602
      %v1442 = vunpack.c.l.b16 %v603
      %v1443 = vunpack.c.l.b16 %v604
      %v1444 = vunpack.c.l.b16 %v605
      %v1445 = vunpack.c.l.b16 %v606
      %v1446 = vunpack.c.l.b16 %v607
      %v1447 = vunpack.c.l.b16 %v608
      %v1448 = vunpack.c.l.b16 %v609
      %v1449 = vunpack.c.l.b16 %v610
      %v1450 = vunpack.c.l.b16 %v611
      %v1451 = vunpack.c.l.b16 %v612
      %v1452 = vunpack.c.l.b16 %v613
      %v1453 = vunpack.c.l.b16 %v614
      %v1454 = vunpack.c.l.b16 %v615
      %v1455 = vunpack.c.l.b16 %v616
      %v1456 = vunpack.c.l.b16 %v617
      %v1457 = vunpack.c.l.b16 %v618
      %v1458 = vunpack.c.l.b16 %v619
      %v1459 = vunpack.c.l.b16 %v620
      %v1460 = vunpack.c.l.b16 %v621
      %v1461 = vunpack.c.l.b16 %v622
      %v1462 = vunpack.c.l.b16 %v623
      %v1463 = vunpack.c.l.b16 %v624
      %v1464 = vunpack.c.l.b16 %v625
      %v1465 = vunpack.c.l.b16 %v626
      %v1466 = vunpack.c.l.b16 %v627
      %v1467 = vunpack.c.l.b16 %v628
      %v1468 = vunpack.c.l.b16 %v629
      %v1469 = vunpack.c.l.b16 %v630
      %v1470 = vunpack.c.l.b16 %v631
      %v1471 = vunpack.c.l.b16 %v632
      %v1472 = vunpack.c.l.b16 %v633
      %v1473 = vunpack.c.l.b16 %v634
      %v1474 = vunpack.c.l.b16 %v635
      %v1475 = vunpack.c.l.b16 %v636
      %v1476 = vunpack.c.l.b16 %v637
      %v1477 = vunpack.c.l.b16 %v638
      %v1478 = vunpack.c.l.b16 %v639
      %v1479 = vunpack.c.l.b16 %v640
      %v1480 = vunpack.c.l.b16 %v641
      %v1481 = vunpack.c.l.b16 %v642
      %v1482 = vunpack.c.l.b16 %v643
      %v1483 = vunpack.c.l.b16 %v644
      %v1484 = vunpack.c.l.b16 %v645
      %v1485 = vunpack.c.l.b16 %v646
      %v1486 = vunpack.c.l.b16 %v647
      %v1487 = vunpack.c.l.b16 %v648
      %v1488 = vunpack.c.l.b16 %v649
      %v1489 = vunpack.c.l.b16 %v650
      %v1490 = vunpack.c.l.b16 %v651
      %v1491 = vpack.c.b16 %v1236, %v1235
      %v1492 = vpack.c.b16 %v1238, %v1237
      %v1493 = vpack.c.b16 %v1240, %v1239
      %v1494 = vpack.c.b16 %v1242, %v1241
      %v1495 = vpack.c.b16 %v1244, %v1243
      %v1496 = vpack.c.b16 %v1246, %v1245
      %v1497 = vpack.c.b16 %v1248, %v1247
      %v1498 = vpack.c.b16 %v1250, %v1249
      %v1499 = vpack.c.b16 %v1252, %v1251
      %v1500 = vpack.c.b16 %v1254, %v1253
      %v1501 = vpack.c.b16 %v1256, %v1255
      %v1502 = vpack.c.b16 %v1258, %v1257
      %v1503 = vpack.c.b16 %v1260, %v1259
      %v1504 = vpack.c.b16 %v1262, %v1261
      %v1505 = vpack.c.b16 %v1264, %v1263
      %v1506 = vpack.c.b16 %v1266, %v1265
      %v1507 = vpack.c.b16 %v1268, %v1267
      %v1508 = vpack.c.b16 %v1270, %v1269
      %v1509 = vpack.c.b16 %v1272, %v1271
      %v1510 = vpack.c.b16 %v1274, %v1273
      %v1511 = vpack.c.b16 %v1276, %v1275
      %v1512 = vpack.c.b16 %v1278, %v1277
      %v1513 = vpack.c.b16 %v1280, %v1279
      %v1514 = vpack.c.b16 %v1282, %v1281
      %v1515 = vpack.c.b16 %v1284, %v1283
      %v1516 = vpack.c.b16 %v1286, %v1285
      %v1517 = vpack.c.b16 %v1288, %v1287
      %v1518 = vpack.c.b16 %v1290, %v1289
      %v1519 = vpack.c.b16 %v1292, %v1291
      %v1520 = vpack.c.b16 %v1294, %v1293
      %v1521 = vpack.c.b16 %v1296, %v1295
      %v1522 = vpack.c.b16 %v1298, %v1297
      %v1523 = vpack.c.b16 %v1300, %v1299
      %v1524 = vpack.c.b16 %v1302, %v1301
      %v1525 = vpack.c.b16 %v1304, %v1303
      %v1526 = vpack.c.b16 %v1306, %v1305
      %v1527 = vpack.c.b16 %v1308, %v1307
      %v1528 = vpack.c.b16 %v1310, %v1309
      %v1529 = vpack.c.b16 %v1312, %v1311
      %v1530 = vpack.c.b16 %v1314, %v1313
      %v1531 = vpack.c.b16 %v1316, %v1315
      %v1532 = vpack.c.b16 %v1318, %v1317
      %v1533 = vpack.c.b16 %v1320, %v1319
      %v1534 = vpack.c.b16 %v1322, %v1321
      %v1535 = vpack.c.b16 %v1324, %v1323
      %v1536 = vpack.c.b16 %v1326, %v1325
      %v1537 = vpack.c.b16 %v1328, %v1327
      %v1538 = vpack.c.b16 %v1330, %v1329
      %v1539 = vpack.c.b16 %v1332, %v1331
      %v1540 = vpack.c.b16 %v1334, %v1333
      %v1541 = vpack.c.b16 %v1336, %v1335
      %v1542 = vpack.c.b16 %v1338, %v1337
      %v1543 = vpack.c.b16 %v1340, %v1339
      %v1544 = vpack.c.b16 %v1342, %v1341
      %v1545 = vpack.c.b16 %v1344, %v1343
      %v1546 = vpack.c.b16 %v1346, %v1345
      %v1547 = vpack.c.b16 %v1348, %v1347
      %v1548 = vpack.c.b16 %v1350, %v1349
      %v1549 = vpack.c.b16 %v1352, %v1351
      %v1550 = vpack.c.b16 %v1354, %v1353
      %v1551 = vpack.c.b16 %v1356, %v1355
      %v1552 = vpack.c.b16 %v1358, %v1357
      %v1553 = vpack.c.b16 %v1360, %v1359
      %v1554 = vpack.c.b16 %v1362, %v1361
      %v1555 = vpack.c.b16 %v1364, %v1363
      %v1556 = vpack.c.b16 %v1366, %v1365
      %v1557 = vpack.c.b16 %v1368, %v1367
      %v1558 = vpack.c.b16 %v1370, %v1369
      %v1559 = vpack.c.b16 %v1372, %v1371
      %v1560 = vpack.c.b16 %v1374, %v1373
      %v1561 = vpack.c.b16 %v1376, %v1375
      %v1562 = vpack.c.b16 %v1378, %v1377
      %v1563 = vpack.c.b16 %v1380, %v1379
      %v1564 = vpack.c.b16 %v1382, %v1381
      %v1565 = vpack.c.b16 %v1384, %v1383
      %v1566 = vpack.c.b16 %v1386, %v1385
      %v1567 = vpack.c.b16 %v1388, %v1387
      %v1568 = vpack.c.b16 %v1390, %v1389
      %v1569 = vpack.c.b16 %v1392, %v1391
      %v1570 = vpack.c.b16 %v1394, %v1393
      %v1571 = vpack.c.b16 %v1396, %v1395
      %v1572 = vpack.c.b16 %v1398, %v1397
      %v1573 = vpack.c.b16 %v1400, %v1399
      %v1574 = vpack.c.b16 %v1402, %v1401
      %v1575 = vpack.c.b16 %v1404, %v1403
      %v1576 = vpack.c.b16 %v1406, %v1405
      %v1577 = vpack.c.b16 %v1408, %v1407
      %v1578 = vpack.c.b16 %v1410, %v1409
      %v1579 = vpack.c.b16 %v1412, %v1411
      %v1580 = vpack.c.b16 %v1414, %v1413
      %v1581 = vpack.c.b16 %v1416, %v1415
      %v1582 = vpack.c.b16 %v1418, %v1417
      %v1583 = vpack.c.b16 %v1420, %v1419
      %v1584 = vpack.c.b16 %v1422, %v1421
      %v1585 = vpack.c.b16 %v1424, %v1423
      %v1586 = vpack.c.b16 %v1426, %v1425
      %v1587 = vpack.c.b16 %v1428, %v1427
      %v1588 = vpack.c.b16 %v1430, %v1429
      %v1589 = vpack.c.b16 %v1432, %v1431
      %v1590 = vpack.c.b16 %v1434, %v1433
      %v1591 = vpack.c.b16 %v1436, %v1435
      %v1592 = vpack.c.b16 %v1438, %v1437
      %v1593 = vpack.c.b16 %v1440, %v1439
      %v1594 = vpack.c.b16 %v1442, %v1441
      %v1595 = vpack.c.b16 %v1444, %v1443
      %v1596 = vpack.c.b16 %v1446, %v1445
      %v1597 = vpack.c.b16 %v1448, %v1447
      %v1598 = vpack.c.b16 %v1450, %v1449
      %v1599 = vpack.c.b16 %v1452, %v1451
      %v1600 = vpack.c.b16 %v1454, %v1453
      %v1601 = vpack.c.b16 %v1456, %v1455
      %v1602 = vpack.c.b16 %v1458, %v1457
      %v1603 = vpack.c.b16 %v1460, %v1459
      %v1604 = vpack.c.b16 %v1462, %v1461
      %v1605 = vpack.c.b16 %v1464, %v1463
      %v1606 = vpack.c.b16 %v1466, %v1465
      %v1607 = vpack.c.b16 %v1468, %v1467
      %v1608 = vpack.c.b16 %v1470, %v1469
      %v1609 = vpack.c.b16 %v1472, %v1471
      %v1610 = vpack.c.b16 %v1474, %v1473
      %v1611 = vpack.c.b16 %v1476, %v1475
      %v1612 = vpack.c.b16 %v1478, %v1477
      %v1613 = vpack.c.b16 %v1480, %v1479
      %v1614 = vpack.c.b16 %v1482, %v1481
      %v1615 = vpack.c.b16 %v1484, %v1483
      %v1616 = vpack.c.b16 %v1486, %v1485
      %v1617 = vpack.c.b16 %v1488, %v1487
      %v1618 = vpack.c.b16 %v1490, %v1489
      %1747 = vmatprep.subr.bf16.mxu0 0
      %1748 = vmatpush1.bf16.msra.mxu0 %v1491
      %1749 = vmatprep.subr.bf16.mxu0 0
      %1750 = vmatpush1.bf16.msra.mxu0 %v1492
      %1751 = vmatprep.subr.bf16.mxu0 0
      %1752 = vmatpush1.bf16.msra.mxu0 %v1493
      %1753 = vmatprep.subr.bf16.mxu0 0
      %1754 = vmatpush1.bf16.msra.mxu0 %v1494
      %1755 = vmatprep.subr.bf16.mxu0 0
      %1756 = vmatpush1.bf16.msra.mxu0 %v1495
      %1757 = vmatprep.subr.bf16.mxu0 0
      %1758 = vmatpush1.bf16.msra.mxu0 %v1496
      %1759 = vmatprep.subr.bf16.mxu0 0
      %1760 = vmatpush1.bf16.msra.mxu0 %v1497
      %1761 = vmatprep.subr.bf16.mxu0 0
      %1762 = vmatpush1.bf16.msra.mxu0 %v1498
      %1763 = vmatprep.subr.bf16.mxu0 0
      %1764 = vmatpush1.bf16.msra.mxu0 %v1499
      %1765 = vmatprep.subr.bf16.mxu0 0
      %1766 = vmatpush1.bf16.msra.mxu0 %v1500
      %1767 = vmatprep.subr.bf16.mxu0 0
      %1768 = vmatpush1.bf16.msra.mxu0 %v1501
      %1769 = vmatprep.subr.bf16.mxu0 0
      %1770 = vmatpush1.bf16.msra.mxu0 %v1502
      %1771 = vmatprep.subr.bf16.mxu0 0
      %1772 = vmatpush1.bf16.msra.mxu0 %v1503
      %1773 = vmatprep.subr.bf16.mxu0 0
      %1774 = vmatpush1.bf16.msra.mxu0 %v1504
      %1775 = vmatprep.subr.bf16.mxu0 0
      %1776 = vmatpush1.bf16.msra.mxu0 %v1505
      %1777 = vmatprep.subr.bf16.mxu0 0
      %1778 = vmatpush1.bf16.msra.mxu0 %v1506
      %1779 = vmatprep.mubr.bf16.mxu0 %v852
      %1780 = vmatmul.mubr.bf16.gmra.mrb[0].mxu0 %v851
      %v1781 = vpop.f32.mrb[0].mxu0
      %v1782 = vadd.f32 %v657, %v1781
      %v1783 = vpop.f32.mrb[0].mxu0
      %v1784 = vpop.f32.mrb[0].mxu0
      %v1785 = vadd.f32 %v657, %v1784
      %v1786 = vpop.f32.mrb[0].mxu0
      %1787 = vmatprep.mubr.bf16.mxu0 %v868
      %1788 = vmatmul.mubr.bf16.gmra.mrb[0].mxu0 %v867
      %v1789 = vpop.f32.mrb[0].mxu0
      %v1790 = vadd.f32 %v657, %v1789
      %v1791 = vpop.f32.mrb[0].mxu0
      %v1792 = vpop.f32.mrb[0].mxu0
      %v1793 = vadd.f32 %v657, %v1792
      %v1794 = vpop.f32.mrb[0].mxu0
      %1795 = vmatprep.mubr.bf16.mxu0 %v884
      %1796 = vmatmul.mubr.bf16.gmra.mrb[0].mxu0 %v883
      %v1797 = vpop.f32.mrb[0].mxu0
      %v1798 = vadd.f32 %v657, %v1797
      %v1799 = vpop.f32.mrb[0].mxu0
      %v1800 = vpop.f32.mrb[0].mxu0
      %v1801 = vadd.f32 %v657, %v1800
      %v1802 = vpop.f32.mrb[0].mxu0
      %1803 = vmatprep.mubr.bf16.mxu0 %v900
      %1804 = vmatmul.mubr.bf16.gmra.mrb[0].mxu0 %v899
      %v1805 = vpop.f32.mrb[0].mxu0
      %v1806 = vadd.f32 %v657, %v1805
      %v1807 = vpop.f32.mrb[0].mxu0
      %v1808 = vpop.f32.mrb[0].mxu0
      %v1809 = vadd.f32 %v657, %v1808
      %v1810 = vpop.f32.mrb[0].mxu0
      %1811 = vdwg.mxu0
      %1812 = vmatprep.subr.bf16.mxu0 0
      %1813 = vmatpush1.bf16.msra.mxu0 %v1507
      %1814 = vmatprep.subr.bf16.mxu0 0
      %1815 = vmatpush1.bf16.msra.mxu0 %v1508
      %1816 = vmatprep.subr.bf16.mxu0 0
      %1817 = vmatpush1.bf16.msra.mxu0 %v1509
      %1818 = vmatprep.subr.bf16.mxu0 0
      %1819 = vmatpush1.bf16.msra.mxu0 %v1510
      %1820 = vmatprep.subr.bf16.mxu0 0
      %1821 = vmatpush1.bf16.msra.mxu0 %v1511
      %1822 = vmatprep.subr.bf16.mxu0 0
      %1823 = vmatpush1.bf16.msra.mxu0 %v1512
      %1824 = vmatprep.subr.bf16.mxu0 0
      %1825 = vmatpush1.bf16.msra.mxu0 %v1513
      %1826 = vmatprep.subr.bf16.mxu0 0
      %1827 = vmatpush1.bf16.msra.mxu0 %v1514
      %1828 = vmatprep.subr.bf16.mxu0 0
      %1829 = vmatpush1.bf16.msra.mxu0 %v1515
      %1830 = vmatprep.subr.bf16.mxu0 0
      %1831 = vmatpush1.bf16.msra.mxu0 %v1516
      %1832 = vmatprep.subr.bf16.mxu0 0
      %1833 = vmatpush1.bf16.msra.mxu0 %v1517
      %1834 = vmatprep.subr.bf16.mxu0 0
      %1835 = vmatpush1.bf16.msra.mxu0 %v1518
      %1836 = vmatprep.subr.bf16.mxu0 0
      %1837 = vmatpush1.bf16.msra.mxu0 %v1519
      %1838 = vmatprep.subr.bf16.mxu0 0
      %1839 = vmatpush1.bf16.msra.mxu0 %v1520
      %1840 = vmatprep.subr.bf16.mxu0 0
      %1841 = vmatpush1.bf16.msra.mxu0 %v1521
      %1842 = vmatprep.subr.bf16.mxu0 0
      %1843 = vmatpush1.bf16.msra.mxu0 %v1522
      %1844 = vmatprep.mubr.bf16.mxu0 %v854
      %1845 = vmatmul.mubr.bf16.gmra.mrb[0].mxu0 %v853
      %v1846 = vpop.f32.mrb[0].mxu0
      %v1847 = vadd.f32 %v1782, %v1846
      %v1848 = vpop.f32.mrb[0].mxu0
      %v1849 = vpop.f32.mrb[0].mxu0
      %v1850 = vadd.f32 %v1785, %v1849
      %v1851 = vpop.f32.mrb[0].mxu0
      %1852 = vmatprep.mubr.bf16.mxu0 %v870
      %1853 = vmatmul.mubr.bf16.gmra.mrb[0].mxu0 %v869
      %v1854 = vpop.f32.mrb[0].mxu0
      %v1855 = vadd.f32 %v1790, %v1854
      %v1856 = vpop.f32.mrb[0].mxu0
      %v1857 = vpop.f32.mrb[0].mxu0
      %v1858 = vadd.f32 %v1793, %v1857
      %v1859 = vpop.f32.mrb[0].mxu0
      %1860 = vmatprep.mubr.bf16.mxu0 %v886
      %1861 = vmatmul.mubr.bf16.gmra.mrb[0].mxu0 %v885
      %v1862 = vpop.f32.mrb[0].mxu0
      %v1863 = vadd.f32 %v1798, %v1862
      %v1864 = vpop.f32.mrb[0].mxu0
      %v1865 = vpop.f32.mrb[0].mxu0
      %v1866 = vadd.f32 %v1801, %v1865
      %v1867 = vpop.f32.mrb[0].mxu0
      %1868 = vmatprep.mubr.bf16.mxu0 %v902
      %1869 = vmatmul.mubr.bf16.gmra.mrb[0].mxu0 %v901
      %v1870 = vpop.f32.mrb[0].mxu0
      %v1871 = vadd.f32 %v1806, %v1870
      %v1872 = vpop.f32.mrb[0].mxu0
      %v1873 = vpop.f32.mrb[0].mxu0
      %v1874 = vadd.f32 %v1809, %v1873
      %v1875 = vpop.f32.mrb[0].mxu0
      %1876 = vdwg.mxu0
      %1877 = vmatprep.subr.bf16.mxu0 0
      %1878 = vmatpush1.bf16.msra.mxu0 %v1523
      %1879 = vmatprep.subr.bf16.mxu0 0
      %1880 = vmatpush1.bf16.msra.mxu0 %v1524
      %1881 = vmatprep.subr.bf16.mxu0 0
      %1882 = vmatpush1.bf16.msra.mxu0 %v1525
      %1883 = vmatprep.subr.bf16.mxu0 0
      %1884 = vmatpush1.bf16.msra.mxu0 %v1526
      %1885 = vmatprep.subr.bf16.mxu0 0
      %1886 = vmatpush1.bf16.msra.mxu0 %v1527
      %1887 = vmatprep.subr.bf16.mxu0 0
      %1888 = vmatpush1.bf16.msra.mxu0 %v1528
      %1889 = vmatprep.subr.bf16.mxu0 0
      %1890 = vmatpush1.bf16.msra.mxu0 %v1529
      %1891 = vmatprep.subr.bf16.mxu0 0
      %1892 = vmatpush1.bf16.msra.mxu0 %v1530
      %1893 = vmatprep.subr.bf16.mxu0 0
      %1894 = vmatpush1.bf16.msra.mxu0 %v1531
      %1895 = vmatprep.subr.bf16.mxu0 0
      %1896 = vmatpush1.bf16.msra.mxu0 %v1532
      %1897 = vmatprep.subr.bf16.mxu0 0
      %1898 = vmatpush1.bf16.msra.mxu0 %v1533
      %1899 = vmatprep.subr.bf16.mxu0 0
      %1900 = vmatpush1.bf16.msra.mxu0 %v1534
      %1901 = vmatprep.subr.bf16.mxu0 0
      %1902 = vmatpush1.bf16.msra.mxu0 %v1535
      %1903 = vmatprep.subr.bf16.mxu0 0
      %1904 = vmatpush1.bf16.msra.mxu0 %v1536
      %1905 = vmatprep.subr.bf16.mxu0 0
      %1906 = vmatpush1.bf16.msra.mxu0 %v1537
      %1907 = vmatprep.subr.bf16.mxu0 0
      %1908 = vmatpush1.bf16.msra.mxu0 %v1538
      %1909 = vmatprep.mubr.bf16.mxu0 %v856
      %1910 = vmatmul.mubr.bf16.gmra.mrb[0].mxu0 %v855
      %v1911 = vpop.f32.mrb[0].mxu0
      %v1912 = vadd.f32 %v1847, %v1911
      %v1913 = vpop.f32.mrb[0].mxu0
      %v1914 = vpop.f32.mrb[0].mxu0
      %v1915 = vadd.f32 %v1850, %v1914
      %v1916 = vpop.f32.mrb[0].mxu0
      %1917 = vmatprep.mubr.bf16.mxu0 %v872
      %1918 = vmatmul.mubr.bf16.gmra.mrb[0].mxu0 %v871
      %v1919 = vpop.f32.mrb[0].mxu0
      %v1920 = vadd.f32 %v1855, %v1919
      %v1921 = vpop.f32.mrb[0].mxu0
      %v1922 = vpop.f32.mrb[0].mxu0
      %v1923 = vadd.f32 %v1858, %v1922
      %v1924 = vpop.f32.mrb[0].mxu0
      %1925 = vmatprep.mubr.bf16.mxu0 %v888
      %1926 = vmatmul.mubr.bf16.gmra.mrb[0].mxu0 %v887
      %v1927 = vpop.f32.mrb[0].mxu0
      %v1928 = vadd.f32 %v1863, %v1927
      %v1929 = vpop.f32.mrb[0].mxu0
      %v1930 = vpop.f32.mrb[0].mxu0
      %v1931 = vadd.f32 %v1866, %v1930
      %v1932 = vpop.f32.mrb[0].mxu0
      %1933 = vmatprep.mubr.bf16.mxu0 %v904
      %1934 = vmatmul.mubr.bf16.gmra.mrb[0].mxu0 %v903
      %v1935 = vpop.f32.mrb[0].mxu0
      %v1936 = vadd.f32 %v1871, %v1935
      %v1937 = vpop.f32.mrb[0].mxu0
      %v1938 = vpop.f32.mrb[0].mxu0
      %v1939 = vadd.f32 %v1874, %v1938
      %v1940 = vpop.f32.mrb[0].mxu0
      %1941 = vdwg.mxu0
      %1942 = vmatprep.subr.bf16.mxu0 0
      %1943 = vmatpush1.bf16.msra.mxu0 %v1539
      %1944 = vmatprep.subr.bf16.mxu0 0
      %1945 = vmatpush1.bf16.msra.mxu0 %v1540
      %1946 = vmatprep.subr.bf16.mxu0 0
      %1947 = vmatpush1.bf16.msra.mxu0 %v1541
      %1948 = vmatprep.subr.bf16.mxu0 0
      %1949 = vmatpush1.bf16.msra.mxu0 %v1542
      %1950 = vmatprep.subr.bf16.mxu0 0
      %1951 = vmatpush1.bf16.msra.mxu0 %v1543
      %1952 = vmatprep.subr.bf16.mxu0 0
      %1953 = vmatpush1.bf16.msra.mxu0 %v1544
      %1954 = vmatprep.subr.bf16.mxu0 0
      %1955 = vmatpush1.bf16.msra.mxu0 %v1545
      %1956 = vmatprep.subr.bf16.mxu0 0
      %1957 = vmatpush1.bf16.msra.mxu0 %v1546
      %1958 = vmatprep.subr.bf16.mxu0 0
      %1959 = vmatpush1.bf16.msra.mxu0 %v1547
      %1960 = vmatprep.subr.bf16.mxu0 0
      %1961 = vmatpush1.bf16.msra.mxu0 %v1548
      %1962 = vmatprep.subr.bf16.mxu0 0
      %1963 = vmatpush1.bf16.msra.mxu0 %v1549
      %1964 = vmatprep.subr.bf16.mxu0 0
      %1965 = vmatpush1.bf16.msra.mxu0 %v1550
      %1966 = vmatprep.subr.bf16.mxu0 0
      %1967 = vmatpush1.bf16.msra.mxu0 %v1551
      %1968 = vmatprep.subr.bf16.mxu0 0
      %1969 = vmatpush1.bf16.msra.mxu0 %v1552
      %1970 = vmatprep.subr.bf16.mxu0 0
      %1971 = vmatpush1.bf16.msra.mxu0 %v1553
      %1972 = vmatprep.subr.bf16.mxu0 0
      %1973 = vmatpush1.bf16.msra.mxu0 %v1554
      %1974 = vmatprep.mubr.bf16.mxu0 %v858
      %1975 = vmatmul.mubr.bf16.gmra.mrb[0].mxu0 %v857
      %v1976 = vpop.f32.mrb[0].mxu0
      %v1977 = vadd.f32 %v1912, %v1976
      %v1978 = vpop.f32.mrb[0].mxu0
      %v1979 = vpop.f32.mrb[0].mxu0
      %v1980 = vadd.f32 %v1915, %v1979
      %v1981 = vpop.f32.mrb[0].mxu0
      %1982 = vmatprep.mubr.bf16.mxu0 %v874
      %1983 = vmatmul.mubr.bf16.gmra.mrb[0].mxu0 %v873
      %v1984 = vpop.f32.mrb[0].mxu0
      %v1985 = vadd.f32 %v1920, %v1984
      %v1986 = vpop.f32.mrb[0].mxu0
      %v1987 = vpop.f32.mrb[0].mxu0
      %v1988 = vadd.f32 %v1923, %v1987
      %v1989 = vpop.f32.mrb[0].mxu0
      %1990 = vmatprep.mubr.bf16.mxu0 %v890
      %1991 = vmatmul.mubr.bf16.gmra.mrb[0].mxu0 %v889
      %v1992 = vpop.f32.mrb[0].mxu0
      %v1993 = vadd.f32 %v1928, %v1992
      %v1994 = vpop.f32.mrb[0].mxu0
      %v1995 = vpop.f32.mrb[0].mxu0
      %v1996 = vadd.f32 %v1931, %v1995
      %v1997 = vpop.f32.mrb[0].mxu0
      %1998 = vmatprep.mubr.bf16.mxu0 %v906
      %1999 = vmatmul.mubr.bf16.gmra.mrb[0].mxu0 %v905
      %v2000 = vpop.f32.mrb[0].mxu0
      %v2001 = vadd.f32 %v1936, %v2000
      %v2002 = vpop.f32.mrb[0].mxu0
      %v2003 = vpop.f32.mrb[0].mxu0
      %v2004 = vadd.f32 %v1939, %v2003
      %v2005 = vpop.f32.mrb[0].mxu0
      %2006 = vdwg.mxu0
      %2007 = vmatprep.subr.bf16.mxu0 0
      %2008 = vmatpush1.bf16.msra.mxu0 %v1555
      %2009 = vmatprep.subr.bf16.mxu0 0
      %2010 = vmatpush1.bf16.msra.mxu0 %v1556
      %2011 = vmatprep.subr.bf16.mxu0 0
      %2012 = vmatpush1.bf16.msra.mxu0 %v1557
      %2013 = vmatprep.subr.bf16.mxu0 0
      %2014 = vmatpush1.bf16.msra.mxu0 %v1558
      %2015 = vmatprep.subr.bf16.mxu0 0
      %2016 = vmatpush1.bf16.msra.mxu0 %v1559
      %2017 = vmatprep.subr.bf16.mxu0 0
      %2018 = vmatpush1.bf16.msra.mxu0 %v1560
      %2019 = vmatprep.subr.bf16.mxu0 0
      %2020 = vmatpush1.bf16.msra.mxu0 %v1561
      %2021 = vmatprep.subr.bf16.mxu0 0
      %2022 = vmatpush1.bf16.msra.mxu0 %v1562
      %2023 = vmatprep.subr.bf16.mxu0 0
      %2024 = vmatpush1.bf16.msra.mxu0 %v1563
      %2025 = vmatprep.subr.bf16.mxu0 0
      %2026 = vmatpush1.bf16.msra.mxu0 %v1564
      %2027 = vmatprep.subr.bf16.mxu0 0
      %2028 = vmatpush1.bf16.msra.mxu0 %v1565
      %2029 = vmatprep.subr.bf16.mxu0 0
      %2030 = vmatpush1.bf16.msra.mxu0 %v1566
      %2031 = vmatprep.subr.bf16.mxu0 0
      %2032 = vmatpush1.bf16.msra.mxu0 %v1567
      %2033 = vmatprep.subr.bf16.mxu0 0
      %2034 = vmatpush1.bf16.msra.mxu0 %v1568
      %2035 = vmatprep.subr.bf16.mxu0 0
      %2036 = vmatpush1.bf16.msra.mxu0 %v1569
      %2037 = vmatprep.subr.bf16.mxu0 0
      %2038 = vmatpush1.bf16.msra.mxu0 %v1570
      %2039 = vmatprep.mubr.bf16.mxu0 %v860
      %2040 = vmatmul.mubr.bf16.gmra.mrb[0].mxu0 %v859
      %v2041 = vpop.f32.mrb[0].mxu0
      %v2042 = vadd.f32 %v1977, %v2041
      %v2043 = vpop.f32.mrb[0].mxu0
      %v2044 = vpop.f32.mrb[0].mxu0
      %v2045 = vadd.f32 %v1980, %v2044
      %v2046 = vpop.f32.mrb[0].mxu0
      %2047 = vmatprep.mubr.bf16.mxu0 %v876
      %2048 = vmatmul.mubr.bf16.gmra.mrb[0].mxu0 %v875
      %v2049 = vpop.f32.mrb[0].mxu0
      %v2050 = vadd.f32 %v1985, %v2049
      %v2051 = vpop.f32.mrb[0].mxu0
      %v2052 = vpop.f32.mrb[0].mxu0
      %v2053 = vadd.f32 %v1988, %v2052
      %v2054 = vpop.f32.mrb[0].mxu0
      %2055 = vmatprep.mubr.bf16.mxu0 %v892
      %2056 = vmatmul.mubr.bf16.gmra.mrb[0].mxu0 %v891
      %v2057 = vpop.f32.mrb[0].mxu0
      %v2058 = vadd.f32 %v1993, %v2057
      %v2059 = vpop.f32.mrb[0].mxu0
      %v2060 = vpop.f32.mrb[0].mxu0
      %v2061 = vadd.f32 %v1996, %v2060
      %v2062 = vpop.f32.mrb[0].mxu0
      %2063 = vmatprep.mubr.bf16.mxu0 %v908
      %2064 = vmatmul.mubr.bf16.gmra.mrb[0].mxu0 %v907
      %v2065 = vpop.f32.mrb[0].mxu0
      %v2066 = vadd.f32 %v2001, %v2065
      %v2067 = vpop.f32.mrb[0].mxu0
      %v2068 = vpop.f32.mrb[0].mxu0
      %v2069 = vadd.f32 %v2004, %v2068
      %v2070 = vpop.f32.mrb[0].mxu0
      %2071 = vdwg.mxu0
      %2072 = vmatprep.subr.bf16.mxu0 0
      %2073 = vmatpush1.bf16.msra.mxu0 %v1571
      %2074 = vmatprep.subr.bf16.mxu0 0
      %2075 = vmatpush1.bf16.msra.mxu0 %v1572
      %2076 = vmatprep.subr.bf16.mxu0 0
      %2077 = vmatpush1.bf16.msra.mxu0 %v1573
      %2078 = vmatprep.subr.bf16.mxu0 0
      %2079 = vmatpush1.bf16.msra.mxu0 %v1574
      %2080 = vmatprep.subr.bf16.mxu0 0
      %2081 = vmatpush1.bf16.msra.mxu0 %v1575
      %2082 = vmatprep.subr.bf16.mxu0 0
      %2083 = vmatpush1.bf16.msra.mxu0 %v1576
      %2084 = vmatprep.subr.bf16.mxu0 0
      %2085 = vmatpush1.bf16.msra.mxu0 %v1577
      %2086 = vmatprep.subr.bf16.mxu0 0
      %2087 = vmatpush1.bf16.msra.mxu0 %v1578
      %2088 = vmatprep.subr.bf16.mxu0 0
      %2089 = vmatpush1.bf16.msra.mxu0 %v1579
      %2090 = vmatprep.subr.bf16.mxu0 0
      %2091 = vmatpush1.bf16.msra.mxu0 %v1580
      %2092 = vmatprep.subr.bf16.mxu0 0
      %2093 = vmatpush1.bf16.msra.mxu0 %v1581
      %2094 = vmatprep.subr.bf16.mxu0 0
      %2095 = vmatpush1.bf16.msra.mxu0 %v1582
      %2096 = vmatprep.subr.bf16.mxu0 0
      %2097 = vmatpush1.bf16.msra.mxu0 %v1583
      %2098 = vmatprep.subr.bf16.mxu0 0
      %2099 = vmatpush1.bf16.msra.mxu0 %v1584
      %2100 = vmatprep.subr.bf16.mxu0 0
      %2101 = vmatpush1.bf16.msra.mxu0 %v1585
      %2102 = vmatprep.subr.bf16.mxu0 0
      %2103 = vmatpush1.bf16.msra.mxu0 %v1586
      %2104 = vmatprep.mubr.bf16.mxu0 %v862
      %2105 = vmatmul.mubr.bf16.gmra.mrb[0].mxu0 %v861
      %v2106 = vpop.f32.mrb[0].mxu0
      %v2107 = vadd.f32 %v2042, %v2106
      %v2108 = vpop.f32.mrb[0].mxu0
      %v2109 = vpop.f32.mrb[0].mxu0
      %v2110 = vadd.f32 %v2045, %v2109
      %v2111 = vpop.f32.mrb[0].mxu0
      %2112 = vmatprep.mubr.bf16.mxu0 %v878
      %2113 = vmatmul.mubr.bf16.gmra.mrb[0].mxu0 %v877
      %v2114 = vpop.f32.mrb[0].mxu0
      %v2115 = vadd.f32 %v2050, %v2114
      %v2116 = vpop.f32.mrb[0].mxu0
      %v2117 = vpop.f32.mrb[0].mxu0
      %v2118 = vadd.f32 %v2053, %v2117
      %v2119 = vpop.f32.mrb[0].mxu0
      %2120 = vmatprep.mubr.bf16.mxu0 %v894
      %2121 = vmatmul.mubr.bf16.gmra.mrb[0].mxu0 %v893
      %v2122 = vpop.f32.mrb[0].mxu0
      %v2123 = vadd.f32 %v2058, %v2122
      %v2124 = vpop.f32.mrb[0].mxu0
      %v2125 = vpop.f32.mrb[0].mxu0
      %v2126 = vadd.f32 %v2061, %v2125
      %v2127 = vpop.f32.mrb[0].mxu0
      %2128 = vmatprep.mubr.bf16.mxu0 %v910
      %2129 = vmatmul.mubr.bf16.gmra.mrb[0].mxu0 %v909
      %v2130 = vpop.f32.mrb[0].mxu0
      %v2131 = vadd.f32 %v2066, %v2130
      %v2132 = vpop.f32.mrb[0].mxu0
      %v2133 = vpop.f32.mrb[0].mxu0
      %v2134 = vadd.f32 %v2069, %v2133
      %v2135 = vpop.f32.mrb[0].mxu0
      %2136 = vdwg.mxu0
      %2137 = vmatprep.subr.bf16.mxu0 0
      %2138 = vmatpush1.bf16.msra.mxu0 %v1587
      %2139 = vmatprep.subr.bf16.mxu0 0
      %2140 = vmatpush1.bf16.msra.mxu0 %v1588
      %2141 = vmatprep.subr.bf16.mxu0 0
      %2142 = vmatpush1.bf16.msra.mxu0 %v1589
      %2143 = vmatprep.subr.bf16.mxu0 0
      %2144 = vmatpush1.bf16.msra.mxu0 %v1590
      %2145 = vmatprep.subr.bf16.mxu0 0
      %2146 = vmatpush1.bf16.msra.mxu0 %v1591
      %2147 = vmatprep.subr.bf16.mxu0 0
      %2148 = vmatpush1.bf16.msra.mxu0 %v1592
      %2149 = vmatprep.subr.bf16.mxu0 0
      %2150 = vmatpush1.bf16.msra.mxu0 %v1593
      %2151 = vmatprep.subr.bf16.mxu0 0
      %2152 = vmatpush1.bf16.msra.mxu0 %v1594
      %2153 = vmatprep.subr.bf16.mxu0 0
      %2154 = vmatpush1.bf16.msra.mxu0 %v1595
      %2155 = vmatprep.subr.bf16.mxu0 0
      %2156 = vmatpush1.bf16.msra.mxu0 %v1596
      %2157 = vmatprep.subr.bf16.mxu0 0
      %2158 = vmatpush1.bf16.msra.mxu0 %v1597
      %2159 = vmatprep.subr.bf16.mxu0 0
      %2160 = vmatpush1.bf16.msra.mxu0 %v1598
      %2161 = vmatprep.subr.bf16.mxu0 0
      %2162 = vmatpush1.bf16.msra.mxu0 %v1599
      %2163 = vmatprep.subr.bf16.mxu0 0
      %2164 = vmatpush1.bf16.msra.mxu0 %v1600
      %2165 = vmatprep.subr.bf16.mxu0 0
      %2166 = vmatpush1.bf16.msra.mxu0 %v1601
      %2167 = vmatprep.subr.bf16.mxu0 0
      %2168 = vmatpush1.bf16.msra.mxu0 %v1602
      %2169 = vmatprep.mubr.bf16.mxu0 %v864
      %2170 = vmatmul.mubr.bf16.gmra.mrb[0].mxu0 %v863
      %v2171 = vpop.f32.mrb[0].mxu0
      %v2172 = vadd.f32 %v2107, %v2171
      %v2173 = vpop.f32.mrb[0].mxu0
      %v2174 = vpop.f32.mrb[0].mxu0
      %v2175 = vadd.f32 %v2110, %v2174
      %v2176 = vpop.f32.mrb[0].mxu0
      %2177 = vmatprep.mubr.bf16.mxu0 %v880
      %2178 = vmatmul.mubr.bf16.gmra.mrb[0].mxu0 %v879
      %v2179 = vpop.f32.mrb[0].mxu0
      %v2180 = vadd.f32 %v2115, %v2179
      %v2181 = vpop.f32.mrb[0].mxu0
      %v2182 = vpop.f32.mrb[0].mxu0
      %v2183 = vadd.f32 %v2118, %v2182
      %v2184 = vpop.f32.mrb[0].mxu0
      %2185 = vmatprep.mubr.bf16.mxu0 %v896
      %2186 = vmatmul.mubr.bf16.gmra.mrb[0].mxu0 %v895
      %v2187 = vpop.f32.mrb[0].mxu0
      %v2188 = vadd.f32 %v2123, %v2187
      %v2189 = vpop.f32.mrb[0].mxu0
      %v2190 = vpop.f32.mrb[0].mxu0
      %v2191 = vadd.f32 %v2126, %v2190
      %v2192 = vpop.f32.mrb[0].mxu0
      %2193 = vmatprep.mubr.bf16.mxu0 %v912
      %2194 = vmatmul.mubr.bf16.gmra.mrb[0].mxu0 %v911
      %v2195 = vpop.f32.mrb[0].mxu0
      %v2196 = vadd.f32 %v2131, %v2195
      %v2197 = vpop.f32.mrb[0].mxu0
      %v2198 = vpop.f32.mrb[0].mxu0
      %v2199 = vadd.f32 %v2134, %v2198
      %v2200 = vpop.f32.mrb[0].mxu0
      %2201 = vdwg.mxu0
      %2202 = vmatprep.subr.bf16.mxu0 0
      %2203 = vmatpush1.bf16.msra.mxu0 %v1603
      %2204 = vmatprep.subr.bf16.mxu0 0
      %2205 = vmatpush1.bf16.msra.mxu0 %v1604
      %2206 = vmatprep.subr.bf16.mxu0 0
      %2207 = vmatpush1.bf16.msra.mxu0 %v1605
      %2208 = vmatprep.subr.bf16.mxu0 0
      %2209 = vmatpush1.bf16.msra.mxu0 %v1606
      %2210 = vmatprep.subr.bf16.mxu0 0
      %2211 = vmatpush1.bf16.msra.mxu0 %v1607
      %2212 = vmatprep.subr.bf16.mxu0 0
      %2213 = vmatpush1.bf16.msra.mxu0 %v1608
      %2214 = vmatprep.subr.bf16.mxu0 0
      %2215 = vmatpush1.bf16.msra.mxu0 %v1609
      %2216 = vmatprep.subr.bf16.mxu0 0
      %2217 = vmatpush1.bf16.msra.mxu0 %v1610
      %2218 = vmatprep.subr.bf16.mxu0 0
      %2219 = vmatpush1.bf16.msra.mxu0 %v1611
      %2220 = vmatprep.subr.bf16.mxu0 0
      %2221 = vmatpush1.bf16.msra.mxu0 %v1612
      %2222 = vmatprep.subr.bf16.mxu0 0
      %2223 = vmatpush1.bf16.msra.mxu0 %v1613
      %2224 = vmatprep.subr.bf16.mxu0 0
      %2225 = vmatpush1.bf16.msra.mxu0 %v1614
      %2226 = vmatprep.subr.bf16.mxu0 0
      %2227 = vmatpush1.bf16.msra.mxu0 %v1615
      %2228 = vmatprep.subr.bf16.mxu0 0
      %2229 = vmatpush1.bf16.msra.mxu0 %v1616
      %2230 = vmatprep.subr.bf16.mxu0 0
      %2231 = vmatpush1.bf16.msra.mxu0 %v1617
      %2232 = vmatprep.subr.bf16.mxu0 0
      %2233 = vmatpush1.bf16.msra.mxu0 %v1618
      %2234 = vmatprep.mubr.bf16.mxu0 %v866
      %2235 = vmatmul.mubr.bf16.gmra.mrb[0].mxu0 %v865
      %v2236 = vpop.f32.mrb[0].mxu0
      %v2237 = vadd.f32 %v2172, %v2236
      %v2238 = vpop.f32.mrb[0].mxu0
      %v2239 = vpop.f32.mrb[0].mxu0
      %v2240 = vadd.f32 %v2175, %v2239
      %v2241 = vpop.f32.mrb[0].mxu0
      %2242 = vmatprep.mubr.bf16.mxu0 %v882
      %2243 = vmatmul.mubr.bf16.gmra.mrb[0].mxu0 %v881
      %v2244 = vpop.f32.mrb[0].mxu0
      %v2245 = vadd.f32 %v2180, %v2244
      %v2246 = vpop.f32.mrb[0].mxu0
      %v2247 = vpop.f32.mrb[0].mxu0
      %v2248 = vadd.f32 %v2183, %v2247
      %v2249 = vpop.f32.mrb[0].mxu0
      %2250 = vmatprep.mubr.bf16.mxu0 %v898
      %2251 = vmatmul.mubr.bf16.gmra.mrb[0].mxu0 %v897
      %v2252 = vpop.f32.mrb[0].mxu0
      %v2253 = vadd.f32 %v2188, %v2252
      %v2254 = vpop.f32.mrb[0].mxu0
      %v2255 = vpop.f32.mrb[0].mxu0
      %v2256 = vadd.f32 %v2191, %v2255
      %v2257 = vpop.f32.mrb[0].mxu0
      %2258 = vmatprep.mubr.bf16.mxu0 %v914
      %2259 = vmatmul.mubr.bf16.gmra.mrb[0].mxu0 %v913
      %v2260 = vpop.f32.mrb[0].mxu0
      %v2261 = vadd.f32 %v2196, %v2260
      %v2262 = vpop.f32.mrb[0].mxu0
      %v2263 = vpop.f32.mrb[0].mxu0
      %v2264 = vadd.f32 %v2199, %v2263
      %v2265 = vpop.f32.mrb[0].mxu0
      %2266 = vdwg.mxu0
      %v2267 = vpack.c.bf16 %v2240, %v2237
      %v2268 = vpack.c.bf16 %v2248, %v2245
      %v2269 = vpack.c.bf16 %v2256, %v2253
      %v2270 = vpack.c.bf16 %v2264, %v2261
      %v2275 = vunpack.c.l.b16 %v2267
      %v2276 = vunpack.c.h.b16 %v2267
      %v2277 = vunpack.c.l.b16 %v2268
      %v2278 = vunpack.c.h.b16 %v2268
      %v2279 = vunpack.c.l.b16 %v2269
      %v2280 = vunpack.c.h.b16 %v2269
      %v2281 = vunpack.c.l.b16 %v2270
      %v2282 = vunpack.c.h.b16 %v2270
      %v2283 = vpack.c.b16 %v2275, %v2275
      %v2284 = vpack.c.b16 %v2276, %v2276
      %v2285 = vpack.c.b16 %v2277, %v2277
      %v2286 = vpack.c.b16 %v2278, %v2278
      %v2287 = vpack.c.b16 %v2279, %v2279
      %v2288 = vpack.c.b16 %v2280, %v2280
      %v2289 = vpack.c.b16 %v2281, %v2281
      %v2290 = vpack.c.b16 %v2282, %v2282
      %2299 = vst [vmem:[%s313] sm:$0xf] %v2283
      %2300 = vst [vmem:[%s313 + $0x4] sm:$0xf] %v2284
      %2301 = vst [vmem:[%s313 + $0x8] sm:$0xf] %v2285
      %2302 = vst [vmem:[%s313 + $0xc] sm:$0xf] %v2286
      %2303 = vst [vmem:[%s313 + $0x10] sm:$0xf] %v2287
      %2304 = vst [vmem:[%s313 + $0x14] sm:$0xf] %v2288
      %2305 = vst [vmem:[%s313 + $0x18] sm:$0xf] %v2289
      %2306 = vst [vmem:[%s313 + $0x1c] sm:$0xf] %v2290
      %v2307 = vstv %s328
      %v2308 = vadd.s32 %v2307, 1
      %v2309 = vadd.s32 %v2307, 2
      %v2310 = vadd.s32 %v2307, 3
      %v2311 = vlaneseq
      %v2312 = vshrl.u32 %v2311, 7
      %v2313 = vadd.s32 %v2312, 8
      %vm2314 = vcmp.lt.s32.totalorder %v2307, 4
      %vm2315 = vcmp.lt.s32.totalorder %v2308, 4
      %vm2316 = vcmp.lt.s32.totalorder %v2309, 4
      %vm2317 = vcmp.lt.s32.totalorder %v2310, 4
      %vm2318 = vcmp.lt.s32.totalorder %v2312, 4
      %vm2319 = vcmp.lt.s32.totalorder %v2313, 4
      %vm2320 = vmand %vm2314, %vm2318
      %vm2321 = vmand %vm2314, %vm2319
      %vm2322 = vmand %vm2315, %vm2318
      %vm2323 = vmand %vm2315, %vm2319
      %vm2324 = vmand %vm2316, %vm2318
      %vm2325 = vmand %vm2316, %vm2319
      %vm2326 = vmand %vm2317, %vm2318
      %vm2327 = vmand %vm2317, %vm2319
      %v2328 = vsel %vm2320, %v2237, 0.0
      %v2329 = vsel %vm2321, %v2240, 0.0
      %v2330 = vsel %vm2322, %v2245, 0.0
      %v2331 = vsel %vm2323, %v2248, 0.0
      %v2332 = vsel %vm2324, %v2253, 0.0
      %v2333 = vsel %vm2325, %v2256, 0.0
      %v2334 = vsel %vm2326, %v2261, 0.0
      %v2335 = vsel %vm2327, %v2264, 0.0
      %p2336 = scmp.eq.s32.totalorder %s24, 0
      // Predicated region
      $region33: #{_lambda_.11} parent=31 // pred_check
        %p2337 = pneg %p2336
      $region34: #{_lambda_.11} parent=31 // pred_check_branch
        %2339 = sbr.rel (%p2337) target = $region36
      $region35: #{_lambda_.11} parent=31 // pred_region
        %2340 = vst [vmem:[%s320] sm:$0x1] 0.0
        %2341 = vst [vmem:[%s326] sm:$0x1] 0.0
      $region36: #{_lambda_.11} parent=31 // pred_fallthru
        _
      %v2342 = vadd.f32 %v2328, %v2330
      %v2343 = vadd.f32 %v2342, %v2332
      %v2344 = vadd.f32 %v2343, %v2334
      %v2345 = vadd.f32 %v2329, %v2331
      %v2346 = vadd.f32 %v2345, %v2333
      %v2347 = vadd.f32 %v2346, %v2335
      %v2348 = vadd.f32 %v2344, %v2347
      %v2349 = vrot.slane %v2348, 4
      %v2350 = vadd.f32 %v2348, %v2349
      %v2351 = vrot.slane %v2350, 2
      %v2352 = vadd.f32 %v2350, %v2351
      %v2353 = vrot.slane %v2352, 1
      %v2354 = vadd.f32 %v2352, %v2353
      %v2355 = vmul.f32 %v2328, %v2328
      %v2356 = vmul.f32 %v2329, %v2329
      %v2357 = vmul.f32 %v2330, %v2330
      %v2358 = vmul.f32 %v2331, %v2331
      %v2359 = vmul.f32 %v2332, %v2332
      %v2360 = vmul.f32 %v2333, %v2333
      %v2361 = vmul.f32 %v2334, %v2334
      %v2362 = vmul.f32 %v2335, %v2335
      %v2363 = vadd.f32 %v2355, %v2357
      %v2364 = vadd.f32 %v2363, %v2359
      %v2365 = vadd.f32 %v2364, %v2361
      %v2366 = vadd.f32 %v2356, %v2358
      %v2367 = vadd.f32 %v2366, %v2360
      %v2368 = vadd.f32 %v2367, %v2362
      %v2369 = vadd.f32 %v2365, %v2368
      %v2370 = vrot.slane %v2369, 4
      %v2371 = vadd.f32 %v2369, %v2370
      %v2372 = vrot.slane %v2371, 2
      %v2373 = vadd.f32 %v2371, %v2372
      %v2374 = vrot.slane %v2373, 1
      %v2375 = vadd.f32 %v2373, %v2374
      %v2376 = vld [vmem:[%s320] sm:$0x1]
      %v2377 = vadd.f32 %v2376, %v2354
      %2378 = vst [vmem:[%s320] sm:$0x1] %v2377
      %v2379 = vld [vmem:[%s326] sm:$0x1]
      %v2380 = vadd.f32 %v2379, %v2375
      %2381 = vst [vmem:[%s326] sm:$0x1] %v2380
      %s2382 = smul.u32 8, %s24
      %p2383 = scmp.lt.s32.totalorder %s22, 1
      %s2384 = scalar_select %p2383, %s22, 1
      %p2385 = scmp.lt.s32.totalorder %s2382, 7
      %s2386 = scalar_select %p2385, %s2382, 7
      %p2387 = scmp.lt.s32.totalorder %s23, 0
      %s2388 = scalar_select %p2387, %s23, 0
      %s2389 = sadd.s32 %s2388, %s2386
      %s2390 = smul.addr %s2384, 8
      %s2391 = sadd.s32 %s2389, %s2390
      %s2392 = smul.addr %s2391, 4
      %s2393 = scalar_lea.vmem %s3, %s2392
      %p2394 = scmp.lt.s32.totalorder %s22, 1
      %s2395 = scalar_select %p2394, %s22, 1
      %p2396 = scmp.lt.s32.totalorder %s23, 0
      %s2397 = scalar_select %p2396, %s23, 0
      %s2398 = sadd.s32 %s2397, %s2395
      %s2399 = scalar_lea.vmem %s4, %s2398
      %p2400 = scmp.lt.s32.totalorder %s22, 1
      %s2401 = scalar_select %p2400, %s22, 1
      %p2402 = scmp.lt.s32.totalorder %s23, 0
      %s2403 = scalar_select %p2402, %s23, 0
      %s2404 = sadd.s32 %s2403, %s2401
      %s2405 = scalar_lea.vmem %s5, %s2404
      // Predicated region
      $region37: #{_lambda_.11} parent=31 // pred_check
        %p2406 = pneg %p136
      $region38: #{_lambda_.11} parent=31 // pred_check_branch
        %2408 = sbr.rel (%p2406) target = $region40
      $region39: #{_lambda_.11} parent=31 // pred_region
        %s2409 = smul.u32 8, %s24
      $region40: #{_lambda_.11} parent=31 // pred_fallthru
        _
      // Predicated region
      $region41: #{_lambda_.11} parent=31 // pred_check
        %p2410 = pneg %p164
      $region42: #{_lambda_.11} parent=31 // pred_check_branch
        %2412 = sbr.rel (%p2410) target = $region44
      $region43: #{_lambda_.11} parent=31 // pred_region
        _
      $region44: #{_lambda_.11} parent=31 // pred_fallthru
        _
      // Predicated region
      $region45: #{_lambda_.11} parent=31 // pred_check
        %p2413 = pneg %p192
      $region46: #{_lambda_.11} parent=31 // pred_check_branch
        %2415 = sbr.rel (%p2413) target = $region48
      $region47: #{_lambda_.11} parent=31 // pred_region
        _
      $region48: #{_lambda_.11} parent=31 // pred_fallthru
        _
    $region32: #{_lambda_.11} parent=5 // pred_fallthru
      _
    %p2416 = scmp.le.s32.totalorder 2, %s12
    // Predicated region
    $region49: #{_lambda_.11} parent=5 // pred_check
      %p2417 = pneg %p2416
    $region50: #{_lambda_.11} parent=5 // pred_check_branch
      %2419 = sbr.rel (%p2417) target = $region52
    $region51: #{_lambda_.11} parent=5 // pred_region
      %s2420 = ssub.s32 %s12, 2
      // Predicated region
      $region53: #{_lambda_.11} parent=51 // pred_check
        %p2421 = pneg %p142
      $region54: #{_lambda_.11} parent=51 // pred_check_branch
        %2423 = sbr.rel (%p2421) target = $region56
      $region55: #{_lambda_.11} parent=51 // pred_region
        %s2424 = smul.u32 8, %s27
        %p2425 = scmp.lt.s32.totalorder %s25, 1
        %s2426 = scalar_select %p2425, %s25, 1
        %p2427 = scmp.lt.s32.totalorder %s2424, 7
        %s2428 = scalar_select %p2427, %s2424, 7
        %p2429 = scmp.lt.s32.totalorder %s26, 0
        %s2430 = scalar_select %p2429, %s26, 0
        %s2431 = sadd.s32 %s2430, %s2428
        %s2432 = smul.addr %s2426, 8
        %s2433 = sadd.s32 %s2431, %s2432
        %s2434 = smul.addr %s2433, 4
        %s2435 = scalar_lea.vmem %s3, %s2434
      $region56: #{_lambda_.11} parent=51 // pred_fallthru
        _
      // Predicated region
      $region57: #{_lambda_.11} parent=51 // pred_check
        %p2436 = pneg %p170
      $region58: #{_lambda_.11} parent=51 // pred_check_branch
        %2438 = sbr.rel (%p2436) target = $region60
      $region59: #{_lambda_.11} parent=51 // pred_region
        %p2439 = scmp.lt.s32.totalorder %s25, 1
        %s2440 = scalar_select %p2439, %s25, 1
        %p2441 = scmp.lt.s32.totalorder %s26, 0
        %s2442 = scalar_select %p2441, %s26, 0
        %s2443 = sadd.s32 %s2442, %s2440
        %s2444 = scalar_lea.vmem %s4, %s2443
      $region60: #{_lambda_.11} parent=51 // pred_fallthru
        _
      // Predicated region
      $region61: #{_lambda_.11} parent=51 // pred_check
        %p2445 = pneg %p198
      $region62: #{_lambda_.11} parent=51 // pred_check_branch
        %2447 = sbr.rel (%p2445) target = $region64
      $region63: #{_lambda_.11} parent=51 // pred_region
        %p2448 = scmp.lt.s32.totalorder %s25, 1
        %s2449 = scalar_select %p2448, %s25, 1
        %p2450 = scmp.lt.s32.totalorder %s26, 0
        %s2451 = scalar_select %p2450, %s26, 0
        %s2452 = sadd.s32 %s2451, %s2449
        %s2453 = scalar_lea.vmem %s5, %s2452
      $region64: #{_lambda_.11} parent=51 // pred_fallthru
        _
    $region52: #{_lambda_.11} parent=5 // pred_fallthru
      _
  $region6: #{_lambda_.11} parent=0 // loop_footer
    %s16 = sadd.s32 1, %s12
  $region7: #{_lambda_.11} parent=0 // loop_footer_branch
    %11 = sbr.rel target = $region3
  $region8: #{_lambda_.11} parent=0 // loop_exit
    _

// kernel: _lambda_.13
$region0: #{_lambda_.13}
  #allocation0 [shape = 'u32[]', space=smem, size = 0x4, offset = 0x4, fixed_abs, tag = 'smem constant byte address 0x4 - core index']
  #allocation1 [shape = 'u32[144,128]{1,0:T(1,128)}', space=vmem, size = 0x12000, scoped, tag = 'internal scratch']
  %s0 = inlined_call_operand.vmem [shape: bf16[2,6,16,512], index: 0, kind: input, shape index: {}]
  %s1 = inlined_call_operand.vmem [shape: bf16[4,512,128], index: 1, kind: input, shape index: {}]
  %s2 = inlined_call_operand.vmem [shape: f32[1,128], index: 2, kind: input, shape index: {}]
  %s3 = inlined_call_operand.vmem [shape: bf16[2,48,128], index: 3, kind: output, shape index: {0}]
  %s4 = inlined_call_operand.vmem [shape: f32[2,1,128], index: 4, kind: output, shape index: {1}]
  %s5 = inlined_call_operand.vmem [shape: f32[2,1,128], index: 5, kind: output, shape index: {2}]
  %6 = xla_tuple %s3, %s4, %s5
  %s7 = sld [smem:[#allocation0]]
  $region65: #{_lambda_.13} parent=0
    _
  %s9 = ssub.s32 1, %s7
  %s10 = scalar_select 0, %s9, %s7
  loop: start=0, step=1, limit=4
  $region2: #{_lambda_.13} parent=0 // loop_pre_header
    _
  $region3: #{_lambda_.13} parent=0 // loop_header
    %s12 = sphi 0, %s16
    %p13 = scmp.ge.s32.totalorder %s12, 4
    %s19 = sphi 0, %s38
    %s20 = sphi 0, %s34
    %s21 = sphi 0, %s30
    %s22 = sphi 0, %s19
    %s23 = sphi 0, %s20
    %s24 = sphi 0, %s21
    %s25 = sphi 0, %s22
    %s26 = sphi 0, %s23
    %s27 = sphi 0, %s24
    %s41 = sphi 0, %s43
    %s44 = sphi 0, %s41
    %s45 = sphi 0, %s44
    %s61 = sphi 0, %s45
    %s67 = sphi 0, %s69
    %s70 = sphi 0, %s67
    %s71 = sphi 0, %s70
    %s87 = sphi 0, %s71
    %s93 = sphi 0, %s95
    %s96 = sphi 0, %s93
    %s97 = sphi 0, %s96
    %s113 = sphi 0, %s97
    %s123 = sphi 0, %s125
    %s126 = sphi 0, %s123
    %s127 = sphi 0, %s126
    %s143 = sphi 0, %s127
    %s151 = sphi 0, %s153
    %s154 = sphi 0, %s151
    %s155 = sphi 0, %s154
    %s171 = sphi 0, %s155
    %s179 = sphi 0, %s181
    %s182 = sphi 0, %s179
    %s183 = sphi 0, %s182
    %s199 = sphi 0, %s183
  $region4: #{_lambda_.13} parent=0 // loop_header_branch
    %15 = sbr.rel (%p13) target = $region8
  $region5: #{_lambda_.13} parent=0 // loop_body
    %s17 = ssub.s32 %s12, 1
    %s18 = ssub.s32 %s12, 2
    %s28 = sadd.s32 1, %s21
    %p29 = scmp.ge.s32.totalorder %s28, 1
    %s30 = scalar_select %p29, 0, %s28
    %s31 = sadd.s32 1, %s20
    %s32 = scalar_select %p29, %s31, %s20
    %p33 = scmp.ge.s32.totalorder %s32, 1
    %s34 = scalar_select %p33, 0, %s32
    %s35 = sadd.s32 1, %s19
    %s36 = scalar_select %p33, %s35, %s19
    %p37 = scmp.ge.s32.totalorder %s36, 2
    %s38 = scalar_select %p37, 0, %s36
    %s39 = ssub.s32 %s19, %s38
    %p40 = scmp.eq.s32.totalorder %s39, 0
    %s42 = sadd.s32 %s41, 1
    %s43 = scalar_select %p40, %s41, %s42
    %p46 = pneg %p40
    %p47 = scmp.eq.s32.totalorder %s12, 1
    %p48 = por %p46, %p47
    %p49 = scmp.ne.s32.totalorder %s41, %s44
    %p50 = scmp.eq.s32.totalorder %s12, 0
    %p51 = por %p49, %p50
    %p52 = scmp.ne.s32.totalorder %s41, %s44
    %p53 = scmp.eq.s32.totalorder %s17, 1
    %p54 = por %p52, %p53
    %p55 = scmp.ne.s32.totalorder %s44, %s45
    %p56 = scmp.eq.s32.totalorder %s17, 0
    %p57 = por %p55, %p56
    %p58 = scmp.ne.s32.totalorder %s44, %s45
    %p59 = scmp.eq.s32.totalorder %s18, 1
    %p60 = por %p58, %p59
    %p62 = scmp.ne.s32.totalorder %s45, %s61
    %p63 = scmp.eq.s32.totalorder %s18, 0
    %p64 = por %p62, %p63
    %s65 = ssub.s32 %s20, %s34
    %p66 = scmp.eq.s32.totalorder %s65, 0
    %s68 = sadd.s32 %s67, 1
    %s69 = scalar_select %p66, %s67, %s68
    %p72 = pneg %p66
    %p73 = scmp.eq.s32.totalorder %s12, 1
    %p74 = por %p72, %p73
    %p75 = scmp.ne.s32.totalorder %s67, %s70
    %p76 = scmp.eq.s32.totalorder %s12, 0
    %p77 = por %p75, %p76
    %p78 = scmp.ne.s32.totalorder %s67, %s70
    %p79 = scmp.eq.s32.totalorder %s17, 1
    %p80 = por %p78, %p79
    %p81 = scmp.ne.s32.totalorder %s70, %s71
    %p82 = scmp.eq.s32.totalorder %s17, 0
    %p83 = por %p81, %p82
    %p84 = scmp.ne.s32.totalorder %s70, %s71
    %p85 = scmp.eq.s32.totalorder %s18, 1
    %p86 = por %p84, %p85
    %p88 = scmp.ne.s32.totalorder %s71, %s87
    %p89 = scmp.eq.s32.totalorder %s18, 0
    %p90 = por %p88, %p89
    %s91 = ssub.s32 %s20, %s34
    %p92 = scmp.eq.s32.totalorder %s91, 0
    %s94 = sadd.s32 %s93, 1
    %s95 = scalar_select %p92, %s93, %s94
    %p98 = pneg %p92
    %p99 = scmp.eq.s32.totalorder %s12, 1
    %p100 = por %p98, %p99
    %p101 = scmp.ne.s32.totalorder %s93, %s96
    %p102 = scmp.eq.s32.totalorder %s12, 0
    %p103 = por %p101, %p102
    %p104 = scmp.ne.s32.totalorder %s93, %s96
    %p105 = scmp.eq.s32.totalorder %s17, 1
    %p106 = por %p104, %p105
    %p107 = scmp.ne.s32.totalorder %s96, %s97
    %p108 = scmp.eq.s32.totalorder %s17, 0
    %p109 = por %p107, %p108
    %p110 = scmp.ne.s32.totalorder %s96, %s97
    %p111 = scmp.eq.s32.totalorder %s18, 1
    %p112 = por %p110, %p111
    %p114 = scmp.ne.s32.totalorder %s97, %s113
    %p115 = scmp.eq.s32.totalorder %s18, 0
    %p116 = por %p114, %p115
    %s117 = ssub.s32 %s19, %s38
    %s118 = ssub.s32 %s21, %s30
    %s119 = sor.u32 %s117, %s118
    %s120 = ssub.s32 %s20, %s34
    %s121 = sor.u32 %s119, %s120
    %p122 = scmp.eq.s32.totalorder %s121, 0
    %s124 = sadd.s32 %s123, 1
    %s125 = scalar_select %p122, %s123, %s124
    %p128 = pneg %p122
    %p129 = scmp.eq.s32.totalorder %s12, 1
    %p130 = por %p128, %p129
    %p131 = scmp.ne.s32.totalorder %s123, %s126
    %p132 = scmp.eq.s32.totalorder %s12, 0
    %p133 = por %p131, %p132
    %p134 = scmp.ne.s32.totalorder %s123, %s126
    %p135 = scmp.eq.s32.totalorder %s17, 1
    %p136 = por %p134, %p135
    %p137 = scmp.ne.s32.totalorder %s126, %s127
    %p138 = scmp.eq.s32.totalorder %s17, 0
    %p139 = por %p137, %p138
    %p140 = scmp.ne.s32.totalorder %s126, %s127
    %p141 = scmp.eq.s32.totalorder %s18, 1
    %p142 = por %p140, %p141
    %p144 = scmp.ne.s32.totalorder %s127, %s143
    %p145 = scmp.eq.s32.totalorder %s18, 0
    %p146 = por %p144, %p145
    %s147 = ssub.s32 %s19, %s38
    %s148 = ssub.s32 %s20, %s34
    %s149 = sor.u32 %s147, %s148
    %p150 = scmp.eq.s32.totalorder %s149, 0
    %s152 = sadd.s32 %s151, 1
    %s153 = scalar_select %p150, %s151, %s152
    %p156 = pneg %p150
    %p157 = scmp.eq.s32.totalorder %s12, 1
    %p158 = por %p156, %p157
    %p159 = scmp.ne.s32.totalorder %s151, %s154
    %p160 = scmp.eq.s32.totalorder %s12, 0
    %p161 = por %p159, %p160
    %p162 = scmp.ne.s32.totalorder %s151, %s154
    %p163 = scmp.eq.s32.totalorder %s17, 1
    %p164 = por %p162, %p163
    %p165 = scmp.ne.s32.totalorder %s154, %s155
    %p166 = scmp.eq.s32.totalorder %s17, 0
    %p167 = por %p165, %p166
    %p168 = scmp.ne.s32.totalorder %s154, %s155
    %p169 = scmp.eq.s32.totalorder %s18, 1
    %p170 = por %p168, %p169
    %p172 = scmp.ne.s32.totalorder %s155, %s171
    %p173 = scmp.eq.s32.totalorder %s18, 0
    %p174 = por %p172, %p173
    %s175 = ssub.s32 %s19, %s38
    %s176 = ssub.s32 %s20, %s34
    %s177 = sor.u32 %s175, %s176
    %p178 = scmp.eq.s32.totalorder %s177, 0
    %s180 = sadd.s32 %s179, 1
    %s181 = scalar_select %p178, %s179, %s180
    %p184 = pneg %p178
    %p185 = scmp.eq.s32.totalorder %s12, 1
    %p186 = por %p184, %p185
    %p187 = scmp.ne.s32.totalorder %s179, %s182
    %p188 = scmp.eq.s32.totalorder %s12, 0
    %p189 = por %p187, %p188
    %p190 = scmp.ne.s32.totalorder %s179, %s182
    %p191 = scmp.eq.s32.totalorder %s17, 1
    %p192 = por %p190, %p191
    %p193 = scmp.ne.s32.totalorder %s182, %s183
    %p194 = scmp.eq.s32.totalorder %s17, 0
    %p195 = por %p193, %p194
    %p196 = scmp.ne.s32.totalorder %s182, %s183
    %p197 = scmp.eq.s32.totalorder %s18, 1
    %p198 = por %p196, %p197
    %p200 = scmp.ne.s32.totalorder %s183, %s199
    %p201 = scmp.eq.s32.totalorder %s18, 0
    %p202 = por %p200, %p201
    %p203 = scmp.le.s32.totalorder 1, %s12
    %p204 = scmp.lt.s32.totalorder %s12, 3
    %p205 = pnand %p203, %p204
    %p206 = pneg %p205
    // Predicated region
    $region9: #{_lambda_.13} parent=5 // pred_check
      _
    $region10: #{_lambda_.13} parent=5 // pred_check_branch
      %208 = sbr.rel (%p205) target = $region12
    $region11: #{_lambda_.13} parent=5 // pred_region
      %s209 = ssub.s32 %s12, 1
      // Predicated region
      $region13: #{_lambda_.13} parent=11 // pred_check
        %p210 = pneg %p83
      $region14: #{_lambda_.13} parent=11 // pred_check_branch
        %212 = sbr.rel (%p210) target = $region16
      $region15: #{_lambda_.13} parent=11 // pred_region
        %p213 = scmp.lt.s32.totalorder %s23, 0
        %s214 = scalar_select %p213, %s23, 0
        %s215 = smul.addr %s214, 4
        %s216 = scalar_lea.vmem %s1, %s215
      $region16: #{_lambda_.13} parent=11 // pred_fallthru
        _
      // Predicated region
      $region17: #{_lambda_.13} parent=11 // pred_check
        %p217 = pneg %p109
      $region18: #{_lambda_.13} parent=11 // pred_check_branch
        %219 = sbr.rel (%p217) target = $region20
      $region19: #{_lambda_.13} parent=11 // pred_region
        %p220 = scmp.lt.s32.totalorder %s23, 0
        %s221 = scalar_select %p220, %s23, 0
        %s222 = scalar_lea.vmem %s2, %s221
      $region20: #{_lambda_.13} parent=11 // pred_fallthru
        _
    $region12: #{_lambda_.13} parent=5 // pred_fallthru
      _
    %p223 = scmp.lt.s32.totalorder %s12, 2
    // Predicated region
    $region21: #{_lambda_.13} parent=5 // pred_check
      %p224 = pneg %p223
    $region22: #{_lambda_.13} parent=5 // pred_check_branch
      %226 = sbr.rel (%p224) target = $region24
    $region23: #{_lambda_.13} parent=5 // pred_region
      // Predicated region
      $region25: #{_lambda_.13} parent=23 // pred_check
        %p227 = pneg %p51
      $region26: #{_lambda_.13} parent=23 // pred_check_branch
        %229 = sbr.rel (%p227) target = $region28
      $region27: #{_lambda_.13} parent=23 // pred_region
        %p230 = scmp.lt.s32.totalorder %s19, 1
        %s231 = scalar_select %p230, %s19, 1
        %s232 = smul.addr %s231, 48
        %s233 = smul.addr %s232, 4
        %s234 = scalar_lea.vmem %s0, %s233
      $region28: #{_lambda_.13} parent=23 // pred_fallthru
        _
    $region24: #{_lambda_.13} parent=5 // pred_fallthru
      _
    %p235 = scmp.le.s32.totalorder 1, %s12
    %p236 = scmp.lt.s32.totalorder %s12, 3
    %p237 = pnand %p235, %p236
    %p238 = pneg %p237
    // Predicated region
    $region29: #{_lambda_.13} parent=5 // pred_check
      _
    $region30: #{_lambda_.13} parent=5 // pred_check_branch
      %240 = sbr.rel (%p237) target = $region32
    $region31: #{_lambda_.13} parent=5 // pred_region
      %s241 = ssub.s32 %s12, 1
      %p242 = scmp.lt.s32.totalorder %s22, 1
      %s243 = scalar_select %p242, %s22, 1
      %s244 = smul.addr %s243, 48
      %s245 = smul.addr %s244, 4
      %s246 = scalar_lea.vmem %s0, %s245
      %p247 = pneg %p57
      %p248 = pneg %p54
      %p249 = scmp.lt.s32.totalorder %s23, 0
      %s250 = scalar_select %p249, %s23, 0
      %s251 = smul.addr %s250, 4
      %s252 = scalar_lea.vmem %s1, %s251
      %p253 = pneg %p83
      %p254 = pneg %p80
      %p255 = scmp.lt.s32.totalorder %s23, 0
      %s256 = scalar_select %p255, %s23, 0
      %s257 = scalar_lea.vmem %s2, %s256
      %p258 = pneg %p109
      %p259 = pneg %p106
      %p260 = pneg %p139
      %p261 = pneg %p136
      %s262 = smul.u32 6, %s24
      %p263 = scmp.lt.s32.totalorder %s22, 1
      %s264 = scalar_select %p263, %s22, 1
      %p265 = scmp.lt.s32.totalorder %s262, 5
      %s266 = scalar_select %p265, %s262, 5
      %p267 = scmp.lt.s32.totalorder %s23, 0
      %s268 = scalar_select %p267, %s23, 0
      %s269 = sadd.s32 %s268, %s266
      %s270 = smul.addr %s264, 6
      %s271 = sadd.s32 %s269, %s270
      %s272 = smul.addr %s271, 4
      %s273 = scalar_lea.vmem %s3, %s272
      %p274 = pneg %p167
      %p275 = pneg %p164
      %p276 = scmp.lt.s32.totalorder %s22, 1
      %s277 = scalar_select %p276, %s22, 1
      %p278 = scmp.lt.s32.totalorder %s23, 0
      %s279 = scalar_select %p278, %s23, 0
      %s280 = sadd.s32 %s279, %s277
      %s281 = scalar_lea.vmem %s4, %s280
      %p282 = pneg %p195
      %p283 = pneg %p192
      %p284 = scmp.lt.s32.totalorder %s22, 1
      %s285 = scalar_select %p284, %s22, 1
      %p286 = scmp.lt.s32.totalorder %s23, 0
      %s287 = scalar_select %p286, %s23, 0
      %s288 = sadd.s32 %s287, %s285
      %s289 = scalar_lea.vmem %s5, %s288
      %p290 = scmp.lt.s32.totalorder %s22, 1
      %s291 = scalar_select %p290, %s22, 1
      %s292 = smul.addr %s291, 48
      %s293 = smul.addr %s292, 4
      %s294 = scalar_lea.vmem %s0, %s293
      %p295 = scmp.lt.s32.totalorder %s23, 0
      %s296 = scalar_select %p295, %s23, 0
      %s297 = smul.addr %s296, 4
      %s298 = scalar_lea.vmem %s1, %s297
      %p299 = scmp.lt.s32.totalorder %s23, 0
      %s300 = scalar_select %p299, %s23, 0
      %s301 = scalar_lea.vmem %s2, %s300
      %s302 = smul.u32 6, %s24
      %p303 = scmp.lt.s32.totalorder %s22, 1
      %s304 = scalar_select %p303, %s22, 1
      %p305 = scmp.lt.s32.totalorder %s302, 5
      %s306 = scalar_select %p305, %s302, 5
      %p307 = scmp.lt.s32.totalorder %s23, 0
      %s308 = scalar_select %p307, %s23, 0
      %s309 = sadd.s32 %s308, %s306
      %s310 = smul.addr %s304, 6
      %s311 = sadd.s32 %s309, %s310
      %s312 = smul.addr %s311, 4
      %s313 = scalar_lea.vmem %s3, %s312
      %s314 = smul.u32 6, %s24
      %p315 = scmp.lt.s32.totalorder %s22, 1
      %s316 = scalar_select %p315, %s22, 1
      %p317 = scmp.lt.s32.totalorder %s23, 0
      %s318 = scalar_select %p317, %s23, 0
      %s319 = sadd.s32 %s318, %s316
      %s320 = scalar_lea.vmem %s4, %s319
      %p321 = scmp.lt.s32.totalorder %s22, 1
      %s322 = scalar_select %p321, %s22, 1
      %p323 = scmp.lt.s32.totalorder %s23, 0
      %s324 = scalar_select %p323, %s23, 0
      %s325 = sadd.s32 %s324, %s322
      %s326 = scalar_lea.vmem %s5, %s325
      %s328 = smul.u32 %s24, 3
      %s329 = smul.u32 %s328, 8
      %s330 = smul.addr %s329, 4
      %s331 = scalar_lea.vmem %s294, %s330
      %v332 = vld [vmem:[%s331] sm:$0xff]
      %v333 = vld [vmem:[%s331 + $0x8] sm:$0xff]
      %v334 = vld [vmem:[%s331 + $0x10] sm:$0xff]
      %v335 = vld [vmem:[%s331 + $0x18] sm:$0xff]
      %v336 = vld [vmem:[%s331 + $0x20] sm:$0xff]
      %v337 = vld [vmem:[%s331 + $0x28] sm:$0xff]
      %v338 = vld [vmem:[%s331 + $0x30] sm:$0xff]
      %v339 = vld [vmem:[%s331 + $0x38] sm:$0xff]
      %v340 = vld [vmem:[%s331 + $0x40] sm:$0xff]
      %v341 = vld [vmem:[%s331 + $0x48] sm:$0xff]
      %v342 = vld [vmem:[%s331 + $0x50] sm:$0xff]
      %v343 = vld [vmem:[%s331 + $0x58] sm:$0xff]
      %v344 = vld [vmem:[%s298] sm:$0xf]
      %v345 = vld [vmem:[%s298 + $0x4] sm:$0xf]
      %v346 = vld [vmem:[%s298 + $0x8] sm:$0xf]
      %v347 = vld [vmem:[%s298 + $0xc] sm:$0xf]
      %v348 = vld [vmem:[%s298 + $0x10] sm:$0xf]
      %v349 = vld [vmem:[%s298 + $0x14] sm:$0xf]
      %v350 = vld [vmem:[%s298 + $0x18] sm:$0xf]
      %v351 = vld [vmem:[%s298 + $0x1c] sm:$0xf]
      %v352 = vld [vmem:[%s298 + $0x20] sm:$0xf]
      %v353 = vld [vmem:[%s298 + $0x24] sm:$0xf]
      %v354 = vld [vmem:[%s298 + $0x28] sm:$0xf]
      %v355 = vld [vmem:[%s298 + $0x2c] sm:$0xf]
      %v356 = vld [vmem:[%s298 + $0x30] sm:$0xf]
      %v357 = vld [vmem:[%s298 + $0x34] sm:$0xf]
      %v358 = vld [vmem:[%s298 + $0x38] sm:$0xf]
      %v359 = vld [vmem:[%s298 + $0x3c] sm:$0xf]
      %v360 = vld [vmem:[%s298 + $0x40] sm:$0xf]
      %v361 = vld [vmem:[%s298 + $0x44] sm:$0xf]
      %v362 = vld [vmem:[%s298 + $0x48] sm:$0xf]
      %v363 = vld [vmem:[%s298 + $0x4c] sm:$0xf]
      %v364 = vld [vmem:[%s298 + $0x50] sm:$0xf]
      %v365 = vld [vmem:[%s298 + $0x54] sm:$0xf]
      %v366 = vld [vmem:[%s298 + $0x58] sm:$0xf]
      %v367 = vld [vmem:[%s298 + $0x5c] sm:$0xf]
      %v368 = vld [vmem:[%s298 + $0x60] sm:$0xf]
      %v369 = vld [vmem:[%s298 + $0x64] sm:$0xf]
      %v370 = vld [vmem:[%s298 + $0x68] sm:$0xf]
      %v371 = vld [vmem:[%s298 + $0x6c] sm:$0xf]
      %v372 = vld [vmem:[%s298 + $0x70] sm:$0xf]
      %v373 = vld [vmem:[%s298 + $0x74] sm:$0xf]
      %v374 = vld [vmem:[%s298 + $0x78] sm:$0xf]
      %v375 = vld [vmem:[%s298 + $0x7c] sm:$0xf]
      %v376 = vld [vmem:[%s298 + $0x80] sm:$0xf]
      %v377 = vld [vmem:[%s298 + $0x84] sm:$0xf]
      %v378 = vld [vmem:[%s298 + $0x88] sm:$0xf]
      %v379 = vld [vmem:[%s298 + $0x8c] sm:$0xf]
      %v380 = vld [vmem:[%s298 + $0x90] sm:$0xf]
      %v381 = vld [vmem:[%s298 + $0x94] sm:$0xf]
      %v382 = vld [vmem:[%s298 + $0x98] sm:$0xf]
      %v383 = vld [vmem:[%s298 + $0x9c] sm:$0xf]
      %v384 = vld [vmem:[%s298 + $0xa0] sm:$0xf]
      %v385 = vld [vmem:[%s298 + $0xa4] sm:$0xf]
      %v386 = vld [vmem:[%s298 + $0xa8] sm:$0xf]
      %v387 = vld [vmem:[%s298 + $0xac] sm:$0xf]
      %v388 = vld [vmem:[%s298 + $0xb0] sm:$0xf]
      %v389 = vld [vmem:[%s298 + $0xb4] sm:$0xf]
      %v390 = vld [vmem:[%s298 + $0xb8] sm:$0xf]
      %v391 = vld [vmem:[%s298 + $0xbc] sm:$0xf]
      %v392 = vld [vmem:[%s298 + $0xc0] sm:$0xf]
      %v393 = vld [vmem:[%s298 + $0xc4] sm:$0xf]
      %v394 = vld [vmem:[%s298 + $0xc8] sm:$0xf]
      %v395 = vld [vmem:[%s298 + $0xcc] sm:$0xf]
      %v396 = vld [vmem:[%s298 + $0xd0] sm:$0xf]
      %v397 = vld [vmem:[%s298 + $0xd4] sm:$0xf]
      %v398 = vld [vmem:[%s298 + $0xd8] sm:$0xf]
      %v399 = vld [vmem:[%s298 + $0xdc] sm:$0xf]
      %v400 = vld [vmem:[%s298 + $0xe0] sm:$0xf]
      %v401 = vld [vmem:[%s298 + $0xe4] sm:$0xf]
      %v402 = vld [vmem:[%s298 + $0xe8] sm:$0xf]
      %v403 = vld [vmem:[%s298 + $0xec] sm:$0xf]
      %v404 = vld [vmem:[%s298 + $0xf0] sm:$0xf]
      %v405 = vld [vmem:[%s298 + $0xf4] sm:$0xf]
      %v406 = vld [vmem:[%s298 + $0xf8] sm:$0xf]
      %v407 = vld [vmem:[%s298 + $0xfc] sm:$0xf]
      %s408 = sadd.s32 %s328, 1
      %s409 = smul.u32 %s408, 8
      %s410 = smul.addr %s409, 4
      %s411 = scalar_lea.vmem %s294, %s410
      %v412 = vld [vmem:[%s411] sm:$0xff]
      %v413 = vld [vmem:[%s411 + $0x8] sm:$0xff]
      %v414 = vld [vmem:[%s411 + $0x10] sm:$0xff]
      %v415 = vld [vmem:[%s411 + $0x18] sm:$0xff]
      %v416 = vld [vmem:[%s411 + $0x20] sm:$0xff]
      %v417 = vld [vmem:[%s411 + $0x28] sm:$0xff]
      %v418 = vld [vmem:[%s411 + $0x30] sm:$0xff]
      %v419 = vld [vmem:[%s411 + $0x38] sm:$0xff]
      %v420 = vld [vmem:[%s411 + $0x40] sm:$0xff]
      %v421 = vld [vmem:[%s411 + $0x48] sm:$0xff]
      %v422 = vld [vmem:[%s411 + $0x50] sm:$0xff]
      %v423 = vld [vmem:[%s411 + $0x58] sm:$0xff]
      %s424 = scalar_lea.vmem %s298, 256
      %v425 = vld [vmem:[%s424] sm:$0xf]
      %v426 = vld [vmem:[%s424 + $0x4] sm:$0xf]
      %v427 = vld [vmem:[%s424 + $0x8] sm:$0xf]
      %v428 = vld [vmem:[%s424 + $0xc] sm:$0xf]
      %v429 = vld [vmem:[%s424 + $0x10] sm:$0xf]
      %v430 = vld [vmem:[%s424 + $0x14] sm:$0xf]
      %v431 = vld [vmem:[%s424 + $0x18] sm:$0xf]
      %v432 = vld [vmem:[%s424 + $0x1c] sm:$0xf]
      %v433 = vld [vmem:[%s424 + $0x20] sm:$0xf]
      %v434 = vld [vmem:[%s424 + $0x24] sm:$0xf]
      %v435 = vld [vmem:[%s424 + $0x28] sm:$0xf]
      %v436 = vld [vmem:[%s424 + $0x2c] sm:$0xf]
      %v437 = vld [vmem:[%s424 + $0x30] sm:$0xf]
      %v438 = vld [vmem:[%s424 + $0x34] sm:$0xf]
      %v439 = vld [vmem:[%s424 + $0x38] sm:$0xf]
      %v440 = vld [vmem:[%s424 + $0x3c] sm:$0xf]
      %v441 = vld [vmem:[%s424 + $0x40] sm:$0xf]
      %v442 = vld [vmem:[%s424 + $0x44] sm:$0xf]
      %v443 = vld [vmem:[%s424 + $0x48] sm:$0xf]
      %v444 = vld [vmem:[%s424 + $0x4c] sm:$0xf]
      %v445 = vld [vmem:[%s424 + $0x50] sm:$0xf]
      %v446 = vld [vmem:[%s424 + $0x54] sm:$0xf]
      %v447 = vld [vmem:[%s424 + $0x58] sm:$0xf]
      %v448 = vld [vmem:[%s424 + $0x5c] sm:$0xf]
      %v449 = vld [vmem:[%s424 + $0x60] sm:$0xf]
      %v450 = vld [vmem:[%s424 + $0x64] sm:$0xf]
      %v451 = vld [vmem:[%s424 + $0x68] sm:$0xf]
      %v452 = vld [vmem:[%s424 + $0x6c] sm:$0xf]
      %v453 = vld [vmem:[%s424 + $0x70] sm:$0xf]
      %v454 = vld [vmem:[%s424 + $0x74] sm:$0xf]
      %v455 = vld [vmem:[%s424 + $0x78] sm:$0xf]
      %v456 = vld [vmem:[%s424 + $0x7c] sm:$0xf]
      %v457 = vld [vmem:[%s424 + $0x80] sm:$0xf]
      %v458 = vld [vmem:[%s424 + $0x84] sm:$0xf]
      %v459 = vld [vmem:[%s424 + $0x88] sm:$0xf]
      %v460 = vld [vmem:[%s424 + $0x8c] sm:$0xf]
      %v461 = vld [vmem:[%s424 + $0x90] sm:$0xf]
      %v462 = vld [vmem:[%s424 + $0x94] sm:$0xf]
      %v463 = vld [vmem:[%s424 + $0x98] sm:$0xf]
      %v464 = vld [vmem:[%s424 + $0x9c] sm:$0xf]
      %v465 = vld [vmem:[%s424 + $0xa0] sm:$0xf]
      %v466 = vld [vmem:[%s424 + $0xa4] sm:$0xf]
      %v467 = vld [vmem:[%s424 + $0xa8] sm:$0xf]
      %v468 = vld [vmem:[%s424 + $0xac] sm:$0xf]
      %v469 = vld [vmem:[%s424 + $0xb0] sm:$0xf]
      %v470 = vld [vmem:[%s424 + $0xb4] sm:$0xf]
      %v471 = vld [vmem:[%s424 + $0xb8] sm:$0xf]
      %v472 = vld [vmem:[%s424 + $0xbc] sm:$0xf]
      %v473 = vld [vmem:[%s424 + $0xc0] sm:$0xf]
      %v474 = vld [vmem:[%s424 + $0xc4] sm:$0xf]
      %v475 = vld [vmem:[%s424 + $0xc8] sm:$0xf]
      %v476 = vld [vmem:[%s424 + $0xcc] sm:$0xf]
      %v477 = vld [vmem:[%s424 + $0xd0] sm:$0xf]
      %v478 = vld [vmem:[%s424 + $0xd4] sm:$0xf]
      %v479 = vld [vmem:[%s424 + $0xd8] sm:$0xf]
      %v480 = vld [vmem:[%s424 + $0xdc] sm:$0xf]
      %v481 = vld [vmem:[%s424 + $0xe0] sm:$0xf]
      %v482 = vld [vmem:[%s424 + $0xe4] sm:$0xf]
      %v483 = vld [vmem:[%s424 + $0xe8] sm:$0xf]
      %v484 = vld [vmem:[%s424 + $0xec] sm:$0xf]
      %v485 = vld [vmem:[%s424 + $0xf0] sm:$0xf]
      %v486 = vld [vmem:[%s424 + $0xf4] sm:$0xf]
      %v487 = vld [vmem:[%s424 + $0xf8] sm:$0xf]
      %v488 = vld [vmem:[%s424 + $0xfc] sm:$0xf]
      %v501 = vunpack.c.l.b16 %v412
      %v502 = vunpack.c.h.b16 %v412
      %v503 = vunpack.c.l.b16 %v413
      %v504 = vunpack.c.h.b16 %v413
      %v505 = vunpack.c.l.b16 %v414
      %v506 = vunpack.c.h.b16 %v414
      %v507 = vunpack.c.l.b16 %v415
      %v508 = vunpack.c.h.b16 %v415
      %v509 = vunpack.c.l.b16 %v416
      %v510 = vunpack.c.h.b16 %v416
      %v511 = vunpack.c.l.b16 %v417
      %v512 = vunpack.c.h.b16 %v417
      %v513 = vunpack.c.l.b16 %v418
      %v514 = vunpack.c.h.b16 %v418
      %v515 = vunpack.c.l.b16 %v419
      %v516 = vunpack.c.h.b16 %v419
      %v517 = vunpack.c.l.b16 %v420
      %v518 = vunpack.c.h.b16 %v420
      %v519 = vunpack.c.l.b16 %v421
      %v520 = vunpack.c.h.b16 %v421
      %v521 = vunpack.c.l.b16 %v422
      %v522 = vunpack.c.h.b16 %v422
      %v523 = vunpack.c.l.b16 %v423
      %v524 = vunpack.c.h.b16 %v423
      %v525 = vpack.c.b16 %v505, %v501
      %v526 = vpack.c.b16 %v506, %v502
      %v527 = vpack.c.b16 %v507, %v503
      %v528 = vpack.c.b16 %v508, %v504
      %v529 = vpack.c.b16 %v513, %v509
      %v530 = vpack.c.b16 %v514, %v510
      %v531 = vpack.c.b16 %v515, %v511
      %v532 = vpack.c.b16 %v516, %v512
      %v533 = vpack.c.b16 %v521, %v517
      %v534 = vpack.c.b16 %v522, %v518
      %v535 = vpack.c.b16 %v523, %v519
      %v536 = vpack.c.b16 %v524, %v520
      %v613 = vunpack.c.l.b16 %v425
      %v614 = vunpack.c.l.b16 %v426
      %v615 = vunpack.c.l.b16 %v427
      %v616 = vunpack.c.l.b16 %v428
      %v617 = vunpack.c.l.b16 %v429
      %v618 = vunpack.c.l.b16 %v430
      %v619 = vunpack.c.l.b16 %v431
      %v620 = vunpack.c.l.b16 %v432
      %v621 = vunpack.c.l.b16 %v433
      %v622 = vunpack.c.l.b16 %v434
      %v623 = vunpack.c.l.b16 %v435
      %v624 = vunpack.c.l.b16 %v436
      %v625 = vunpack.c.l.b16 %v437
      %v626 = vunpack.c.l.b16 %v438
      %v627 = vunpack.c.l.b16 %v439
      %v628 = vunpack.c.l.b16 %v440
      %v629 = vunpack.c.l.b16 %v441
      %v630 = vunpack.c.l.b16 %v442
      %v631 = vunpack.c.l.b16 %v443
      %v632 = vunpack.c.l.b16 %v444
      %v633 = vunpack.c.l.b16 %v445
      %v634 = vunpack.c.l.b16 %v446
      %v635 = vunpack.c.l.b16 %v447
      %v636 = vunpack.c.l.b16 %v448
      %v637 = vunpack.c.l.b16 %v449
      %v638 = vunpack.c.l.b16 %v450
      %v639 = vunpack.c.l.b16 %v451
      %v640 = vunpack.c.l.b16 %v452
      %v641 = vunpack.c.l.b16 %v453
      %v642 = vunpack.c.l.b16 %v454
      %v643 = vunpack.c.l.b16 %v455
      %v644 = vunpack.c.l.b16 %v456
      %v645 = vunpack.c.l.b16 %v457
      %v646 = vunpack.c.l.b16 %v458
      %v647 = vunpack.c.l.b16 %v459
      %v648 = vunpack.c.l.b16 %v460
      %v649 = vunpack.c.l.b16 %v461
      %v650 = vunpack.c.l.b16 %v462
      %v651 = vunpack.c.l.b16 %v463
      %v652 = vunpack.c.l.b16 %v464
      %v653 = vunpack.c.l.b16 %v465
      %v654 = vunpack.c.l.b16 %v466
      %v655 = vunpack.c.l.b16 %v467
      %v656 = vunpack.c.l.b16 %v468
      %v657 = vunpack.c.l.b16 %v469
      %v658 = vunpack.c.l.b16 %v470
      %v659 = vunpack.c.l.b16 %v471
      %v660 = vunpack.c.l.b16 %v472
      %v661 = vunpack.c.l.b16 %v473
      %v662 = vunpack.c.l.b16 %v474
      %v663 = vunpack.c.l.b16 %v475
      %v664 = vunpack.c.l.b16 %v476
      %v665 = vunpack.c.l.b16 %v477
      %v666 = vunpack.c.l.b16 %v478
      %v667 = vunpack.c.l.b16 %v479
      %v668 = vunpack.c.l.b16 %v480
      %v669 = vunpack.c.l.b16 %v481
      %v670 = vunpack.c.l.b16 %v482
      %v671 = vunpack.c.l.b16 %v483
      %v672 = vunpack.c.l.b16 %v484
      %v673 = vunpack.c.l.b16 %v485
      %v674 = vunpack.c.l.b16 %v486
      %v675 = vunpack.c.l.b16 %v487
      %v676 = vunpack.c.l.b16 %v488
      %v677 = vpack.c.b16 %v614, %v613
      %v678 = vpack.c.b16 %v616, %v615
      %v679 = vpack.c.b16 %v618, %v617
      %v680 = vpack.c.b16 %v620, %v619
      %v681 = vpack.c.b16 %v622, %v621
      %v682 = vpack.c.b16 %v624, %v623
      %v683 = vpack.c.b16 %v626, %v625
      %v684 = vpack.c.b16 %v628, %v627
      %v685 = vpack.c.b16 %v630, %v629
      %v686 = vpack.c.b16 %v632, %v631
      %v687 = vpack.c.b16 %v634, %v633
      %v688 = vpack.c.b16 %v636, %v635
      %v689 = vpack.c.b16 %v638, %v637
      %v690 = vpack.c.b16 %v640, %v639
      %v691 = vpack.c.b16 %v642, %v641
      %v692 = vpack.c.b16 %v644, %v643
      %v693 = vpack.c.b16 %v646, %v645
      %v694 = vpack.c.b16 %v648, %v647
      %v695 = vpack.c.b16 %v650, %v649
      %v696 = vpack.c.b16 %v652, %v651
      %v697 = vpack.c.b16 %v654, %v653
      %v698 = vpack.c.b16 %v656, %v655
      %v699 = vpack.c.b16 %v658, %v657
      %v700 = vpack.c.b16 %v660, %v659
      %v701 = vpack.c.b16 %v662, %v661
      %v702 = vpack.c.b16 %v664, %v663
      %v703 = vpack.c.b16 %v666, %v665
      %v704 = vpack.c.b16 %v668, %v667
      %v705 = vpack.c.b16 %v670, %v669
      %v706 = vpack.c.b16 %v672, %v671
      %v707 = vpack.c.b16 %v674, %v673
      %v708 = vpack.c.b16 %v676, %v675
      %741 = vmatprep.subr.bf16.mxu0 0
      %742 = vmatpush1.bf16.msra.mxu0 %v677
      %743 = vmatprep.subr.bf16.mxu0 0
      %744 = vmatpush1.bf16.msra.mxu0 %v678
      %745 = vmatprep.subr.bf16.mxu0 0
      %746 = vmatpush1.bf16.msra.mxu0 %v679
      %747 = vmatprep.subr.bf16.mxu0 0
      %748 = vmatpush1.bf16.msra.mxu0 %v680
      %749 = vmatprep.subr.bf16.mxu0 0
      %750 = vmatpush1.bf16.msra.mxu0 %v681
      %751 = vmatprep.subr.bf16.mxu0 0
      %752 = vmatpush1.bf16.msra.mxu0 %v682
      %753 = vmatprep.subr.bf16.mxu0 0
      %754 = vmatpush1.bf16.msra.mxu0 %v683
      %755 = vmatprep.subr.bf16.mxu0 0
      %756 = vmatpush1.bf16.msra.mxu0 %v684
      %757 = vmatprep.subr.bf16.mxu0 0
      %758 = vmatpush1.bf16.msra.mxu0 %v685
      %759 = vmatprep.subr.bf16.mxu0 0
      %760 = vmatpush1.bf16.msra.mxu0 %v686
      %761 = vmatprep.subr.bf16.mxu0 0
      %762 = vmatpush1.bf16.msra.mxu0 %v687
      %763 = vmatprep.subr.bf16.mxu0 0
      %764 = vmatpush1.bf16.msra.mxu0 %v688
      %765 = vmatprep.subr.bf16.mxu0 0
      %766 = vmatpush1.bf16.msra.mxu0 %v689
      %767 = vmatprep.subr.bf16.mxu0 0
      %768 = vmatpush1.bf16.msra.mxu0 %v690
      %769 = vmatprep.subr.bf16.mxu0 0
      %770 = vmatpush1.bf16.msra.mxu0 %v691
      %771 = vmatprep.subr.bf16.mxu0 0
      %772 = vmatpush1.bf16.msra.mxu0 %v692
      %773 = vmatprep.mubr.bf16.mxu0 %v526
      %774 = vmatmul.mubr.bf16.gmra.mrb[0].mxu0 %v525
      %v775 = vpop.f32.mrb[0].mxu0
      %v776 = vadd.f32 0.0, %v775
      %v777 = vpop.f32.mrb[0].mxu0
      %v778 = vpop.f32.mrb[0].mxu0
      %v779 = vadd.f32 0.0, %v778
      %v780 = vpop.f32.mrb[0].mxu0
      %781 = vmatprep.mubr.bf16.mxu0 %v530
      %782 = vmatmul.mubr.bf16.gmra.mrb[0].mxu0 %v529
      %v783 = vpop.f32.mrb[0].mxu0
      %v784 = vadd.f32 0.0, %v783
      %v785 = vpop.f32.mrb[0].mxu0
      %v786 = vpop.f32.mrb[0].mxu0
      %v787 = vadd.f32 0.0, %v786
      %v788 = vpop.f32.mrb[0].mxu0
      %789 = vmatprep.mubr.bf16.mxu0 %v534
      %790 = vmatmul.mubr.bf16.gmra.mrb[0].mxu0 %v533
      %v791 = vpop.f32.mrb[0].mxu0
      %v792 = vadd.f32 0.0, %v791
      %v793 = vpop.f32.mrb[0].mxu0
      %v794 = vpop.f32.mrb[0].mxu0
      %v795 = vadd.f32 0.0, %v794
      %v796 = vpop.f32.mrb[0].mxu0
      %797 = vdwg.mxu0
      %798 = vmatprep.subr.bf16.mxu0 0
      %799 = vmatpush1.bf16.msra.mxu0 %v693
      %800 = vmatprep.subr.bf16.mxu0 0
      %801 = vmatpush1.bf16.msra.mxu0 %v694
      %802 = vmatprep.subr.bf16.mxu0 0
      %803 = vmatpush1.bf16.msra.mxu0 %v695
      %804 = vmatprep.subr.bf16.mxu0 0
      %805 = vmatpush1.bf16.msra.mxu0 %v696
      %806 = vmatprep.subr.bf16.mxu0 0
      %807 = vmatpush1.bf16.msra.mxu0 %v697
      %808 = vmatprep.subr.bf16.mxu0 0
      %809 = vmatpush1.bf16.msra.mxu0 %v698
      %810 = vmatprep.subr.bf16.mxu0 0
      %811 = vmatpush1.bf16.msra.mxu0 %v699
      %812 = vmatprep.subr.bf16.mxu0 0
      %813 = vmatpush1.bf16.msra.mxu0 %v700
      %814 = vmatprep.subr.bf16.mxu0 0
      %815 = vmatpush1.bf16.msra.mxu0 %v701
      %816 = vmatprep.subr.bf16.mxu0 0
      %817 = vmatpush1.bf16.msra.mxu0 %v702
      %818 = vmatprep.subr.bf16.mxu0 0
      %819 = vmatpush1.bf16.msra.mxu0 %v703
      %820 = vmatprep.subr.bf16.mxu0 0
      %821 = vmatpush1.bf16.msra.mxu0 %v704
      %822 = vmatprep.subr.bf16.mxu0 0
      %823 = vmatpush1.bf16.msra.mxu0 %v705
      %824 = vmatprep.subr.bf16.mxu0 0
      %825 = vmatpush1.bf16.msra.mxu0 %v706
      %826 = vmatprep.subr.bf16.mxu0 0
      %827 = vmatpush1.bf16.msra.mxu0 %v707
      %828 = vmatprep.subr.bf16.mxu0 0
      %829 = vmatpush1.bf16.msra.mxu0 %v708
      %830 = vmatprep.mubr.bf16.mxu0 %v528
      %831 = vmatmul.mubr.bf16.gmra.mrb[0].mxu0 %v527
      %v832 = vpop.f32.mrb[0].mxu0
      %v833 = vadd.f32 %v776, %v832
      %v834 = vpop.f32.mrb[0].mxu0
      %v835 = vpop.f32.mrb[0].mxu0
      %v836 = vadd.f32 %v779, %v835
      %v837 = vpop.f32.mrb[0].mxu0
      %838 = vmatprep.mubr.bf16.mxu0 %v532
      %839 = vmatmul.mubr.bf16.gmra.mrb[0].mxu0 %v531
      %v840 = vpop.f32.mrb[0].mxu0
      %v841 = vadd.f32 %v784, %v840
      %v842 = vpop.f32.mrb[0].mxu0
      %v843 = vpop.f32.mrb[0].mxu0
      %v844 = vadd.f32 %v787, %v843
      %v845 = vpop.f32.mrb[0].mxu0
      %846 = vmatprep.mubr.bf16.mxu0 %v536
      %847 = vmatmul.mubr.bf16.gmra.mrb[0].mxu0 %v535
      %v848 = vpop.f32.mrb[0].mxu0
      %v849 = vadd.f32 %v792, %v848
      %v850 = vpop.f32.mrb[0].mxu0
      %v851 = vpop.f32.mrb[0].mxu0
      %v852 = vadd.f32 %v795, %v851
      %v853 = vpop.f32.mrb[0].mxu0
      %854 = vdwg.mxu0
      %v867 = vunpack.c.l.b16 %v332
      %v868 = vunpack.c.h.b16 %v332
      %v869 = vunpack.c.l.b16 %v333
      %v870 = vunpack.c.h.b16 %v333
      %v871 = vunpack.c.l.b16 %v334
      %v872 = vunpack.c.h.b16 %v334
      %v873 = vunpack.c.l.b16 %v335
      %v874 = vunpack.c.h.b16 %v335
      %v875 = vunpack.c.l.b16 %v336
      %v876 = vunpack.c.h.b16 %v336
      %v877 = vunpack.c.l.b16 %v337
      %v878 = vunpack.c.h.b16 %v337
      %v879 = vunpack.c.l.b16 %v338
      %v880 = vunpack.c.h.b16 %v338
      %v881 = vunpack.c.l.b16 %v339
      %v882 = vunpack.c.h.b16 %v339
      %v883 = vunpack.c.l.b16 %v340
      %v884 = vunpack.c.h.b16 %v340
      %v885 = vunpack.c.l.b16 %v341
      %v886 = vunpack.c.h.b16 %v341
      %v887 = vunpack.c.l.b16 %v342
      %v888 = vunpack.c.h.b16 %v342
      %v889 = vunpack.c.l.b16 %v343
      %v890 = vunpack.c.h.b16 %v343
      %v891 = vpack.c.b16 %v871, %v867
      %v892 = vpack.c.b16 %v872, %v868
      %v893 = vpack.c.b16 %v873, %v869
      %v894 = vpack.c.b16 %v874, %v870
      %v895 = vpack.c.b16 %v879, %v875
      %v896 = vpack.c.b16 %v880, %v876
      %v897 = vpack.c.b16 %v881, %v877
      %v898 = vpack.c.b16 %v882, %v878
      %v899 = vpack.c.b16 %v887, %v883
      %v900 = vpack.c.b16 %v888, %v884
      %v901 = vpack.c.b16 %v889, %v885
      %v902 = vpack.c.b16 %v890, %v886
      %v979 = vunpack.c.l.b16 %v344
      %v980 = vunpack.c.l.b16 %v345
      %v981 = vunpack.c.l.b16 %v346
      %v982 = vunpack.c.l.b16 %v347
      %v983 = vunpack.c.l.b16 %v348
      %v984 = vunpack.c.l.b16 %v349
      %v985 = vunpack.c.l.b16 %v350
      %v986 = vunpack.c.l.b16 %v351
      %v987 = vunpack.c.l.b16 %v352
      %v988 = vunpack.c.l.b16 %v353
      %v989 = vunpack.c.l.b16 %v354
      %v990 = vunpack.c.l.b16 %v355
      %v991 = vunpack.c.l.b16 %v356
      %v992 = vunpack.c.l.b16 %v357
      %v993 = vunpack.c.l.b16 %v358
      %v994 = vunpack.c.l.b16 %v359
      %v995 = vunpack.c.l.b16 %v360
      %v996 = vunpack.c.l.b16 %v361
      %v997 = vunpack.c.l.b16 %v362
      %v998 = vunpack.c.l.b16 %v363
      %v999 = vunpack.c.l.b16 %v364
      %v1000 = vunpack.c.l.b16 %v365
      %v1001 = vunpack.c.l.b16 %v366
      %v1002 = vunpack.c.l.b16 %v367
      %v1003 = vunpack.c.l.b16 %v368
      %v1004 = vunpack.c.l.b16 %v369
      %v1005 = vunpack.c.l.b16 %v370
      %v1006 = vunpack.c.l.b16 %v371
      %v1007 = vunpack.c.l.b16 %v372
      %v1008 = vunpack.c.l.b16 %v373
      %v1009 = vunpack.c.l.b16 %v374
      %v1010 = vunpack.c.l.b16 %v375
      %v1011 = vunpack.c.l.b16 %v376
      %v1012 = vunpack.c.l.b16 %v377
      %v1013 = vunpack.c.l.b16 %v378
      %v1014 = vunpack.c.l.b16 %v379
      %v1015 = vunpack.c.l.b16 %v380
      %v1016 = vunpack.c.l.b16 %v381
      %v1017 = vunpack.c.l.b16 %v382
      %v1018 = vunpack.c.l.b16 %v383
      %v1019 = vunpack.c.l.b16 %v384
      %v1020 = vunpack.c.l.b16 %v385
      %v1021 = vunpack.c.l.b16 %v386
      %v1022 = vunpack.c.l.b16 %v387
      %v1023 = vunpack.c.l.b16 %v388
      %v1024 = vunpack.c.l.b16 %v389
      %v1025 = vunpack.c.l.b16 %v390
      %v1026 = vunpack.c.l.b16 %v391
      %v1027 = vunpack.c.l.b16 %v392
      %v1028 = vunpack.c.l.b16 %v393
      %v1029 = vunpack.c.l.b16 %v394
      %v1030 = vunpack.c.l.b16 %v395
      %v1031 = vunpack.c.l.b16 %v396
      %v1032 = vunpack.c.l.b16 %v397
      %v1033 = vunpack.c.l.b16 %v398
      %v1034 = vunpack.c.l.b16 %v399
      %v1035 = vunpack.c.l.b16 %v400
      %v1036 = vunpack.c.l.b16 %v401
      %v1037 = vunpack.c.l.b16 %v402
      %v1038 = vunpack.c.l.b16 %v403
      %v1039 = vunpack.c.l.b16 %v404
      %v1040 = vunpack.c.l.b16 %v405
      %v1041 = vunpack.c.l.b16 %v406
      %v1042 = vunpack.c.l.b16 %v407
      %v1043 = vpack.c.b16 %v980, %v979
      %v1044 = vpack.c.b16 %v982, %v981
      %v1045 = vpack.c.b16 %v984, %v983
      %v1046 = vpack.c.b16 %v986, %v985
      %v1047 = vpack.c.b16 %v988, %v987
      %v1048 = vpack.c.b16 %v990, %v989
      %v1049 = vpack.c.b16 %v992, %v991
      %v1050 = vpack.c.b16 %v994, %v993
      %v1051 = vpack.c.b16 %v996, %v995
      %v1052 = vpack.c.b16 %v998, %v997
      %v1053 = vpack.c.b16 %v1000, %v999
      %v1054 = vpack.c.b16 %v1002, %v1001
      %v1055 = vpack.c.b16 %v1004, %v1003
      %v1056 = vpack.c.b16 %v1006, %v1005
      %v1057 = vpack.c.b16 %v1008, %v1007
      %v1058 = vpack.c.b16 %v1010, %v1009
      %v1059 = vpack.c.b16 %v1012, %v1011
      %v1060 = vpack.c.b16 %v1014, %v1013
      %v1061 = vpack.c.b16 %v1016, %v1015
      %v1062 = vpack.c.b16 %v1018, %v1017
      %v1063 = vpack.c.b16 %v1020, %v1019
      %v1064 = vpack.c.b16 %v1022, %v1021
      %v1065 = vpack.c.b16 %v1024, %v1023
      %v1066 = vpack.c.b16 %v1026, %v1025
      %v1067 = vpack.c.b16 %v1028, %v1027
      %v1068 = vpack.c.b16 %v1030, %v1029
      %v1069 = vpack.c.b16 %v1032, %v1031
      %v1070 = vpack.c.b16 %v1034, %v1033
      %v1071 = vpack.c.b16 %v1036, %v1035
      %v1072 = vpack.c.b16 %v1038, %v1037
      %v1073 = vpack.c.b16 %v1040, %v1039
      %v1074 = vpack.c.b16 %v1042, %v1041
      %1107 = vmatprep.subr.bf16.mxu0 0
      %1108 = vmatpush1.bf16.msra.mxu0 %v1043
      %1109 = vmatprep.subr.bf16.mxu0 0
      %1110 = vmatpush1.bf16.msra.mxu0 %v1044
      %1111 = vmatprep.subr.bf16.mxu0 0
      %1112 = vmatpush1.bf16.msra.mxu0 %v1045
      %1113 = vmatprep.subr.bf16.mxu0 0
      %1114 = vmatpush1.bf16.msra.mxu0 %v1046
      %1115 = vmatprep.subr.bf16.mxu0 0
      %1116 = vmatpush1.bf16.msra.mxu0 %v1047
      %1117 = vmatprep.subr.bf16.mxu0 0
      %1118 = vmatpush1.bf16.msra.mxu0 %v1048
      %1119 = vmatprep.subr.bf16.mxu0 0
      %1120 = vmatpush1.bf16.msra.mxu0 %v1049
      %1121 = vmatprep.subr.bf16.mxu0 0
      %1122 = vmatpush1.bf16.msra.mxu0 %v1050
      %1123 = vmatprep.subr.bf16.mxu0 0
      %1124 = vmatpush1.bf16.msra.mxu0 %v1051
      %1125 = vmatprep.subr.bf16.mxu0 0
      %1126 = vmatpush1.bf16.msra.mxu0 %v1052
      %1127 = vmatprep.subr.bf16.mxu0 0
      %1128 = vmatpush1.bf16.msra.mxu0 %v1053
      %1129 = vmatprep.subr.bf16.mxu0 0
      %1130 = vmatpush1.bf16.msra.mxu0 %v1054
      %1131 = vmatprep.subr.bf16.mxu0 0
      %1132 = vmatpush1.bf16.msra.mxu0 %v1055
      %1133 = vmatprep.subr.bf16.mxu0 0
      %1134 = vmatpush1.bf16.msra.mxu0 %v1056
      %1135 = vmatprep.subr.bf16.mxu0 0
      %1136 = vmatpush1.bf16.msra.mxu0 %v1057
      %1137 = vmatprep.subr.bf16.mxu0 0
      %1138 = vmatpush1.bf16.msra.mxu0 %v1058
      %1139 = vmatprep.mubr.bf16.mxu0 %v892
      %1140 = vmatmul.mubr.bf16.gmra.mrb[0].mxu0 %v891
      %v1141 = vpop.f32.mrb[0].mxu0
      %v1142 = vadd.f32 %v833, %v1141
      %v1143 = vpop.f32.mrb[0].mxu0
      %v1144 = vpop.f32.mrb[0].mxu0
      %v1145 = vadd.f32 %v836, %v1144
      %v1146 = vpop.f32.mrb[0].mxu0
      %1147 = vmatprep.mubr.bf16.mxu0 %v896
      %1148 = vmatmul.mubr.bf16.gmra.mrb[0].mxu0 %v895
      %v1149 = vpop.f32.mrb[0].mxu0
      %v1150 = vadd.f32 %v841, %v1149
      %v1151 = vpop.f32.mrb[0].mxu0
      %v1152 = vpop.f32.mrb[0].mxu0
      %v1153 = vadd.f32 %v844, %v1152
      %v1154 = vpop.f32.mrb[0].mxu0
      %1155 = vmatprep.mubr.bf16.mxu0 %v900
      %1156 = vmatmul.mubr.bf16.gmra.mrb[0].mxu0 %v899
      %v1157 = vpop.f32.mrb[0].mxu0
      %v1158 = vadd.f32 %v849, %v1157
      %v1159 = vpop.f32.mrb[0].mxu0
      %v1160 = vpop.f32.mrb[0].mxu0
      %v1161 = vadd.f32 %v852, %v1160
      %v1162 = vpop.f32.mrb[0].mxu0
      %1163 = vdwg.mxu0
      %1164 = vmatprep.subr.bf16.mxu0 0
      %1165 = vmatpush1.bf16.msra.mxu0 %v1059
      %1166 = vmatprep.subr.bf16.mxu0 0
      %1167 = vmatpush1.bf16.msra.mxu0 %v1060
      %1168 = vmatprep.subr.bf16.mxu0 0
      %1169 = vmatpush1.bf16.msra.mxu0 %v1061
      %1170 = vmatprep.subr.bf16.mxu0 0
      %1171 = vmatpush1.bf16.msra.mxu0 %v1062
      %1172 = vmatprep.subr.bf16.mxu0 0
      %1173 = vmatpush1.bf16.msra.mxu0 %v1063
      %1174 = vmatprep.subr.bf16.mxu0 0
      %1175 = vmatpush1.bf16.msra.mxu0 %v1064
      %1176 = vmatprep.subr.bf16.mxu0 0
      %1177 = vmatpush1.bf16.msra.mxu0 %v1065
      %1178 = vmatprep.subr.bf16.mxu0 0
      %1179 = vmatpush1.bf16.msra.mxu0 %v1066
      %1180 = vmatprep.subr.bf16.mxu0 0
      %1181 = vmatpush1.bf16.msra.mxu0 %v1067
      %1182 = vmatprep.subr.bf16.mxu0 0
      %1183 = vmatpush1.bf16.msra.mxu0 %v1068
      %1184 = vmatprep.subr.bf16.mxu0 0
      %1185 = vmatpush1.bf16.msra.mxu0 %v1069
      %1186 = vmatprep.subr.bf16.mxu0 0
      %1187 = vmatpush1.bf16.msra.mxu0 %v1070
      %1188 = vmatprep.subr.bf16.mxu0 0
      %1189 = vmatpush1.bf16.msra.mxu0 %v1071
      %1190 = vmatprep.subr.bf16.mxu0 0
      %1191 = vmatpush1.bf16.msra.mxu0 %v1072
      %1192 = vmatprep.subr.bf16.mxu0 0
      %1193 = vmatpush1.bf16.msra.mxu0 %v1073
      %1194 = vmatprep.subr.bf16.mxu0 0
      %1195 = vmatpush1.bf16.msra.mxu0 %v1074
      %1196 = vmatprep.mubr.bf16.mxu0 %v894
      %1197 = vmatmul.mubr.bf16.gmra.mrb[0].mxu0 %v893
      %v1198 = vpop.f32.mrb[0].mxu0
      %v1199 = vadd.f32 %v1142, %v1198
      %v1200 = vpop.f32.mrb[0].mxu0
      %v1201 = vpop.f32.mrb[0].mxu0
      %v1202 = vadd.f32 %v1145, %v1201
      %v1203 = vpop.f32.mrb[0].mxu0
      %1204 = vmatprep.mubr.bf16.mxu0 %v898
      %1205 = vmatmul.mubr.bf16.gmra.mrb[0].mxu0 %v897
      %v1206 = vpop.f32.mrb[0].mxu0
      %v1207 = vadd.f32 %v1150, %v1206
      %v1208 = vpop.f32.mrb[0].mxu0
      %v1209 = vpop.f32.mrb[0].mxu0
      %v1210 = vadd.f32 %v1153, %v1209
      %v1211 = vpop.f32.mrb[0].mxu0
      %1212 = vmatprep.mubr.bf16.mxu0 %v902
      %1213 = vmatmul.mubr.bf16.gmra.mrb[0].mxu0 %v901
      %v1214 = vpop.f32.mrb[0].mxu0
      %v1215 = vadd.f32 %v1158, %v1214
      %v1216 = vpop.f32.mrb[0].mxu0
      %v1217 = vpop.f32.mrb[0].mxu0
      %v1218 = vadd.f32 %v1161, %v1217
      %v1219 = vpop.f32.mrb[0].mxu0
      %1220 = vdwg.mxu0
      %s1221 = sadd.s32 %s328, 2
      %s1222 = smul.u32 %s1221, 8
      %s1223 = smul.addr %s1222, 4
      %s1224 = scalar_lea.vmem %s294, %s1223
      %v1225 = vld [vmem:[%s1224] sm:$0xff]
      %v1226 = vld [vmem:[%s1224 + $0x8] sm:$0xff]
      %v1227 = vld [vmem:[%s1224 + $0x10] sm:$0xff]
      %v1228 = vld [vmem:[%s1224 + $0x18] sm:$0xff]
      %v1229 = vld [vmem:[%s1224 + $0x20] sm:$0xff]
      %v1230 = vld [vmem:[%s1224 + $0x28] sm:$0xff]
      %v1231 = vld [vmem:[%s1224 + $0x30] sm:$0xff]
      %v1232 = vld [vmem:[%s1224 + $0x38] sm:$0xff]
      %v1233 = vld [vmem:[%s1224 + $0x40] sm:$0xff]
      %v1234 = vld [vmem:[%s1224 + $0x48] sm:$0xff]
      %v1235 = vld [vmem:[%s1224 + $0x50] sm:$0xff]
      %v1236 = vld [vmem:[%s1224 + $0x58] sm:$0xff]
      %s1237 = scalar_lea.vmem %s298, 512
      %v1238 = vld [vmem:[%s1237] sm:$0xf]
      %v1239 = vld [vmem:[%s1237 + $0x4] sm:$0xf]
      %v1240 = vld [vmem:[%s1237 + $0x8] sm:$0xf]
      %v1241 = vld [vmem:[%s1237 + $0xc] sm:$0xf]
      %v1242 = vld [vmem:[%s1237 + $0x10] sm:$0xf]
      %v1243 = vld [vmem:[%s1237 + $0x14] sm:$0xf]
      %v1244 = vld [vmem:[%s1237 + $0x18] sm:$0xf]
      %v1245 = vld [vmem:[%s1237 + $0x1c] sm:$0xf]
      %v1246 = vld [vmem:[%s1237 + $0x20] sm:$0xf]
      %v1247 = vld [vmem:[%s1237 + $0x24] sm:$0xf]
      %v1248 = vld [vmem:[%s1237 + $0x28] sm:$0xf]
      %v1249 = vld [vmem:[%s1237 + $0x2c] sm:$0xf]
      %v1250 = vld [vmem:[%s1237 + $0x30] sm:$0xf]
      %v1251 = vld [vmem:[%s1237 + $0x34] sm:$0xf]
      %v1252 = vld [vmem:[%s1237 + $0x38] sm:$0xf]
      %v1253 = vld [vmem:[%s1237 + $0x3c] sm:$0xf]
      %v1254 = vld [vmem:[%s1237 + $0x40] sm:$0xf]
      %v1255 = vld [vmem:[%s1237 + $0x44] sm:$0xf]
      %v1256 = vld [vmem:[%s1237 + $0x48] sm:$0xf]
      %v1257 = vld [vmem:[%s1237 + $0x4c] sm:$0xf]
      %v1258 = vld [vmem:[%s1237 + $0x50] sm:$0xf]
      %v1259 = vld [vmem:[%s1237 + $0x54] sm:$0xf]
      %v1260 = vld [vmem:[%s1237 + $0x58] sm:$0xf]
      %v1261 = vld [vmem:[%s1237 + $0x5c] sm:$0xf]
      %v1262 = vld [vmem:[%s1237 + $0x60] sm:$0xf]
      %v1263 = vld [vmem:[%s1237 + $0x64] sm:$0xf]
      %v1264 = vld [vmem:[%s1237 + $0x68] sm:$0xf]
      %v1265 = vld [vmem:[%s1237 + $0x6c] sm:$0xf]
      %v1266 = vld [vmem:[%s1237 + $0x70] sm:$0xf]
      %v1267 = vld [vmem:[%s1237 + $0x74] sm:$0xf]
      %v1268 = vld [vmem:[%s1237 + $0x78] sm:$0xf]
      %v1269 = vld [vmem:[%s1237 + $0x7c] sm:$0xf]
      %v1270 = vld [vmem:[%s1237 + $0x80] sm:$0xf]
      %v1271 = vld [vmem:[%s1237 + $0x84] sm:$0xf]
      %v1272 = vld [vmem:[%s1237 + $0x88] sm:$0xf]
      %v1273 = vld [vmem:[%s1237 + $0x8c] sm:$0xf]
      %v1274 = vld [vmem:[%s1237 + $0x90] sm:$0xf]
      %v1275 = vld [vmem:[%s1237 + $0x94] sm:$0xf]
      %v1276 = vld [vmem:[%s1237 + $0x98] sm:$0xf]
      %v1277 = vld [vmem:[%s1237 + $0x9c] sm:$0xf]
      %v1278 = vld [vmem:[%s1237 + $0xa0] sm:$0xf]
      %v1279 = vld [vmem:[%s1237 + $0xa4] sm:$0xf]
      %v1280 = vld [vmem:[%s1237 + $0xa8] sm:$0xf]
      %v1281 = vld [vmem:[%s1237 + $0xac] sm:$0xf]
      %v1282 = vld [vmem:[%s1237 + $0xb0] sm:$0xf]
      %v1283 = vld [vmem:[%s1237 + $0xb4] sm:$0xf]
      %v1284 = vld [vmem:[%s1237 + $0xb8] sm:$0xf]
      %v1285 = vld [vmem:[%s1237 + $0xbc] sm:$0xf]
      %v1286 = vld [vmem:[%s1237 + $0xc0] sm:$0xf]
      %v1287 = vld [vmem:[%s1237 + $0xc4] sm:$0xf]
      %v1288 = vld [vmem:[%s1237 + $0xc8] sm:$0xf]
      %v1289 = vld [vmem:[%s1237 + $0xcc] sm:$0xf]
      %v1290 = vld [vmem:[%s1237 + $0xd0] sm:$0xf]
      %v1291 = vld [vmem:[%s1237 + $0xd4] sm:$0xf]
      %v1292 = vld [vmem:[%s1237 + $0xd8] sm:$0xf]
      %v1293 = vld [vmem:[%s1237 + $0xdc] sm:$0xf]
      %v1294 = vld [vmem:[%s1237 + $0xe0] sm:$0xf]
      %v1295 = vld [vmem:[%s1237 + $0xe4] sm:$0xf]
      %v1296 = vld [vmem:[%s1237 + $0xe8] sm:$0xf]
      %v1297 = vld [vmem:[%s1237 + $0xec] sm:$0xf]
      %v1298 = vld [vmem:[%s1237 + $0xf0] sm:$0xf]
      %v1299 = vld [vmem:[%s1237 + $0xf4] sm:$0xf]
      %v1300 = vld [vmem:[%s1237 + $0xf8] sm:$0xf]
      %v1301 = vld [vmem:[%s1237 + $0xfc] sm:$0xf]
      %v1314 = vunpack.c.l.b16 %v1225
      %v1315 = vunpack.c.h.b16 %v1225
      %v1316 = vunpack.c.l.b16 %v1226
      %v1317 = vunpack.c.h.b16 %v1226
      %v1318 = vunpack.c.l.b16 %v1227
      %v1319 = vunpack.c.h.b16 %v1227
      %v1320 = vunpack.c.l.b16 %v1228
      %v1321 = vunpack.c.h.b16 %v1228
      %v1322 = vunpack.c.l.b16 %v1229
      %v1323 = vunpack.c.h.b16 %v1229
      %v1324 = vunpack.c.l.b16 %v1230
      %v1325 = vunpack.c.h.b16 %v1230
      %v1326 = vunpack.c.l.b16 %v1231
      %v1327 = vunpack.c.h.b16 %v1231
      %v1328 = vunpack.c.l.b16 %v1232
      %v1329 = vunpack.c.h.b16 %v1232
      %v1330 = vunpack.c.l.b16 %v1233
      %v1331 = vunpack.c.h.b16 %v1233
      %v1332 = vunpack.c.l.b16 %v1234
      %v1333 = vunpack.c.h.b16 %v1234
      %v1334 = vunpack.c.l.b16 %v1235
      %v1335 = vunpack.c.h.b16 %v1235
      %v1336 = vunpack.c.l.b16 %v1236
      %v1337 = vunpack.c.h.b16 %v1236
      %v1338 = vpack.c.b16 %v1318, %v1314
      %v1339 = vpack.c.b16 %v1319, %v1315
      %v1340 = vpack.c.b16 %v1320, %v1316
      %v1341 = vpack.c.b16 %v1321, %v1317
      %v1342 = vpack.c.b16 %v1326, %v1322
      %v1343 = vpack.c.b16 %v1327, %v1323
      %v1344 = vpack.c.b16 %v1328, %v1324
      %v1345 = vpack.c.b16 %v1329, %v1325
      %v1346 = vpack.c.b16 %v1334, %v1330
      %v1347 = vpack.c.b16 %v1335, %v1331
      %v1348 = vpack.c.b16 %v1336, %v1332
      %v1349 = vpack.c.b16 %v1337, %v1333
      %v1426 = vunpack.c.l.b16 %v1238
      %v1427 = vunpack.c.l.b16 %v1239
      %v1428 = vunpack.c.l.b16 %v1240
      %v1429 = vunpack.c.l.b16 %v1241
      %v1430 = vunpack.c.l.b16 %v1242
      %v1431 = vunpack.c.l.b16 %v1243
      %v1432 = vunpack.c.l.b16 %v1244
      %v1433 = vunpack.c.l.b16 %v1245
      %v1434 = vunpack.c.l.b16 %v1246
      %v1435 = vunpack.c.l.b16 %v1247
      %v1436 = vunpack.c.l.b16 %v1248
      %v1437 = vunpack.c.l.b16 %v1249
      %v1438 = vunpack.c.l.b16 %v1250
      %v1439 = vunpack.c.l.b16 %v1251
      %v1440 = vunpack.c.l.b16 %v1252
      %v1441 = vunpack.c.l.b16 %v1253
      %v1442 = vunpack.c.l.b16 %v1254
      %v1443 = vunpack.c.l.b16 %v1255
      %v1444 = vunpack.c.l.b16 %v1256
      %v1445 = vunpack.c.l.b16 %v1257
      %v1446 = vunpack.c.l.b16 %v1258
      %v1447 = vunpack.c.l.b16 %v1259
      %v1448 = vunpack.c.l.b16 %v1260
      %v1449 = vunpack.c.l.b16 %v1261
      %v1450 = vunpack.c.l.b16 %v1262
      %v1451 = vunpack.c.l.b16 %v1263
      %v1452 = vunpack.c.l.b16 %v1264
      %v1453 = vunpack.c.l.b16 %v1265
      %v1454 = vunpack.c.l.b16 %v1266
      %v1455 = vunpack.c.l.b16 %v1267
      %v1456 = vunpack.c.l.b16 %v1268
      %v1457 = vunpack.c.l.b16 %v1269
      %v1458 = vunpack.c.l.b16 %v1270
      %v1459 = vunpack.c.l.b16 %v1271
      %v1460 = vunpack.c.l.b16 %v1272
      %v1461 = vunpack.c.l.b16 %v1273
      %v1462 = vunpack.c.l.b16 %v1274
      %v1463 = vunpack.c.l.b16 %v1275
      %v1464 = vunpack.c.l.b16 %v1276
      %v1465 = vunpack.c.l.b16 %v1277
      %v1466 = vunpack.c.l.b16 %v1278
      %v1467 = vunpack.c.l.b16 %v1279
      %v1468 = vunpack.c.l.b16 %v1280
      %v1469 = vunpack.c.l.b16 %v1281
      %v1470 = vunpack.c.l.b16 %v1282
      %v1471 = vunpack.c.l.b16 %v1283
      %v1472 = vunpack.c.l.b16 %v1284
      %v1473 = vunpack.c.l.b16 %v1285
      %v1474 = vunpack.c.l.b16 %v1286
      %v1475 = vunpack.c.l.b16 %v1287
      %v1476 = vunpack.c.l.b16 %v1288
      %v1477 = vunpack.c.l.b16 %v1289
      %v1478 = vunpack.c.l.b16 %v1290
      %v1479 = vunpack.c.l.b16 %v1291
      %v1480 = vunpack.c.l.b16 %v1292
      %v1481 = vunpack.c.l.b16 %v1293
      %v1482 = vunpack.c.l.b16 %v1294
      %v1483 = vunpack.c.l.b16 %v1295
      %v1484 = vunpack.c.l.b16 %v1296
      %v1485 = vunpack.c.l.b16 %v1297
      %v1486 = vunpack.c.l.b16 %v1298
      %v1487 = vunpack.c.l.b16 %v1299
      %v1488 = vunpack.c.l.b16 %v1300
      %v1489 = vunpack.c.l.b16 %v1301
      %v1490 = vpack.c.b16 %v1427, %v1426
      %v1491 = vpack.c.b16 %v1429, %v1428
      %v1492 = vpack.c.b16 %v1431, %v1430
      %v1493 = vpack.c.b16 %v1433, %v1432
      %v1494 = vpack.c.b16 %v1435, %v1434
      %v1495 = vpack.c.b16 %v1437, %v1436
      %v1496 = vpack.c.b16 %v1439, %v1438
      %v1497 = vpack.c.b16 %v1441, %v1440
      %v1498 = vpack.c.b16 %v1443, %v1442
      %v1499 = vpack.c.b16 %v1445, %v1444
      %v1500 = vpack.c.b16 %v1447, %v1446
      %v1501 = vpack.c.b16 %v1449, %v1448
      %v1502 = vpack.c.b16 %v1451, %v1450
      %v1503 = vpack.c.b16 %v1453, %v1452
      %v1504 = vpack.c.b16 %v1455, %v1454
      %v1505 = vpack.c.b16 %v1457, %v1456
      %v1506 = vpack.c.b16 %v1459, %v1458
      %v1507 = vpack.c.b16 %v1461, %v1460
      %v1508 = vpack.c.b16 %v1463, %v1462
      %v1509 = vpack.c.b16 %v1465, %v1464
      %v1510 = vpack.c.b16 %v1467, %v1466
      %v1511 = vpack.c.b16 %v1469, %v1468
      %v1512 = vpack.c.b16 %v1471, %v1470
      %v1513 = vpack.c.b16 %v1473, %v1472
      %v1514 = vpack.c.b16 %v1475, %v1474
      %v1515 = vpack.c.b16 %v1477, %v1476
      %v1516 = vpack.c.b16 %v1479, %v1478
      %v1517 = vpack.c.b16 %v1481, %v1480
      %v1518 = vpack.c.b16 %v1483, %v1482
      %v1519 = vpack.c.b16 %v1485, %v1484
      %v1520 = vpack.c.b16 %v1487, %v1486
      %v1521 = vpack.c.b16 %v1489, %v1488
      %1554 = vmatprep.subr.bf16.mxu0 0
      %1555 = vmatpush1.bf16.msra.mxu0 %v1490
      %1556 = vmatprep.subr.bf16.mxu0 0
      %1557 = vmatpush1.bf16.msra.mxu0 %v1491
      %1558 = vmatprep.subr.bf16.mxu0 0
      %1559 = vmatpush1.bf16.msra.mxu0 %v1492
      %1560 = vmatprep.subr.bf16.mxu0 0
      %1561 = vmatpush1.bf16.msra.mxu0 %v1493
      %1562 = vmatprep.subr.bf16.mxu0 0
      %1563 = vmatpush1.bf16.msra.mxu0 %v1494
      %1564 = vmatprep.subr.bf16.mxu0 0
      %1565 = vmatpush1.bf16.msra.mxu0 %v1495
      %1566 = vmatprep.subr.bf16.mxu0 0
      %1567 = vmatpush1.bf16.msra.mxu0 %v1496
      %1568 = vmatprep.subr.bf16.mxu0 0
      %1569 = vmatpush1.bf16.msra.mxu0 %v1497
      %1570 = vmatprep.subr.bf16.mxu0 0
      %1571 = vmatpush1.bf16.msra.mxu0 %v1498
      %1572 = vmatprep.subr.bf16.mxu0 0
      %1573 = vmatpush1.bf16.msra.mxu0 %v1499
      %1574 = vmatprep.subr.bf16.mxu0 0
      %1575 = vmatpush1.bf16.msra.mxu0 %v1500
      %1576 = vmatprep.subr.bf16.mxu0 0
      %1577 = vmatpush1.bf16.msra.mxu0 %v1501
      %1578 = vmatprep.subr.bf16.mxu0 0
      %1579 = vmatpush1.bf16.msra.mxu0 %v1502
      %1580 = vmatprep.subr.bf16.mxu0 0
      %1581 = vmatpush1.bf16.msra.mxu0 %v1503
      %1582 = vmatprep.subr.bf16.mxu0 0
      %1583 = vmatpush1.bf16.msra.mxu0 %v1504
      %1584 = vmatprep.subr.bf16.mxu0 0
      %1585 = vmatpush1.bf16.msra.mxu0 %v1505
      %1586 = vmatprep.mubr.bf16.mxu0 %v1339
      %1587 = vmatmul.mubr.bf16.gmra.mrb[0].mxu0 %v1338
      %v1588 = vpop.f32.mrb[0].mxu0
      %v1589 = vadd.f32 0.0, %v1588
      %v1590 = vpop.f32.mrb[0].mxu0
      %v1591 = vpop.f32.mrb[0].mxu0
      %v1592 = vadd.f32 0.0, %v1591
      %v1593 = vpop.f32.mrb[0].mxu0
      %1594 = vmatprep.mubr.bf16.mxu0 %v1343
      %1595 = vmatmul.mubr.bf16.gmra.mrb[0].mxu0 %v1342
      %v1596 = vpop.f32.mrb[0].mxu0
      %v1597 = vadd.f32 0.0, %v1596
      %v1598 = vpop.f32.mrb[0].mxu0
      %v1599 = vpop.f32.mrb[0].mxu0
      %v1600 = vadd.f32 0.0, %v1599
      %v1601 = vpop.f32.mrb[0].mxu0
      %1602 = vmatprep.mubr.bf16.mxu0 %v1347
      %1603 = vmatmul.mubr.bf16.gmra.mrb[0].mxu0 %v1346
      %v1604 = vpop.f32.mrb[0].mxu0
      %v1605 = vadd.f32 0.0, %v1604
      %v1606 = vpop.f32.mrb[0].mxu0
      %v1607 = vpop.f32.mrb[0].mxu0
      %v1608 = vadd.f32 0.0, %v1607
      %v1609 = vpop.f32.mrb[0].mxu0
      %1610 = vdwg.mxu0
      %1611 = vmatprep.subr.bf16.mxu0 0
      %1612 = vmatpush1.bf16.msra.mxu0 %v1506
      %1613 = vmatprep.subr.bf16.mxu0 0
      %1614 = vmatpush1.bf16.msra.mxu0 %v1507
      %1615 = vmatprep.subr.bf16.mxu0 0
      %1616 = vmatpush1.bf16.msra.mxu0 %v1508
      %1617 = vmatprep.subr.bf16.mxu0 0
      %1618 = vmatpush1.bf16.msra.mxu0 %v1509
      %1619 = vmatprep.subr.bf16.mxu0 0
      %1620 = vmatpush1.bf16.msra.mxu0 %v1510
      %1621 = vmatprep.subr.bf16.mxu0 0
      %1622 = vmatpush1.bf16.msra.mxu0 %v1511
      %1623 = vmatprep.subr.bf16.mxu0 0
      %1624 = vmatpush1.bf16.msra.mxu0 %v1512
      %1625 = vmatprep.subr.bf16.mxu0 0
      %1626 = vmatpush1.bf16.msra.mxu0 %v1513
      %1627 = vmatprep.subr.bf16.mxu0 0
      %1628 = vmatpush1.bf16.msra.mxu0 %v1514
      %1629 = vmatprep.subr.bf16.mxu0 0
      %1630 = vmatpush1.bf16.msra.mxu0 %v1515
      %1631 = vmatprep.subr.bf16.mxu0 0
      %1632 = vmatpush1.bf16.msra.mxu0 %v1516
      %1633 = vmatprep.subr.bf16.mxu0 0
      %1634 = vmatpush1.bf16.msra.mxu0 %v1517
      %1635 = vmatprep.subr.bf16.mxu0 0
      %1636 = vmatpush1.bf16.msra.mxu0 %v1518
      %1637 = vmatprep.subr.bf16.mxu0 0
      %1638 = vmatpush1.bf16.msra.mxu0 %v1519
      %1639 = vmatprep.subr.bf16.mxu0 0
      %1640 = vmatpush1.bf16.msra.mxu0 %v1520
      %1641 = vmatprep.subr.bf16.mxu0 0
      %1642 = vmatpush1.bf16.msra.mxu0 %v1521
      %1643 = vmatprep.mubr.bf16.mxu0 %v1341
      %1644 = vmatmul.mubr.bf16.gmra.mrb[0].mxu0 %v1340
      %v1645 = vpop.f32.mrb[0].mxu0
      %v1646 = vadd.f32 %v1589, %v1645
      %v1647 = vpop.f32.mrb[0].mxu0
      %v1648 = vpop.f32.mrb[0].mxu0
      %v1649 = vadd.f32 %v1592, %v1648
      %v1650 = vpop.f32.mrb[0].mxu0
      %1651 = vmatprep.mubr.bf16.mxu0 %v1345
      %1652 = vmatmul.mubr.bf16.gmra.mrb[0].mxu0 %v1344
      %v1653 = vpop.f32.mrb[0].mxu0
      %v1654 = vadd.f32 %v1597, %v1653
      %v1655 = vpop.f32.mrb[0].mxu0
      %v1656 = vpop.f32.mrb[0].mxu0
      %v1657 = vadd.f32 %v1600, %v1656
      %v1658 = vpop.f32.mrb[0].mxu0
      %1659 = vmatprep.mubr.bf16.mxu0 %v1349
      %1660 = vmatmul.mubr.bf16.gmra.mrb[0].mxu0 %v1348
      %v1661 = vpop.f32.mrb[0].mxu0
      %v1662 = vadd.f32 %v1605, %v1661
      %v1663 = vpop.f32.mrb[0].mxu0
      %v1664 = vpop.f32.mrb[0].mxu0
      %v1665 = vadd.f32 %v1608, %v1664
      %v1666 = vpop.f32.mrb[0].mxu0
      %1667 = vdwg.mxu0
      %v1668 = vadd.f32 %v1199, %v1646
      %v1669 = vadd.f32 %v1202, %v1649
      %v1670 = vadd.f32 %v1207, %v1654
      %v1671 = vadd.f32 %v1210, %v1657
      %v1672 = vadd.f32 %v1215, %v1662
      %v1673 = vadd.f32 %v1218, %v1665
      %s1674 = sadd.s32 %s328, 3
      %s1675 = smul.u32 %s1674, 8
      %s1676 = smul.addr %s1675, 4
      %s1677 = scalar_lea.vmem %s294, %s1676
      %v1678 = vld [vmem:[%s1677] sm:$0xff]
      %v1679 = vld [vmem:[%s1677 + $0x8] sm:$0xff]
      %v1680 = vld [vmem:[%s1677 + $0x10] sm:$0xff]
      %v1681 = vld [vmem:[%s1677 + $0x18] sm:$0xff]
      %v1682 = vld [vmem:[%s1677 + $0x20] sm:$0xff]
      %v1683 = vld [vmem:[%s1677 + $0x28] sm:$0xff]
      %v1684 = vld [vmem:[%s1677 + $0x30] sm:$0xff]
      %v1685 = vld [vmem:[%s1677 + $0x38] sm:$0xff]
      %v1686 = vld [vmem:[%s1677 + $0x40] sm:$0xff]
      %v1687 = vld [vmem:[%s1677 + $0x48] sm:$0xff]
      %v1688 = vld [vmem:[%s1677 + $0x50] sm:$0xff]
      %v1689 = vld [vmem:[%s1677 + $0x58] sm:$0xff]
      %s1690 = scalar_lea.vmem %s298, 768
      %v1691 = vld [vmem:[%s1690] sm:$0xf]
      %v1692 = vld [vmem:[%s1690 + $0x4] sm:$0xf]
      %v1693 = vld [vmem:[%s1690 + $0x8] sm:$0xf]
      %v1694 = vld [vmem:[%s1690 + $0xc] sm:$0xf]
      %v1695 = vld [vmem:[%s1690 + $0x10] sm:$0xf]
      %v1696 = vld [vmem:[%s1690 + $0x14] sm:$0xf]
      %v1697 = vld [vmem:[%s1690 + $0x18] sm:$0xf]
      %v1698 = vld [vmem:[%s1690 + $0x1c] sm:$0xf]
      %v1699 = vld [vmem:[%s1690 + $0x20] sm:$0xf]
      %v1700 = vld [vmem:[%s1690 + $0x24] sm:$0xf]
      %v1701 = vld [vmem:[%s1690 + $0x28] sm:$0xf]
      %v1702 = vld [vmem:[%s1690 + $0x2c] sm:$0xf]
      %v1703 = vld [vmem:[%s1690 + $0x30] sm:$0xf]
      %v1704 = vld [vmem:[%s1690 + $0x34] sm:$0xf]
      %v1705 = vld [vmem:[%s1690 + $0x38] sm:$0xf]
      %v1706 = vld [vmem:[%s1690 + $0x3c] sm:$0xf]
      %v1707 = vld [vmem:[%s1690 + $0x40] sm:$0xf]
      %v1708 = vld [vmem:[%s1690 + $0x44] sm:$0xf]
      %v1709 = vld [vmem:[%s1690 + $0x48] sm:$0xf]
      %v1710 = vld [vmem:[%s1690 + $0x4c] sm:$0xf]
      %v1711 = vld [vmem:[%s1690 + $0x50] sm:$0xf]
      %v1712 = vld [vmem:[%s1690 + $0x54] sm:$0xf]
      %v1713 = vld [vmem:[%s1690 + $0x58] sm:$0xf]
      %v1714 = vld [vmem:[%s1690 + $0x5c] sm:$0xf]
      %v1715 = vld [vmem:[%s1690 + $0x60] sm:$0xf]
      %v1716 = vld [vmem:[%s1690 + $0x64] sm:$0xf]
      %v1717 = vld [vmem:[%s1690 + $0x68] sm:$0xf]
      %v1718 = vld [vmem:[%s1690 + $0x6c] sm:$0xf]
      %v1719 = vld [vmem:[%s1690 + $0x70] sm:$0xf]
      %v1720 = vld [vmem:[%s1690 + $0x74] sm:$0xf]
      %v1721 = vld [vmem:[%s1690 + $0x78] sm:$0xf]
      %v1722 = vld [vmem:[%s1690 + $0x7c] sm:$0xf]
      %v1723 = vld [vmem:[%s1690 + $0x80] sm:$0xf]
      %v1724 = vld [vmem:[%s1690 + $0x84] sm:$0xf]
      %v1725 = vld [vmem:[%s1690 + $0x88] sm:$0xf]
      %v1726 = vld [vmem:[%s1690 + $0x8c] sm:$0xf]
      %v1727 = vld [vmem:[%s1690 + $0x90] sm:$0xf]
      %v1728 = vld [vmem:[%s1690 + $0x94] sm:$0xf]
      %v1729 = vld [vmem:[%s1690 + $0x98] sm:$0xf]
      %v1730 = vld [vmem:[%s1690 + $0x9c] sm:$0xf]
      %v1731 = vld [vmem:[%s1690 + $0xa0] sm:$0xf]
      %v1732 = vld [vmem:[%s1690 + $0xa4] sm:$0xf]
      %v1733 = vld [vmem:[%s1690 + $0xa8] sm:$0xf]
      %v1734 = vld [vmem:[%s1690 + $0xac] sm:$0xf]
      %v1735 = vld [vmem:[%s1690 + $0xb0] sm:$0xf]
      %v1736 = vld [vmem:[%s1690 + $0xb4] sm:$0xf]
      %v1737 = vld [vmem:[%s1690 + $0xb8] sm:$0xf]
      %v1738 = vld [vmem:[%s1690 + $0xbc] sm:$0xf]
      %v1739 = vld [vmem:[%s1690 + $0xc0] sm:$0xf]
      %v1740 = vld [vmem:[%s1690 + $0xc4] sm:$0xf]
      %v1741 = vld [vmem:[%s1690 + $0xc8] sm:$0xf]
      %v1742 = vld [vmem:[%s1690 + $0xcc] sm:$0xf]
      %v1743 = vld [vmem:[%s1690 + $0xd0] sm:$0xf]
      %v1744 = vld [vmem:[%s1690 + $0xd4] sm:$0xf]
      %v1745 = vld [vmem:[%s1690 + $0xd8] sm:$0xf]
      %v1746 = vld [vmem:[%s1690 + $0xdc] sm:$0xf]
      %v1747 = vld [vmem:[%s1690 + $0xe0] sm:$0xf]
      %v1748 = vld [vmem:[%s1690 + $0xe4] sm:$0xf]
      %v1749 = vld [vmem:[%s1690 + $0xe8] sm:$0xf]
      %v1750 = vld [vmem:[%s1690 + $0xec] sm:$0xf]
      %v1751 = vld [vmem:[%s1690 + $0xf0] sm:$0xf]
      %v1752 = vld [vmem:[%s1690 + $0xf4] sm:$0xf]
      %v1753 = vld [vmem:[%s1690 + $0xf8] sm:$0xf]
      %v1754 = vld [vmem:[%s1690 + $0xfc] sm:$0xf]
      %v1767 = vunpack.c.l.b16 %v1678
      %v1768 = vunpack.c.h.b16 %v1678
      %v1769 = vunpack.c.l.b16 %v1679
      %v1770 = vunpack.c.h.b16 %v1679
      %v1771 = vunpack.c.l.b16 %v1680
      %v1772 = vunpack.c.h.b16 %v1680
      %v1773 = vunpack.c.l.b16 %v1681
      %v1774 = vunpack.c.h.b16 %v1681
      %v1775 = vunpack.c.l.b16 %v1682
      %v1776 = vunpack.c.h.b16 %v1682
      %v1777 = vunpack.c.l.b16 %v1683
      %v1778 = vunpack.c.h.b16 %v1683
      %v1779 = vunpack.c.l.b16 %v1684
      %v1780 = vunpack.c.h.b16 %v1684
      %v1781 = vunpack.c.l.b16 %v1685
      %v1782 = vunpack.c.h.b16 %v1685
      %v1783 = vunpack.c.l.b16 %v1686
      %v1784 = vunpack.c.h.b16 %v1686
      %v1785 = vunpack.c.l.b16 %v1687
      %v1786 = vunpack.c.h.b16 %v1687
      %v1787 = vunpack.c.l.b16 %v1688
      %v1788 = vunpack.c.h.b16 %v1688
      %v1789 = vunpack.c.l.b16 %v1689
      %v1790 = vunpack.c.h.b16 %v1689
      %v1791 = vpack.c.b16 %v1771, %v1767
      %v1792 = vpack.c.b16 %v1772, %v1768
      %v1793 = vpack.c.b16 %v1773, %v1769
      %v1794 = vpack.c.b16 %v1774, %v1770
      %v1795 = vpack.c.b16 %v1779, %v1775
      %v1796 = vpack.c.b16 %v1780, %v1776
      %v1797 = vpack.c.b16 %v1781, %v1777
      %v1798 = vpack.c.b16 %v1782, %v1778
      %v1799 = vpack.c.b16 %v1787, %v1783
      %v1800 = vpack.c.b16 %v1788, %v1784
      %v1801 = vpack.c.b16 %v1789, %v1785
      %v1802 = vpack.c.b16 %v1790, %v1786
      %v1879 = vunpack.c.l.b16 %v1691
      %v1880 = vunpack.c.l.b16 %v1692
      %v1881 = vunpack.c.l.b16 %v1693
      %v1882 = vunpack.c.l.b16 %v1694
      %v1883 = vunpack.c.l.b16 %v1695
      %v1884 = vunpack.c.l.b16 %v1696
      %v1885 = vunpack.c.l.b16 %v1697
      %v1886 = vunpack.c.l.b16 %v1698
      %v1887 = vunpack.c.l.b16 %v1699
      %v1888 = vunpack.c.l.b16 %v1700
      %v1889 = vunpack.c.l.b16 %v1701
      %v1890 = vunpack.c.l.b16 %v1702
      %v1891 = vunpack.c.l.b16 %v1703
      %v1892 = vunpack.c.l.b16 %v1704
      %v1893 = vunpack.c.l.b16 %v1705
      %v1894 = vunpack.c.l.b16 %v1706
      %v1895 = vunpack.c.l.b16 %v1707
      %v1896 = vunpack.c.l.b16 %v1708
      %v1897 = vunpack.c.l.b16 %v1709
      %v1898 = vunpack.c.l.b16 %v1710
      %v1899 = vunpack.c.l.b16 %v1711
      %v1900 = vunpack.c.l.b16 %v1712
      %v1901 = vunpack.c.l.b16 %v1713
      %v1902 = vunpack.c.l.b16 %v1714
      %v1903 = vunpack.c.l.b16 %v1715
      %v1904 = vunpack.c.l.b16 %v1716
      %v1905 = vunpack.c.l.b16 %v1717
      %v1906 = vunpack.c.l.b16 %v1718
      %v1907 = vunpack.c.l.b16 %v1719
      %v1908 = vunpack.c.l.b16 %v1720
      %v1909 = vunpack.c.l.b16 %v1721
      %v1910 = vunpack.c.l.b16 %v1722
      %v1911 = vunpack.c.l.b16 %v1723
      %v1912 = vunpack.c.l.b16 %v1724
      %v1913 = vunpack.c.l.b16 %v1725
      %v1914 = vunpack.c.l.b16 %v1726
      %v1915 = vunpack.c.l.b16 %v1727
      %v1916 = vunpack.c.l.b16 %v1728
      %v1917 = vunpack.c.l.b16 %v1729
      %v1918 = vunpack.c.l.b16 %v1730
      %v1919 = vunpack.c.l.b16 %v1731
      %v1920 = vunpack.c.l.b16 %v1732
      %v1921 = vunpack.c.l.b16 %v1733
      %v1922 = vunpack.c.l.b16 %v1734
      %v1923 = vunpack.c.l.b16 %v1735
      %v1924 = vunpack.c.l.b16 %v1736
      %v1925 = vunpack.c.l.b16 %v1737
      %v1926 = vunpack.c.l.b16 %v1738
      %v1927 = vunpack.c.l.b16 %v1739
      %v1928 = vunpack.c.l.b16 %v1740
      %v1929 = vunpack.c.l.b16 %v1741
      %v1930 = vunpack.c.l.b16 %v1742
      %v1931 = vunpack.c.l.b16 %v1743
      %v1932 = vunpack.c.l.b16 %v1744
      %v1933 = vunpack.c.l.b16 %v1745
      %v1934 = vunpack.c.l.b16 %v1746
      %v1935 = vunpack.c.l.b16 %v1747
      %v1936 = vunpack.c.l.b16 %v1748
      %v1937 = vunpack.c.l.b16 %v1749
      %v1938 = vunpack.c.l.b16 %v1750
      %v1939 = vunpack.c.l.b16 %v1751
      %v1940 = vunpack.c.l.b16 %v1752
      %v1941 = vunpack.c.l.b16 %v1753
      %v1942 = vunpack.c.l.b16 %v1754
      %v1943 = vpack.c.b16 %v1880, %v1879
      %v1944 = vpack.c.b16 %v1882, %v1881
      %v1945 = vpack.c.b16 %v1884, %v1883
      %v1946 = vpack.c.b16 %v1886, %v1885
      %v1947 = vpack.c.b16 %v1888, %v1887
      %v1948 = vpack.c.b16 %v1890, %v1889
      %v1949 = vpack.c.b16 %v1892, %v1891
      %v1950 = vpack.c.b16 %v1894, %v1893
      %v1951 = vpack.c.b16 %v1896, %v1895
      %v1952 = vpack.c.b16 %v1898, %v1897
      %v1953 = vpack.c.b16 %v1900, %v1899
      %v1954 = vpack.c.b16 %v1902, %v1901
      %v1955 = vpack.c.b16 %v1904, %v1903
      %v1956 = vpack.c.b16 %v1906, %v1905
      %v1957 = vpack.c.b16 %v1908, %v1907
      %v1958 = vpack.c.b16 %v1910, %v1909
      %v1959 = vpack.c.b16 %v1912, %v1911
      %v1960 = vpack.c.b16 %v1914, %v1913
      %v1961 = vpack.c.b16 %v1916, %v1915
      %v1962 = vpack.c.b16 %v1918, %v1917
      %v1963 = vpack.c.b16 %v1920, %v1919
      %v1964 = vpack.c.b16 %v1922, %v1921
      %v1965 = vpack.c.b16 %v1924, %v1923
      %v1966 = vpack.c.b16 %v1926, %v1925
      %v1967 = vpack.c.b16 %v1928, %v1927
      %v1968 = vpack.c.b16 %v1930, %v1929
      %v1969 = vpack.c.b16 %v1932, %v1931
      %v1970 = vpack.c.b16 %v1934, %v1933
      %v1971 = vpack.c.b16 %v1936, %v1935
      %v1972 = vpack.c.b16 %v1938, %v1937
      %v1973 = vpack.c.b16 %v1940, %v1939
      %v1974 = vpack.c.b16 %v1942, %v1941
      %2007 = vmatprep.subr.bf16.mxu0 0
      %2008 = vmatpush1.bf16.msra.mxu0 %v1943
      %2009 = vmatprep.subr.bf16.mxu0 0
      %2010 = vmatpush1.bf16.msra.mxu0 %v1944
      %2011 = vmatprep.subr.bf16.mxu0 0
      %2012 = vmatpush1.bf16.msra.mxu0 %v1945
      %2013 = vmatprep.subr.bf16.mxu0 0
      %2014 = vmatpush1.bf16.msra.mxu0 %v1946
      %2015 = vmatprep.subr.bf16.mxu0 0
      %2016 = vmatpush1.bf16.msra.mxu0 %v1947
      %2017 = vmatprep.subr.bf16.mxu0 0
      %2018 = vmatpush1.bf16.msra.mxu0 %v1948
      %2019 = vmatprep.subr.bf16.mxu0 0
      %2020 = vmatpush1.bf16.msra.mxu0 %v1949
      %2021 = vmatprep.subr.bf16.mxu0 0
      %2022 = vmatpush1.bf16.msra.mxu0 %v1950
      %2023 = vmatprep.subr.bf16.mxu0 0
      %2024 = vmatpush1.bf16.msra.mxu0 %v1951
      %2025 = vmatprep.subr.bf16.mxu0 0
      %2026 = vmatpush1.bf16.msra.mxu0 %v1952
      %2027 = vmatprep.subr.bf16.mxu0 0
      %2028 = vmatpush1.bf16.msra.mxu0 %v1953
      %2029 = vmatprep.subr.bf16.mxu0 0
      %2030 = vmatpush1.bf16.msra.mxu0 %v1954
      %2031 = vmatprep.subr.bf16.mxu0 0
      %2032 = vmatpush1.bf16.msra.mxu0 %v1955
      %2033 = vmatprep.subr.bf16.mxu0 0
      %2034 = vmatpush1.bf16.msra.mxu0 %v1956
      %2035 = vmatprep.subr.bf16.mxu0 0
      %2036 = vmatpush1.bf16.msra.mxu0 %v1957
      %2037 = vmatprep.subr.bf16.mxu0 0
      %2038 = vmatpush1.bf16.msra.mxu0 %v1958
      %2039 = vmatprep.mubr.bf16.mxu0 %v1792
      %2040 = vmatmul.mubr.bf16.gmra.mrb[0].mxu0 %v1791
      %v2041 = vpop.f32.mrb[0].mxu0
      %v2042 = vadd.f32 0.0, %v2041
      %v2043 = vpop.f32.mrb[0].mxu0
      %v2044 = vpop.f32.mrb[0].mxu0
      %v2045 = vadd.f32 0.0, %v2044
      %v2046 = vpop.f32.mrb[0].mxu0
      %2047 = vmatprep.mubr.bf16.mxu0 %v1796
      %2048 = vmatmul.mubr.bf16.gmra.mrb[0].mxu0 %v1795
      %v2049 = vpop.f32.mrb[0].mxu0
      %v2050 = vadd.f32 0.0, %v2049
      %v2051 = vpop.f32.mrb[0].mxu0
      %v2052 = vpop.f32.mrb[0].mxu0
      %v2053 = vadd.f32 0.0, %v2052
      %v2054 = vpop.f32.mrb[0].mxu0
      %2055 = vmatprep.mubr.bf16.mxu0 %v1800
      %2056 = vmatmul.mubr.bf16.gmra.mrb[0].mxu0 %v1799
      %v2057 = vpop.f32.mrb[0].mxu0
      %v2058 = vadd.f32 0.0, %v2057
      %v2059 = vpop.f32.mrb[0].mxu0
      %v2060 = vpop.f32.mrb[0].mxu0
      %v2061 = vadd.f32 0.0, %v2060
      %v2062 = vpop.f32.mrb[0].mxu0
      %2063 = vdwg.mxu0
      %2064 = vmatprep.subr.bf16.mxu0 0
      %2065 = vmatpush1.bf16.msra.mxu0 %v1959
      %2066 = vmatprep.subr.bf16.mxu0 0
      %2067 = vmatpush1.bf16.msra.mxu0 %v1960
      %2068 = vmatprep.subr.bf16.mxu0 0
      %2069 = vmatpush1.bf16.msra.mxu0 %v1961
      %2070 = vmatprep.subr.bf16.mxu0 0
      %2071 = vmatpush1.bf16.msra.mxu0 %v1962
      %2072 = vmatprep.subr.bf16.mxu0 0
      %2073 = vmatpush1.bf16.msra.mxu0 %v1963
      %2074 = vmatprep.subr.bf16.mxu0 0
      %2075 = vmatpush1.bf16.msra.mxu0 %v1964
      %2076 = vmatprep.subr.bf16.mxu0 0
      %2077 = vmatpush1.bf16.msra.mxu0 %v1965
      %2078 = vmatprep.subr.bf16.mxu0 0
      %2079 = vmatpush1.bf16.msra.mxu0 %v1966
      %2080 = vmatprep.subr.bf16.mxu0 0
      %2081 = vmatpush1.bf16.msra.mxu0 %v1967
      %2082 = vmatprep.subr.bf16.mxu0 0
      %2083 = vmatpush1.bf16.msra.mxu0 %v1968
      %2084 = vmatprep.subr.bf16.mxu0 0
      %2085 = vmatpush1.bf16.msra.mxu0 %v1969
      %2086 = vmatprep.subr.bf16.mxu0 0
      %2087 = vmatpush1.bf16.msra.mxu0 %v1970
      %2088 = vmatprep.subr.bf16.mxu0 0
      %2089 = vmatpush1.bf16.msra.mxu0 %v1971
      %2090 = vmatprep.subr.bf16.mxu0 0
      %2091 = vmatpush1.bf16.msra.mxu0 %v1972
      %2092 = vmatprep.subr.bf16.mxu0 0
      %2093 = vmatpush1.bf16.msra.mxu0 %v1973
      %2094 = vmatprep.subr.bf16.mxu0 0
      %2095 = vmatpush1.bf16.msra.mxu0 %v1974
      %2096 = vmatprep.mubr.bf16.mxu0 %v1794
      %2097 = vmatmul.mubr.bf16.gmra.mrb[0].mxu0 %v1793
      %v2098 = vpop.f32.mrb[0].mxu0
      %v2099 = vadd.f32 %v2042, %v2098
      %v2100 = vpop.f32.mrb[0].mxu0
      %v2101 = vpop.f32.mrb[0].mxu0
      %v2102 = vadd.f32 %v2045, %v2101
      %v2103 = vpop.f32.mrb[0].mxu0
      %2104 = vmatprep.mubr.bf16.mxu0 %v1798
      %2105 = vmatmul.mubr.bf16.gmra.mrb[0].mxu0 %v1797
      %v2106 = vpop.f32.mrb[0].mxu0
      %v2107 = vadd.f32 %v2050, %v2106
      %v2108 = vpop.f32.mrb[0].mxu0
      %v2109 = vpop.f32.mrb[0].mxu0
      %v2110 = vadd.f32 %v2053, %v2109
      %v2111 = vpop.f32.mrb[0].mxu0
      %2112 = vmatprep.mubr.bf16.mxu0 %v1802
      %2113 = vmatmul.mubr.bf16.gmra.mrb[0].mxu0 %v1801
      %v2114 = vpop.f32.mrb[0].mxu0
      %v2115 = vadd.f32 %v2058, %v2114
      %v2116 = vpop.f32.mrb[0].mxu0
      %v2117 = vpop.f32.mrb[0].mxu0
      %v2118 = vadd.f32 %v2061, %v2117
      %v2119 = vpop.f32.mrb[0].mxu0
      %2120 = vdwg.mxu0
      %v2121 = vadd.f32 %v1668, %v2099
      %v2122 = vadd.f32 %v1669, %v2102
      %v2123 = vadd.f32 %v1670, %v2107
      %v2124 = vadd.f32 %v1671, %v2110
      %v2125 = vadd.f32 %v1672, %v2115
      %v2126 = vadd.f32 %v1673, %v2118
      %v2127 = vld [vmem:[%s301] sm:$0x1]
      %v2129 = vlaneseq
      %v2130 = vshrl.u32 %v2129, 7
      %v2131 = vsub.s32 0, %v2130
      %v2132 = vrot.slane %v2127, %v2131
      %v2134 = vadd.f32 %v2121, %v2132
      %v2135 = vadd.f32 %v2122, %v2132
      %v2136 = vadd.f32 %v2123, %v2132
      %v2137 = vadd.f32 %v2124, %v2132
      %v2138 = vadd.f32 %v2125, %v2132
      %v2139 = vadd.f32 %v2126, %v2132
      %v2140 = vpack.c.bf16 %v2135, %v2134
      %v2141 = vpack.c.bf16 %v2137, %v2136
      %v2142 = vpack.c.bf16 %v2139, %v2138
      %v2146 = vunpack.c.l.b16 %v2140
      %v2147 = vunpack.c.h.b16 %v2140
      %v2148 = vunpack.c.l.b16 %v2141
      %v2149 = vunpack.c.h.b16 %v2141
      %v2150 = vunpack.c.l.b16 %v2142
      %v2151 = vunpack.c.h.b16 %v2142
      %v2152 = vpack.c.b16 %v2146, %v2146
      %v2153 = vpack.c.b16 %v2147, %v2147
      %v2154 = vpack.c.b16 %v2148, %v2148
      %v2155 = vpack.c.b16 %v2149, %v2149
      %v2156 = vpack.c.b16 %v2150, %v2150
      %v2157 = vpack.c.b16 %v2151, %v2151
      %2164 = vst [vmem:[%s313] sm:$0xf] %v2152
      %2165 = vst [vmem:[%s313 + $0x4] sm:$0xf] %v2153
      %2166 = vst [vmem:[%s313 + $0x8] sm:$0xf] %v2154
      %2167 = vst [vmem:[%s313 + $0xc] sm:$0xf] %v2155
      %2168 = vst [vmem:[%s313 + $0x10] sm:$0xf] %v2156
      %2169 = vst [vmem:[%s313 + $0x14] sm:$0xf] %v2157
      %v2170 = vstv %s328
      %v2171 = vadd.s32 %v2170, 1
      %v2172 = vadd.s32 %v2170, 2
      %v2173 = vlaneseq
      %v2174 = vshrl.u32 %v2173, 7
      %v2175 = vadd.s32 %v2174, 8
      %vm2176 = vcmp.lt.s32.totalorder %v2170, 3
      %vm2177 = vcmp.lt.s32.totalorder %v2171, 3
      %vm2178 = vcmp.lt.s32.totalorder %v2172, 3
      %vm2179 = vcmp.lt.s32.totalorder %v2174, 3
      %vm2180 = vcmp.lt.s32.totalorder %v2175, 3
      %vm2181 = vmand %vm2176, %vm2179
      %vm2182 = vmand %vm2176, %vm2180
      %vm2183 = vmand %vm2177, %vm2179
      %vm2184 = vmand %vm2177, %vm2180
      %vm2185 = vmand %vm2178, %vm2179
      %vm2186 = vmand %vm2178, %vm2180
      %v2187 = vsel %vm2181, %v2134, 0.0
      %v2188 = vsel %vm2182, %v2135, 0.0
      %v2189 = vsel %vm2183, %v2136, 0.0
      %v2190 = vsel %vm2184, %v2137, 0.0
      %v2191 = vsel %vm2185, %v2138, 0.0
      %v2192 = vsel %vm2186, %v2139, 0.0
      %p2193 = scmp.eq.s32.totalorder %s24, 0
      // Predicated region
      $region33: #{_lambda_.13} parent=31 // pred_check
        %p2194 = pneg %p2193
      $region34: #{_lambda_.13} parent=31 // pred_check_branch
        %2196 = sbr.rel (%p2194) target = $region36
      $region35: #{_lambda_.13} parent=31 // pred_region
        %2197 = vst [vmem:[%s320] sm:$0x1] 0.0
        %2198 = vst [vmem:[%s326] sm:$0x1] 0.0
      $region36: #{_lambda_.13} parent=31 // pred_fallthru
        _
      %v2199 = vadd.f32 %v2187, %v2189
      %v2200 = vadd.f32 %v2199, %v2191
      %v2201 = vadd.f32 %v2188, %v2190
      %v2202 = vadd.f32 %v2201, %v2192
      %v2203 = vadd.f32 %v2200, %v2202
      %v2204 = vrot.slane %v2203, 4
      %v2205 = vadd.f32 %v2203, %v2204
      %v2206 = vrot.slane %v2205, 2
      %v2207 = vadd.f32 %v2205, %v2206
      %v2208 = vrot.slane %v2207, 1
      %v2209 = vadd.f32 %v2207, %v2208
      %v2210 = vmul.f32 %v2187, %v2187
      %v2211 = vmul.f32 %v2188, %v2188
      %v2212 = vmul.f32 %v2189, %v2189
      %v2213 = vmul.f32 %v2190, %v2190
      %v2214 = vmul.f32 %v2191, %v2191
      %v2215 = vmul.f32 %v2192, %v2192
      %v2216 = vadd.f32 %v2210, %v2212
      %v2217 = vadd.f32 %v2216, %v2214
      %v2218 = vadd.f32 %v2211, %v2213
      %v2219 = vadd.f32 %v2218, %v2215
      %v2220 = vadd.f32 %v2217, %v2219
      %v2221 = vrot.slane %v2220, 4
      %v2222 = vadd.f32 %v2220, %v2221
      %v2223 = vrot.slane %v2222, 2
      %v2224 = vadd.f32 %v2222, %v2223
      %v2225 = vrot.slane %v2224, 1
      %v2226 = vadd.f32 %v2224, %v2225
      %v2227 = vld [vmem:[%s320] sm:$0x1]
      %v2228 = vadd.f32 %v2227, %v2209
      %2229 = vst [vmem:[%s320] sm:$0x1] %v2228
      %v2230 = vld [vmem:[%s326] sm:$0x1]
      %v2231 = vadd.f32 %v2230, %v2226
      %2232 = vst [vmem:[%s326] sm:$0x1] %v2231
      %s2233 = smul.u32 6, %s24
      %p2234 = scmp.lt.s32.totalorder %s22, 1
      %s2235 = scalar_select %p2234, %s22, 1
      %p2236 = scmp.lt.s32.totalorder %s2233, 5
      %s2237 = scalar_select %p2236, %s2233, 5
      %p2238 = scmp.lt.s32.totalorder %s23, 0
      %s2239 = scalar_select %p2238, %s23, 0
      %s2240 = sadd.s32 %s2239, %s2237
      %s2241 = smul.addr %s2235, 6
      %s2242 = sadd.s32 %s2240, %s2241
      %s2243 = smul.addr %s2242, 4
      %s2244 = scalar_lea.vmem %s3, %s2243
      %p2245 = scmp.lt.s32.totalorder %s22, 1
      %s2246 = scalar_select %p2245, %s22, 1
      %p2247 = scmp.lt.s32.totalorder %s23, 0
      %s2248 = scalar_select %p2247, %s23, 0
      %s2249 = sadd.s32 %s2248, %s2246
      %s2250 = scalar_lea.vmem %s4, %s2249
      %p2251 = scmp.lt.s32.totalorder %s22, 1
      %s2252 = scalar_select %p2251, %s22, 1
      %p2253 = scmp.lt.s32.totalorder %s23, 0
      %s2254 = scalar_select %p2253, %s23, 0
      %s2255 = sadd.s32 %s2254, %s2252
      %s2256 = scalar_lea.vmem %s5, %s2255
      // Predicated region
      $region37: #{_lambda_.13} parent=31 // pred_check
        %p2257 = pneg %p136
      $region38: #{_lambda_.13} parent=31 // pred_check_branch
        %2259 = sbr.rel (%p2257) target = $region40
      $region39: #{_lambda_.13} parent=31 // pred_region
        %s2260 = smul.u32 6, %s24
      $region40: #{_lambda_.13} parent=31 // pred_fallthru
        _
      // Predicated region
      $region41: #{_lambda_.13} parent=31 // pred_check
        %p2261 = pneg %p164
      $region42: #{_lambda_.13} parent=31 // pred_check_branch
        %2263 = sbr.rel (%p2261) target = $region44
      $region43: #{_lambda_.13} parent=31 // pred_region
        _
      $region44: #{_lambda_.13} parent=31 // pred_fallthru
        _
      // Predicated region
      $region45: #{_lambda_.13} parent=31 // pred_check
        %p2264 = pneg %p192
      $region46: #{_lambda_.13} parent=31 // pred_check_branch
        %2266 = sbr.rel (%p2264) target = $region48
      $region47: #{_lambda_.13} parent=31 // pred_region
        _
      $region48: #{_lambda_.13} parent=31 // pred_fallthru
        _
    $region32: #{_lambda_.13} parent=5 // pred_fallthru
      _
    %p2267 = scmp.le.s32.totalorder 2, %s12
    // Predicated region
    $region49: #{_lambda_.13} parent=5 // pred_check
      %p2268 = pneg %p2267
    $region50: #{_lambda_.13} parent=5 // pred_check_branch
      %2270 = sbr.rel (%p2268) target = $region52
    $region51: #{_lambda_.13} parent=5 // pred_region
      %s2271 = ssub.s32 %s12, 2
      // Predicated region
      $region53: #{_lambda_.13} parent=51 // pred_check
        %p2272 = pneg %p142
      $region54: #{_lambda_.13} parent=51 // pred_check_branch
        %2274 = sbr.rel (%p2272) target = $region56
      $region55: #{_lambda_.13} parent=51 // pred_region
        %s2275 = smul.u32 6, %s27
        %p2276 = scmp.lt.s32.totalorder %s25, 1
        %s2277 = scalar_select %p2276, %s25, 1
        %p2278 = scmp.lt.s32.totalorder %s2275, 5
        %s2279 = scalar_select %p2278, %s2275, 5
        %p2280 = scmp.lt.s32.totalorder %s26, 0
        %s2281 = scalar_select %p2280, %s26, 0
        %s2282 = sadd.s32 %s2281, %s2279
        %s2283 = smul.addr %s2277, 6
        %s2284 = sadd.s32 %s2282, %s2283
        %s2285 = smul.addr %s2284, 4
        %s2286 = scalar_lea.vmem %s3, %s2285
      $region56: #{_lambda_.13} parent=51 // pred_fallthru
        _
      // Predicated region
      $region57: #{_lambda_.13} parent=51 // pred_check
        %p2287 = pneg %p170
      $region58: #{_lambda_.13} parent=51 // pred_check_branch
        %2289 = sbr.rel (%p2287) target = $region60
      $region59: #{_lambda_.13} parent=51 // pred_region
        %p2290 = scmp.lt.s32.totalorder %s25, 1
        %s2291 = scalar_select %p2290, %s25, 1
        %p2292 = scmp.lt.s32.totalorder %s26, 0
        %s2293 = scalar_select %p2292, %s26, 0
        %s2294 = sadd.s32 %s2293, %s2291
        %s2295 = scalar_lea.vmem %s4, %s2294
      $region60: #{_lambda_.13} parent=51 // pred_fallthru
        _
      // Predicated region
      $region61: #{_lambda_.13} parent=51 // pred_check
        %p2296 = pneg %p198
      $region62: #{_lambda_.13} parent=51 // pred_check_branch
        %2298 = sbr.rel (%p2296) target = $region64
      $region63: #{_lambda_.13} parent=51 // pred_region
        %p2299 = scmp.lt.s32.totalorder %s25, 1
        %s2300 = scalar_select %p2299, %s25, 1
        %p2301 = scmp.lt.s32.totalorder %s26, 0
        %s2302 = scalar_select %p2301, %s26, 0
        %s2303 = sadd.s32 %s2302, %s2300
        %s2304 = scalar_lea.vmem %s5, %s2303
      $region64: #{_lambda_.13} parent=51 // pred_fallthru
        _
    $region52: #{_lambda_.13} parent=5 // pred_fallthru
      _
  $region6: #{_lambda_.13} parent=0 // loop_footer
    %s16 = sadd.s32 1, %s12
  $region7: #{_lambda_.13} parent=0 // loop_footer_branch
    %11 = sbr.rel target = $region3
  $region8: #{_lambda_.13} parent=0 // loop_exit
    _

// kernel: _lambda_.15
$region0: #{_lambda_.15}
  #allocation0 [shape = 'u32[]', space=smem, size = 0x4, offset = 0x4, fixed_abs, tag = 'smem constant byte address 0x4 - core index']
  #allocation1 [shape = 'u32[144,128]{1,0:T(1,128)}', space=vmem, size = 0x12000, scoped, tag = 'internal scratch']
  %s0 = inlined_call_operand.vmem [shape: bf16[2,5,16,512], index: 0, kind: input, shape index: {}]
  %s1 = inlined_call_operand.vmem [shape: bf16[4,512,128], index: 1, kind: input, shape index: {}]
  %s2 = inlined_call_operand.vmem [shape: f32[1,128], index: 2, kind: input, shape index: {}]
  %s3 = inlined_call_operand.vmem [shape: f32[2,32,128], index: 3, kind: output, shape index: {}]
  %s4 = sld [smem:[#allocation0]]
  $region45: #{_lambda_.15} parent=0
    _
  %s6 = ssub.s32 1, %s4
  %s7 = scalar_select 0, %s6, %s4
  loop: start=0, step=1, limit=4
  $region2: #{_lambda_.15} parent=0 // loop_pre_header
    _
  $region3: #{_lambda_.15} parent=0 // loop_header
    %s9 = sphi 0, %s13
    %p10 = scmp.ge.s32.totalorder %s9, 4
    %s16 = sphi 0, %s35
    %s17 = sphi 0, %s31
    %s18 = sphi 0, %s27
    %s19 = sphi 0, %s16
    %s20 = sphi 0, %s17
    %s21 = sphi 0, %s18
    %s22 = sphi 0, %s19
    %s23 = sphi 0, %s20
    %s24 = sphi 0, %s21
    %s38 = sphi 0, %s40
    %s41 = sphi 0, %s38
    %s42 = sphi 0, %s41
    %s58 = sphi 0, %s42
    %s64 = sphi 0, %s66
    %s67 = sphi 0, %s64
    %s68 = sphi 0, %s67
    %s84 = sphi 0, %s68
    %s90 = sphi 0, %s92
    %s93 = sphi 0, %s90
    %s94 = sphi 0, %s93
    %s110 = sphi 0, %s94
    %s120 = sphi 0, %s122
    %s123 = sphi 0, %s120
    %s124 = sphi 0, %s123
    %s140 = sphi 0, %s124
  $region4: #{_lambda_.15} parent=0 // loop_header_branch
    %12 = sbr.rel (%p10) target = $region8
  $region5: #{_lambda_.15} parent=0 // loop_body
    %s14 = ssub.s32 %s9, 1
    %s15 = ssub.s32 %s9, 2
    %s25 = sadd.s32 1, %s18
    %p26 = scmp.ge.s32.totalorder %s25, 1
    %s27 = scalar_select %p26, 0, %s25
    %s28 = sadd.s32 1, %s17
    %s29 = scalar_select %p26, %s28, %s17
    %p30 = scmp.ge.s32.totalorder %s29, 1
    %s31 = scalar_select %p30, 0, %s29
    %s32 = sadd.s32 1, %s16
    %s33 = scalar_select %p30, %s32, %s16
    %p34 = scmp.ge.s32.totalorder %s33, 2
    %s35 = scalar_select %p34, 0, %s33
    %s36 = ssub.s32 %s16, %s35
    %p37 = scmp.eq.s32.totalorder %s36, 0
    %s39 = sadd.s32 %s38, 1
    %s40 = scalar_select %p37, %s38, %s39
    %p43 = pneg %p37
    %p44 = scmp.eq.s32.totalorder %s9, 1
    %p45 = por %p43, %p44
    %p46 = scmp.ne.s32.totalorder %s38, %s41
    %p47 = scmp.eq.s32.totalorder %s9, 0
    %p48 = por %p46, %p47
    %p49 = scmp.ne.s32.totalorder %s38, %s41
    %p50 = scmp.eq.s32.totalorder %s14, 1
    %p51 = por %p49, %p50
    %p52 = scmp.ne.s32.totalorder %s41, %s42
    %p53 = scmp.eq.s32.totalorder %s14, 0
    %p54 = por %p52, %p53
    %p55 = scmp.ne.s32.totalorder %s41, %s42
    %p56 = scmp.eq.s32.totalorder %s15, 1
    %p57 = por %p55, %p56
    %p59 = scmp.ne.s32.totalorder %s42, %s58
    %p60 = scmp.eq.s32.totalorder %s15, 0
    %p61 = por %p59, %p60
    %s62 = ssub.s32 %s17, %s31
    %p63 = scmp.eq.s32.totalorder %s62, 0
    %s65 = sadd.s32 %s64, 1
    %s66 = scalar_select %p63, %s64, %s65
    %p69 = pneg %p63
    %p70 = scmp.eq.s32.totalorder %s9, 1
    %p71 = por %p69, %p70
    %p72 = scmp.ne.s32.totalorder %s64, %s67
    %p73 = scmp.eq.s32.totalorder %s9, 0
    %p74 = por %p72, %p73
    %p75 = scmp.ne.s32.totalorder %s64, %s67
    %p76 = scmp.eq.s32.totalorder %s14, 1
    %p77 = por %p75, %p76
    %p78 = scmp.ne.s32.totalorder %s67, %s68
    %p79 = scmp.eq.s32.totalorder %s14, 0
    %p80 = por %p78, %p79
    %p81 = scmp.ne.s32.totalorder %s67, %s68
    %p82 = scmp.eq.s32.totalorder %s15, 1
    %p83 = por %p81, %p82
    %p85 = scmp.ne.s32.totalorder %s68, %s84
    %p86 = scmp.eq.s32.totalorder %s15, 0
    %p87 = por %p85, %p86
    %s88 = ssub.s32 %s17, %s31
    %p89 = scmp.eq.s32.totalorder %s88, 0
    %s91 = sadd.s32 %s90, 1
    %s92 = scalar_select %p89, %s90, %s91
    %p95 = pneg %p89
    %p96 = scmp.eq.s32.totalorder %s9, 1
    %p97 = por %p95, %p96
    %p98 = scmp.ne.s32.totalorder %s90, %s93
    %p99 = scmp.eq.s32.totalorder %s9, 0
    %p100 = por %p98, %p99
    %p101 = scmp.ne.s32.totalorder %s90, %s93
    %p102 = scmp.eq.s32.totalorder %s14, 1
    %p103 = por %p101, %p102
    %p104 = scmp.ne.s32.totalorder %s93, %s94
    %p105 = scmp.eq.s32.totalorder %s14, 0
    %p106 = por %p104, %p105
    %p107 = scmp.ne.s32.totalorder %s93, %s94
    %p108 = scmp.eq.s32.totalorder %s15, 1
    %p109 = por %p107, %p108
    %p111 = scmp.ne.s32.totalorder %s94, %s110
    %p112 = scmp.eq.s32.totalorder %s15, 0
    %p113 = por %p111, %p112
    %s114 = ssub.s32 %s16, %s35
    %s115 = ssub.s32 %s18, %s27
    %s116 = sor.u32 %s114, %s115
    %s117 = ssub.s32 %s17, %s31
    %s118 = sor.u32 %s116, %s117
    %p119 = scmp.eq.s32.totalorder %s118, 0
    %s121 = sadd.s32 %s120, 1
    %s122 = scalar_select %p119, %s120, %s121
    %p125 = pneg %p119
    %p126 = scmp.eq.s32.totalorder %s9, 1
    %p127 = por %p125, %p126
    %p128 = scmp.ne.s32.totalorder %s120, %s123
    %p129 = scmp.eq.s32.totalorder %s9, 0
    %p130 = por %p128, %p129
    %p131 = scmp.ne.s32.totalorder %s120, %s123
    %p132 = scmp.eq.s32.totalorder %s14, 1
    %p133 = por %p131, %p132
    %p134 = scmp.ne.s32.totalorder %s123, %s124
    %p135 = scmp.eq.s32.totalorder %s14, 0
    %p136 = por %p134, %p135
    %p137 = scmp.ne.s32.totalorder %s123, %s124
    %p138 = scmp.eq.s32.totalorder %s15, 1
    %p139 = por %p137, %p138
    %p141 = scmp.ne.s32.totalorder %s124, %s140
    %p142 = scmp.eq.s32.totalorder %s15, 0
    %p143 = por %p141, %p142
    %p144 = scmp.le.s32.totalorder 1, %s9
    %p145 = scmp.lt.s32.totalorder %s9, 3
    %p146 = pnand %p144, %p145
    %p147 = pneg %p146
    // Predicated region
    $region9: #{_lambda_.15} parent=5 // pred_check
      _
    $region10: #{_lambda_.15} parent=5 // pred_check_branch
      %149 = sbr.rel (%p146) target = $region12
    $region11: #{_lambda_.15} parent=5 // pred_region
      %s150 = ssub.s32 %s9, 1
      // Predicated region
      $region13: #{_lambda_.15} parent=11 // pred_check
        %p151 = pneg %p80
      $region14: #{_lambda_.15} parent=11 // pred_check_branch
        %153 = sbr.rel (%p151) target = $region16
      $region15: #{_lambda_.15} parent=11 // pred_region
        %p154 = scmp.lt.s32.totalorder %s20, 0
        %s155 = scalar_select %p154, %s20, 0
        %s156 = smul.addr %s155, 4
        %s157 = scalar_lea.vmem %s1, %s156
      $region16: #{_lambda_.15} parent=11 // pred_fallthru
        _
      // Predicated region
      $region17: #{_lambda_.15} parent=11 // pred_check
        %p158 = pneg %p106
      $region18: #{_lambda_.15} parent=11 // pred_check_branch
        %160 = sbr.rel (%p158) target = $region20
      $region19: #{_lambda_.15} parent=11 // pred_region
        %p161 = scmp.lt.s32.totalorder %s20, 0
        %s162 = scalar_select %p161, %s20, 0
        %s163 = scalar_lea.vmem %s2, %s162
      $region20: #{_lambda_.15} parent=11 // pred_fallthru
        _
    $region12: #{_lambda_.15} parent=5 // pred_fallthru
      _
    %p164 = scmp.lt.s32.totalorder %s9, 2
    // Predicated region
    $region21: #{_lambda_.15} parent=5 // pred_check
      %p165 = pneg %p164
    $region22: #{_lambda_.15} parent=5 // pred_check_branch
      %167 = sbr.rel (%p165) target = $region24
    $region23: #{_lambda_.15} parent=5 // pred_region
      // Predicated region
      $region25: #{_lambda_.15} parent=23 // pred_check
        %p168 = pneg %p48
      $region26: #{_lambda_.15} parent=23 // pred_check_branch
        %170 = sbr.rel (%p168) target = $region28
      $region27: #{_lambda_.15} parent=23 // pred_region
        %p171 = scmp.lt.s32.totalorder %s16, 1
        %s172 = scalar_select %p171, %s16, 1
        %s173 = smul.addr %s172, 40
        %s174 = smul.addr %s173, 4
        %s175 = scalar_lea.vmem %s0, %s174
      $region28: #{_lambda_.15} parent=23 // pred_fallthru
        _
    $region24: #{_lambda_.15} parent=5 // pred_fallthru
      _
    %p176 = scmp.le.s32.totalorder 1, %s9
    %p177 = scmp.lt.s32.totalorder %s9, 3
    %p178 = pnand %p176, %p177
    %p179 = pneg %p178
    // Predicated region
    $region29: #{_lambda_.15} parent=5 // pred_check
      _
    $region30: #{_lambda_.15} parent=5 // pred_check_branch
      %181 = sbr.rel (%p178) target = $region32
    $region31: #{_lambda_.15} parent=5 // pred_region
      %s182 = ssub.s32 %s9, 1
      %p183 = scmp.lt.s32.totalorder %s19, 1
      %s184 = scalar_select %p183, %s19, 1
      %s185 = smul.addr %s184, 40
      %s186 = smul.addr %s185, 4
      %s187 = scalar_lea.vmem %s0, %s186
      %p188 = pneg %p54
      %p189 = pneg %p51
      %p190 = scmp.lt.s32.totalorder %s20, 0
      %s191 = scalar_select %p190, %s20, 0
      %s192 = smul.addr %s191, 4
      %s193 = scalar_lea.vmem %s1, %s192
      %p194 = pneg %p80
      %p195 = pneg %p77
      %p196 = scmp.lt.s32.totalorder %s20, 0
      %s197 = scalar_select %p196, %s20, 0
      %s198 = scalar_lea.vmem %s2, %s197
      %p199 = pneg %p106
      %p200 = pneg %p103
      %p201 = pneg %p136
      %p202 = pneg %p133
      %s203 = smul.u32 4, %s21
      %p204 = scmp.lt.s32.totalorder %s19, 1
      %s205 = scalar_select %p204, %s19, 1
      %p206 = scmp.lt.s32.totalorder %s203, 3
      %s207 = scalar_select %p206, %s203, 3
      %p208 = scmp.lt.s32.totalorder %s20, 0
      %s209 = scalar_select %p208, %s20, 0
      %s210 = sadd.s32 %s209, %s207
      %s211 = smul.addr %s205, 4
      %s212 = sadd.s32 %s210, %s211
      %s213 = smul.addr %s212, 8
      %s214 = scalar_lea.vmem %s3, %s213
      %p215 = scmp.lt.s32.totalorder %s19, 1
      %s216 = scalar_select %p215, %s19, 1
      %s217 = smul.addr %s216, 40
      %s218 = smul.addr %s217, 4
      %s219 = scalar_lea.vmem %s0, %s218
      %p220 = scmp.lt.s32.totalorder %s20, 0
      %s221 = scalar_select %p220, %s20, 0
      %s222 = smul.addr %s221, 4
      %s223 = scalar_lea.vmem %s1, %s222
      %p224 = scmp.lt.s32.totalorder %s20, 0
      %s225 = scalar_select %p224, %s20, 0
      %s226 = scalar_lea.vmem %s2, %s225
      %s227 = smul.u32 4, %s21
      %p228 = scmp.lt.s32.totalorder %s19, 1
      %s229 = scalar_select %p228, %s19, 1
      %p230 = scmp.lt.s32.totalorder %s227, 3
      %s231 = scalar_select %p230, %s227, 3
      %p232 = scmp.lt.s32.totalorder %s20, 0
      %s233 = scalar_select %p232, %s20, 0
      %s234 = sadd.s32 %s233, %s231
      %s235 = smul.addr %s229, 4
      %s236 = sadd.s32 %s234, %s235
      %s237 = smul.addr %s236, 8
      %s238 = scalar_lea.vmem %s3, %s237
      %s239 = smul.u32 4, %s21
      %s241 = smul.u32 %s21, 2
      %s242 = smul.u32 %s241, 8
      %s243 = smul.addr %s242, 4
      %s244 = scalar_lea.vmem %s219, %s243
      %v245 = vld [vmem:[%s244] sm:$0xff]
      %v246 = vld [vmem:[%s244 + $0x8] sm:$0xff]
      %v247 = vld [vmem:[%s244 + $0x10] sm:$0xff]
      %v248 = vld [vmem:[%s244 + $0x18] sm:$0xff]
      %v249 = vld [vmem:[%s244 + $0x20] sm:$0xff]
      %v250 = vld [vmem:[%s244 + $0x28] sm:$0xff]
      %v251 = vld [vmem:[%s244 + $0x30] sm:$0xff]
      %v252 = vld [vmem:[%s244 + $0x38] sm:$0xff]
      %v253 = vld [vmem:[%s223] sm:$0xf]
      %v254 = vld [vmem:[%s223 + $0x4] sm:$0xf]
      %v255 = vld [vmem:[%s223 + $0x8] sm:$0xf]
      %v256 = vld [vmem:[%s223 + $0xc] sm:$0xf]
      %v257 = vld [vmem:[%s223 + $0x10] sm:$0xf]
      %v258 = vld [vmem:[%s223 + $0x14] sm:$0xf]
      %v259 = vld [vmem:[%s223 + $0x18] sm:$0xf]
      %v260 = vld [vmem:[%s223 + $0x1c] sm:$0xf]
      %v261 = vld [vmem:[%s223 + $0x20] sm:$0xf]
      %v262 = vld [vmem:[%s223 + $0x24] sm:$0xf]
      %v263 = vld [vmem:[%s223 + $0x28] sm:$0xf]
      %v264 = vld [vmem:[%s223 + $0x2c] sm:$0xf]
      %v265 = vld [vmem:[%s223 + $0x30] sm:$0xf]
      %v266 = vld [vmem:[%s223 + $0x34] sm:$0xf]
      %v267 = vld [vmem:[%s223 + $0x38] sm:$0xf]
      %v268 = vld [vmem:[%s223 + $0x3c] sm:$0xf]
      %v269 = vld [vmem:[%s223 + $0x40] sm:$0xf]
      %v270 = vld [vmem:[%s223 + $0x44] sm:$0xf]
      %v271 = vld [vmem:[%s223 + $0x48] sm:$0xf]
      %v272 = vld [vmem:[%s223 + $0x4c] sm:$0xf]
      %v273 = vld [vmem:[%s223 + $0x50] sm:$0xf]
      %v274 = vld [vmem:[%s223 + $0x54] sm:$0xf]
      %v275 = vld [vmem:[%s223 + $0x58] sm:$0xf]
      %v276 = vld [vmem:[%s223 + $0x5c] sm:$0xf]
      %v277 = vld [vmem:[%s223 + $0x60] sm:$0xf]
      %v278 = vld [vmem:[%s223 + $0x64] sm:$0xf]
      %v279 = vld [vmem:[%s223 + $0x68] sm:$0xf]
      %v280 = vld [vmem:[%s223 + $0x6c] sm:$0xf]
      %v281 = vld [vmem:[%s223 + $0x70] sm:$0xf]
      %v282 = vld [vmem:[%s223 + $0x74] sm:$0xf]
      %v283 = vld [vmem:[%s223 + $0x78] sm:$0xf]
      %v284 = vld [vmem:[%s223 + $0x7c] sm:$0xf]
      %v285 = vld [vmem:[%s223 + $0x80] sm:$0xf]
      %v286 = vld [vmem:[%s223 + $0x84] sm:$0xf]
      %v287 = vld [vmem:[%s223 + $0x88] sm:$0xf]
      %v288 = vld [vmem:[%s223 + $0x8c] sm:$0xf]
      %v289 = vld [vmem:[%s223 + $0x90] sm:$0xf]
      %v290 = vld [vmem:[%s223 + $0x94] sm:$0xf]
      %v291 = vld [vmem:[%s223 + $0x98] sm:$0xf]
      %v292 = vld [vmem:[%s223 + $0x9c] sm:$0xf]
      %v293 = vld [vmem:[%s223 + $0xa0] sm:$0xf]
      %v294 = vld [vmem:[%s223 + $0xa4] sm:$0xf]
      %v295 = vld [vmem:[%s223 + $0xa8] sm:$0xf]
      %v296 = vld [vmem:[%s223 + $0xac] sm:$0xf]
      %v297 = vld [vmem:[%s223 + $0xb0] sm:$0xf]
      %v298 = vld [vmem:[%s223 + $0xb4] sm:$0xf]
      %v299 = vld [vmem:[%s223 + $0xb8] sm:$0xf]
      %v300 = vld [vmem:[%s223 + $0xbc] sm:$0xf]
      %v301 = vld [vmem:[%s223 + $0xc0] sm:$0xf]
      %v302 = vld [vmem:[%s223 + $0xc4] sm:$0xf]
      %v303 = vld [vmem:[%s223 + $0xc8] sm:$0xf]
      %v304 = vld [vmem:[%s223 + $0xcc] sm:$0xf]
      %v305 = vld [vmem:[%s223 + $0xd0] sm:$0xf]
      %v306 = vld [vmem:[%s223 + $0xd4] sm:$0xf]
      %v307 = vld [vmem:[%s223 + $0xd8] sm:$0xf]
      %v308 = vld [vmem:[%s223 + $0xdc] sm:$0xf]
      %v309 = vld [vmem:[%s223 + $0xe0] sm:$0xf]
      %v310 = vld [vmem:[%s223 + $0xe4] sm:$0xf]
      %v311 = vld [vmem:[%s223 + $0xe8] sm:$0xf]
      %v312 = vld [vmem:[%s223 + $0xec] sm:$0xf]
      %v313 = vld [vmem:[%s223 + $0xf0] sm:$0xf]
      %v314 = vld [vmem:[%s223 + $0xf4] sm:$0xf]
      %v315 = vld [vmem:[%s223 + $0xf8] sm:$0xf]
      %v316 = vld [vmem:[%s223 + $0xfc] sm:$0xf]
      %s317 = sadd.s32 %s241, 1
      %s318 = smul.u32 %s317, 8
      %s319 = smul.addr %s318, 4
      %s320 = scalar_lea.vmem %s219, %s319
      %v321 = vld [vmem:[%s320] sm:$0xff]
      %v322 = vld [vmem:[%s320 + $0x8] sm:$0xff]
      %v323 = vld [vmem:[%s320 + $0x10] sm:$0xff]
      %v324 = vld [vmem:[%s320 + $0x18] sm:$0xff]
      %v325 = vld [vmem:[%s320 + $0x20] sm:$0xff]
      %v326 = vld [vmem:[%s320 + $0x28] sm:$0xff]
      %v327 = vld [vmem:[%s320 + $0x30] sm:$0xff]
      %v328 = vld [vmem:[%s320 + $0x38] sm:$0xff]
      %s329 = scalar_lea.vmem %s223, 256
      %v330 = vld [vmem:[%s329] sm:$0xf]
      %v331 = vld [vmem:[%s329 + $0x4] sm:$0xf]
      %v332 = vld [vmem:[%s329 + $0x8] sm:$0xf]
      %v333 = vld [vmem:[%s329 + $0xc] sm:$0xf]
      %v334 = vld [vmem:[%s329 + $0x10] sm:$0xf]
      %v335 = vld [vmem:[%s329 + $0x14] sm:$0xf]
      %v336 = vld [vmem:[%s329 + $0x18] sm:$0xf]
      %v337 = vld [vmem:[%s329 + $0x1c] sm:$0xf]
      %v338 = vld [vmem:[%s329 + $0x20] sm:$0xf]
      %v339 = vld [vmem:[%s329 + $0x24] sm:$0xf]
      %v340 = vld [vmem:[%s329 + $0x28] sm:$0xf]
      %v341 = vld [vmem:[%s329 + $0x2c] sm:$0xf]
      %v342 = vld [vmem:[%s329 + $0x30] sm:$0xf]
      %v343 = vld [vmem:[%s329 + $0x34] sm:$0xf]
      %v344 = vld [vmem:[%s329 + $0x38] sm:$0xf]
      %v345 = vld [vmem:[%s329 + $0x3c] sm:$0xf]
      %v346 = vld [vmem:[%s329 + $0x40] sm:$0xf]
      %v347 = vld [vmem:[%s329 + $0x44] sm:$0xf]
      %v348 = vld [vmem:[%s329 + $0x48] sm:$0xf]
      %v349 = vld [vmem:[%s329 + $0x4c] sm:$0xf]
      %v350 = vld [vmem:[%s329 + $0x50] sm:$0xf]
      %v351 = vld [vmem:[%s329 + $0x54] sm:$0xf]
      %v352 = vld [vmem:[%s329 + $0x58] sm:$0xf]
      %v353 = vld [vmem:[%s329 + $0x5c] sm:$0xf]
      %v354 = vld [vmem:[%s329 + $0x60] sm:$0xf]
      %v355 = vld [vmem:[%s329 + $0x64] sm:$0xf]
      %v356 = vld [vmem:[%s329 + $0x68] sm:$0xf]
      %v357 = vld [vmem:[%s329 + $0x6c] sm:$0xf]
      %v358 = vld [vmem:[%s329 + $0x70] sm:$0xf]
      %v359 = vld [vmem:[%s329 + $0x74] sm:$0xf]
      %v360 = vld [vmem:[%s329 + $0x78] sm:$0xf]
      %v361 = vld [vmem:[%s329 + $0x7c] sm:$0xf]
      %v362 = vld [vmem:[%s329 + $0x80] sm:$0xf]
      %v363 = vld [vmem:[%s329 + $0x84] sm:$0xf]
      %v364 = vld [vmem:[%s329 + $0x88] sm:$0xf]
      %v365 = vld [vmem:[%s329 + $0x8c] sm:$0xf]
      %v366 = vld [vmem:[%s329 + $0x90] sm:$0xf]
      %v367 = vld [vmem:[%s329 + $0x94] sm:$0xf]
      %v368 = vld [vmem:[%s329 + $0x98] sm:$0xf]
      %v369 = vld [vmem:[%s329 + $0x9c] sm:$0xf]
      %v370 = vld [vmem:[%s329 + $0xa0] sm:$0xf]
      %v371 = vld [vmem:[%s329 + $0xa4] sm:$0xf]
      %v372 = vld [vmem:[%s329 + $0xa8] sm:$0xf]
      %v373 = vld [vmem:[%s329 + $0xac] sm:$0xf]
      %v374 = vld [vmem:[%s329 + $0xb0] sm:$0xf]
      %v375 = vld [vmem:[%s329 + $0xb4] sm:$0xf]
      %v376 = vld [vmem:[%s329 + $0xb8] sm:$0xf]
      %v377 = vld [vmem:[%s329 + $0xbc] sm:$0xf]
      %v378 = vld [vmem:[%s329 + $0xc0] sm:$0xf]
      %v379 = vld [vmem:[%s329 + $0xc4] sm:$0xf]
      %v380 = vld [vmem:[%s329 + $0xc8] sm:$0xf]
      %v381 = vld [vmem:[%s329 + $0xcc] sm:$0xf]
      %v382 = vld [vmem:[%s329 + $0xd0] sm:$0xf]
      %v383 = vld [vmem:[%s329 + $0xd4] sm:$0xf]
      %v384 = vld [vmem:[%s329 + $0xd8] sm:$0xf]
      %v385 = vld [vmem:[%s329 + $0xdc] sm:$0xf]
      %v386 = vld [vmem:[%s329 + $0xe0] sm:$0xf]
      %v387 = vld [vmem:[%s329 + $0xe4] sm:$0xf]
      %v388 = vld [vmem:[%s329 + $0xe8] sm:$0xf]
      %v389 = vld [vmem:[%s329 + $0xec] sm:$0xf]
      %v390 = vld [vmem:[%s329 + $0xf0] sm:$0xf]
      %v391 = vld [vmem:[%s329 + $0xf4] sm:$0xf]
      %v392 = vld [vmem:[%s329 + $0xf8] sm:$0xf]
      %v393 = vld [vmem:[%s329 + $0xfc] sm:$0xf]
      %v402 = vunpack.c.l.b16 %v321
      %v403 = vunpack.c.h.b16 %v321
      %v404 = vunpack.c.l.b16 %v322
      %v405 = vunpack.c.h.b16 %v322
      %v406 = vunpack.c.l.b16 %v323
      %v407 = vunpack.c.h.b16 %v323
      %v408 = vunpack.c.l.b16 %v324
      %v409 = vunpack.c.h.b16 %v324
      %v410 = vunpack.c.l.b16 %v325
      %v411 = vunpack.c.h.b16 %v325
      %v412 = vunpack.c.l.b16 %v326
      %v413 = vunpack.c.h.b16 %v326
      %v414 = vunpack.c.l.b16 %v327
      %v415 = vunpack.c.h.b16 %v327
      %v416 = vunpack.c.l.b16 %v328
      %v417 = vunpack.c.h.b16 %v328
      %v418 = vpack.c.b16 %v406, %v402
      %v419 = vpack.c.b16 %v407, %v403
      %v420 = vpack.c.b16 %v408, %v404
      %v421 = vpack.c.b16 %v409, %v405
      %v422 = vpack.c.b16 %v414, %v410
      %v423 = vpack.c.b16 %v415, %v411
      %v424 = vpack.c.b16 %v416, %v412
      %v425 = vpack.c.b16 %v417, %v413
      %v498 = vunpack.c.l.b16 %v330
      %v499 = vunpack.c.l.b16 %v331
      %v500 = vunpack.c.l.b16 %v332
      %v501 = vunpack.c.l.b16 %v333
      %v502 = vunpack.c.l.b16 %v334
      %v503 = vunpack.c.l.b16 %v335
      %v504 = vunpack.c.l.b16 %v336
      %v505 = vunpack.c.l.b16 %v337
      %v506 = vunpack.c.l.b16 %v338
      %v507 = vunpack.c.l.b16 %v339
      %v508 = vunpack.c.l.b16 %v340
      %v509 = vunpack.c.l.b16 %v341
      %v510 = vunpack.c.l.b16 %v342
      %v511 = vunpack.c.l.b16 %v343
      %v512 = vunpack.c.l.b16 %v344
      %v513 = vunpack.c.l.b16 %v345
      %v514 = vunpack.c.l.b16 %v346
      %v515 = vunpack.c.l.b16 %v347
      %v516 = vunpack.c.l.b16 %v348
      %v517 = vunpack.c.l.b16 %v349
      %v518 = vunpack.c.l.b16 %v350
      %v519 = vunpack.c.l.b16 %v351
      %v520 = vunpack.c.l.b16 %v352
      %v521 = vunpack.c.l.b16 %v353
      %v522 = vunpack.c.l.b16 %v354
      %v523 = vunpack.c.l.b16 %v355
      %v524 = vunpack.c.l.b16 %v356
      %v525 = vunpack.c.l.b16 %v357
      %v526 = vunpack.c.l.b16 %v358
      %v527 = vunpack.c.l.b16 %v359
      %v528 = vunpack.c.l.b16 %v360
      %v529 = vunpack.c.l.b16 %v361
      %v530 = vunpack.c.l.b16 %v362
      %v531 = vunpack.c.l.b16 %v363
      %v532 = vunpack.c.l.b16 %v364
      %v533 = vunpack.c.l.b16 %v365
      %v534 = vunpack.c.l.b16 %v366
      %v535 = vunpack.c.l.b16 %v367
      %v536 = vunpack.c.l.b16 %v368
      %v537 = vunpack.c.l.b16 %v369
      %v538 = vunpack.c.l.b16 %v370
      %v539 = vunpack.c.l.b16 %v371
      %v540 = vunpack.c.l.b16 %v372
      %v541 = vunpack.c.l.b16 %v373
      %v542 = vunpack.c.l.b16 %v374
      %v543 = vunpack.c.l.b16 %v375
      %v544 = vunpack.c.l.b16 %v376
      %v545 = vunpack.c.l.b16 %v377
      %v546 = vunpack.c.l.b16 %v378
      %v547 = vunpack.c.l.b16 %v379
      %v548 = vunpack.c.l.b16 %v380
      %v549 = vunpack.c.l.b16 %v381
      %v550 = vunpack.c.l.b16 %v382
      %v551 = vunpack.c.l.b16 %v383
      %v552 = vunpack.c.l.b16 %v384
      %v553 = vunpack.c.l.b16 %v385
      %v554 = vunpack.c.l.b16 %v386
      %v555 = vunpack.c.l.b16 %v387
      %v556 = vunpack.c.l.b16 %v388
      %v557 = vunpack.c.l.b16 %v389
      %v558 = vunpack.c.l.b16 %v390
      %v559 = vunpack.c.l.b16 %v391
      %v560 = vunpack.c.l.b16 %v392
      %v561 = vunpack.c.l.b16 %v393
      %v562 = vpack.c.b16 %v499, %v498
      %v563 = vpack.c.b16 %v501, %v500
      %v564 = vpack.c.b16 %v503, %v502
      %v565 = vpack.c.b16 %v505, %v504
      %v566 = vpack.c.b16 %v507, %v506
      %v567 = vpack.c.b16 %v509, %v508
      %v568 = vpack.c.b16 %v511, %v510
      %v569 = vpack.c.b16 %v513, %v512
      %v570 = vpack.c.b16 %v515, %v514
      %v571 = vpack.c.b16 %v517, %v516
      %v572 = vpack.c.b16 %v519, %v518
      %v573 = vpack.c.b16 %v521, %v520
      %v574 = vpack.c.b16 %v523, %v522
      %v575 = vpack.c.b16 %v525, %v524
      %v576 = vpack.c.b16 %v527, %v526
      %v577 = vpack.c.b16 %v529, %v528
      %v578 = vpack.c.b16 %v531, %v530
      %v579 = vpack.c.b16 %v533, %v532
      %v580 = vpack.c.b16 %v535, %v534
      %v581 = vpack.c.b16 %v537, %v536
      %v582 = vpack.c.b16 %v539, %v538
      %v583 = vpack.c.b16 %v541, %v540
      %v584 = vpack.c.b16 %v543, %v542
      %v585 = vpack.c.b16 %v545, %v544
      %v586 = vpack.c.b16 %v547, %v546
      %v587 = vpack.c.b16 %v549, %v548
      %v588 = vpack.c.b16 %v551, %v550
      %v589 = vpack.c.b16 %v553, %v552
      %v590 = vpack.c.b16 %v555, %v554
      %v591 = vpack.c.b16 %v557, %v556
      %v592 = vpack.c.b16 %v559, %v558
      %v593 = vpack.c.b16 %v561, %v560
      %626 = vmatprep.subr.bf16.mxu0 0
      %627 = vmatpush1.bf16.msra.mxu0 %v562
      %628 = vmatprep.subr.bf16.mxu0 0
      %629 = vmatpush1.bf16.msra.mxu0 %v563
      %630 = vmatprep.subr.bf16.mxu0 0
      %631 = vmatpush1.bf16.msra.mxu0 %v564
      %632 = vmatprep.subr.bf16.mxu0 0
      %633 = vmatpush1.bf16.msra.mxu0 %v565
      %634 = vmatprep.subr.bf16.mxu0 0
      %635 = vmatpush1.bf16.msra.mxu0 %v566
      %636 = vmatprep.subr.bf16.mxu0 0
      %637 = vmatpush1.bf16.msra.mxu0 %v567
      %638 = vmatprep.subr.bf16.mxu0 0
      %639 = vmatpush1.bf16.msra.mxu0 %v568
      %640 = vmatprep.subr.bf16.mxu0 0
      %641 = vmatpush1.bf16.msra.mxu0 %v569
      %642 = vmatprep.subr.bf16.mxu0 0
      %643 = vmatpush1.bf16.msra.mxu0 %v570
      %644 = vmatprep.subr.bf16.mxu0 0
      %645 = vmatpush1.bf16.msra.mxu0 %v571
      %646 = vmatprep.subr.bf16.mxu0 0
      %647 = vmatpush1.bf16.msra.mxu0 %v572
      %648 = vmatprep.subr.bf16.mxu0 0
      %649 = vmatpush1.bf16.msra.mxu0 %v573
      %650 = vmatprep.subr.bf16.mxu0 0
      %651 = vmatpush1.bf16.msra.mxu0 %v574
      %652 = vmatprep.subr.bf16.mxu0 0
      %653 = vmatpush1.bf16.msra.mxu0 %v575
      %654 = vmatprep.subr.bf16.mxu0 0
      %655 = vmatpush1.bf16.msra.mxu0 %v576
      %656 = vmatprep.subr.bf16.mxu0 0
      %657 = vmatpush1.bf16.msra.mxu0 %v577
      %658 = vmatprep.mubr.bf16.mxu0 %v419
      %659 = vmatmul.mubr.bf16.gmra.mrb[0].mxu0 %v418
      %v660 = vpop.f32.mrb[0].mxu0
      %v661 = vadd.f32 0.0, %v660
      %v662 = vpop.f32.mrb[0].mxu0
      %v663 = vpop.f32.mrb[0].mxu0
      %v664 = vadd.f32 0.0, %v663
      %v665 = vpop.f32.mrb[0].mxu0
      %666 = vmatprep.mubr.bf16.mxu0 %v423
      %667 = vmatmul.mubr.bf16.gmra.mrb[0].mxu0 %v422
      %v668 = vpop.f32.mrb[0].mxu0
      %v669 = vadd.f32 0.0, %v668
      %v670 = vpop.f32.mrb[0].mxu0
      %v671 = vpop.f32.mrb[0].mxu0
      %v672 = vadd.f32 0.0, %v671
      %v673 = vpop.f32.mrb[0].mxu0
      %674 = vdwg.mxu0
      %675 = vmatprep.subr.bf16.mxu0 0
      %676 = vmatpush1.bf16.msra.mxu0 %v578
      %677 = vmatprep.subr.bf16.mxu0 0
      %678 = vmatpush1.bf16.msra.mxu0 %v579
      %679 = vmatprep.subr.bf16.mxu0 0
      %680 = vmatpush1.bf16.msra.mxu0 %v580
      %681 = vmatprep.subr.bf16.mxu0 0
      %682 = vmatpush1.bf16.msra.mxu0 %v581
      %683 = vmatprep.subr.bf16.mxu0 0
      %684 = vmatpush1.bf16.msra.mxu0 %v582
      %685 = vmatprep.subr.bf16.mxu0 0
      %686 = vmatpush1.bf16.msra.mxu0 %v583
      %687 = vmatprep.subr.bf16.mxu0 0
      %688 = vmatpush1.bf16.msra.mxu0 %v584
      %689 = vmatprep.subr.bf16.mxu0 0
      %690 = vmatpush1.bf16.msra.mxu0 %v585
      %691 = vmatprep.subr.bf16.mxu0 0
      %692 = vmatpush1.bf16.msra.mxu0 %v586
      %693 = vmatprep.subr.bf16.mxu0 0
      %694 = vmatpush1.bf16.msra.mxu0 %v587
      %695 = vmatprep.subr.bf16.mxu0 0
      %696 = vmatpush1.bf16.msra.mxu0 %v588
      %697 = vmatprep.subr.bf16.mxu0 0
      %698 = vmatpush1.bf16.msra.mxu0 %v589
      %699 = vmatprep.subr.bf16.mxu0 0
      %700 = vmatpush1.bf16.msra.mxu0 %v590
      %701 = vmatprep.subr.bf16.mxu0 0
      %702 = vmatpush1.bf16.msra.mxu0 %v591
      %703 = vmatprep.subr.bf16.mxu0 0
      %704 = vmatpush1.bf16.msra.mxu0 %v592
      %705 = vmatprep.subr.bf16.mxu0 0
      %706 = vmatpush1.bf16.msra.mxu0 %v593
      %707 = vmatprep.mubr.bf16.mxu0 %v421
      %708 = vmatmul.mubr.bf16.gmra.mrb[0].mxu0 %v420
      %v709 = vpop.f32.mrb[0].mxu0
      %v710 = vadd.f32 %v661, %v709
      %v711 = vpop.f32.mrb[0].mxu0
      %v712 = vpop.f32.mrb[0].mxu0
      %v713 = vadd.f32 %v664, %v712
      %v714 = vpop.f32.mrb[0].mxu0
      %715 = vmatprep.mubr.bf16.mxu0 %v425
      %716 = vmatmul.mubr.bf16.gmra.mrb[0].mxu0 %v424
      %v717 = vpop.f32.mrb[0].mxu0
      %v718 = vadd.f32 %v669, %v717
      %v719 = vpop.f32.mrb[0].mxu0
      %v720 = vpop.f32.mrb[0].mxu0
      %v721 = vadd.f32 %v672, %v720
      %v722 = vpop.f32.mrb[0].mxu0
      %723 = vdwg.mxu0
      %v732 = vunpack.c.l.b16 %v245
      %v733 = vunpack.c.h.b16 %v245
      %v734 = vunpack.c.l.b16 %v246
      %v735 = vunpack.c.h.b16 %v246
      %v736 = vunpack.c.l.b16 %v247
      %v737 = vunpack.c.h.b16 %v247
      %v738 = vunpack.c.l.b16 %v248
      %v739 = vunpack.c.h.b16 %v248
      %v740 = vunpack.c.l.b16 %v249
      %v741 = vunpack.c.h.b16 %v249
      %v742 = vunpack.c.l.b16 %v250
      %v743 = vunpack.c.h.b16 %v250
      %v744 = vunpack.c.l.b16 %v251
      %v745 = vunpack.c.h.b16 %v251
      %v746 = vunpack.c.l.b16 %v252
      %v747 = vunpack.c.h.b16 %v252
      %v748 = vpack.c.b16 %v736, %v732
      %v749 = vpack.c.b16 %v737, %v733
      %v750 = vpack.c.b16 %v738, %v734
      %v751 = vpack.c.b16 %v739, %v735
      %v752 = vpack.c.b16 %v744, %v740
      %v753 = vpack.c.b16 %v745, %v741
      %v754 = vpack.c.b16 %v746, %v742
      %v755 = vpack.c.b16 %v747, %v743
      %v828 = vunpack.c.l.b16 %v253
      %v829 = vunpack.c.l.b16 %v254
      %v830 = vunpack.c.l.b16 %v255
      %v831 = vunpack.c.l.b16 %v256
      %v832 = vunpack.c.l.b16 %v257
      %v833 = vunpack.c.l.b16 %v258
      %v834 = vunpack.c.l.b16 %v259
      %v835 = vunpack.c.l.b16 %v260
      %v836 = vunpack.c.l.b16 %v261
      %v837 = vunpack.c.l.b16 %v262
      %v838 = vunpack.c.l.b16 %v263
      %v839 = vunpack.c.l.b16 %v264
      %v840 = vunpack.c.l.b16 %v265
      %v841 = vunpack.c.l.b16 %v266
      %v842 = vunpack.c.l.b16 %v267
      %v843 = vunpack.c.l.b16 %v268
      %v844 = vunpack.c.l.b16 %v269
      %v845 = vunpack.c.l.b16 %v270
      %v846 = vunpack.c.l.b16 %v271
      %v847 = vunpack.c.l.b16 %v272
      %v848 = vunpack.c.l.b16 %v273
      %v849 = vunpack.c.l.b16 %v274
      %v850 = vunpack.c.l.b16 %v275
      %v851 = vunpack.c.l.b16 %v276
      %v852 = vunpack.c.l.b16 %v277
      %v853 = vunpack.c.l.b16 %v278
      %v854 = vunpack.c.l.b16 %v279
      %v855 = vunpack.c.l.b16 %v280
      %v856 = vunpack.c.l.b16 %v281
      %v857 = vunpack.c.l.b16 %v282
      %v858 = vunpack.c.l.b16 %v283
      %v859 = vunpack.c.l.b16 %v284
      %v860 = vunpack.c.l.b16 %v285
      %v861 = vunpack.c.l.b16 %v286
      %v862 = vunpack.c.l.b16 %v287
      %v863 = vunpack.c.l.b16 %v288
      %v864 = vunpack.c.l.b16 %v289
      %v865 = vunpack.c.l.b16 %v290
      %v866 = vunpack.c.l.b16 %v291
      %v867 = vunpack.c.l.b16 %v292
      %v868 = vunpack.c.l.b16 %v293
      %v869 = vunpack.c.l.b16 %v294
      %v870 = vunpack.c.l.b16 %v295
      %v871 = vunpack.c.l.b16 %v296
      %v872 = vunpack.c.l.b16 %v297
      %v873 = vunpack.c.l.b16 %v298
      %v874 = vunpack.c.l.b16 %v299
      %v875 = vunpack.c.l.b16 %v300
      %v876 = vunpack.c.l.b16 %v301
      %v877 = vunpack.c.l.b16 %v302
      %v878 = vunpack.c.l.b16 %v303
      %v879 = vunpack.c.l.b16 %v304
      %v880 = vunpack.c.l.b16 %v305
      %v881 = vunpack.c.l.b16 %v306
      %v882 = vunpack.c.l.b16 %v307
      %v883 = vunpack.c.l.b16 %v308
      %v884 = vunpack.c.l.b16 %v309
      %v885 = vunpack.c.l.b16 %v310
      %v886 = vunpack.c.l.b16 %v311
      %v887 = vunpack.c.l.b16 %v312
      %v888 = vunpack.c.l.b16 %v313
      %v889 = vunpack.c.l.b16 %v314
      %v890 = vunpack.c.l.b16 %v315
      %v891 = vunpack.c.l.b16 %v316
      %v892 = vpack.c.b16 %v829, %v828
      %v893 = vpack.c.b16 %v831, %v830
      %v894 = vpack.c.b16 %v833, %v832
      %v895 = vpack.c.b16 %v835, %v834
      %v896 = vpack.c.b16 %v837, %v836
      %v897 = vpack.c.b16 %v839, %v838
      %v898 = vpack.c.b16 %v841, %v840
      %v899 = vpack.c.b16 %v843, %v842
      %v900 = vpack.c.b16 %v845, %v844
      %v901 = vpack.c.b16 %v847, %v846
      %v902 = vpack.c.b16 %v849, %v848
      %v903 = vpack.c.b16 %v851, %v850
      %v904 = vpack.c.b16 %v853, %v852
      %v905 = vpack.c.b16 %v855, %v854
      %v906 = vpack.c.b16 %v857, %v856
      %v907 = vpack.c.b16 %v859, %v858
      %v908 = vpack.c.b16 %v861, %v860
      %v909 = vpack.c.b16 %v863, %v862
      %v910 = vpack.c.b16 %v865, %v864
      %v911 = vpack.c.b16 %v867, %v866
      %v912 = vpack.c.b16 %v869, %v868
      %v913 = vpack.c.b16 %v871, %v870
      %v914 = vpack.c.b16 %v873, %v872
      %v915 = vpack.c.b16 %v875, %v874
      %v916 = vpack.c.b16 %v877, %v876
      %v917 = vpack.c.b16 %v879, %v878
      %v918 = vpack.c.b16 %v881, %v880
      %v919 = vpack.c.b16 %v883, %v882
      %v920 = vpack.c.b16 %v885, %v884
      %v921 = vpack.c.b16 %v887, %v886
      %v922 = vpack.c.b16 %v889, %v888
      %v923 = vpack.c.b16 %v891, %v890
      %956 = vmatprep.subr.bf16.mxu0 0
      %957 = vmatpush1.bf16.msra.mxu0 %v892
      %958 = vmatprep.subr.bf16.mxu0 0
      %959 = vmatpush1.bf16.msra.mxu0 %v893
      %960 = vmatprep.subr.bf16.mxu0 0
      %961 = vmatpush1.bf16.msra.mxu0 %v894
      %962 = vmatprep.subr.bf16.mxu0 0
      %963 = vmatpush1.bf16.msra.mxu0 %v895
      %964 = vmatprep.subr.bf16.mxu0 0
      %965 = vmatpush1.bf16.msra.mxu0 %v896
      %966 = vmatprep.subr.bf16.mxu0 0
      %967 = vmatpush1.bf16.msra.mxu0 %v897
      %968 = vmatprep.subr.bf16.mxu0 0
      %969 = vmatpush1.bf16.msra.mxu0 %v898
      %970 = vmatprep.subr.bf16.mxu0 0
      %971 = vmatpush1.bf16.msra.mxu0 %v899
      %972 = vmatprep.subr.bf16.mxu0 0
      %973 = vmatpush1.bf16.msra.mxu0 %v900
      %974 = vmatprep.subr.bf16.mxu0 0
      %975 = vmatpush1.bf16.msra.mxu0 %v901
      %976 = vmatprep.subr.bf16.mxu0 0
      %977 = vmatpush1.bf16.msra.mxu0 %v902
      %978 = vmatprep.subr.bf16.mxu0 0
      %979 = vmatpush1.bf16.msra.mxu0 %v903
      %980 = vmatprep.subr.bf16.mxu0 0
      %981 = vmatpush1.bf16.msra.mxu0 %v904
      %982 = vmatprep.subr.bf16.mxu0 0
      %983 = vmatpush1.bf16.msra.mxu0 %v905
      %984 = vmatprep.subr.bf16.mxu0 0
      %985 = vmatpush1.bf16.msra.mxu0 %v906
      %986 = vmatprep.subr.bf16.mxu0 0
      %987 = vmatpush1.bf16.msra.mxu0 %v907
      %988 = vmatprep.mubr.bf16.mxu0 %v749
      %989 = vmatmul.mubr.bf16.gmra.mrb[0].mxu0 %v748
      %v990 = vpop.f32.mrb[0].mxu0
      %v991 = vadd.f32 %v710, %v990
      %v992 = vpop.f32.mrb[0].mxu0
      %v993 = vpop.f32.mrb[0].mxu0
      %v994 = vadd.f32 %v713, %v993
      %v995 = vpop.f32.mrb[0].mxu0
      %996 = vmatprep.mubr.bf16.mxu0 %v753
      %997 = vmatmul.mubr.bf16.gmra.mrb[0].mxu0 %v752
      %v998 = vpop.f32.mrb[0].mxu0
      %v999 = vadd.f32 %v718, %v998
      %v1000 = vpop.f32.mrb[0].mxu0
      %v1001 = vpop.f32.mrb[0].mxu0
      %v1002 = vadd.f32 %v721, %v1001
      %v1003 = vpop.f32.mrb[0].mxu0
      %1004 = vdwg.mxu0
      %1005 = vmatprep.subr.bf16.mxu0 0
      %1006 = vmatpush1.bf16.msra.mxu0 %v908
      %1007 = vmatprep.subr.bf16.mxu0 0
      %1008 = vmatpush1.bf16.msra.mxu0 %v909
      %1009 = vmatprep.subr.bf16.mxu0 0
      %1010 = vmatpush1.bf16.msra.mxu0 %v910
      %1011 = vmatprep.subr.bf16.mxu0 0
      %1012 = vmatpush1.bf16.msra.mxu0 %v911
      %1013 = vmatprep.subr.bf16.mxu0 0
      %1014 = vmatpush1.bf16.msra.mxu0 %v912
      %1015 = vmatprep.subr.bf16.mxu0 0
      %1016 = vmatpush1.bf16.msra.mxu0 %v913
      %1017 = vmatprep.subr.bf16.mxu0 0
      %1018 = vmatpush1.bf16.msra.mxu0 %v914
      %1019 = vmatprep.subr.bf16.mxu0 0
      %1020 = vmatpush1.bf16.msra.mxu0 %v915
      %1021 = vmatprep.subr.bf16.mxu0 0
      %1022 = vmatpush1.bf16.msra.mxu0 %v916
      %1023 = vmatprep.subr.bf16.mxu0 0
      %1024 = vmatpush1.bf16.msra.mxu0 %v917
      %1025 = vmatprep.subr.bf16.mxu0 0
      %1026 = vmatpush1.bf16.msra.mxu0 %v918
      %1027 = vmatprep.subr.bf16.mxu0 0
      %1028 = vmatpush1.bf16.msra.mxu0 %v919
      %1029 = vmatprep.subr.bf16.mxu0 0
      %1030 = vmatpush1.bf16.msra.mxu0 %v920
      %1031 = vmatprep.subr.bf16.mxu0 0
      %1032 = vmatpush1.bf16.msra.mxu0 %v921
      %1033 = vmatprep.subr.bf16.mxu0 0
      %1034 = vmatpush1.bf16.msra.mxu0 %v922
      %1035 = vmatprep.subr.bf16.mxu0 0
      %1036 = vmatpush1.bf16.msra.mxu0 %v923
      %1037 = vmatprep.mubr.bf16.mxu0 %v751
      %1038 = vmatmul.mubr.bf16.gmra.mrb[0].mxu0 %v750
      %v1039 = vpop.f32.mrb[0].mxu0
      %v1040 = vadd.f32 %v991, %v1039
      %v1041 = vpop.f32.mrb[0].mxu0
      %v1042 = vpop.f32.mrb[0].mxu0
      %v1043 = vadd.f32 %v994, %v1042
      %v1044 = vpop.f32.mrb[0].mxu0
      %1045 = vmatprep.mubr.bf16.mxu0 %v755
      %1046 = vmatmul.mubr.bf16.gmra.mrb[0].mxu0 %v754
      %v1047 = vpop.f32.mrb[0].mxu0
      %v1048 = vadd.f32 %v999, %v1047
      %v1049 = vpop.f32.mrb[0].mxu0
      %v1050 = vpop.f32.mrb[0].mxu0
      %v1051 = vadd.f32 %v1002, %v1050
      %v1052 = vpop.f32.mrb[0].mxu0
      %1053 = vdwg.mxu0
      %s1054 = sadd.s32 %s241, 2
      %s1055 = smul.u32 %s1054, 8
      %s1056 = smul.addr %s1055, 4
      %s1057 = scalar_lea.vmem %s219, %s1056
      %v1058 = vld [vmem:[%s1057] sm:$0xff]
      %v1059 = vld [vmem:[%s1057 + $0x8] sm:$0xff]
      %v1060 = vld [vmem:[%s1057 + $0x10] sm:$0xff]
      %v1061 = vld [vmem:[%s1057 + $0x18] sm:$0xff]
      %v1062 = vld [vmem:[%s1057 + $0x20] sm:$0xff]
      %v1063 = vld [vmem:[%s1057 + $0x28] sm:$0xff]
      %v1064 = vld [vmem:[%s1057 + $0x30] sm:$0xff]
      %v1065 = vld [vmem:[%s1057 + $0x38] sm:$0xff]
      %s1066 = scalar_lea.vmem %s223, 512
      %v1067 = vld [vmem:[%s1066] sm:$0xf]
      %v1068 = vld [vmem:[%s1066 + $0x4] sm:$0xf]
      %v1069 = vld [vmem:[%s1066 + $0x8] sm:$0xf]
      %v1070 = vld [vmem:[%s1066 + $0xc] sm:$0xf]
      %v1071 = vld [vmem:[%s1066 + $0x10] sm:$0xf]
      %v1072 = vld [vmem:[%s1066 + $0x14] sm:$0xf]
      %v1073 = vld [vmem:[%s1066 + $0x18] sm:$0xf]
      %v1074 = vld [vmem:[%s1066 + $0x1c] sm:$0xf]
      %v1075 = vld [vmem:[%s1066 + $0x20] sm:$0xf]
      %v1076 = vld [vmem:[%s1066 + $0x24] sm:$0xf]
      %v1077 = vld [vmem:[%s1066 + $0x28] sm:$0xf]
      %v1078 = vld [vmem:[%s1066 + $0x2c] sm:$0xf]
      %v1079 = vld [vmem:[%s1066 + $0x30] sm:$0xf]
      %v1080 = vld [vmem:[%s1066 + $0x34] sm:$0xf]
      %v1081 = vld [vmem:[%s1066 + $0x38] sm:$0xf]
      %v1082 = vld [vmem:[%s1066 + $0x3c] sm:$0xf]
      %v1083 = vld [vmem:[%s1066 + $0x40] sm:$0xf]
      %v1084 = vld [vmem:[%s1066 + $0x44] sm:$0xf]
      %v1085 = vld [vmem:[%s1066 + $0x48] sm:$0xf]
      %v1086 = vld [vmem:[%s1066 + $0x4c] sm:$0xf]
      %v1087 = vld [vmem:[%s1066 + $0x50] sm:$0xf]
      %v1088 = vld [vmem:[%s1066 + $0x54] sm:$0xf]
      %v1089 = vld [vmem:[%s1066 + $0x58] sm:$0xf]
      %v1090 = vld [vmem:[%s1066 + $0x5c] sm:$0xf]
      %v1091 = vld [vmem:[%s1066 + $0x60] sm:$0xf]
      %v1092 = vld [vmem:[%s1066 + $0x64] sm:$0xf]
      %v1093 = vld [vmem:[%s1066 + $0x68] sm:$0xf]
      %v1094 = vld [vmem:[%s1066 + $0x6c] sm:$0xf]
      %v1095 = vld [vmem:[%s1066 + $0x70] sm:$0xf]
      %v1096 = vld [vmem:[%s1066 + $0x74] sm:$0xf]
      %v1097 = vld [vmem:[%s1066 + $0x78] sm:$0xf]
      %v1098 = vld [vmem:[%s1066 + $0x7c] sm:$0xf]
      %v1099 = vld [vmem:[%s1066 + $0x80] sm:$0xf]
      %v1100 = vld [vmem:[%s1066 + $0x84] sm:$0xf]
      %v1101 = vld [vmem:[%s1066 + $0x88] sm:$0xf]
      %v1102 = vld [vmem:[%s1066 + $0x8c] sm:$0xf]
      %v1103 = vld [vmem:[%s1066 + $0x90] sm:$0xf]
      %v1104 = vld [vmem:[%s1066 + $0x94] sm:$0xf]
      %v1105 = vld [vmem:[%s1066 + $0x98] sm:$0xf]
      %v1106 = vld [vmem:[%s1066 + $0x9c] sm:$0xf]
      %v1107 = vld [vmem:[%s1066 + $0xa0] sm:$0xf]
      %v1108 = vld [vmem:[%s1066 + $0xa4] sm:$0xf]
      %v1109 = vld [vmem:[%s1066 + $0xa8] sm:$0xf]
      %v1110 = vld [vmem:[%s1066 + $0xac] sm:$0xf]
      %v1111 = vld [vmem:[%s1066 + $0xb0] sm:$0xf]
      %v1112 = vld [vmem:[%s1066 + $0xb4] sm:$0xf]
      %v1113 = vld [vmem:[%s1066 + $0xb8] sm:$0xf]
      %v1114 = vld [vmem:[%s1066 + $0xbc] sm:$0xf]
      %v1115 = vld [vmem:[%s1066 + $0xc0] sm:$0xf]
      %v1116 = vld [vmem:[%s1066 + $0xc4] sm:$0xf]
      %v1117 = vld [vmem:[%s1066 + $0xc8] sm:$0xf]
      %v1118 = vld [vmem:[%s1066 + $0xcc] sm:$0xf]
      %v1119 = vld [vmem:[%s1066 + $0xd0] sm:$0xf]
      %v1120 = vld [vmem:[%s1066 + $0xd4] sm:$0xf]
      %v1121 = vld [vmem:[%s1066 + $0xd8] sm:$0xf]
      %v1122 = vld [vmem:[%s1066 + $0xdc] sm:$0xf]
      %v1123 = vld [vmem:[%s1066 + $0xe0] sm:$0xf]
      %v1124 = vld [vmem:[%s1066 + $0xe4] sm:$0xf]
      %v1125 = vld [vmem:[%s1066 + $0xe8] sm:$0xf]
      %v1126 = vld [vmem:[%s1066 + $0xec] sm:$0xf]
      %v1127 = vld [vmem:[%s1066 + $0xf0] sm:$0xf]
      %v1128 = vld [vmem:[%s1066 + $0xf4] sm:$0xf]
      %v1129 = vld [vmem:[%s1066 + $0xf8] sm:$0xf]
      %v1130 = vld [vmem:[%s1066 + $0xfc] sm:$0xf]
      %v1139 = vunpack.c.l.b16 %v1058
      %v1140 = vunpack.c.h.b16 %v1058
      %v1141 = vunpack.c.l.b16 %v1059
      %v1142 = vunpack.c.h.b16 %v1059
      %v1143 = vunpack.c.l.b16 %v1060
      %v1144 = vunpack.c.h.b16 %v1060
      %v1145 = vunpack.c.l.b16 %v1061
      %v1146 = vunpack.c.h.b16 %v1061
      %v1147 = vunpack.c.l.b16 %v1062
      %v1148 = vunpack.c.h.b16 %v1062
      %v1149 = vunpack.c.l.b16 %v1063
      %v1150 = vunpack.c.h.b16 %v1063
      %v1151 = vunpack.c.l.b16 %v1064
      %v1152 = vunpack.c.h.b16 %v1064
      %v1153 = vunpack.c.l.b16 %v1065
      %v1154 = vunpack.c.h.b16 %v1065
      %v1155 = vpack.c.b16 %v1143, %v1139
      %v1156 = vpack.c.b16 %v1144, %v1140
      %v1157 = vpack.c.b16 %v1145, %v1141
      %v1158 = vpack.c.b16 %v1146, %v1142
      %v1159 = vpack.c.b16 %v1151, %v1147
      %v1160 = vpack.c.b16 %v1152, %v1148
      %v1161 = vpack.c.b16 %v1153, %v1149
      %v1162 = vpack.c.b16 %v1154, %v1150
      %v1235 = vunpack.c.l.b16 %v1067
      %v1236 = vunpack.c.l.b16 %v1068
      %v1237 = vunpack.c.l.b16 %v1069
      %v1238 = vunpack.c.l.b16 %v1070
      %v1239 = vunpack.c.l.b16 %v1071
      %v1240 = vunpack.c.l.b16 %v1072
      %v1241 = vunpack.c.l.b16 %v1073
      %v1242 = vunpack.c.l.b16 %v1074
      %v1243 = vunpack.c.l.b16 %v1075
      %v1244 = vunpack.c.l.b16 %v1076
      %v1245 = vunpack.c.l.b16 %v1077
      %v1246 = vunpack.c.l.b16 %v1078
      %v1247 = vunpack.c.l.b16 %v1079
      %v1248 = vunpack.c.l.b16 %v1080
      %v1249 = vunpack.c.l.b16 %v1081
      %v1250 = vunpack.c.l.b16 %v1082
      %v1251 = vunpack.c.l.b16 %v1083
      %v1252 = vunpack.c.l.b16 %v1084
      %v1253 = vunpack.c.l.b16 %v1085
      %v1254 = vunpack.c.l.b16 %v1086
      %v1255 = vunpack.c.l.b16 %v1087
      %v1256 = vunpack.c.l.b16 %v1088
      %v1257 = vunpack.c.l.b16 %v1089
      %v1258 = vunpack.c.l.b16 %v1090
      %v1259 = vunpack.c.l.b16 %v1091
      %v1260 = vunpack.c.l.b16 %v1092
      %v1261 = vunpack.c.l.b16 %v1093
      %v1262 = vunpack.c.l.b16 %v1094
      %v1263 = vunpack.c.l.b16 %v1095
      %v1264 = vunpack.c.l.b16 %v1096
      %v1265 = vunpack.c.l.b16 %v1097
      %v1266 = vunpack.c.l.b16 %v1098
      %v1267 = vunpack.c.l.b16 %v1099
      %v1268 = vunpack.c.l.b16 %v1100
      %v1269 = vunpack.c.l.b16 %v1101
      %v1270 = vunpack.c.l.b16 %v1102
      %v1271 = vunpack.c.l.b16 %v1103
      %v1272 = vunpack.c.l.b16 %v1104
      %v1273 = vunpack.c.l.b16 %v1105
      %v1274 = vunpack.c.l.b16 %v1106
      %v1275 = vunpack.c.l.b16 %v1107
      %v1276 = vunpack.c.l.b16 %v1108
      %v1277 = vunpack.c.l.b16 %v1109
      %v1278 = vunpack.c.l.b16 %v1110
      %v1279 = vunpack.c.l.b16 %v1111
      %v1280 = vunpack.c.l.b16 %v1112
      %v1281 = vunpack.c.l.b16 %v1113
      %v1282 = vunpack.c.l.b16 %v1114
      %v1283 = vunpack.c.l.b16 %v1115
      %v1284 = vunpack.c.l.b16 %v1116
      %v1285 = vunpack.c.l.b16 %v1117
      %v1286 = vunpack.c.l.b16 %v1118
      %v1287 = vunpack.c.l.b16 %v1119
      %v1288 = vunpack.c.l.b16 %v1120
      %v1289 = vunpack.c.l.b16 %v1121
      %v1290 = vunpack.c.l.b16 %v1122
      %v1291 = vunpack.c.l.b16 %v1123
      %v1292 = vunpack.c.l.b16 %v1124
      %v1293 = vunpack.c.l.b16 %v1125
      %v1294 = vunpack.c.l.b16 %v1126
      %v1295 = vunpack.c.l.b16 %v1127
      %v1296 = vunpack.c.l.b16 %v1128
      %v1297 = vunpack.c.l.b16 %v1129
      %v1298 = vunpack.c.l.b16 %v1130
      %v1299 = vpack.c.b16 %v1236, %v1235
      %v1300 = vpack.c.b16 %v1238, %v1237
      %v1301 = vpack.c.b16 %v1240, %v1239
      %v1302 = vpack.c.b16 %v1242, %v1241
      %v1303 = vpack.c.b16 %v1244, %v1243
      %v1304 = vpack.c.b16 %v1246, %v1245
      %v1305 = vpack.c.b16 %v1248, %v1247
      %v1306 = vpack.c.b16 %v1250, %v1249
      %v1307 = vpack.c.b16 %v1252, %v1251
      %v1308 = vpack.c.b16 %v1254, %v1253
      %v1309 = vpack.c.b16 %v1256, %v1255
      %v1310 = vpack.c.b16 %v1258, %v1257
      %v1311 = vpack.c.b16 %v1260, %v1259
      %v1312 = vpack.c.b16 %v1262, %v1261
      %v1313 = vpack.c.b16 %v1264, %v1263
      %v1314 = vpack.c.b16 %v1266, %v1265
      %v1315 = vpack.c.b16 %v1268, %v1267
      %v1316 = vpack.c.b16 %v1270, %v1269
      %v1317 = vpack.c.b16 %v1272, %v1271
      %v1318 = vpack.c.b16 %v1274, %v1273
      %v1319 = vpack.c.b16 %v1276, %v1275
      %v1320 = vpack.c.b16 %v1278, %v1277
      %v1321 = vpack.c.b16 %v1280, %v1279
      %v1322 = vpack.c.b16 %v1282, %v1281
      %v1323 = vpack.c.b16 %v1284, %v1283
      %v1324 = vpack.c.b16 %v1286, %v1285
      %v1325 = vpack.c.b16 %v1288, %v1287
      %v1326 = vpack.c.b16 %v1290, %v1289
      %v1327 = vpack.c.b16 %v1292, %v1291
      %v1328 = vpack.c.b16 %v1294, %v1293
      %v1329 = vpack.c.b16 %v1296, %v1295
      %v1330 = vpack.c.b16 %v1298, %v1297
      %1363 = vmatprep.subr.bf16.mxu0 0
      %1364 = vmatpush1.bf16.msra.mxu0 %v1299
      %1365 = vmatprep.subr.bf16.mxu0 0
      %1366 = vmatpush1.bf16.msra.mxu0 %v1300
      %1367 = vmatprep.subr.bf16.mxu0 0
      %1368 = vmatpush1.bf16.msra.mxu0 %v1301
      %1369 = vmatprep.subr.bf16.mxu0 0
      %1370 = vmatpush1.bf16.msra.mxu0 %v1302
      %1371 = vmatprep.subr.bf16.mxu0 0
      %1372 = vmatpush1.bf16.msra.mxu0 %v1303
      %1373 = vmatprep.subr.bf16.mxu0 0
      %1374 = vmatpush1.bf16.msra.mxu0 %v1304
      %1375 = vmatprep.subr.bf16.mxu0 0
      %1376 = vmatpush1.bf16.msra.mxu0 %v1305
      %1377 = vmatprep.subr.bf16.mxu0 0
      %1378 = vmatpush1.bf16.msra.mxu0 %v1306
      %1379 = vmatprep.subr.bf16.mxu0 0
      %1380 = vmatpush1.bf16.msra.mxu0 %v1307
      %1381 = vmatprep.subr.bf16.mxu0 0
      %1382 = vmatpush1.bf16.msra.mxu0 %v1308
      %1383 = vmatprep.subr.bf16.mxu0 0
      %1384 = vmatpush1.bf16.msra.mxu0 %v1309
      %1385 = vmatprep.subr.bf16.mxu0 0
      %1386 = vmatpush1.bf16.msra.mxu0 %v1310
      %1387 = vmatprep.subr.bf16.mxu0 0
      %1388 = vmatpush1.bf16.msra.mxu0 %v1311
      %1389 = vmatprep.subr.bf16.mxu0 0
      %1390 = vmatpush1.bf16.msra.mxu0 %v1312
      %1391 = vmatprep.subr.bf16.mxu0 0
      %1392 = vmatpush1.bf16.msra.mxu0 %v1313
      %1393 = vmatprep.subr.bf16.mxu0 0
      %1394 = vmatpush1.bf16.msra.mxu0 %v1314
      %1395 = vmatprep.mubr.bf16.mxu0 %v1156
      %1396 = vmatmul.mubr.bf16.gmra.mrb[0].mxu0 %v1155
      %v1397 = vpop.f32.mrb[0].mxu0
      %v1398 = vadd.f32 0.0, %v1397
      %v1399 = vpop.f32.mrb[0].mxu0
      %v1400 = vpop.f32.mrb[0].mxu0
      %v1401 = vadd.f32 0.0, %v1400
      %v1402 = vpop.f32.mrb[0].mxu0
      %1403 = vmatprep.mubr.bf16.mxu0 %v1160
      %1404 = vmatmul.mubr.bf16.gmra.mrb[0].mxu0 %v1159
      %v1405 = vpop.f32.mrb[0].mxu0
      %v1406 = vadd.f32 0.0, %v1405
      %v1407 = vpop.f32.mrb[0].mxu0
      %v1408 = vpop.f32.mrb[0].mxu0
      %v1409 = vadd.f32 0.0, %v1408
      %v1410 = vpop.f32.mrb[0].mxu0
      %1411 = vdwg.mxu0
      %1412 = vmatprep.subr.bf16.mxu0 0
      %1413 = vmatpush1.bf16.msra.mxu0 %v1315
      %1414 = vmatprep.subr.bf16.mxu0 0
      %1415 = vmatpush1.bf16.msra.mxu0 %v1316
      %1416 = vmatprep.subr.bf16.mxu0 0
      %1417 = vmatpush1.bf16.msra.mxu0 %v1317
      %1418 = vmatprep.subr.bf16.mxu0 0
      %1419 = vmatpush1.bf16.msra.mxu0 %v1318
      %1420 = vmatprep.subr.bf16.mxu0 0
      %1421 = vmatpush1.bf16.msra.mxu0 %v1319
      %1422 = vmatprep.subr.bf16.mxu0 0
      %1423 = vmatpush1.bf16.msra.mxu0 %v1320
      %1424 = vmatprep.subr.bf16.mxu0 0
      %1425 = vmatpush1.bf16.msra.mxu0 %v1321
      %1426 = vmatprep.subr.bf16.mxu0 0
      %1427 = vmatpush1.bf16.msra.mxu0 %v1322
      %1428 = vmatprep.subr.bf16.mxu0 0
      %1429 = vmatpush1.bf16.msra.mxu0 %v1323
      %1430 = vmatprep.subr.bf16.mxu0 0
      %1431 = vmatpush1.bf16.msra.mxu0 %v1324
      %1432 = vmatprep.subr.bf16.mxu0 0
      %1433 = vmatpush1.bf16.msra.mxu0 %v1325
      %1434 = vmatprep.subr.bf16.mxu0 0
      %1435 = vmatpush1.bf16.msra.mxu0 %v1326
      %1436 = vmatprep.subr.bf16.mxu0 0
      %1437 = vmatpush1.bf16.msra.mxu0 %v1327
      %1438 = vmatprep.subr.bf16.mxu0 0
      %1439 = vmatpush1.bf16.msra.mxu0 %v1328
      %1440 = vmatprep.subr.bf16.mxu0 0
      %1441 = vmatpush1.bf16.msra.mxu0 %v1329
      %1442 = vmatprep.subr.bf16.mxu0 0
      %1443 = vmatpush1.bf16.msra.mxu0 %v1330
      %1444 = vmatprep.mubr.bf16.mxu0 %v1158
      %1445 = vmatmul.mubr.bf16.gmra.mrb[0].mxu0 %v1157
      %v1446 = vpop.f32.mrb[0].mxu0
      %v1447 = vadd.f32 %v1398, %v1446
      %v1448 = vpop.f32.mrb[0].mxu0
      %v1449 = vpop.f32.mrb[0].mxu0
      %v1450 = vadd.f32 %v1401, %v1449
      %v1451 = vpop.f32.mrb[0].mxu0
      %1452 = vmatprep.mubr.bf16.mxu0 %v1162
      %1453 = vmatmul.mubr.bf16.gmra.mrb[0].mxu0 %v1161
      %v1454 = vpop.f32.mrb[0].mxu0
      %v1455 = vadd.f32 %v1406, %v1454
      %v1456 = vpop.f32.mrb[0].mxu0
      %v1457 = vpop.f32.mrb[0].mxu0
      %v1458 = vadd.f32 %v1409, %v1457
      %v1459 = vpop.f32.mrb[0].mxu0
      %1460 = vdwg.mxu0
      %v1461 = vadd.f32 %v1040, %v1447
      %v1462 = vadd.f32 %v1043, %v1450
      %v1463 = vadd.f32 %v1048, %v1455
      %v1464 = vadd.f32 %v1051, %v1458
      %s1465 = sadd.s32 %s241, 3
      %s1466 = smul.u32 %s1465, 8
      %s1467 = smul.addr %s1466, 4
      %s1468 = scalar_lea.vmem %s219, %s1467
      %v1469 = vld [vmem:[%s1468] sm:$0xff]
      %v1470 = vld [vmem:[%s1468 + $0x8] sm:$0xff]
      %v1471 = vld [vmem:[%s1468 + $0x10] sm:$0xff]
      %v1472 = vld [vmem:[%s1468 + $0x18] sm:$0xff]
      %v1473 = vld [vmem:[%s1468 + $0x20] sm:$0xff]
      %v1474 = vld [vmem:[%s1468 + $0x28] sm:$0xff]
      %v1475 = vld [vmem:[%s1468 + $0x30] sm:$0xff]
      %v1476 = vld [vmem:[%s1468 + $0x38] sm:$0xff]
      %s1477 = scalar_lea.vmem %s223, 768
      %v1478 = vld [vmem:[%s1477] sm:$0xf]
      %v1479 = vld [vmem:[%s1477 + $0x4] sm:$0xf]
      %v1480 = vld [vmem:[%s1477 + $0x8] sm:$0xf]
      %v1481 = vld [vmem:[%s1477 + $0xc] sm:$0xf]
      %v1482 = vld [vmem:[%s1477 + $0x10] sm:$0xf]
      %v1483 = vld [vmem:[%s1477 + $0x14] sm:$0xf]
      %v1484 = vld [vmem:[%s1477 + $0x18] sm:$0xf]
      %v1485 = vld [vmem:[%s1477 + $0x1c] sm:$0xf]
      %v1486 = vld [vmem:[%s1477 + $0x20] sm:$0xf]
      %v1487 = vld [vmem:[%s1477 + $0x24] sm:$0xf]
      %v1488 = vld [vmem:[%s1477 + $0x28] sm:$0xf]
      %v1489 = vld [vmem:[%s1477 + $0x2c] sm:$0xf]
      %v1490 = vld [vmem:[%s1477 + $0x30] sm:$0xf]
      %v1491 = vld [vmem:[%s1477 + $0x34] sm:$0xf]
      %v1492 = vld [vmem:[%s1477 + $0x38] sm:$0xf]
      %v1493 = vld [vmem:[%s1477 + $0x3c] sm:$0xf]
      %v1494 = vld [vmem:[%s1477 + $0x40] sm:$0xf]
      %v1495 = vld [vmem:[%s1477 + $0x44] sm:$0xf]
      %v1496 = vld [vmem:[%s1477 + $0x48] sm:$0xf]
      %v1497 = vld [vmem:[%s1477 + $0x4c] sm:$0xf]
      %v1498 = vld [vmem:[%s1477 + $0x50] sm:$0xf]
      %v1499 = vld [vmem:[%s1477 + $0x54] sm:$0xf]
      %v1500 = vld [vmem:[%s1477 + $0x58] sm:$0xf]
      %v1501 = vld [vmem:[%s1477 + $0x5c] sm:$0xf]
      %v1502 = vld [vmem:[%s1477 + $0x60] sm:$0xf]
      %v1503 = vld [vmem:[%s1477 + $0x64] sm:$0xf]
      %v1504 = vld [vmem:[%s1477 + $0x68] sm:$0xf]
      %v1505 = vld [vmem:[%s1477 + $0x6c] sm:$0xf]
      %v1506 = vld [vmem:[%s1477 + $0x70] sm:$0xf]
      %v1507 = vld [vmem:[%s1477 + $0x74] sm:$0xf]
      %v1508 = vld [vmem:[%s1477 + $0x78] sm:$0xf]
      %v1509 = vld [vmem:[%s1477 + $0x7c] sm:$0xf]
      %v1510 = vld [vmem:[%s1477 + $0x80] sm:$0xf]
      %v1511 = vld [vmem:[%s1477 + $0x84] sm:$0xf]
      %v1512 = vld [vmem:[%s1477 + $0x88] sm:$0xf]
      %v1513 = vld [vmem:[%s1477 + $0x8c] sm:$0xf]
      %v1514 = vld [vmem:[%s1477 + $0x90] sm:$0xf]
      %v1515 = vld [vmem:[%s1477 + $0x94] sm:$0xf]
      %v1516 = vld [vmem:[%s1477 + $0x98] sm:$0xf]
      %v1517 = vld [vmem:[%s1477 + $0x9c] sm:$0xf]
      %v1518 = vld [vmem:[%s1477 + $0xa0] sm:$0xf]
      %v1519 = vld [vmem:[%s1477 + $0xa4] sm:$0xf]
      %v1520 = vld [vmem:[%s1477 + $0xa8] sm:$0xf]
      %v1521 = vld [vmem:[%s1477 + $0xac] sm:$0xf]
      %v1522 = vld [vmem:[%s1477 + $0xb0] sm:$0xf]
      %v1523 = vld [vmem:[%s1477 + $0xb4] sm:$0xf]
      %v1524 = vld [vmem:[%s1477 + $0xb8] sm:$0xf]
      %v1525 = vld [vmem:[%s1477 + $0xbc] sm:$0xf]
      %v1526 = vld [vmem:[%s1477 + $0xc0] sm:$0xf]
      %v1527 = vld [vmem:[%s1477 + $0xc4] sm:$0xf]
      %v1528 = vld [vmem:[%s1477 + $0xc8] sm:$0xf]
      %v1529 = vld [vmem:[%s1477 + $0xcc] sm:$0xf]
      %v1530 = vld [vmem:[%s1477 + $0xd0] sm:$0xf]
      %v1531 = vld [vmem:[%s1477 + $0xd4] sm:$0xf]
      %v1532 = vld [vmem:[%s1477 + $0xd8] sm:$0xf]
      %v1533 = vld [vmem:[%s1477 + $0xdc] sm:$0xf]
      %v1534 = vld [vmem:[%s1477 + $0xe0] sm:$0xf]
      %v1535 = vld [vmem:[%s1477 + $0xe4] sm:$0xf]
      %v1536 = vld [vmem:[%s1477 + $0xe8] sm:$0xf]
      %v1537 = vld [vmem:[%s1477 + $0xec] sm:$0xf]
      %v1538 = vld [vmem:[%s1477 + $0xf0] sm:$0xf]
      %v1539 = vld [vmem:[%s1477 + $0xf4] sm:$0xf]
      %v1540 = vld [vmem:[%s1477 + $0xf8] sm:$0xf]
      %v1541 = vld [vmem:[%s1477 + $0xfc] sm:$0xf]
      %v1550 = vunpack.c.l.b16 %v1469
      %v1551 = vunpack.c.h.b16 %v1469
      %v1552 = vunpack.c.l.b16 %v1470
      %v1553 = vunpack.c.h.b16 %v1470
      %v1554 = vunpack.c.l.b16 %v1471
      %v1555 = vunpack.c.h.b16 %v1471
      %v1556 = vunpack.c.l.b16 %v1472
      %v1557 = vunpack.c.h.b16 %v1472
      %v1558 = vunpack.c.l.b16 %v1473
      %v1559 = vunpack.c.h.b16 %v1473
      %v1560 = vunpack.c.l.b16 %v1474
      %v1561 = vunpack.c.h.b16 %v1474
      %v1562 = vunpack.c.l.b16 %v1475
      %v1563 = vunpack.c.h.b16 %v1475
      %v1564 = vunpack.c.l.b16 %v1476
      %v1565 = vunpack.c.h.b16 %v1476
      %v1566 = vpack.c.b16 %v1554, %v1550
      %v1567 = vpack.c.b16 %v1555, %v1551
      %v1568 = vpack.c.b16 %v1556, %v1552
      %v1569 = vpack.c.b16 %v1557, %v1553
      %v1570 = vpack.c.b16 %v1562, %v1558
      %v1571 = vpack.c.b16 %v1563, %v1559
      %v1572 = vpack.c.b16 %v1564, %v1560
      %v1573 = vpack.c.b16 %v1565, %v1561
      %v1646 = vunpack.c.l.b16 %v1478
      %v1647 = vunpack.c.l.b16 %v1479
      %v1648 = vunpack.c.l.b16 %v1480
      %v1649 = vunpack.c.l.b16 %v1481
      %v1650 = vunpack.c.l.b16 %v1482
      %v1651 = vunpack.c.l.b16 %v1483
      %v1652 = vunpack.c.l.b16 %v1484
      %v1653 = vunpack.c.l.b16 %v1485
      %v1654 = vunpack.c.l.b16 %v1486
      %v1655 = vunpack.c.l.b16 %v1487
      %v1656 = vunpack.c.l.b16 %v1488
      %v1657 = vunpack.c.l.b16 %v1489
      %v1658 = vunpack.c.l.b16 %v1490
      %v1659 = vunpack.c.l.b16 %v1491
      %v1660 = vunpack.c.l.b16 %v1492
      %v1661 = vunpack.c.l.b16 %v1493
      %v1662 = vunpack.c.l.b16 %v1494
      %v1663 = vunpack.c.l.b16 %v1495
      %v1664 = vunpack.c.l.b16 %v1496
      %v1665 = vunpack.c.l.b16 %v1497
      %v1666 = vunpack.c.l.b16 %v1498
      %v1667 = vunpack.c.l.b16 %v1499
      %v1668 = vunpack.c.l.b16 %v1500
      %v1669 = vunpack.c.l.b16 %v1501
      %v1670 = vunpack.c.l.b16 %v1502
      %v1671 = vunpack.c.l.b16 %v1503
      %v1672 = vunpack.c.l.b16 %v1504
      %v1673 = vunpack.c.l.b16 %v1505
      %v1674 = vunpack.c.l.b16 %v1506
      %v1675 = vunpack.c.l.b16 %v1507
      %v1676 = vunpack.c.l.b16 %v1508
      %v1677 = vunpack.c.l.b16 %v1509
      %v1678 = vunpack.c.l.b16 %v1510
      %v1679 = vunpack.c.l.b16 %v1511
      %v1680 = vunpack.c.l.b16 %v1512
      %v1681 = vunpack.c.l.b16 %v1513
      %v1682 = vunpack.c.l.b16 %v1514
      %v1683 = vunpack.c.l.b16 %v1515
      %v1684 = vunpack.c.l.b16 %v1516
      %v1685 = vunpack.c.l.b16 %v1517
      %v1686 = vunpack.c.l.b16 %v1518
      %v1687 = vunpack.c.l.b16 %v1519
      %v1688 = vunpack.c.l.b16 %v1520
      %v1689 = vunpack.c.l.b16 %v1521
      %v1690 = vunpack.c.l.b16 %v1522
      %v1691 = vunpack.c.l.b16 %v1523
      %v1692 = vunpack.c.l.b16 %v1524
      %v1693 = vunpack.c.l.b16 %v1525
      %v1694 = vunpack.c.l.b16 %v1526
      %v1695 = vunpack.c.l.b16 %v1527
      %v1696 = vunpack.c.l.b16 %v1528
      %v1697 = vunpack.c.l.b16 %v1529
      %v1698 = vunpack.c.l.b16 %v1530
      %v1699 = vunpack.c.l.b16 %v1531
      %v1700 = vunpack.c.l.b16 %v1532
      %v1701 = vunpack.c.l.b16 %v1533
      %v1702 = vunpack.c.l.b16 %v1534
      %v1703 = vunpack.c.l.b16 %v1535
      %v1704 = vunpack.c.l.b16 %v1536
      %v1705 = vunpack.c.l.b16 %v1537
      %v1706 = vunpack.c.l.b16 %v1538
      %v1707 = vunpack.c.l.b16 %v1539
      %v1708 = vunpack.c.l.b16 %v1540
      %v1709 = vunpack.c.l.b16 %v1541
      %v1710 = vpack.c.b16 %v1647, %v1646
      %v1711 = vpack.c.b16 %v1649, %v1648
      %v1712 = vpack.c.b16 %v1651, %v1650
      %v1713 = vpack.c.b16 %v1653, %v1652
      %v1714 = vpack.c.b16 %v1655, %v1654
      %v1715 = vpack.c.b16 %v1657, %v1656
      %v1716 = vpack.c.b16 %v1659, %v1658
      %v1717 = vpack.c.b16 %v1661, %v1660
      %v1718 = vpack.c.b16 %v1663, %v1662
      %v1719 = vpack.c.b16 %v1665, %v1664
      %v1720 = vpack.c.b16 %v1667, %v1666
      %v1721 = vpack.c.b16 %v1669, %v1668
      %v1722 = vpack.c.b16 %v1671, %v1670
      %v1723 = vpack.c.b16 %v1673, %v1672
      %v1724 = vpack.c.b16 %v1675, %v1674
      %v1725 = vpack.c.b16 %v1677, %v1676
      %v1726 = vpack.c.b16 %v1679, %v1678
      %v1727 = vpack.c.b16 %v1681, %v1680
      %v1728 = vpack.c.b16 %v1683, %v1682
      %v1729 = vpack.c.b16 %v1685, %v1684
      %v1730 = vpack.c.b16 %v1687, %v1686
      %v1731 = vpack.c.b16 %v1689, %v1688
      %v1732 = vpack.c.b16 %v1691, %v1690
      %v1733 = vpack.c.b16 %v1693, %v1692
      %v1734 = vpack.c.b16 %v1695, %v1694
      %v1735 = vpack.c.b16 %v1697, %v1696
      %v1736 = vpack.c.b16 %v1699, %v1698
      %v1737 = vpack.c.b16 %v1701, %v1700
      %v1738 = vpack.c.b16 %v1703, %v1702
      %v1739 = vpack.c.b16 %v1705, %v1704
      %v1740 = vpack.c.b16 %v1707, %v1706
      %v1741 = vpack.c.b16 %v1709, %v1708
      %1774 = vmatprep.subr.bf16.mxu0 0
      %1775 = vmatpush1.bf16.msra.mxu0 %v1710
      %1776 = vmatprep.subr.bf16.mxu0 0
      %1777 = vmatpush1.bf16.msra.mxu0 %v1711
      %1778 = vmatprep.subr.bf16.mxu0 0
      %1779 = vmatpush1.bf16.msra.mxu0 %v1712
      %1780 = vmatprep.subr.bf16.mxu0 0
      %1781 = vmatpush1.bf16.msra.mxu0 %v1713
      %1782 = vmatprep.subr.bf16.mxu0 0
      %1783 = vmatpush1.bf16.msra.mxu0 %v1714
      %1784 = vmatprep.subr.bf16.mxu0 0
      %1785 = vmatpush1.bf16.msra.mxu0 %v1715
      %1786 = vmatprep.subr.bf16.mxu0 0
      %1787 = vmatpush1.bf16.msra.mxu0 %v1716
      %1788 = vmatprep.subr.bf16.mxu0 0
      %1789 = vmatpush1.bf16.msra.mxu0 %v1717
      %1790 = vmatprep.subr.bf16.mxu0 0
      %1791 = vmatpush1.bf16.msra.mxu0 %v1718
      %1792 = vmatprep.subr.bf16.mxu0 0
      %1793 = vmatpush1.bf16.msra.mxu0 %v1719
      %1794 = vmatprep.subr.bf16.mxu0 0
      %1795 = vmatpush1.bf16.msra.mxu0 %v1720
      %1796 = vmatprep.subr.bf16.mxu0 0
      %1797 = vmatpush1.bf16.msra.mxu0 %v1721
      %1798 = vmatprep.subr.bf16.mxu0 0
      %1799 = vmatpush1.bf16.msra.mxu0 %v1722
      %1800 = vmatprep.subr.bf16.mxu0 0
      %1801 = vmatpush1.bf16.msra.mxu0 %v1723
      %1802 = vmatprep.subr.bf16.mxu0 0
      %1803 = vmatpush1.bf16.msra.mxu0 %v1724
      %1804 = vmatprep.subr.bf16.mxu0 0
      %1805 = vmatpush1.bf16.msra.mxu0 %v1725
      %1806 = vmatprep.mubr.bf16.mxu0 %v1567
      %1807 = vmatmul.mubr.bf16.gmra.mrb[0].mxu0 %v1566
      %v1808 = vpop.f32.mrb[0].mxu0
      %v1809 = vadd.f32 0.0, %v1808
      %v1810 = vpop.f32.mrb[0].mxu0
      %v1811 = vpop.f32.mrb[0].mxu0
      %v1812 = vadd.f32 0.0, %v1811
      %v1813 = vpop.f32.mrb[0].mxu0
      %1814 = vmatprep.mubr.bf16.mxu0 %v1571
      %1815 = vmatmul.mubr.bf16.gmra.mrb[0].mxu0 %v1570
      %v1816 = vpop.f32.mrb[0].mxu0
      %v1817 = vadd.f32 0.0, %v1816
      %v1818 = vpop.f32.mrb[0].mxu0
      %v1819 = vpop.f32.mrb[0].mxu0
      %v1820 = vadd.f32 0.0, %v1819
      %v1821 = vpop.f32.mrb[0].mxu0
      %1822 = vdwg.mxu0
      %1823 = vmatprep.subr.bf16.mxu0 0
      %1824 = vmatpush1.bf16.msra.mxu0 %v1726
      %1825 = vmatprep.subr.bf16.mxu0 0
      %1826 = vmatpush1.bf16.msra.mxu0 %v1727
      %1827 = vmatprep.subr.bf16.mxu0 0
      %1828 = vmatpush1.bf16.msra.mxu0 %v1728
      %1829 = vmatprep.subr.bf16.mxu0 0
      %1830 = vmatpush1.bf16.msra.mxu0 %v1729
      %1831 = vmatprep.subr.bf16.mxu0 0
      %1832 = vmatpush1.bf16.msra.mxu0 %v1730
      %1833 = vmatprep.subr.bf16.mxu0 0
      %1834 = vmatpush1.bf16.msra.mxu0 %v1731
      %1835 = vmatprep.subr.bf16.mxu0 0
      %1836 = vmatpush1.bf16.msra.mxu0 %v1732
      %1837 = vmatprep.subr.bf16.mxu0 0
      %1838 = vmatpush1.bf16.msra.mxu0 %v1733
      %1839 = vmatprep.subr.bf16.mxu0 0
      %1840 = vmatpush1.bf16.msra.mxu0 %v1734
      %1841 = vmatprep.subr.bf16.mxu0 0
      %1842 = vmatpush1.bf16.msra.mxu0 %v1735
      %1843 = vmatprep.subr.bf16.mxu0 0
      %1844 = vmatpush1.bf16.msra.mxu0 %v1736
      %1845 = vmatprep.subr.bf16.mxu0 0
      %1846 = vmatpush1.bf16.msra.mxu0 %v1737
      %1847 = vmatprep.subr.bf16.mxu0 0
      %1848 = vmatpush1.bf16.msra.mxu0 %v1738
      %1849 = vmatprep.subr.bf16.mxu0 0
      %1850 = vmatpush1.bf16.msra.mxu0 %v1739
      %1851 = vmatprep.subr.bf16.mxu0 0
      %1852 = vmatpush1.bf16.msra.mxu0 %v1740
      %1853 = vmatprep.subr.bf16.mxu0 0
      %1854 = vmatpush1.bf16.msra.mxu0 %v1741
      %1855 = vmatprep.mubr.bf16.mxu0 %v1569
      %1856 = vmatmul.mubr.bf16.gmra.mrb[0].mxu0 %v1568
      %v1857 = vpop.f32.mrb[0].mxu0
      %v1858 = vadd.f32 %v1809, %v1857
      %v1859 = vpop.f32.mrb[0].mxu0
      %v1860 = vpop.f32.mrb[0].mxu0
      %v1861 = vadd.f32 %v1812, %v1860
      %v1862 = vpop.f32.mrb[0].mxu0
      %1863 = vmatprep.mubr.bf16.mxu0 %v1573
      %1864 = vmatmul.mubr.bf16.gmra.mrb[0].mxu0 %v1572
      %v1865 = vpop.f32.mrb[0].mxu0
      %v1866 = vadd.f32 %v1817, %v1865
      %v1867 = vpop.f32.mrb[0].mxu0
      %v1868 = vpop.f32.mrb[0].mxu0
      %v1869 = vadd.f32 %v1820, %v1868
      %v1870 = vpop.f32.mrb[0].mxu0
      %1871 = vdwg.mxu0
      %v1872 = vadd.f32 %v1461, %v1858
      %v1873 = vadd.f32 %v1462, %v1861
      %v1874 = vadd.f32 %v1463, %v1866
      %v1875 = vadd.f32 %v1464, %v1869
      %v1876 = vld [vmem:[%s226] sm:$0x1]
      %v1878 = vlaneseq
      %v1879 = vshrl.u32 %v1878, 7
      %v1880 = vsub.s32 0, %v1879
      %v1881 = vrot.slane %v1876, %v1880
      %v1883 = vadd.f32 %v1872, %v1881
      %v1884 = vadd.f32 %v1873, %v1881
      %v1885 = vadd.f32 %v1874, %v1881
      %v1886 = vadd.f32 %v1875, %v1881
      %1887 = vst [vmem:[%s238] sm:$0xff] %v1883
      %1888 = vst [vmem:[%s238 + $0x8] sm:$0xff] %v1884
      %1889 = vst [vmem:[%s238 + $0x10] sm:$0xff] %v1885
      %1890 = vst [vmem:[%s238 + $0x18] sm:$0xff] %v1886
      %s1891 = smul.u32 4, %s21
      %p1892 = scmp.lt.s32.totalorder %s19, 1
      %s1893 = scalar_select %p1892, %s19, 1
      %p1894 = scmp.lt.s32.totalorder %s1891, 3
      %s1895 = scalar_select %p1894, %s1891, 3
      %p1896 = scmp.lt.s32.totalorder %s20, 0
      %s1897 = scalar_select %p1896, %s20, 0
      %s1898 = sadd.s32 %s1897, %s1895
      %s1899 = smul.addr %s1893, 4
      %s1900 = sadd.s32 %s1898, %s1899
      %s1901 = smul.addr %s1900, 8
      %s1902 = scalar_lea.vmem %s3, %s1901
      // Predicated region
      $region33: #{_lambda_.15} parent=31 // pred_check
        %p1903 = pneg %p133
      $region34: #{_lambda_.15} parent=31 // pred_check_branch
        %1905 = sbr.rel (%p1903) target = $region36
      $region35: #{_lambda_.15} parent=31 // pred_region
        %s1906 = smul.u32 4, %s21
      $region36: #{_lambda_.15} parent=31 // pred_fallthru
        _
    $region32: #{_lambda_.15} parent=5 // pred_fallthru
      _
    %p1907 = scmp.le.s32.totalorder 2, %s9
    // Predicated region
    $region37: #{_lambda_.15} parent=5 // pred_check
      %p1908 = pneg %p1907
    $region38: #{_lambda_.15} parent=5 // pred_check_branch
      %1910 = sbr.rel (%p1908) target = $region40
    $region39: #{_lambda_.15} parent=5 // pred_region
      %s1911 = ssub.s32 %s9, 2
      // Predicated region
      $region41: #{_lambda_.15} parent=39 // pred_check
        %p1912 = pneg %p139
      $region42: #{_lambda_.15} parent=39 // pred_check_branch
        %1914 = sbr.rel (%p1912) target = $region44
      $region43: #{_lambda_.15} parent=39 // pred_region
        %s1915 = smul.u32 4, %s24
        %p1916 = scmp.lt.s32.totalorder %s22, 1
        %s1917 = scalar_select %p1916, %s22, 1
        %p1918 = scmp.lt.s32.totalorder %s1915, 3
        %s1919 = scalar_select %p1918, %s1915, 3
        %p1920 = scmp.lt.s32.totalorder %s23, 0
        %s1921 = scalar_select %p1920, %s23, 0
        %s1922 = sadd.s32 %s1921, %s1919
        %s1923 = smul.addr %s1917, 4
        %s1924 = sadd.s32 %s1922, %s1923
        %s1925 = smul.addr %s1924, 8
        %s1926 = scalar_lea.vmem %s3, %s1925
      $region44: #{_lambda_.15} parent=39 // pred_fallthru
        _
    $region40: #{_lambda_.15} parent=5 // pred_fallthru
      _
  $region6: #{_lambda_.15} parent=0 // loop_footer
    %s13 = sadd.s32 1, %s9
  $region7: #{_lambda_.15} parent=0 // loop_footer_branch
    %8 = sbr.rel target = $region3
  $region8: #{_lambda_.15} parent=0 // loop_exit
    _

</llo_original>
